<compile_context>
chip_gen: v5e
topology: v5e:2x2
jax: 0.10.0
libtpu: 0.0.40
codegen_flags: <defaults>
</compile_context>

<pallas_src>
import functools

import jax
import jax.numpy as jnp
import numpy as np
from jax import lax
from jax.experimental import pallas as pl
from jax.experimental.pallas import tpu as pltpu

LANE = 128       # final-store lane width (output channels padded to this)
SMALL_CIN = 32   # <= this input-channel count -> single K=9*Cin matmul path


# ---------------------------------------------------------------------------
# Fused kernel: upsample(x1) + pad(x2) + concat + (conv3x3 -> BN -> ReLU) * 2.
# One image per grid step.
# ---------------------------------------------------------------------------
def _up_double_conv_kernel(x1_ref, x2_ref, w1_ref, w2_ref,
                           s1_ref, t1_ref, s2_ref, t2_ref,
                           o_ref, xcat_ref, y1_ref, *, ph_lo, pw_lo):
    # x1_ref: (1, H1, W1, C1) bf16  -- raw x1 (half-res) or pre-upsampled x1
    # x2_ref: (1, H2, W2, C2) bf16  -- (cropped) x2
    # w*_ref: (9*Cin, Cout) or (3, 3*Cin, Cout) bf16 -- tap-stacked conv weights
    # s*/t*:  (1, Cout) f32         -- folded conv-bias + BN scale / shift
    # o_ref:  (1, Hc, Wc, Cp) bf16  -- lane-dense (128-padded) output
    # xcat_ref: (Hc+2, Wc+2, Ccat) bf16 scratch (padded + concatenated input)
    # y1_ref:   (Hc+2, Wc+2, Cmid) bf16 scratch (padded conv1 output)
    Hc = xcat_ref.shape[0] - 2
    Wc = xcat_ref.shape[1] - 2
    Ccat = xcat_ref.shape[2]
    _, H1, W1, C1 = x1_ref.shape
    _, H2, W2, C2 = x2_ref.shape
    Cmid = y1_ref.shape[-1]
    Cp = o_ref.shape[-1]
    cdt = xcat_ref.dtype

    # ---- zero ONLY the halo ring + F.pad strips (interiors fully overwritten
    #      below; the per-image whole-scratch memset is gone) ----------------
    xcat_ref[0:1 + ph_lo, :, :] = jnp.zeros((1 + ph_lo, Wc + 2, Ccat), cdt)
    xcat_ref[1 + ph_lo + H2:Hc + 2, :, :] = jnp.zeros(
        (Hc + 1 - ph_lo - H2, Wc + 2, Ccat), cdt)
    xcat_ref[:, 0:1 + pw_lo, :] = jnp.zeros((Hc + 2, 1 + pw_lo, Ccat), cdt)
    xcat_ref[:, 1 + pw_lo + W2:Wc + 2, :] = jnp.zeros(
        (Hc + 2, Wc + 1 - pw_lo - W2, Ccat), cdt)

    # ---- fused F.pad(x2) + channel concat + 2x nearest upsample of x1 -------
    xcat_ref[1 + ph_lo:1 + ph_lo + H2, 1 + pw_lo:1 + pw_lo + W2, 0:C2] = x2_ref[0]
    if H1 == Hc:
        # Fallback path: x1 already upsampled by the wrapper.
        xcat_ref[1:1 + Hc, 1:1 + Wc, C2:C2 + C1] = x1_ref[0]
    else:
        # In-kernel 2x nearest upsample: W interleave (sublane merge) then H
        # duplication (major-dim merge); both reshapes keep the lane dim fixed.
        x1v = x1_ref[0]                                           # (H1, W1, C1)
        x1w = jnp.broadcast_to(x1v[:, :, None, :],
                               (H1, W1, 2, C1)).reshape(H1, 2 * W1, C1)
        x1u = jnp.broadcast_to(x1w[:, None, :, :],
                               (H1, 2, 2 * W1, C1)).reshape(Hc, Wc, C1)
        xcat_ref[1:1 + Hc, 1:1 + Wc, C2:C2 + C1] = x1u

    def conv3x3_bn_relu(xp, w_ref, s_ref, t_ref):
        # xp: (Hc+2, Wc+2, Cin) bf16, spatially pre-padded by 1.
        cin = xp.shape[-1]
        if w_ref.ndim == 2:
            # Small Cin: lane-concat all 9 taps once -> one MXU matmul, K=9*Cin.
            xs = jnp.concatenate(
                [xp[dy:dy + Hc, dx:dx + Wc, :]
                 for dy in range(3) for dx in range(3)], axis=-1)
            acc = jnp.dot(xs.reshape(Hc * Wc, 9 * cin), w_ref[...],
                          preferred_element_type=jnp.float32)
        else:
            # Large Cin: 3 matmuls, K=3*Cin; dx shifts lane-concatenated once.
            xs = jnp.concatenate([xp[:, dx:dx + Wc, :] for dx in range(3)],
                                 axis=-1)
            acc = jnp.dot(xs[0:Hc].reshape(Hc * Wc, 3 * cin), w_ref[0],
                          preferred_element_type=jnp.float32)
            for dy in (1, 2):
                acc = acc + jnp.dot(
                    xs[dy:dy + Hc].reshape(Hc * Wc, 3 * cin), w_ref[dy],
                    preferred_element_type=jnp.float32)
        # f32 epilogue: folded conv-bias + BN affine (eval mode), then ReLU.
        return jnp.maximum(acc * s_ref[0] + t_ref[0], 0.0)

    # ---- conv1 -> BN -> ReLU; kept in VMEM, ring re-zeroed for conv2 ---------
    y1 = conv3x3_bn_relu(xcat_ref[...], w1_ref, s1_ref, t1_ref)   # (Hc*Wc, Cmid)
    ydt = y1_ref.dtype
    y1_ref[0:1, :, :] = jnp.zeros((1, Wc + 2, Cmid), ydt)
    y1_ref[Hc + 1:Hc + 2, :, :] = jnp.zeros((1, Wc + 2, Cmid), ydt)
    y1_ref[:, 0:1, :] = jnp.zeros((Hc + 2, 1, Cmid), ydt)
    y1_ref[:, Wc + 1:Wc + 2, :] = jnp.zeros((Hc + 2, 1, Cmid), ydt)
    y1_ref[1:1 + Hc, 1:1 + Wc, :] = y1.reshape(Hc, Wc, Cmid).astype(ydt)

    # ---- conv2 -> BN -> ReLU -> lane-dense bf16 store ------------------------
    y2 = conv3x3_bn_relu(y1_ref[...], w2_ref, s2_ref, t2_ref)      # (Hc*Wc, Cp)
    o_ref[0] = y2.reshape(Hc, Wc, Cp).astype(o_ref.dtype)


# ---------------------------------------------------------------------------
# Parameter construction (deterministic, mirrors the PyTorch module shapes).
# ---------------------------------------------------------------------------
def make_up_params(key, in_ch, out_ch):
    """Build deterministic params for double_conv(in_ch, out_ch) (BN in eval)."""
    ks = jax.random.split(key, 12)
    eps = 1e-5

    def conv_bn(k0, k1, k2, k3, k4, k5, cin, cout):
        w_oihw = 0.1 * jax.random.normal(k0, (cout, cin, 3, 3), jnp.float32)
        b = 0.05 * jax.random.normal(k1, (cout,), jnp.float32)
        gamma = 1.0 + 0.1 * jax.random.normal(k2, (cout,), jnp.float32)
        beta = 0.1 * jax.random.normal(k3, (cout,), jnp.float32)
        run_mean = 0.1 * jax.random.normal(k4, (cout,), jnp.float32)
        run_var = 0.5 + jax.random.uniform(k5, (cout,), jnp.float32)  # > 0
        w_hwio = jnp.transpose(w_oihw, (2, 3, 1, 0))                  # HWIO
        scale = gamma / jnp.sqrt(run_var + eps)
        shift = beta + (b - run_mean) * scale
        return w_hwio, scale, shift

    w1, s1, t1 = conv_bn(*ks[0:6], in_ch, out_ch)
    w2, s2, t2 = conv_bn(*ks[6:12], out_ch, out_ch)
    return dict(w1=w1, scale1=s1, shift1=t1, w2=w2, scale2=s2, shift2=t2)


def _round_up(x, m):
    return (x + m - 1) // m * m


def _nbytes(shape, dtype):
    return int(np.prod(shape)) * jnp.dtype(dtype).itemsize


# ---------------------------------------------------------------------------
# up.forward(x1, x2)  — NCHW in / NCHW out, matching the PyTorch module.
# ---------------------------------------------------------------------------
@functools.partial(jax.jit, static_argnames=("upsample_in_kernel",))
def up_forward(params, x1, x2, upsample_in_kernel=True):
    N, C1, H1, W1 = x1.shape
    _, C2, H2, W2 = x2.shape
    Hc, Wc = 2 * H1, 2 * W1
    Ccat = C1 + C2
    out_ch = params["w2"].shape[-1]
    Cp = _round_up(out_ch, LANE)                 # lane-dense final-store width
    Cmid = min(Cp, _round_up(out_ch, 8))         # minimal conv1-N / conv2-K width
    assert params["w1"].shape[2] == Ccat

    # Reference module's quirky pad amounts: diffX (from H sizes) pads W and
    # diffY (from W sizes) pads H, with int(diff/2) on the high side — all
    # reproduced exactly.  Negative F.pad amounts crop; crops are applied here.
    diffX, diffY = Hc - H2, Wc - W2
    w_lo, w_hi = diffX // 2, int(diffX / 2)
    h_lo, h_hi = diffY // 2, int(diffY / 2)
    x2c = x2[:, :, max(0, -h_lo):H2 - max(0, -h_hi),
             max(0, -w_lo):W2 - max(0, -w_hi)]
    ph_lo, ph_hi = max(0, h_lo), max(0, h_hi)
    pw_lo, pw_hi = max(0, w_lo), max(0, w_hi)
    H2c, W2c = x2c.shape[2], x2c.shape[3]
    if (H2c <= 0 or W2c <= 0 or ph_lo + H2c + ph_hi != Hc
            or pw_lo + W2c + pw_hi != Wc):
        raise ValueError("padded x2 does not match upsampled x1 spatially "
                         "(torch.cat would fail for these shapes)")

    # NCHW -> NHWC, bf16 boundary glue.  The 2x nearest upsample of x1 is done
    # inside the kernel, so x1 is read from HBM at 1/4 of the upsampled size.
    x1n = jnp.transpose(x1, (0, 2, 3, 1)).astype(jnp.bfloat16)
    x2n = jnp.transpose(x2c, (0, 2, 3, 1)).astype(jnp.bfloat16)
    if upsample_in_kernel:
        x1_in, x1_block = x1n, (1, H1, W1, C1)
    else:
        x1_in = jnp.repeat(jnp.repeat(x1n, 2, axis=1), 2, axis=2)
        x1_block = (1, Hc, Wc, C1)

    # Weights: HWIO -> tap-stacked, input channels padded to the actual K used,
    # output channels padded to Cmid (conv1) / Cp (conv2, lane-dense store).
    def prep_w(w_hwio, cin_pad, cout_pad):
        _, _, cin, cout = w_hwio.shape
        w = jnp.pad(w_hwio,
                    ((0, 0), (0, 0), (0, cin_pad - cin), (0, cout_pad - cout)))
        if cin_pad <= SMALL_CIN:                       # single-matmul path
            return w.reshape(9 * cin_pad, cout_pad).astype(jnp.bfloat16)
        return w.reshape(3, 3 * cin_pad, cout_pad).astype(jnp.bfloat16)

    def prep_v(v, cpad):
        return jnp.pad(v, (0, cpad - v.shape[0])).reshape(1, cpad).astype(jnp.float32)

    w1s = prep_w(params["w1"], Ccat, Cmid)
    w2s = prep_w(params["w2"], Cmid, Cp)
    s1, t1 = prep_v(params["scale1"], Cmid), prep_v(params["shift1"], Cmid)
    s2, t2 = prep_v(params["scale2"], Cp), prep_v(params["shift2"], Cp)

    def const_spec(arr):
        nd = arr.ndim
        # Grid-invariant operand (same block every step; no re-DMA).
        return pl.BlockSpec(arr.shape, lambda n, _nd=nd: (0,) * _nd)

    # Scoped-VMEM budget: double-buffered blocks + scratch + conv temporaries.
    footprint = (
        2 * _nbytes(x1_block, jnp.bfloat16)
        + 2 * _nbytes((1, H2c, W2c, C2), jnp.bfloat16)
        + 2 * (_nbytes(w1s.shape, jnp.bfloat16) + _nbytes(w2s.shape, jnp.bfloat16))
        + 4 * (_nbytes((1, Cmid), jnp.float32) + _nbytes((1, Cp), jnp.float32))
        + 2 * _nbytes((1, Hc, Wc, Cp), jnp.bfloat16)
        + _nbytes((Hc + 2, Wc + 2, Ccat), jnp.bfloat16)
        + _nbytes((Hc + 2, Wc + 2, Cmid), jnp.bfloat16)
        + _nbytes((Hc * Wc, Cp), jnp.float32)                      # accumulator
        + _nbytes((Hc, Wc, 9 * max(Ccat, Cmid)), jnp.bfloat16))    # tap concat
    vmem_limit = int(min(96 * 2**20, max(32 * 2**20, 4 * footprint)))

    kernel = functools.partial(_up_double_conv_kernel, ph_lo=ph_lo, pw_lo=pw_lo)
    out = pl.pallas_call(
        kernel,
        out_shape=jax.ShapeDtypeStruct((N, Hc, Wc, Cp), jnp.bfloat16),
        grid_spec=pltpu.PrefetchScalarGridSpec(
            num_scalar_prefetch=0,
            grid=(N,),
            in_specs=[
                pl.BlockSpec(x1_block, lambda n: (n, 0, 0, 0)),
                pl.BlockSpec((1, H2c, W2c, C2), lambda n: (n, 0, 0, 0)),
                const_spec(w1s), const_spec(w2s),
                const_spec(s1), const_spec(t1),
                const_spec(s2), const_spec(t2),
            ],
            out_specs=pl.BlockSpec((1, Hc, Wc, Cp), lambda n: (n, 0, 0, 0)),
            scratch_shapes=[
                pltpu.VMEM((Hc + 2, Wc + 2, Ccat), jnp.bfloat16),  # padded concat
                pltpu.VMEM((Hc + 2, Wc + 2, Cmid), jnp.bfloat16),  # padded conv1
            ],
        ),
        compiler_params=pltpu.CompilerParams(
            dimension_semantics=("parallel",),
            vmem_limit_bytes=vmem_limit),
    )(x1_in, x2n, w1s, w2s, s1, t1, s2, t2)

    # Drop the lane-padding channels; back to NCHW f32 (module output dtype).
    return jnp.transpose(out[:, :, :, :out_ch].astype(jnp.float32), (0, 3, 1, 2))


# ---------------------------------------------------------------------------
# Pure-JAX reference with the same bf16-in / f32-accumulate numerics.
# (Only exercises the non-negative-pad case used by the test shapes.)
# ---------------------------------------------------------------------------
@jax.jit
def up_forward_ref(params, x1, x2):
    N, C1, H1, W1 = x1.shape
    _, C2, H2, W2 = x2.shape
    Hc, Wc = 2 * H1, 2 * W1
    x1u = jnp.repeat(jnp.repeat(x1, 2, axis=2), 2, axis=3)
    diffX, diffY = Hc - H2, Wc - W2
    x2p = jnp.pad(x2, ((0, 0), (0, 0),
                       (diffY // 2, int(diffY / 2)),
                       (diffX // 2, int(diffX / 2))))
    x = jnp.concatenate([x2p, x1u], axis=1)                       # NCHW
    x = jnp.transpose(x, (0, 2, 3, 1)).astype(jnp.bfloat16)       # NHWC bf16

    def conv_bn_relu(xv, w_hwio, scale, shift):
        y = lax.conv_general_dilated(
            xv, w_hwio.astype(jnp.bfloat16), (1, 1), "SAME",
            dimension_numbers=("NHWC", "HWIO", "NHWC"),
            preferred_element_type=jnp.float32)
        return jnp.maximum(y * scale + shift, 0.0)

    y = conv_bn_relu(x, params["w1"], params["scale1"], params["shift1"])
    y = conv_bn_relu(y.astype(jnp.bfloat16),
                     params["w2"], params["scale2"], params["shift2"])
    y = y.astype(jnp.bfloat16).astype(jnp.float32)   # match kernel's bf16 store
    return jnp.transpose(y, (0, 3, 1, 2))


if __name__ == "__main__":
    key = jax.random.PRNGKey(0)
    k_param, k_x1, k_x2 = jax.random.split(key, 3)

    # up(in_ch=8, out_ch=8): x1 has in_ch//2 = 4 channels, x2 has 4 channels.
    in_ch, out_ch = 8, 8
    N = 2
    x1 = jax.random.normal(k_x1, (N, in_ch // 2, 8, 8), jnp.float32)    # -> 16x16
    x2 = jax.random.normal(k_x2, (N, in_ch // 2, 14, 14), jnp.float32)  # padded to 16x16

    params = make_up_params(k_param, in_ch, out_ch)

    try:
        out = jax.block_until_ready(
            up_forward(params, x1, x2, upsample_in_kernel=True))
    except Exception:
        # TODO(synk): drop this fallback once the in-kernel sublane-interleave
        # upsample reshape is confirmed on all deployed Mosaic versions.
        out = jax.block_until_ready(
            up_forward(params, x1, x2, upsample_in_kernel=False))

    assert out.shape == (N, out_ch, 16, 16)
    assert out.dtype == jnp.float32

    ref = jax.block_until_ready(up_forward_ref(params, x1, x2))
    np.testing.assert_allclose(np.asarray(out), np.asarray(ref),
                               rtol=1e-2, atol=1e-2)
    print("KERNEL_OK")
</pallas_src>

<mosaic_0001>
module attributes {stable_mosaic.version = 11 : i64} {
  func.func @_up_double_conv_kernel(%arg0: i32, %arg1: memref<1x8x8x4xbf16, #tpu.memory_space<vmem>>, %arg2: memref<1x14x14x4xbf16, #tpu.memory_space<vmem>>, %arg3: memref<72x8xbf16, #tpu.memory_space<vmem>>, %arg4: memref<72x128xbf16, #tpu.memory_space<vmem>>, %arg5: memref<1x8xf32, #tpu.memory_space<vmem>>, %arg6: memref<1x8xf32, #tpu.memory_space<vmem>>, %arg7: memref<1x128xf32, #tpu.memory_space<vmem>>, %arg8: memref<1x128xf32, #tpu.memory_space<vmem>>, %arg9: memref<1x16x16x128xbf16, #tpu.memory_space<vmem>>, %arg10: memref<18x18x8xbf16, #tpu.memory_space<vmem>>, %arg11: memref<18x18x8xbf16, #tpu.memory_space<vmem>>) attributes {dimension_semantics = [#tpu.dimension_semantics<parallel>], iteration_bounds = array<i64: 2>, scalar_prefetch = 0 : i64, scratch_operands = 2 : i64, tpu.core_type = #tpu.core_type<tc>, window_params = [{transform_indices = @transform_0, window_bounds = array<i64: 1, 8, 8, 4>}, {transform_indices = @transform_1, window_bounds = array<i64: 1, 14, 14, 4>}, {pipeline_mode = #tpu.pipeline_mode<synchronous>, transform_indices = @transform_2, window_bounds = array<i64: 72, 8>}, {pipeline_mode = #tpu.pipeline_mode<synchronous>, transform_indices = @transform_3, window_bounds = array<i64: 72, 128>}, {pipeline_mode = #tpu.pipeline_mode<synchronous>, transform_indices = @transform_4, window_bounds = array<i64: 1, 8>}, {pipeline_mode = #tpu.pipeline_mode<synchronous>, transform_indices = @transform_5, window_bounds = array<i64: 1, 8>}, {pipeline_mode = #tpu.pipeline_mode<synchronous>, transform_indices = @transform_6, window_bounds = array<i64: 1, 128>}, {pipeline_mode = #tpu.pipeline_mode<synchronous>, transform_indices = @transform_7, window_bounds = array<i64: 1, 128>}, {transform_indices = @transform_8, window_bounds = array<i64: 1, 16, 16, 128>}]} {
    %cst = arith.constant 0.000000e+00 : bf16
    %0 = vector.broadcast %cst : bf16 to vector<2x18x8xbf16>
    %c0 = arith.constant 0 : index
    %c0_0 = arith.constant 0 : index
    %c0_1 = arith.constant 0 : index
    %1 = vector.load %arg10[%c0, %c0_0, %c0_1] : memref<18x18x8xbf16, #tpu.memory_space<vmem>>, vector<2x18x8xbf16>
    tpu.vector_store %arg10[%c0, %c0_0, %c0_1], %0 {strides = array<i32>} : memref<18x18x8xbf16, #tpu.memory_space<vmem>>, vector<2x18x8xbf16>,
    %cst_2 = arith.constant 0.000000e+00 : bf16
    %2 = vector.broadcast %cst_2 : bf16 to vector<2x18x8xbf16>
    %c16 = arith.constant 16 : index
    %c0_3 = arith.constant 0 : index
    %c0_4 = arith.constant 0 : index
    %3 = vector.load %arg10[%c16, %c0_3, %c0_4] : memref<18x18x8xbf16, #tpu.memory_space<vmem>>, vector<2x18x8xbf16>
    tpu.vector_store %arg10[%c16, %c0_3, %c0_4], %2 {strides = array<i32>} : memref<18x18x8xbf16, #tpu.memory_space<vmem>>, vector<2x18x8xbf16>,
    %cst_5 = arith.constant 0.000000e+00 : bf16
    %4 = vector.broadcast %cst_5 : bf16 to vector<18x2x8xbf16>
    %c0_6 = arith.constant 0 : index
    %c0_7 = arith.constant 0 : index
    %c0_8 = arith.constant 0 : index
    %5 = vector.load %arg10[%c0_6, %c0_7, %c0_8] : memref<18x18x8xbf16, #tpu.memory_space<vmem>>, vector<18x2x8xbf16>
    tpu.vector_store %arg10[%c0_6, %c0_7, %c0_8], %4 {strides = array<i32>} : memref<18x18x8xbf16, #tpu.memory_space<vmem>>, vector<18x2x8xbf16>,
    %cst_9 = arith.constant 0.000000e+00 : bf16
    %6 = vector.broadcast %cst_9 : bf16 to vector<18x2x8xbf16>
    %c0_10 = arith.constant 0 : index
    %c16_11 = arith.constant 16 : index
    %c0_12 = arith.constant 0 : index
    %7 = vector.load %arg10[%c0_10, %c16_11, %c0_12] : memref<18x18x8xbf16, #tpu.memory_space<vmem>>, vector<18x2x8xbf16>
    tpu.vector_store %arg10[%c0_10, %c16_11, %c0_12], %6 {strides = array<i32>} : memref<18x18x8xbf16, #tpu.memory_space<vmem>>, vector<18x2x8xbf16>,
    %c0_13 = arith.constant 0 : index
    %c0_14 = arith.constant 0 : index
    %c0_15 = arith.constant 0 : index
    %c0_16 = arith.constant 0 : index
    %8 = vector.load %arg2[%c0_13, %c0_14, %c0_15, %c0_16] : memref<1x14x14x4xbf16, #tpu.memory_space<vmem>>, vector<1x14x14x4xbf16>
    %9 = vector.shape_cast %8 : vector<1x14x14x4xbf16> to vector<14x14x4xbf16>
    %c2 = arith.constant 2 : index
    %c2_17 = arith.constant 2 : index
    %c0_18 = arith.constant 0 : index
    %10 = vector.load %arg10[%c2, %c2_17, %c0_18] : memref<18x18x8xbf16, #tpu.memory_space<vmem>>, vector<14x14x4xbf16>
    tpu.vector_store %arg10[%c2, %c2_17, %c0_18], %9 {strides = array<i32>} : memref<18x18x8xbf16, #tpu.memory_space<vmem>>, vector<14x14x4xbf16>,
    %c0_19 = arith.constant 0 : index
    %c0_20 = arith.constant 0 : index
    %c0_21 = arith.constant 0 : index
    %c0_22 = arith.constant 0 : index
    %11 = vector.load %arg1[%c0_19, %c0_20, %c0_21, %c0_22] : memref<1x8x8x4xbf16, #tpu.memory_space<vmem>>, vector<1x8x8x4xbf16>
    %12 = vector.shape_cast %11 : vector<1x8x8x4xbf16> to vector<8x8x4xbf16>
    %13 = vector.shape_cast %12 : vector<8x8x4xbf16> to vector<8x8x1x4xbf16>
    %14 = vector.shape_cast %13 : vector<8x8x1x4xbf16> to vector<8x8x1x4xbf16>
    %15 = vector.broadcast %14 : vector<8x8x1x4xbf16> to vector<8x8x2x4xbf16>
    %16 = vector.shape_cast %15 : vector<8x8x2x4xbf16> to vector<8x16x4xbf16>
    %17 = vector.shape_cast %16 : vector<8x16x4xbf16> to vector<8x1x16x4xbf16>
    %18 = vector.shape_cast %17 : vector<8x1x16x4xbf16> to vector<8x1x16x4xbf16>
    %19 = vector.broadcast %18 : vector<8x1x16x4xbf16> to vector<8x2x16x4xbf16>
    %20 = vector.shape_cast %19 : vector<8x2x16x4xbf16> to vector<16x16x4xbf16>
    %c1 = arith.constant 1 : index
    %c1_23 = arith.constant 1 : index
    %c4 = arith.constant 4 : index
    %21 = vector.load %arg10[%c1, %c1_23, %c4] : memref<18x18x8xbf16, #tpu.memory_space<vmem>>, vector<16x16x4xbf16>
    tpu.vector_store %arg10[%c1, %c1_23, %c4], %20 {strides = array<i32>} : memref<18x18x8xbf16, #tpu.memory_space<vmem>>, vector<16x16x4xbf16>,
    %c0_24 = arith.constant 0 : index
    %c0_25 = arith.constant 0 : index
    %c0_26 = arith.constant 0 : index
    %22 = vector.load %arg10[%c0_24, %c0_25, %c0_26] : memref<18x18x8xbf16, #tpu.memory_space<vmem>>, vector<18x18x8xbf16>
    %23 = vector.extract_strided_slice %22 {offsets = [0, 0, 0], sizes = [16, 16, 8], strides = [1, 1, 1]} : vector<18x18x8xbf16> to vector<16x16x8xbf16>
    %24 = vector.extract_strided_slice %22 {offsets = [0, 1, 0], sizes = [16, 16, 8], strides = [1, 1, 1]} : vector<18x18x8xbf16> to vector<16x16x8xbf16>
    %25 = vector.extract_strided_slice %22 {offsets = [0, 2, 0], sizes = [16, 16, 8], strides = [1, 1, 1]} : vector<18x18x8xbf16> to vector<16x16x8xbf16>
    %26 = vector.extract_strided_slice %22 {offsets = [1, 0, 0], sizes = [16, 16, 8], strides = [1, 1, 1]} : vector<18x18x8xbf16> to vector<16x16x8xbf16>
    %27 = vector.extract_strided_slice %22 {offsets = [1, 1, 0], sizes = [16, 16, 8], strides = [1, 1, 1]} : vector<18x18x8xbf16> to vector<16x16x8xbf16>
    %28 = vector.extract_strided_slice %22 {offsets = [1, 2, 0], sizes = [16, 16, 8], strides = [1, 1, 1]} : vector<18x18x8xbf16> to vector<16x16x8xbf16>
    %29 = vector.extract_strided_slice %22 {offsets = [2, 0, 0], sizes = [16, 16, 8], strides = [1, 1, 1]} : vector<18x18x8xbf16> to vector<16x16x8xbf16>
    %30 = vector.extract_strided_slice %22 {offsets = [2, 1, 0], sizes = [16, 16, 8], strides = [1, 1, 1]} : vector<18x18x8xbf16> to vector<16x16x8xbf16>
    %31 = vector.extract_strided_slice %22 {offsets = [2, 2, 0], sizes = [16, 16, 8], strides = [1, 1, 1]} : vector<18x18x8xbf16> to vector<16x16x8xbf16>
    %32 = tpu.concatenate %23, %24, %25, %26, %27, %28, %29, %30, %31 in 2 : vector<16x16x8xbf16>, vector<16x16x8xbf16>, vector<16x16x8xbf16>, vector<16x16x8xbf16>, vector<16x16x8xbf16>, vector<16x16x8xbf16>, vector<16x16x8xbf16>, vector<16x16x8xbf16>, vector<16x16x8xbf16> -> vector<16x16x72xbf16>
    %33 = vector.shape_cast %32 : vector<16x16x72xbf16> to vector<256x72xbf16>
    %c0_27 = arith.constant 0 : index
    %c0_28 = arith.constant 0 : index
    %34 = vector.load %arg3[%c0_27, %c0_28] : memref<72x8xbf16, #tpu.memory_space<vmem>>, vector<72x8xbf16>
    %cst_29 = arith.constant dense<0.000000e+00> : vector<256x8xf32>
    %35 = tpu.matmul %33, %34, %cst_29 {dimension_numbers = #tpu.dot_dimension_numbers<[1], [0], [0], [1], [0, 0, 1, 1], [], []>} : vector<256x72xbf16>, vector<72x8xbf16>, vector<256x8xf32> -> vector<256x8xf32>
    %c0_30 = arith.constant 0 : index
    %c0_31 = arith.constant 0 : index
    %36 = vector.load %arg5[%c0_30, %c0_31] : memref<1x8xf32, #tpu.memory_space<vmem>>, vector<1x8xf32>
    %37 = vector.shape_cast %36 : vector<1x8xf32> to vector<8xf32>
    %38 = vector.shape_cast %37 : vector<8xf32> to vector<1x8xf32>
    %39 = vector.broadcast %38 : vector<1x8xf32> to vector<256x8xf32>
    %40 = arith.mulf %35, %39 : vector<256x8xf32>
    %c0_32 = arith.constant 0 : index
    %c0_33 = arith.constant 0 : index
    %41 = vector.load %arg6[%c0_32, %c0_33] : memref<1x8xf32, #tpu.memory_space<vmem>>, vector<1x8xf32>
    %42 = vector.shape_cast %41 : vector<1x8xf32> to vector<8xf32>
    %43 = vector.shape_cast %42 : vector<8xf32> to vector<1x8xf32>
    %44 = vector.broadcast %43 : vector<1x8xf32> to vector<256x8xf32>
    %45 = arith.addf %40, %44 : vector<256x8xf32>
    %cst_34 = arith.constant 0.000000e+00 : f32
    %46 = vector.broadcast %cst_34 : f32 to vector<256x8xf32>
    %47 = arith.maximumf %45, %46 : vector<256x8xf32>
    %cst_35 = arith.constant 0.000000e+00 : bf16
    %48 = vector.broadcast %cst_35 : bf16 to vector<1x18x8xbf16>
    %c0_36 = arith.constant 0 : index
    %c0_37 = arith.constant 0 : index
    %c0_38 = arith.constant 0 : index
    %49 = vector.load %arg11[%c0_36, %c0_37, %c0_38] : memref<18x18x8xbf16, #tpu.memory_space<vmem>>, vector<1x18x8xbf16>
    tpu.vector_store %arg11[%c0_36, %c0_37, %c0_38], %48 {strides = array<i32>} : memref<18x18x8xbf16, #tpu.memory_space<vmem>>, vector<1x18x8xbf16>,
    %cst_39 = arith.constant 0.000000e+00 : bf16
    %50 = vector.broadcast %cst_39 : bf16 to vector<1x18x8xbf16>
    %c17 = arith.constant 17 : index
    %c0_40 = arith.constant 0 : index
    %c0_41 = arith.constant 0 : index
    %51 = vector.load %arg11[%c17, %c0_40, %c0_41] : memref<18x18x8xbf16, #tpu.memory_space<vmem>>, vector<1x18x8xbf16>
    tpu.vector_store %arg11[%c17, %c0_40, %c0_41], %50 {strides = array<i32>} : memref<18x18x8xbf16, #tpu.memory_space<vmem>>, vector<1x18x8xbf16>,
    %cst_42 = arith.constant 0.000000e+00 : bf16
    %52 = vector.broadcast %cst_42 : bf16 to vector<18x1x8xbf16>
    %c0_43 = arith.constant 0 : index
    %c0_44 = arith.constant 0 : index
    %c0_45 = arith.constant 0 : index
    %53 = vector.load %arg11[%c0_43, %c0_44, %c0_45] : memref<18x18x8xbf16, #tpu.memory_space<vmem>>, vector<18x1x8xbf16>
    tpu.vector_store %arg11[%c0_43, %c0_44, %c0_45], %52 {strides = array<i32>} : memref<18x18x8xbf16, #tpu.memory_space<vmem>>, vector<18x1x8xbf16>,
    %cst_46 = arith.constant 0.000000e+00 : bf16
    %54 = vector.broadcast %cst_46 : bf16 to vector<18x1x8xbf16>
    %c0_47 = arith.constant 0 : index
    %c17_48 = arith.constant 17 : index
    %c0_49 = arith.constant 0 : index
    %55 = vector.load %arg11[%c0_47, %c17_48, %c0_49] : memref<18x18x8xbf16, #tpu.memory_space<vmem>>, vector<18x1x8xbf16>
    tpu.vector_store %arg11[%c0_47, %c17_48, %c0_49], %54 {strides = array<i32>} : memref<18x18x8xbf16, #tpu.memory_space<vmem>>, vector<18x1x8xbf16>,
    %56 = vector.shape_cast %47 : vector<256x8xf32> to vector<16x16x8xf32>
    %57 = arith.truncf %56 : vector<16x16x8xf32> to vector<16x16x8xbf16>
    %c1_50 = arith.constant 1 : index
    %c1_51 = arith.constant 1 : index
    %c0_52 = arith.constant 0 : index
    %58 = vector.load %arg11[%c1_50, %c1_51, %c0_52] : memref<18x18x8xbf16, #tpu.memory_space<vmem>>, vector<16x16x8xbf16>
    tpu.vector_store %arg11[%c1_50, %c1_51, %c0_52], %57 {strides = array<i32>} : memref<18x18x8xbf16, #tpu.memory_space<vmem>>, vector<16x16x8xbf16>,
    %c0_53 = arith.constant 0 : index
    %c0_54 = arith.constant 0 : index
    %c0_55 = arith.constant 0 : index
    %59 = vector.load %arg11[%c0_53, %c0_54, %c0_55] : memref<18x18x8xbf16, #tpu.memory_space<vmem>>, vector<18x18x8xbf16>
    %60 = vector.extract_strided_slice %59 {offsets = [0, 0, 0], sizes = [16, 16, 8], strides = [1, 1, 1]} : vector<18x18x8xbf16> to vector<16x16x8xbf16>
    %61 = vector.extract_strided_slice %59 {offsets = [0, 1, 0], sizes = [16, 16, 8], strides = [1, 1, 1]} : vector<18x18x8xbf16> to vector<16x16x8xbf16>
    %62 = vector.extract_strided_slice %59 {offsets = [0, 2, 0], sizes = [16, 16, 8], strides = [1, 1, 1]} : vector<18x18x8xbf16> to vector<16x16x8xbf16>
    %63 = vector.extract_strided_slice %59 {offsets = [1, 0, 0], sizes = [16, 16, 8], strides = [1, 1, 1]} : vector<18x18x8xbf16> to vector<16x16x8xbf16>
    %64 = vector.extract_strided_slice %59 {offsets = [1, 1, 0], sizes = [16, 16, 8], strides = [1, 1, 1]} : vector<18x18x8xbf16> to vector<16x16x8xbf16>
    %65 = vector.extract_strided_slice %59 {offsets = [1, 2, 0], sizes = [16, 16, 8], strides = [1, 1, 1]} : vector<18x18x8xbf16> to vector<16x16x8xbf16>
    %66 = vector.extract_strided_slice %59 {offsets = [2, 0, 0], sizes = [16, 16, 8], strides = [1, 1, 1]} : vector<18x18x8xbf16> to vector<16x16x8xbf16>
    %67 = vector.extract_strided_slice %59 {offsets = [2, 1, 0], sizes = [16, 16, 8], strides = [1, 1, 1]} : vector<18x18x8xbf16> to vector<16x16x8xbf16>
    %68 = vector.extract_strided_slice %59 {offsets = [2, 2, 0], sizes = [16, 16, 8], strides = [1, 1, 1]} : vector<18x18x8xbf16> to vector<16x16x8xbf16>
    %69 = tpu.concatenate %60, %61, %62, %63, %64, %65, %66, %67, %68 in 2 : vector<16x16x8xbf16>, vector<16x16x8xbf16>, vector<16x16x8xbf16>, vector<16x16x8xbf16>, vector<16x16x8xbf16>, vector<16x16x8xbf16>, vector<16x16x8xbf16>, vector<16x16x8xbf16>, vector<16x16x8xbf16> -> vector<16x16x72xbf16>
    %70 = vector.shape_cast %69 : vector<16x16x72xbf16> to vector<256x72xbf16>
    %c0_56 = arith.constant 0 : index
    %c0_57 = arith.constant 0 : index
    %71 = vector.load %arg4[%c0_56, %c0_57] : memref<72x128xbf16, #tpu.memory_space<vmem>>, vector<72x128xbf16>
    %cst_58 = arith.constant dense<0.000000e+00> : vector<256x128xf32>
    %72 = tpu.matmul %70, %71, %cst_58 {dimension_numbers = #tpu.dot_dimension_numbers<[1], [0], [0], [1], [0, 0, 1, 1], [], []>} : vector<256x72xbf16>, vector<72x128xbf16>, vector<256x128xf32> -> vector<256x128xf32>
    %c0_59 = arith.constant 0 : index
    %c0_60 = arith.constant 0 : index
    %73 = vector.load %arg7[%c0_59, %c0_60] : memref<1x128xf32, #tpu.memory_space<vmem>>, vector<1x128xf32>
    %74 = vector.shape_cast %73 : vector<1x128xf32> to vector<128xf32>
    %75 = vector.shape_cast %74 : vector<128xf32> to vector<1x128xf32>
    %76 = vector.broadcast %75 : vector<1x128xf32> to vector<256x128xf32>
    %77 = arith.mulf %72, %76 : vector<256x128xf32>
    %c0_61 = arith.constant 0 : index
    %c0_62 = arith.constant 0 : index
    %78 = vector.load %arg8[%c0_61, %c0_62] : memref<1x128xf32, #tpu.memory_space<vmem>>, vector<1x128xf32>
    %79 = vector.shape_cast %78 : vector<1x128xf32> to vector<128xf32>
    %80 = vector.shape_cast %79 : vector<128xf32> to vector<1x128xf32>
    %81 = vector.broadcast %80 : vector<1x128xf32> to vector<256x128xf32>
    %82 = arith.addf %77, %81 : vector<256x128xf32>
    %cst_63 = arith.constant 0.000000e+00 : f32
    %83 = vector.broadcast %cst_63 : f32 to vector<256x128xf32>
    %84 = arith.maximumf %82, %83 : vector<256x128xf32>
    %85 = vector.shape_cast %84 : vector<256x128xf32> to vector<16x16x128xf32>
    %86 = arith.truncf %85 : vector<16x16x128xf32> to vector<16x16x128xbf16>
    %c0_64 = arith.constant 0 : index
    %c0_65 = arith.constant 0 : index
    %c0_66 = arith.constant 0 : index
    %c0_67 = arith.constant 0 : index
    %87 = vector.load %arg9[%c0_64, %c0_65, %c0_66, %c0_67] : memref<1x16x16x128xbf16, #tpu.memory_space<vmem>>, vector<1x16x16x128xbf16>
    %88 = vector.shape_cast %87 : vector<1x16x16x128xbf16> to vector<16x16x128xbf16>
    %89 = vector.shape_cast %86 : vector<16x16x128xbf16> to vector<1x16x16x128xbf16>
    tpu.vector_store %arg9[%c0_64, %c0_65, %c0_66, %c0_67], %89 {strides = array<i32>} : memref<1x16x16x128xbf16, #tpu.memory_space<vmem>>, vector<1x16x16x128xbf16>,
    return
  }
  func.func @transform_0(%arg0: i32) -> (i32, i32, i32, i32) {
    %c0_i32 = arith.constant 0 : i32
    %c0_i32_0 = arith.constant 0 : i32
    %c0_i32_1 = arith.constant 0 : i32
    %c0_i32_2 = arith.constant 0 : i32
    return %arg0, %c0_i32, %c0_i32_0, %c0_i32_1 : i32, i32, i32, i32
  }
  func.func @transform_1(%arg0: i32) -> (i32, i32, i32, i32) {
    %c0_i32 = arith.constant 0 : i32
    %c0_i32_0 = arith.constant 0 : i32
    %c0_i32_1 = arith.constant 0 : i32
    %c0_i32_2 = arith.constant 0 : i32
    return %arg0, %c0_i32, %c0_i32_0, %c0_i32_1 : i32, i32, i32, i32
  }
  func.func @transform_2(%arg0: i32) -> (i32, i32) {
    %c0_i32 = arith.constant 0 : i32
    %c0_i32_0 = arith.constant 0 : i32
    %c0_i32_1 = arith.constant 0 : i32
    return %c0_i32, %c0_i32_0 : i32, i32
  }
  func.func @transform_3(%arg0: i32) -> (i32, i32) {
    %c0_i32 = arith.constant 0 : i32
    %c0_i32_0 = arith.constant 0 : i32
    %c0_i32_1 = arith.constant 0 : i32
    return %c0_i32, %c0_i32_0 : i32, i32
  }
  func.func @transform_4(%arg0: i32) -> (i32, i32) {
    %c0_i32 = arith.constant 0 : i32
    %c0_i32_0 = arith.constant 0 : i32
    %c0_i32_1 = arith.constant 0 : i32
    return %c0_i32, %c0_i32_0 : i32, i32
  }
  func.func @transform_5(%arg0: i32) -> (i32, i32) {
    %c0_i32 = arith.constant 0 : i32
    %c0_i32_0 = arith.constant 0 : i32
    %c0_i32_1 = arith.constant 0 : i32
    return %c0_i32, %c0_i32_0 : i32, i32
  }
  func.func @transform_6(%arg0: i32) -> (i32, i32) {
    %c0_i32 = arith.constant 0 : i32
    %c0_i32_0 = arith.constant 0 : i32
    %c0_i32_1 = arith.constant 0 : i32
    return %c0_i32, %c0_i32_0 : i32, i32
  }
  func.func @transform_7(%arg0: i32) -> (i32, i32) {
    %c0_i32 = arith.constant 0 : i32
    %c0_i32_0 = arith.constant 0 : i32
    %c0_i32_1 = arith.constant 0 : i32
    return %c0_i32, %c0_i32_0 : i32, i32
  }
  func.func @transform_8(%arg0: i32) -> (i32, i32, i32, i32) {
    %c0_i32 = arith.constant 0 : i32
    %c0_i32_0 = arith.constant 0 : i32
    %c0_i32_1 = arith.constant 0 : i32
    %c0_i32_2 = arith.constant 0 : i32
    return %arg0, %c0_i32, %c0_i32_0, %c0_i32_1 : i32, i32, i32, i32
  }
}

module attributes {stable_mosaic.version = 11 : i64} {
  func.func @_up_double_conv_kernel(%arg0: i32, %arg1: memref<1x16x16x4xbf16, #tpu.memory_space<vmem>>, %arg2: memref<1x14x14x4xbf16, #tpu.memory_space<vmem>>, %arg3: memref<72x8xbf16, #tpu.memory_space<vmem>>, %arg4: memref<72x128xbf16, #tpu.memory_space<vmem>>, %arg5: memref<1x8xf32, #tpu.memory_space<vmem>>, %arg6: memref<1x8xf32, #tpu.memory_space<vmem>>, %arg7: memref<1x128xf32, #tpu.memory_space<vmem>>, %arg8: memref<1x128xf32, #tpu.memory_space<vmem>>, %arg9: memref<1x16x16x128xbf16, #tpu.memory_space<vmem>>, %arg10: memref<18x18x8xbf16, #tpu.memory_space<vmem>>, %arg11: memref<18x18x8xbf16, #tpu.memory_space<vmem>>) attributes {dimension_semantics = [#tpu.dimension_semantics<parallel>], iteration_bounds = array<i64: 2>, scalar_prefetch = 0 : i64, scratch_operands = 2 : i64, tpu.core_type = #tpu.core_type<tc>, window_params = [{transform_indices = @transform_0, window_bounds = array<i64: 1, 16, 16, 4>}, {transform_indices = @transform_1, window_bounds = array<i64: 1, 14, 14, 4>}, {pipeline_mode = #tpu.pipeline_mode<synchronous>, transform_indices = @transform_2, window_bounds = array<i64: 72, 8>}, {pipeline_mode = #tpu.pipeline_mode<synchronous>, transform_indices = @transform_3, window_bounds = array<i64: 72, 128>}, {pipeline_mode = #tpu.pipeline_mode<synchronous>, transform_indices = @transform_4, window_bounds = array<i64: 1, 8>}, {pipeline_mode = #tpu.pipeline_mode<synchronous>, transform_indices = @transform_5, window_bounds = array<i64: 1, 8>}, {pipeline_mode = #tpu.pipeline_mode<synchronous>, transform_indices = @transform_6, window_bounds = array<i64: 1, 128>}, {pipeline_mode = #tpu.pipeline_mode<synchronous>, transform_indices = @transform_7, window_bounds = array<i64: 1, 128>}, {transform_indices = @transform_8, window_bounds = array<i64: 1, 16, 16, 128>}]} {
    %cst = arith.constant 0.000000e+00 : bf16
    %0 = vector.broadcast %cst : bf16 to vector<2x18x8xbf16>
    %c0 = arith.constant 0 : index
    %c0_0 = arith.constant 0 : index
    %c0_1 = arith.constant 0 : index
    %1 = vector.load %arg10[%c0, %c0_0, %c0_1] : memref<18x18x8xbf16, #tpu.memory_space<vmem>>, vector<2x18x8xbf16>
    tpu.vector_store %arg10[%c0, %c0_0, %c0_1], %0 {strides = array<i32>} : memref<18x18x8xbf16, #tpu.memory_space<vmem>>, vector<2x18x8xbf16>,
    %cst_2 = arith.constant 0.000000e+00 : bf16
    %2 = vector.broadcast %cst_2 : bf16 to vector<2x18x8xbf16>
    %c16 = arith.constant 16 : index
    %c0_3 = arith.constant 0 : index
    %c0_4 = arith.constant 0 : index
    %3 = vector.load %arg10[%c16, %c0_3, %c0_4] : memref<18x18x8xbf16, #tpu.memory_space<vmem>>, vector<2x18x8xbf16>
    tpu.vector_store %arg10[%c16, %c0_3, %c0_4], %2 {strides = array<i32>} : memref<18x18x8xbf16, #tpu.memory_space<vmem>>, vector<2x18x8xbf16>,
    %cst_5 = arith.constant 0.000000e+00 : bf16
    %4 = vector.broadcast %cst_5 : bf16 to vector<18x2x8xbf16>
    %c0_6 = arith.constant 0 : index
    %c0_7 = arith.constant 0 : index
    %c0_8 = arith.constant 0 : index
    %5 = vector.load %arg10[%c0_6, %c0_7, %c0_8] : memref<18x18x8xbf16, #tpu.memory_space<vmem>>, vector<18x2x8xbf16>
    tpu.vector_store %arg10[%c0_6, %c0_7, %c0_8], %4 {strides = array<i32>} : memref<18x18x8xbf16, #tpu.memory_space<vmem>>, vector<18x2x8xbf16>,
    %cst_9 = arith.constant 0.000000e+00 : bf16
    %6 = vector.broadcast %cst_9 : bf16 to vector<18x2x8xbf16>
    %c0_10 = arith.constant 0 : index
    %c16_11 = arith.constant 16 : index
    %c0_12 = arith.constant 0 : index
    %7 = vector.load %arg10[%c0_10, %c16_11, %c0_12] : memref<18x18x8xbf16, #tpu.memory_space<vmem>>, vector<18x2x8xbf16>
    tpu.vector_store %arg10[%c0_10, %c16_11, %c0_12], %6 {strides = array<i32>} : memref<18x18x8xbf16, #tpu.memory_space<vmem>>, vector<18x2x8xbf16>,
    %c0_13 = arith.constant 0 : index
    %c0_14 = arith.constant 0 : index
    %c0_15 = arith.constant 0 : index
    %c0_16 = arith.constant 0 : index
    %8 = vector.load %arg2[%c0_13, %c0_14, %c0_15, %c0_16] : memref<1x14x14x4xbf16, #tpu.memory_space<vmem>>, vector<1x14x14x4xbf16>
    %9 = vector.shape_cast %8 : vector<1x14x14x4xbf16> to vector<14x14x4xbf16>
    %c2 = arith.constant 2 : index
    %c2_17 = arith.constant 2 : index
    %c0_18 = arith.constant 0 : index
    %10 = vector.load %arg10[%c2, %c2_17, %c0_18] : memref<18x18x8xbf16, #tpu.memory_space<vmem>>, vector<14x14x4xbf16>
    tpu.vector_store %arg10[%c2, %c2_17, %c0_18], %9 {strides = array<i32>} : memref<18x18x8xbf16, #tpu.memory_space<vmem>>, vector<14x14x4xbf16>,
    %c0_19 = arith.constant 0 : index
    %c0_20 = arith.constant 0 : index
    %c0_21 = arith.constant 0 : index
    %c0_22 = arith.constant 0 : index
    %11 = vector.load %arg1[%c0_19, %c0_20, %c0_21, %c0_22] : memref<1x16x16x4xbf16, #tpu.memory_space<vmem>>, vector<1x16x16x4xbf16>
    %12 = vector.shape_cast %11 : vector<1x16x16x4xbf16> to vector<16x16x4xbf16>
    %c1 = arith.constant 1 : index
    %c1_23 = arith.constant 1 : index
    %c4 = arith.constant 4 : index
    %13 = vector.load %arg10[%c1, %c1_23, %c4] : memref<18x18x8xbf16, #tpu.memory_space<vmem>>, vector<16x16x4xbf16>
    tpu.vector_store %arg10[%c1, %c1_23, %c4], %12 {strides = array<i32>} : memref<18x18x8xbf16, #tpu.memory_space<vmem>>, vector<16x16x4xbf16>,
    %c0_24 = arith.constant 0 : index
    %c0_25 = arith.constant 0 : index
    %c0_26 = arith.constant 0 : index
    %14 = vector.load %arg10[%c0_24, %c0_25, %c0_26] : memref<18x18x8xbf16, #tpu.memory_space<vmem>>, vector<18x18x8xbf16>
    %15 = vector.extract_strided_slice %14 {offsets = [0, 0, 0], sizes = [16, 16, 8], strides = [1, 1, 1]} : vector<18x18x8xbf16> to vector<16x16x8xbf16>
    %16 = vector.extract_strided_slice %14 {offsets = [0, 1, 0], sizes = [16, 16, 8], strides = [1, 1, 1]} : vector<18x18x8xbf16> to vector<16x16x8xbf16>
    %17 = vector.extract_strided_slice %14 {offsets = [0, 2, 0], sizes = [16, 16, 8], strides = [1, 1, 1]} : vector<18x18x8xbf16> to vector<16x16x8xbf16>
    %18 = vector.extract_strided_slice %14 {offsets = [1, 0, 0], sizes = [16, 16, 8], strides = [1, 1, 1]} : vector<18x18x8xbf16> to vector<16x16x8xbf16>
    %19 = vector.extract_strided_slice %14 {offsets = [1, 1, 0], sizes = [16, 16, 8], strides = [1, 1, 1]} : vector<18x18x8xbf16> to vector<16x16x8xbf16>
    %20 = vector.extract_strided_slice %14 {offsets = [1, 2, 0], sizes = [16, 16, 8], strides = [1, 1, 1]} : vector<18x18x8xbf16> to vector<16x16x8xbf16>
    %21 = vector.extract_strided_slice %14 {offsets = [2, 0, 0], sizes = [16, 16, 8], strides = [1, 1, 1]} : vector<18x18x8xbf16> to vector<16x16x8xbf16>
    %22 = vector.extract_strided_slice %14 {offsets = [2, 1, 0], sizes = [16, 16, 8], strides = [1, 1, 1]} : vector<18x18x8xbf16> to vector<16x16x8xbf16>
    %23 = vector.extract_strided_slice %14 {offsets = [2, 2, 0], sizes = [16, 16, 8], strides = [1, 1, 1]} : vector<18x18x8xbf16> to vector<16x16x8xbf16>
    %24 = tpu.concatenate %15, %16, %17, %18, %19, %20, %21, %22, %23 in 2 : vector<16x16x8xbf16>, vector<16x16x8xbf16>, vector<16x16x8xbf16>, vector<16x16x8xbf16>, vector<16x16x8xbf16>, vector<16x16x8xbf16>, vector<16x16x8xbf16>, vector<16x16x8xbf16>, vector<16x16x8xbf16> -> vector<16x16x72xbf16>
    %25 = vector.shape_cast %24 : vector<16x16x72xbf16> to vector<256x72xbf16>
    %c0_27 = arith.constant 0 : index
    %c0_28 = arith.constant 0 : index
    %26 = vector.load %arg3[%c0_27, %c0_28] : memref<72x8xbf16, #tpu.memory_space<vmem>>, vector<72x8xbf16>
    %cst_29 = arith.constant dense<0.000000e+00> : vector<256x8xf32>
    %27 = tpu.matmul %25, %26, %cst_29 {dimension_numbers = #tpu.dot_dimension_numbers<[1], [0], [0], [1], [0, 0, 1, 1], [], []>} : vector<256x72xbf16>, vector<72x8xbf16>, vector<256x8xf32> -> vector<256x8xf32>
    %c0_30 = arith.constant 0 : index
    %c0_31 = arith.constant 0 : index
    %28 = vector.load %arg5[%c0_30, %c0_31] : memref<1x8xf32, #tpu.memory_space<vmem>>, vector<1x8xf32>
    %29 = vector.shape_cast %28 : vector<1x8xf32> to vector<8xf32>
    %30 = vector.shape_cast %29 : vector<8xf32> to vector<1x8xf32>
    %31 = vector.broadcast %30 : vector<1x8xf32> to vector<256x8xf32>
    %32 = arith.mulf %27, %31 : vector<256x8xf32>
    %c0_32 = arith.constant 0 : index
    %c0_33 = arith.constant 0 : index
    %33 = vector.load %arg6[%c0_32, %c0_33] : memref<1x8xf32, #tpu.memory_space<vmem>>, vector<1x8xf32>
    %34 = vector.shape_cast %33 : vector<1x8xf32> to vector<8xf32>
    %35 = vector.shape_cast %34 : vector<8xf32> to vector<1x8xf32>
    %36 = vector.broadcast %35 : vector<1x8xf32> to vector<256x8xf32>
    %37 = arith.addf %32, %36 : vector<256x8xf32>
    %cst_34 = arith.constant 0.000000e+00 : f32
    %38 = vector.broadcast %cst_34 : f32 to vector<256x8xf32>
    %39 = arith.maximumf %37, %38 : vector<256x8xf32>
    %cst_35 = arith.constant 0.000000e+00 : bf16
    %40 = vector.broadcast %cst_35 : bf16 to vector<1x18x8xbf16>
    %c0_36 = arith.constant 0 : index
    %c0_37 = arith.constant 0 : index
    %c0_38 = arith.constant 0 : index
    %41 = vector.load %arg11[%c0_36, %c0_37, %c0_38] : memref<18x18x8xbf16, #tpu.memory_space<vmem>>, vector<1x18x8xbf16>
    tpu.vector_store %arg11[%c0_36, %c0_37, %c0_38], %40 {strides = array<i32>} : memref<18x18x8xbf16, #tpu.memory_space<vmem>>, vector<1x18x8xbf16>,
    %cst_39 = arith.constant 0.000000e+00 : bf16
    %42 = vector.broadcast %cst_39 : bf16 to vector<1x18x8xbf16>
    %c17 = arith.constant 17 : index
    %c0_40 = arith.constant 0 : index
    %c0_41 = arith.constant 0 : index
    %43 = vector.load %arg11[%c17, %c0_40, %c0_41] : memref<18x18x8xbf16, #tpu.memory_space<vmem>>, vector<1x18x8xbf16>
    tpu.vector_store %arg11[%c17, %c0_40, %c0_41], %42 {strides = array<i32>} : memref<18x18x8xbf16, #tpu.memory_space<vmem>>, vector<1x18x8xbf16>,
    %cst_42 = arith.constant 0.000000e+00 : bf16
    %44 = vector.broadcast %cst_42 : bf16 to vector<18x1x8xbf16>
    %c0_43 = arith.constant 0 : index
    %c0_44 = arith.constant 0 : index
    %c0_45 = arith.constant 0 : index
    %45 = vector.load %arg11[%c0_43, %c0_44, %c0_45] : memref<18x18x8xbf16, #tpu.memory_space<vmem>>, vector<18x1x8xbf16>
    tpu.vector_store %arg11[%c0_43, %c0_44, %c0_45], %44 {strides = array<i32>} : memref<18x18x8xbf16, #tpu.memory_space<vmem>>, vector<18x1x8xbf16>,
    %cst_46 = arith.constant 0.000000e+00 : bf16
    %46 = vector.broadcast %cst_46 : bf16 to vector<18x1x8xbf16>
    %c0_47 = arith.constant 0 : index
    %c17_48 = arith.constant 17 : index
    %c0_49 = arith.constant 0 : index
    %47 = vector.load %arg11[%c0_47, %c17_48, %c0_49] : memref<18x18x8xbf16, #tpu.memory_space<vmem>>, vector<18x1x8xbf16>
    tpu.vector_store %arg11[%c0_47, %c17_48, %c0_49], %46 {strides = array<i32>} : memref<18x18x8xbf16, #tpu.memory_space<vmem>>, vector<18x1x8xbf16>,
    %48 = vector.shape_cast %39 : vector<256x8xf32> to vector<16x16x8xf32>
    %49 = arith.truncf %48 : vector<16x16x8xf32> to vector<16x16x8xbf16>
    %c1_50 = arith.constant 1 : index
    %c1_51 = arith.constant 1 : index
    %c0_52 = arith.constant 0 : index
    %50 = vector.load %arg11[%c1_50, %c1_51, %c0_52] : memref<18x18x8xbf16, #tpu.memory_space<vmem>>, vector<16x16x8xbf16>
    tpu.vector_store %arg11[%c1_50, %c1_51, %c0_52], %49 {strides = array<i32>} : memref<18x18x8xbf16, #tpu.memory_space<vmem>>, vector<16x16x8xbf16>,
    %c0_53 = arith.constant 0 : index
    %c0_54 = arith.constant 0 : index
    %c0_55 = arith.constant 0 : index
    %51 = vector.load %arg11[%c0_53, %c0_54, %c0_55] : memref<18x18x8xbf16, #tpu.memory_space<vmem>>, vector<18x18x8xbf16>
    %52 = vector.extract_strided_slice %51 {offsets = [0, 0, 0], sizes = [16, 16, 8], strides = [1, 1, 1]} : vector<18x18x8xbf16> to vector<16x16x8xbf16>
    %53 = vector.extract_strided_slice %51 {offsets = [0, 1, 0], sizes = [16, 16, 8], strides = [1, 1, 1]} : vector<18x18x8xbf16> to vector<16x16x8xbf16>
    %54 = vector.extract_strided_slice %51 {offsets = [0, 2, 0], sizes = [16, 16, 8], strides = [1, 1, 1]} : vector<18x18x8xbf16> to vector<16x16x8xbf16>
    %55 = vector.extract_strided_slice %51 {offsets = [1, 0, 0], sizes = [16, 16, 8], strides = [1, 1, 1]} : vector<18x18x8xbf16> to vector<16x16x8xbf16>
    %56 = vector.extract_strided_slice %51 {offsets = [1, 1, 0], sizes = [16, 16, 8], strides = [1, 1, 1]} : vector<18x18x8xbf16> to vector<16x16x8xbf16>
    %57 = vector.extract_strided_slice %51 {offsets = [1, 2, 0], sizes = [16, 16, 8], strides = [1, 1, 1]} : vector<18x18x8xbf16> to vector<16x16x8xbf16>
    %58 = vector.extract_strided_slice %51 {offsets = [2, 0, 0], sizes = [16, 16, 8], strides = [1, 1, 1]} : vector<18x18x8xbf16> to vector<16x16x8xbf16>
    %59 = vector.extract_strided_slice %51 {offsets = [2, 1, 0], sizes = [16, 16, 8], strides = [1, 1, 1]} : vector<18x18x8xbf16> to vector<16x16x8xbf16>
    %60 = vector.extract_strided_slice %51 {offsets = [2, 2, 0], sizes = [16, 16, 8], strides = [1, 1, 1]} : vector<18x18x8xbf16> to vector<16x16x8xbf16>
    %61 = tpu.concatenate %52, %53, %54, %55, %56, %57, %58, %59, %60 in 2 : vector<16x16x8xbf16>, vector<16x16x8xbf16>, vector<16x16x8xbf16>, vector<16x16x8xbf16>, vector<16x16x8xbf16>, vector<16x16x8xbf16>, vector<16x16x8xbf16>, vector<16x16x8xbf16>, vector<16x16x8xbf16> -> vector<16x16x72xbf16>
    %62 = vector.shape_cast %61 : vector<16x16x72xbf16> to vector<256x72xbf16>
    %c0_56 = arith.constant 0 : index
    %c0_57 = arith.constant 0 : index
    %63 = vector.load %arg4[%c0_56, %c0_57] : memref<72x128xbf16, #tpu.memory_space<vmem>>, vector<72x128xbf16>
    %cst_58 = arith.constant dense<0.000000e+00> : vector<256x128xf32>
    %64 = tpu.matmul %62, %63, %cst_58 {dimension_numbers = #tpu.dot_dimension_numbers<[1], [0], [0], [1], [0, 0, 1, 1], [], []>} : vector<256x72xbf16>, vector<72x128xbf16>, vector<256x128xf32> -> vector<256x128xf32>
    %c0_59 = arith.constant 0 : index
    %c0_60 = arith.constant 0 : index
    %65 = vector.load %arg7[%c0_59, %c0_60] : memref<1x128xf32, #tpu.memory_space<vmem>>, vector<1x128xf32>
    %66 = vector.shape_cast %65 : vector<1x128xf32> to vector<128xf32>
    %67 = vector.shape_cast %66 : vector<128xf32> to vector<1x128xf32>
    %68 = vector.broadcast %67 : vector<1x128xf32> to vector<256x128xf32>
    %69 = arith.mulf %64, %68 : vector<256x128xf32>
    %c0_61 = arith.constant 0 : index
    %c0_62 = arith.constant 0 : index
    %70 = vector.load %arg8[%c0_61, %c0_62] : memref<1x128xf32, #tpu.memory_space<vmem>>, vector<1x128xf32>
    %71 = vector.shape_cast %70 : vector<1x128xf32> to vector<128xf32>
    %72 = vector.shape_cast %71 : vector<128xf32> to vector<1x128xf32>
    %73 = vector.broadcast %72 : vector<1x128xf32> to vector<256x128xf32>
    %74 = arith.addf %69, %73 : vector<256x128xf32>
    %cst_63 = arith.constant 0.000000e+00 : f32
    %75 = vector.broadcast %cst_63 : f32 to vector<256x128xf32>
    %76 = arith.maximumf %74, %75 : vector<256x128xf32>
    %77 = vector.shape_cast %76 : vector<256x128xf32> to vector<16x16x128xf32>
    %78 = arith.truncf %77 : vector<16x16x128xf32> to vector<16x16x128xbf16>
    %c0_64 = arith.constant 0 : index
    %c0_65 = arith.constant 0 : index
    %c0_66 = arith.constant 0 : index
    %c0_67 = arith.constant 0 : index
    %79 = vector.load %arg9[%c0_64, %c0_65, %c0_66, %c0_67] : memref<1x16x16x128xbf16, #tpu.memory_space<vmem>>, vector<1x16x16x128xbf16>
    %80 = vector.shape_cast %79 : vector<1x16x16x128xbf16> to vector<16x16x128xbf16>
    %81 = vector.shape_cast %78 : vector<16x16x128xbf16> to vector<1x16x16x128xbf16>
    tpu.vector_store %arg9[%c0_64, %c0_65, %c0_66, %c0_67], %81 {strides = array<i32>} : memref<1x16x16x128xbf16, #tpu.memory_space<vmem>>, vector<1x16x16x128xbf16>,
    return
  }
  func.func @transform_0(%arg0: i32) -> (i32, i32, i32, i32) {
    %c0_i32 = arith.constant 0 : i32
    %c0_i32_0 = arith.constant 0 : i32
    %c0_i32_1 = arith.constant 0 : i32
    %c0_i32_2 = arith.constant 0 : i32
    return %arg0, %c0_i32, %c0_i32_0, %c0_i32_1 : i32, i32, i32, i32
  }
  func.func @transform_1(%arg0: i32) -> (i32, i32, i32, i32) {
    %c0_i32 = arith.constant 0 : i32
    %c0_i32_0 = arith.constant 0 : i32
    %c0_i32_1 = arith.constant 0 : i32
    %c0_i32_2 = arith.constant 0 : i32
    return %arg0, %c0_i32, %c0_i32_0, %c0_i32_1 : i32, i32, i32, i32
  }
  func.func @transform_2(%arg0: i32) -> (i32, i32) {
    %c0_i32 = arith.constant 0 : i32
    %c0_i32_0 = arith.constant 0 : i32
    %c0_i32_1 = arith.constant 0 : i32
    return %c0_i32, %c0_i32_0 : i32, i32
  }
  func.func @transform_3(%arg0: i32) -> (i32, i32) {
    %c0_i32 = arith.constant 0 : i32
    %c0_i32_0 = arith.constant 0 : i32
    %c0_i32_1 = arith.constant 0 : i32
    return %c0_i32, %c0_i32_0 : i32, i32
  }
  func.func @transform_4(%arg0: i32) -> (i32, i32) {
    %c0_i32 = arith.constant 0 : i32
    %c0_i32_0 = arith.constant 0 : i32
    %c0_i32_1 = arith.constant 0 : i32
    return %c0_i32, %c0_i32_0 : i32, i32
  }
  func.func @transform_5(%arg0: i32) -> (i32, i32) {
    %c0_i32 = arith.constant 0 : i32
    %c0_i32_0 = arith.constant 0 : i32
    %c0_i32_1 = arith.constant 0 : i32
    return %c0_i32, %c0_i32_0 : i32, i32
  }
  func.func @transform_6(%arg0: i32) -> (i32, i32) {
    %c0_i32 = arith.constant 0 : i32
    %c0_i32_0 = arith.constant 0 : i32
    %c0_i32_1 = arith.constant 0 : i32
    return %c0_i32, %c0_i32_0 : i32, i32
  }
  func.func @transform_7(%arg0: i32) -> (i32, i32) {
    %c0_i32 = arith.constant 0 : i32
    %c0_i32_0 = arith.constant 0 : i32
    %c0_i32_1 = arith.constant 0 : i32
    return %c0_i32, %c0_i32_0 : i32, i32
  }
  func.func @transform_8(%arg0: i32) -> (i32, i32, i32, i32) {
    %c0_i32 = arith.constant 0 : i32
    %c0_i32_0 = arith.constant 0 : i32
    %c0_i32_1 = arith.constant 0 : i32
    %c0_i32_2 = arith.constant 0 : i32
    return %arg0, %c0_i32, %c0_i32_0, %c0_i32_1 : i32, i32, i32, i32
  }
}

</mosaic_0001>

<llo_original>
// kernel: up_forward.1
$region0: #{up_forward.1}
  #allocation0 [shape = 'u32[]', space=smem, size = 0x4, offset = 0x4, fixed_abs, tag = 'smem constant byte address 0x4 - core index']
  #allocation1 [shape = 'u32[72,128]{1,0:T(1,128)}', space=vmem, size = 0x9000, scoped, tag = 'internal scratch']
  #allocation2 [shape = 'bf16[18,18,8]{2,1,0:T(8,128)(2,1)}', space=vmem, size = 0x1b000, scoped, tag = 'scratch operand']
  #allocation3 [shape = 'bf16[18,18,8]{2,1,0:T(8,128)(2,1)}', space=vmem, size = 0x1b000, scoped, tag = 'scratch operand']
  %s0 = inlined_call_operand.vmem [shape: bf16[2,8,8,4], index: 0, kind: input, shape index: {}]
  %s1 = inlined_call_operand.vmem [shape: bf16[2,14,14,4], index: 1, kind: input, shape index: {}]
  %s2 = inlined_call_operand.vmem [shape: bf16[72,8], index: 2, kind: input, shape index: {}]
  %s3 = inlined_call_operand.vmem [shape: bf16[72,128], index: 3, kind: input, shape index: {}]
  %s4 = inlined_call_operand.vmem [shape: f32[1,8], index: 4, kind: input, shape index: {}]
  %s5 = inlined_call_operand.vmem [shape: f32[1,8], index: 5, kind: input, shape index: {}]
  %s6 = inlined_call_operand.vmem [shape: f32[1,128], index: 6, kind: input, shape index: {}]
  %s7 = inlined_call_operand.vmem [shape: f32[1,128], index: 7, kind: input, shape index: {}]
  %s8 = inlined_call_operand.vmem [shape: bf16[2,16,16,128], index: 8, kind: output, shape index: {}]
  %s9 = sld [smem:[#allocation0]]
  $region65: #{up_forward.1} parent=0
    _
  %s11 = ssub.s32 1, %s9
  %s12 = scalar_select 0, %s11, %s9
  loop: start=0, step=1, limit=4
  $region2: #{up_forward.1} parent=0 // loop_pre_header
    _
  $region3: #{up_forward.1} parent=0 // loop_header
    %s14 = sphi 0, %s18
    %p15 = scmp.ge.s32.totalorder %s14, 4
    %s24 = sphi 0, %s26
    %s27 = sphi 0, %s24
    %s28 = sphi 0, %s27
    %s44 = sphi 0, %s28
    %s50 = sphi 0, %s52
    %s53 = sphi 0, %s50
    %s54 = sphi 0, %s53
    %s70 = sphi 0, %s54
    %s74 = sphi 0, %s74
    %s76 = sphi 0, %s74
    %s77 = sphi 0, %s76
    %s91 = sphi 0, %s77
    %s95 = sphi 0, %s95
    %s97 = sphi 0, %s95
    %s98 = sphi 0, %s97
    %s112 = sphi 0, %s98
    %s116 = sphi 0, %s116
    %s118 = sphi 0, %s116
    %s119 = sphi 0, %s118
    %s133 = sphi 0, %s119
    %s137 = sphi 0, %s137
    %s139 = sphi 0, %s137
    %s140 = sphi 0, %s139
    %s154 = sphi 0, %s140
    %s158 = sphi 0, %s158
    %s160 = sphi 0, %s158
    %s161 = sphi 0, %s160
    %s175 = sphi 0, %s161
    %s179 = sphi 0, %s179
    %s181 = sphi 0, %s179
    %s182 = sphi 0, %s181
    %s196 = sphi 0, %s182
    %s202 = sphi 0, %s204
    %s205 = sphi 0, %s202
    %s206 = sphi 0, %s205
    %s222 = sphi 0, %s206
  $region4: #{up_forward.1} parent=0 // loop_header_branch
    %17 = sbr.rel (%p15) target = $region8
  $region5: #{up_forward.1} parent=0 // loop_body
    %s19 = ssub.s32 %s14, 1
    %s20 = ssub.s32 %s14, 2
    %s21 = sadd.s32 %s14, 1
    %s22 = ssub.s32 %s14, %s21
    %p23 = scmp.eq.s32.totalorder %s22, 0
    %s25 = sadd.s32 %s24, 1
    %s26 = scalar_select %p23, %s24, %s25
    %p29 = pneg %p23
    %p30 = scmp.eq.s32.totalorder %s14, 1
    %p31 = por %p29, %p30
    %p32 = scmp.ne.s32.totalorder %s24, %s27
    %p33 = scmp.eq.s32.totalorder %s14, 0
    %p34 = por %p32, %p33
    %p35 = scmp.ne.s32.totalorder %s24, %s27
    %p36 = scmp.eq.s32.totalorder %s19, 1
    %p37 = por %p35, %p36
    %p38 = scmp.ne.s32.totalorder %s27, %s28
    %p39 = scmp.eq.s32.totalorder %s19, 0
    %p40 = por %p38, %p39
    %p41 = scmp.ne.s32.totalorder %s27, %s28
    %p42 = scmp.eq.s32.totalorder %s20, 1
    %p43 = por %p41, %p42
    %p45 = scmp.ne.s32.totalorder %s28, %s44
    %p46 = scmp.eq.s32.totalorder %s20, 0
    %p47 = por %p45, %p46
    %s48 = ssub.s32 %s14, %s21
    %p49 = scmp.eq.s32.totalorder %s48, 0
    %s51 = sadd.s32 %s50, 1
    %s52 = scalar_select %p49, %s50, %s51
    %p55 = pneg %p49
    %p56 = scmp.eq.s32.totalorder %s14, 1
    %p57 = por %p55, %p56
    %p58 = scmp.ne.s32.totalorder %s50, %s53
    %p59 = scmp.eq.s32.totalorder %s14, 0
    %p60 = por %p58, %p59
    %p61 = scmp.ne.s32.totalorder %s50, %s53
    %p62 = scmp.eq.s32.totalorder %s19, 1
    %p63 = por %p61, %p62
    %p64 = scmp.ne.s32.totalorder %s53, %s54
    %p65 = scmp.eq.s32.totalorder %s19, 0
    %p66 = por %p64, %p65
    %p67 = scmp.ne.s32.totalorder %s53, %s54
    %p68 = scmp.eq.s32.totalorder %s20, 1
    %p69 = por %p67, %p68
    %p71 = scmp.ne.s32.totalorder %s54, %s70
    %p72 = scmp.eq.s32.totalorder %s20, 0
    %p73 = por %p71, %p72
    %s75 = sadd.s32 %s74, 1
    %p78 = scmp.eq.s32.totalorder %s14, 1
    %p79 = scmp.ne.s32.totalorder %s74, %s76
    %p80 = scmp.eq.s32.totalorder %s14, 0
    %p81 = por %p79, %p80
    %p82 = scmp.ne.s32.totalorder %s74, %s76
    %p83 = scmp.eq.s32.totalorder %s19, 1
    %p84 = por %p82, %p83
    %p85 = scmp.ne.s32.totalorder %s76, %s77
    %p86 = scmp.eq.s32.totalorder %s19, 0
    %p87 = por %p85, %p86
    %p88 = scmp.ne.s32.totalorder %s76, %s77
    %p89 = scmp.eq.s32.totalorder %s20, 1
    %p90 = por %p88, %p89
    %p92 = scmp.ne.s32.totalorder %s77, %s91
    %p93 = scmp.eq.s32.totalorder %s20, 0
    %p94 = por %p92, %p93
    %s96 = sadd.s32 %s95, 1
    %p99 = scmp.eq.s32.totalorder %s14, 1
    %p100 = scmp.ne.s32.totalorder %s95, %s97
    %p101 = scmp.eq.s32.totalorder %s14, 0
    %p102 = por %p100, %p101
    %p103 = scmp.ne.s32.totalorder %s95, %s97
    %p104 = scmp.eq.s32.totalorder %s19, 1
    %p105 = por %p103, %p104
    %p106 = scmp.ne.s32.totalorder %s97, %s98
    %p107 = scmp.eq.s32.totalorder %s19, 0
    %p108 = por %p106, %p107
    %p109 = scmp.ne.s32.totalorder %s97, %s98
    %p110 = scmp.eq.s32.totalorder %s20, 1
    %p111 = por %p109, %p110
    %p113 = scmp.ne.s32.totalorder %s98, %s112
    %p114 = scmp.eq.s32.totalorder %s20, 0
    %p115 = por %p113, %p114
    %s117 = sadd.s32 %s116, 1
    %p120 = scmp.eq.s32.totalorder %s14, 1
    %p121 = scmp.ne.s32.totalorder %s116, %s118
    %p122 = scmp.eq.s32.totalorder %s14, 0
    %p123 = por %p121, %p122
    %p124 = scmp.ne.s32.totalorder %s116, %s118
    %p125 = scmp.eq.s32.totalorder %s19, 1
    %p126 = por %p124, %p125
    %p127 = scmp.ne.s32.totalorder %s118, %s119
    %p128 = scmp.eq.s32.totalorder %s19, 0
    %p129 = por %p127, %p128
    %p130 = scmp.ne.s32.totalorder %s118, %s119
    %p131 = scmp.eq.s32.totalorder %s20, 1
    %p132 = por %p130, %p131
    %p134 = scmp.ne.s32.totalorder %s119, %s133
    %p135 = scmp.eq.s32.totalorder %s20, 0
    %p136 = por %p134, %p135
    %s138 = sadd.s32 %s137, 1
    %p141 = scmp.eq.s32.totalorder %s14, 1
    %p142 = scmp.ne.s32.totalorder %s137, %s139
    %p143 = scmp.eq.s32.totalorder %s14, 0
    %p144 = por %p142, %p143
    %p145 = scmp.ne.s32.totalorder %s137, %s139
    %p146 = scmp.eq.s32.totalorder %s19, 1
    %p147 = por %p145, %p146
    %p148 = scmp.ne.s32.totalorder %s139, %s140
    %p149 = scmp.eq.s32.totalorder %s19, 0
    %p150 = por %p148, %p149
    %p151 = scmp.ne.s32.totalorder %s139, %s140
    %p152 = scmp.eq.s32.totalorder %s20, 1
    %p153 = por %p151, %p152
    %p155 = scmp.ne.s32.totalorder %s140, %s154
    %p156 = scmp.eq.s32.totalorder %s20, 0
    %p157 = por %p155, %p156
    %s159 = sadd.s32 %s158, 1
    %p162 = scmp.eq.s32.totalorder %s14, 1
    %p163 = scmp.ne.s32.totalorder %s158, %s160
    %p164 = scmp.eq.s32.totalorder %s14, 0
    %p165 = por %p163, %p164
    %p166 = scmp.ne.s32.totalorder %s158, %s160
    %p167 = scmp.eq.s32.totalorder %s19, 1
    %p168 = por %p166, %p167
    %p169 = scmp.ne.s32.totalorder %s160, %s161
    %p170 = scmp.eq.s32.totalorder %s19, 0
    %p171 = por %p169, %p170
    %p172 = scmp.ne.s32.totalorder %s160, %s161
    %p173 = scmp.eq.s32.totalorder %s20, 1
    %p174 = por %p172, %p173
    %p176 = scmp.ne.s32.totalorder %s161, %s175
    %p177 = scmp.eq.s32.totalorder %s20, 0
    %p178 = por %p176, %p177
    %s180 = sadd.s32 %s179, 1
    %p183 = scmp.eq.s32.totalorder %s14, 1
    %p184 = scmp.ne.s32.totalorder %s179, %s181
    %p185 = scmp.eq.s32.totalorder %s14, 0
    %p186 = por %p184, %p185
    %p187 = scmp.ne.s32.totalorder %s179, %s181
    %p188 = scmp.eq.s32.totalorder %s19, 1
    %p189 = por %p187, %p188
    %p190 = scmp.ne.s32.totalorder %s181, %s182
    %p191 = scmp.eq.s32.totalorder %s19, 0
    %p192 = por %p190, %p191
    %p193 = scmp.ne.s32.totalorder %s181, %s182
    %p194 = scmp.eq.s32.totalorder %s20, 1
    %p195 = por %p193, %p194
    %p197 = scmp.ne.s32.totalorder %s182, %s196
    %p198 = scmp.eq.s32.totalorder %s20, 0
    %p199 = por %p197, %p198
    %s200 = ssub.s32 %s14, %s21
    %p201 = scmp.eq.s32.totalorder %s200, 0
    %s203 = sadd.s32 %s202, 1
    %s204 = scalar_select %p201, %s202, %s203
    %p207 = pneg %p201
    %p208 = scmp.eq.s32.totalorder %s14, 1
    %p209 = por %p207, %p208
    %p210 = scmp.ne.s32.totalorder %s202, %s205
    %p211 = scmp.eq.s32.totalorder %s14, 0
    %p212 = por %p210, %p211
    %p213 = scmp.ne.s32.totalorder %s202, %s205
    %p214 = scmp.eq.s32.totalorder %s19, 1
    %p215 = por %p213, %p214
    %p216 = scmp.ne.s32.totalorder %s205, %s206
    %p217 = scmp.eq.s32.totalorder %s19, 0
    %p218 = por %p216, %p217
    %p219 = scmp.ne.s32.totalorder %s205, %s206
    %p220 = scmp.eq.s32.totalorder %s20, 1
    %p221 = por %p219, %p220
    %p223 = scmp.ne.s32.totalorder %s206, %s222
    %p224 = scmp.eq.s32.totalorder %s20, 0
    %p225 = por %p223, %p224
    %p226 = scmp.le.s32.totalorder 1, %s14
    %p227 = scmp.lt.s32.totalorder %s14, 3
    %p228 = pnand %p226, %p227
    %p229 = pneg %p228
    // Predicated region
    $region9: #{up_forward.1} parent=5 // pred_check
      _
    $region10: #{up_forward.1} parent=5 // pred_check_branch
      %231 = sbr.rel (%p228) target = $region12
    $region11: #{up_forward.1} parent=5 // pred_region
      %s232 = ssub.s32 %s14, 1
      // Predicated region
      $region13: #{up_forward.1} parent=11 // pred_check
        %p233 = pneg %p87
      $region14: #{up_forward.1} parent=11 // pred_check_branch
        %235 = sbr.rel (%p233) target = $region16
      $region15: #{up_forward.1} parent=11 // pred_region
        _
      $region16: #{up_forward.1} parent=11 // pred_fallthru
        _
      // Predicated region
      $region17: #{up_forward.1} parent=11 // pred_check
        %p236 = pneg %p108
      $region18: #{up_forward.1} parent=11 // pred_check_branch
        %238 = sbr.rel (%p236) target = $region20
      $region19: #{up_forward.1} parent=11 // pred_region
        _
      $region20: #{up_forward.1} parent=11 // pred_fallthru
        _
      // Predicated region
      $region21: #{up_forward.1} parent=11 // pred_check
        %p239 = pneg %p129
      $region22: #{up_forward.1} parent=11 // pred_check_branch
        %241 = sbr.rel (%p239) target = $region24
      $region23: #{up_forward.1} parent=11 // pred_region
        _
      $region24: #{up_forward.1} parent=11 // pred_fallthru
        _
      // Predicated region
      $region25: #{up_forward.1} parent=11 // pred_check
        %p242 = pneg %p150
      $region26: #{up_forward.1} parent=11 // pred_check_branch
        %244 = sbr.rel (%p242) target = $region28
      $region27: #{up_forward.1} parent=11 // pred_region
        _
      $region28: #{up_forward.1} parent=11 // pred_fallthru
        _
      // Predicated region
      $region29: #{up_forward.1} parent=11 // pred_check
        %p245 = pneg %p171
      $region30: #{up_forward.1} parent=11 // pred_check_branch
        %247 = sbr.rel (%p245) target = $region32
      $region31: #{up_forward.1} parent=11 // pred_region
        _
      $region32: #{up_forward.1} parent=11 // pred_fallthru
        _
      // Predicated region
      $region33: #{up_forward.1} parent=11 // pred_check
        %p248 = pneg %p192
      $region34: #{up_forward.1} parent=11 // pred_check_branch
        %250 = sbr.rel (%p248) target = $region36
      $region35: #{up_forward.1} parent=11 // pred_region
        _
      $region36: #{up_forward.1} parent=11 // pred_fallthru
        _
    $region12: #{up_forward.1} parent=5 // pred_fallthru
      _
    %p251 = scmp.lt.s32.totalorder %s14, 2
    // Predicated region
    $region37: #{up_forward.1} parent=5 // pred_check
      %p252 = pneg %p251
    $region38: #{up_forward.1} parent=5 // pred_check_branch
      %254 = sbr.rel (%p252) target = $region40
    $region39: #{up_forward.1} parent=5 // pred_region
      // Predicated region
      $region41: #{up_forward.1} parent=39 // pred_check
        %p255 = pneg %p34
      $region42: #{up_forward.1} parent=39 // pred_check_branch
        %257 = sbr.rel (%p255) target = $region44
      $region43: #{up_forward.1} parent=39 // pred_region
        %p258 = scmp.lt.s32.totalorder %s14, 1
        %s259 = scalar_select %p258, %s14, 1
        %s260 = smul.addr %s259, 8
        %s261 = smul.addr %s260, 4
        %s262 = scalar_lea.vmem %s0, %s261
      $region44: #{up_forward.1} parent=39 // pred_fallthru
        _
      // Predicated region
      $region45: #{up_forward.1} parent=39 // pred_check
        %p263 = pneg %p60
      $region46: #{up_forward.1} parent=39 // pred_check_branch
        %265 = sbr.rel (%p263) target = $region48
      $region47: #{up_forward.1} parent=39 // pred_region
        %p266 = scmp.lt.s32.totalorder %s14, 1
        %s267 = scalar_select %p266, %s14, 1
        %s268 = smul.addr %s267, 28
        %s269 = smul.addr %s268, 4
        %s270 = scalar_lea.vmem %s1, %s269
      $region48: #{up_forward.1} parent=39 // pred_fallthru
        _
    $region40: #{up_forward.1} parent=5 // pred_fallthru
      _
    %p271 = scmp.le.s32.totalorder 1, %s14
    %p272 = scmp.lt.s32.totalorder %s14, 3
    %p273 = pnand %p271, %p272
    %p274 = pneg %p273
    // Predicated region
    $region49: #{up_forward.1} parent=5 // pred_check
      _
    $region50: #{up_forward.1} parent=5 // pred_check_branch
      %276 = sbr.rel (%p273) target = $region52
    $region51: #{up_forward.1} parent=5 // pred_region
      %s277 = ssub.s32 %s14, 1
      %p278 = scmp.lt.s32.totalorder %s19, 1
      %s279 = scalar_select %p278, %s19, 1
      %s280 = smul.addr %s279, 8
      %s281 = smul.addr %s280, 4
      %s282 = scalar_lea.vmem %s0, %s281
      %p283 = pneg %p40
      %p284 = pneg %p37
      %p285 = scmp.lt.s32.totalorder %s19, 1
      %s286 = scalar_select %p285, %s19, 1
      %s287 = smul.addr %s286, 28
      %s288 = smul.addr %s287, 4
      %s289 = scalar_lea.vmem %s1, %s288
      %p290 = pneg %p66
      %p291 = pneg %p63
      %p292 = pneg %p87
      %p293 = pneg %p84
      %p294 = pneg %p108
      %p295 = pneg %p105
      %p296 = pneg %p129
      %p297 = pneg %p126
      %p298 = pneg %p150
      %p299 = pneg %p147
      %p300 = pneg %p171
      %p301 = pneg %p168
      %p302 = pneg %p192
      %p303 = pneg %p189
      %p304 = pneg %p218
      %p305 = pneg %p215
      %p306 = scmp.lt.s32.totalorder %s19, 1
      %s307 = scalar_select %p306, %s19, 1
      %s308 = smul.addr %s307, 32
      %s309 = smul.addr %s308, 4
      %s310 = scalar_lea.vmem %s8, %s309
      %p311 = scmp.lt.s32.totalorder %s19, 1
      %s312 = scalar_select %p311, %s19, 1
      %s313 = smul.addr %s312, 8
      %s314 = smul.addr %s313, 4
      %s315 = scalar_lea.vmem %s0, %s314
      %p316 = scmp.lt.s32.totalorder %s19, 1
      %s317 = scalar_select %p316, %s19, 1
      %s318 = smul.addr %s317, 28
      %s319 = smul.addr %s318, 4
      %s320 = scalar_lea.vmem %s1, %s319
      %p321 = scmp.lt.s32.totalorder %s19, 1
      %s322 = scalar_select %p321, %s19, 1
      %s323 = smul.addr %s322, 32
      %s324 = smul.addr %s323, 4
      %s325 = scalar_lea.vmem %s8, %s324
      %vm327 = vcmask 60416
      %328 = vst.msk [vmem:[#allocation2] sm:$0xf] %vm327, 0
      %329 = vst.msk [vmem:[#allocation2 + $0x4] sm:$0xf] %vm327, 0
      %vm330 = vcmask 57344
      %331 = vst.msk [vmem:[#allocation2 + $0x8] sm:$0x1] %vm330, 0
      %332 = vst.msk [vmem:[#allocation2 + $0xc] sm:$0xf] %vm327, 0
      %333 = vst.msk [vmem:[#allocation2 + $0x10] sm:$0xf] %vm327, 0
      %334 = vst.msk [vmem:[#allocation2 + $0x14] sm:$0x1] %vm330, 0
      %s335 = scalar_lea.vmem [#allocation2], 192
      %336 = vst.msk [vmem:[%s335] sm:$0xf] %vm327, 0
      %337 = vst.msk [vmem:[%s335 + $0x4] sm:$0xf] %vm327, 0
      %338 = vst.msk [vmem:[%s335 + $0x8] sm:$0x1] %vm330, 0
      %339 = vst.msk [vmem:[%s335 + $0xc] sm:$0xf] %vm327, 0
      %340 = vst.msk [vmem:[%s335 + $0x10] sm:$0xf] %vm327, 0
      %341 = vst.msk [vmem:[%s335 + $0x14] sm:$0x1] %vm330, 0
      %342 = vst.msk [vmem:[#allocation2] sm:$0x1] %vm330, 0
      %343 = vst.msk [vmem:[#allocation2 + $0xc] sm:$0x1] %vm330, 0
      %344 = vst.msk [vmem:[#allocation2 + $0x18] sm:$0x1] %vm330, 0
      %345 = vst.msk [vmem:[#allocation2 + $0x24] sm:$0x1] %vm330, 0
      %346 = vst.msk [vmem:[#allocation2 + $0x30] sm:$0x1] %vm330, 0
      %347 = vst.msk [vmem:[#allocation2 + $0x3c] sm:$0x1] %vm330, 0
      %348 = vst.msk [vmem:[#allocation2 + $0x48] sm:$0x1] %vm330, 0
      %349 = vst.msk [vmem:[#allocation2 + $0x54] sm:$0x1] %vm330, 0
      %350 = vst.msk [vmem:[#allocation2 + $0x60] sm:$0x1] %vm330, 0
      %351 = vst.msk [vmem:[#allocation2 + $0x6c] sm:$0x1] %vm330, 0
      %352 = vst.msk [vmem:[#allocation2 + $0x78] sm:$0x1] %vm330, 0
      %353 = vst.msk [vmem:[#allocation2 + $0x84] sm:$0x1] %vm330, 0
      %354 = vst.msk [vmem:[#allocation2 + $0x90] sm:$0x1] %vm330, 0
      %355 = vst.msk [vmem:[#allocation2 + $0x9c] sm:$0x1] %vm330, 0
      %356 = vst.msk [vmem:[#allocation2 + $0xa8] sm:$0x1] %vm330, 0
      %357 = vst.msk [vmem:[#allocation2 + $0xb4] sm:$0x1] %vm330, 0
      %358 = vst.msk [vmem:[#allocation2 + $0xc0] sm:$0x1] %vm330, 0
      %359 = vst.msk [vmem:[#allocation2 + $0xcc] sm:$0x1] %vm330, 0
      %360 = vst.msk [vmem:[#allocation2 + $0x8] sm:$0x1] %vm330, 0
      %361 = vst.msk [vmem:[#allocation2 + $0x14] sm:$0x1] %vm330, 0
      %362 = vst.msk [vmem:[#allocation2 + $0x20] sm:$0x1] %vm330, 0
      %363 = vst.msk [vmem:[#allocation2 + $0x2c] sm:$0x1] %vm330, 0
      %364 = vst.msk [vmem:[#allocation2 + $0x38] sm:$0x1] %vm330, 0
      %365 = vst.msk [vmem:[#allocation2 + $0x44] sm:$0x1] %vm330, 0
      %366 = vst.msk [vmem:[#allocation2 + $0x50] sm:$0x1] %vm330, 0
      %367 = vst.msk [vmem:[#allocation2 + $0x5c] sm:$0x1] %vm330, 0
      %368 = vst.msk [vmem:[#allocation2 + $0x68] sm:$0x1] %vm330, 0
      %369 = vst.msk [vmem:[#allocation2 + $0x74] sm:$0x1] %vm330, 0
      %370 = vst.msk [vmem:[#allocation2 + $0x80] sm:$0x1] %vm330, 0
      %371 = vst.msk [vmem:[#allocation2 + $0x8c] sm:$0x1] %vm330, 0
      %372 = vst.msk [vmem:[#allocation2 + $0x98] sm:$0x1] %vm330, 0
      %373 = vst.msk [vmem:[#allocation2 + $0xa4] sm:$0x1] %vm330, 0
      %374 = vst.msk [vmem:[#allocation2 + $0xb0] sm:$0x1] %vm330, 0
      %375 = vst.msk [vmem:[#allocation2 + $0xbc] sm:$0x1] %vm330, 0
      %376 = vst.msk [vmem:[#allocation2 + $0xc8] sm:$0x1] %vm330, 0
      %377 = vst.msk [vmem:[#allocation2 + $0xd4] sm:$0x1] %vm330, 0
      %v378 = vld [vmem:[%s320] sm:$0xf]
      %v379 = vld [vmem:[%s320 + $0x4] sm:$0x7]
      %v380 = vld [vmem:[%s320 + $0x8] sm:$0xf]
      %v381 = vld [vmem:[%s320 + $0xc] sm:$0x7]
      %v382 = vld [vmem:[%s320 + $0x10] sm:$0xf]
      %v383 = vld [vmem:[%s320 + $0x14] sm:$0x7]
      %v384 = vld [vmem:[%s320 + $0x18] sm:$0xf]
      %v385 = vld [vmem:[%s320 + $0x1c] sm:$0x7]
      %v386 = vld [vmem:[%s320 + $0x20] sm:$0xf]
      %v387 = vld [vmem:[%s320 + $0x24] sm:$0x7]
      %v388 = vld [vmem:[%s320 + $0x28] sm:$0xf]
      %v389 = vld [vmem:[%s320 + $0x2c] sm:$0x7]
      %v390 = vld [vmem:[%s320 + $0x30] sm:$0xf]
      %v391 = vld [vmem:[%s320 + $0x34] sm:$0x7]
      %v392 = vld [vmem:[%s320 + $0x38] sm:$0xf]
      %v393 = vld [vmem:[%s320 + $0x3c] sm:$0x7]
      %v394 = vld [vmem:[%s320 + $0x40] sm:$0xf]
      %v395 = vld [vmem:[%s320 + $0x44] sm:$0x7]
      %v396 = vld [vmem:[%s320 + $0x48] sm:$0xf]
      %v397 = vld [vmem:[%s320 + $0x4c] sm:$0x7]
      %v398 = vld [vmem:[%s320 + $0x50] sm:$0xf]
      %v399 = vld [vmem:[%s320 + $0x54] sm:$0x7]
      %v400 = vld [vmem:[%s320 + $0x58] sm:$0xf]
      %v401 = vld [vmem:[%s320 + $0x5c] sm:$0x7]
      %v402 = vld [vmem:[%s320 + $0x60] sm:$0xf]
      %v403 = vld [vmem:[%s320 + $0x64] sm:$0x7]
      %v404 = vld [vmem:[%s320 + $0x68] sm:$0xf]
      %v405 = vld [vmem:[%s320 + $0x6c] sm:$0x7]
      %vm434 = vcmask 1040384
      %vm435 = vcmask 1044484
      %vm436 = vmor %vm434, %vm435
      %v437 = vrot.slane %v378, 7
      %v438 = vrot.slane %v437, 4
      %v439 = vrot.slane %v379, 7
      %v440 = vsel %vm436, %v438, %v439
      %v441 = vrot.slane %v380, 7
      %v442 = vrot.slane %v441, 4
      %v443 = vrot.slane %v381, 7
      %v444 = vsel %vm436, %v442, %v443
      %v445 = vrot.slane %v382, 7
      %v446 = vrot.slane %v445, 4
      %v447 = vrot.slane %v383, 7
      %v448 = vsel %vm436, %v446, %v447
      %v449 = vrot.slane %v384, 7
      %v450 = vrot.slane %v449, 4
      %v451 = vrot.slane %v385, 7
      %v452 = vsel %vm436, %v450, %v451
      %v453 = vrot.slane %v386, 7
      %v454 = vrot.slane %v453, 4
      %v455 = vrot.slane %v387, 7
      %v456 = vsel %vm436, %v454, %v455
      %v457 = vrot.slane %v388, 7
      %v458 = vrot.slane %v457, 4
      %v459 = vrot.slane %v389, 7
      %v460 = vsel %vm436, %v458, %v459
      %v461 = vrot.slane %v390, 7
      %v462 = vrot.slane %v461, 4
      %v463 = vrot.slane %v391, 7
      %v464 = vsel %vm436, %v462, %v463
      %v465 = vrot.slane %v392, 7
      %v466 = vrot.slane %v465, 4
      %v467 = vrot.slane %v393, 7
      %v468 = vsel %vm436, %v466, %v467
      %v469 = vrot.slane %v394, 7
      %v470 = vrot.slane %v469, 4
      %v471 = vrot.slane %v395, 7
      %v472 = vsel %vm436, %v470, %v471
      %v473 = vrot.slane %v396, 7
      %v474 = vrot.slane %v473, 4
      %v475 = vrot.slane %v397, 7
      %v476 = vsel %vm436, %v474, %v475
      %v477 = vrot.slane %v398, 7
      %v478 = vrot.slane %v477, 4
      %v479 = vrot.slane %v399, 7
      %v480 = vsel %vm436, %v478, %v479
      %v481 = vrot.slane %v400, 7
      %v482 = vrot.slane %v481, 4
      %v483 = vrot.slane %v401, 7
      %v484 = vsel %vm436, %v482, %v483
      %v485 = vrot.slane %v402, 7
      %v486 = vrot.slane %v485, 4
      %v487 = vrot.slane %v403, 7
      %v488 = vsel %vm436, %v486, %v487
      %v489 = vrot.slane %v404, 7
      %v490 = vrot.slane %v489, 4
      %v491 = vrot.slane %v405, 7
      %v492 = vsel %vm436, %v490, %v491
      %s521 = scalar_lea.vmem [#allocation2], 24
      %vm522 = vcmask 27649
      %523 = vst.msk [vmem:[%s521] sm:$0xe] %vm522, %v437
      %vm524 = vcmask 27648
      %525 = vst.msk [vmem:[%s521 + $0x4] sm:$0xf] %vm524, %v440
      %526 = vst.msk [vmem:[%s521 + $0xc] sm:$0xe] %vm522, %v441
      %527 = vst.msk [vmem:[%s521 + $0x10] sm:$0xf] %vm524, %v444
      %528 = vst.msk [vmem:[%s521 + $0x18] sm:$0xe] %vm522, %v445
      %529 = vst.msk [vmem:[%s521 + $0x1c] sm:$0xf] %vm524, %v448
      %530 = vst.msk [vmem:[%s521 + $0x24] sm:$0xe] %vm522, %v449
      %531 = vst.msk [vmem:[%s521 + $0x28] sm:$0xf] %vm524, %v452
      %532 = vst.msk [vmem:[%s521 + $0x30] sm:$0xe] %vm522, %v453
      %533 = vst.msk [vmem:[%s521 + $0x34] sm:$0xf] %vm524, %v456
      %534 = vst.msk [vmem:[%s521 + $0x3c] sm:$0xe] %vm522, %v457
      %535 = vst.msk [vmem:[%s521 + $0x40] sm:$0xf] %vm524, %v460
      %536 = vst.msk [vmem:[%s521 + $0x48] sm:$0xe] %vm522, %v461
      %537 = vst.msk [vmem:[%s521 + $0x4c] sm:$0xf] %vm524, %v464
      %538 = vst.msk [vmem:[%s521 + $0x54] sm:$0xe] %vm522, %v465
      %539 = vst.msk [vmem:[%s521 + $0x58] sm:$0xf] %vm524, %v468
      %540 = vst.msk [vmem:[%s521 + $0x60] sm:$0xe] %vm522, %v469
      %541 = vst.msk [vmem:[%s521 + $0x64] sm:$0xf] %vm524, %v472
      %542 = vst.msk [vmem:[%s521 + $0x6c] sm:$0xe] %vm522, %v473
      %543 = vst.msk [vmem:[%s521 + $0x70] sm:$0xf] %vm524, %v476
      %544 = vst.msk [vmem:[%s521 + $0x78] sm:$0xe] %vm522, %v477
      %545 = vst.msk [vmem:[%s521 + $0x7c] sm:$0xf] %vm524, %v480
      %546 = vst.msk [vmem:[%s521 + $0x84] sm:$0xe] %vm522, %v481
      %547 = vst.msk [vmem:[%s521 + $0x88] sm:$0xf] %vm524, %v484
      %548 = vst.msk [vmem:[%s521 + $0x90] sm:$0xe] %vm522, %v485
      %549 = vst.msk [vmem:[%s521 + $0x94] sm:$0xf] %vm524, %v488
      %550 = vst.msk [vmem:[%s521 + $0x9c] sm:$0xe] %vm522, %v489
      %551 = vst.msk [vmem:[%s521 + $0xa0] sm:$0xf] %vm524, %v492
      %v552 = vld [vmem:[%s315] sm:$0xf]
      %v553 = vld [vmem:[%s315 + $0x4] sm:$0xf]
      %v554 = vld [vmem:[%s315 + $0x8] sm:$0xf]
      %v555 = vld [vmem:[%s315 + $0xc] sm:$0xf]
      %v556 = vld [vmem:[%s315 + $0x10] sm:$0xf]
      %v557 = vld [vmem:[%s315 + $0x14] sm:$0xf]
      %v558 = vld [vmem:[%s315 + $0x18] sm:$0xf]
      %v559 = vld [vmem:[%s315 + $0x1c] sm:$0xf]
      %v568 = vrot.slane %v552, 3
      %v569 = vrot.slane %v553, 3
      %v570 = vrot.slane %v554, 3
      %v571 = vrot.slane %v555, 3
      %v572 = vrot.slane %v556, 3
      %v573 = vrot.slane %v557, 3
      %v574 = vrot.slane %v558, 3
      %v575 = vrot.slane %v559, 3
      %vm576 = vcmask 1040384
      %v579 = vsel %vm576, %v552, %v568
      %vm581 = vcmask 1041409
      %v582 = vsel %vm581, %v552, %v568
      %v584 = vrot.slane %v582, 1
      %vm585 = vcmask 1042434
      %v586 = vsel %vm585, %v552, %v568
      %v588 = vrot.slane %v586, 2
      %vm589 = vcmask 1043459
      %v590 = vsel %vm589, %v552, %v568
      %v592 = vrot.slane %v590, 3
      %v595 = vsel %vm576, %v553, %v569
      %v597 = vsel %vm581, %v553, %v569
      %v599 = vrot.slane %v597, 1
      %v600 = vsel %vm585, %v553, %v569
      %v602 = vrot.slane %v600, 2
      %v603 = vsel %vm589, %v553, %v569
      %v605 = vrot.slane %v603, 3
      %v608 = vsel %vm576, %v554, %v570
      %v610 = vsel %vm581, %v554, %v570
      %v612 = vrot.slane %v610, 1
      %v613 = vsel %vm585, %v554, %v570
      %v615 = vrot.slane %v613, 2
      %v616 = vsel %vm589, %v554, %v570
      %v618 = vrot.slane %v616, 3
      %v621 = vsel %vm576, %v555, %v571
      %v623 = vsel %vm581, %v555, %v571
      %v625 = vrot.slane %v623, 1
      %v626 = vsel %vm585, %v555, %v571
      %v628 = vrot.slane %v626, 2
      %v629 = vsel %vm589, %v555, %v571
      %v631 = vrot.slane %v629, 3
      %v634 = vsel %vm576, %v556, %v572
      %v636 = vsel %vm581, %v556, %v572
      %v638 = vrot.slane %v636, 1
      %v639 = vsel %vm585, %v556, %v572
      %v641 = vrot.slane %v639, 2
      %v642 = vsel %vm589, %v556, %v572
      %v644 = vrot.slane %v642, 3
      %v647 = vsel %vm576, %v557, %v573
      %v649 = vsel %vm581, %v557, %v573
      %v651 = vrot.slane %v649, 1
      %v652 = vsel %vm585, %v557, %v573
      %v654 = vrot.slane %v652, 2
      %v655 = vsel %vm589, %v557, %v573
      %v657 = vrot.slane %v655, 3
      %v660 = vsel %vm576, %v558, %v574
      %v662 = vsel %vm581, %v558, %v574
      %v664 = vrot.slane %v662, 1
      %v665 = vsel %vm585, %v558, %v574
      %v667 = vrot.slane %v665, 2
      %v668 = vsel %vm589, %v558, %v574
      %v670 = vrot.slane %v668, 3
      %v673 = vsel %vm576, %v559, %v575
      %v675 = vsel %vm581, %v559, %v575
      %v677 = vrot.slane %v675, 1
      %v678 = vsel %vm585, %v559, %v575
      %v680 = vrot.slane %v678, 2
      %v681 = vsel %vm589, %v559, %v575
      %v683 = vrot.slane %v681, 3
      %v684 = vunpack.i.l.s16 %v579
      %v685 = vunpack.i.h.s16 %v579
      %v686 = vunpack.i.l.s16 %v584
      %v687 = vunpack.i.h.s16 %v584
      %v688 = vunpack.i.l.s16 %v588
      %v689 = vunpack.i.h.s16 %v588
      %v690 = vunpack.i.l.s16 %v592
      %v691 = vunpack.i.h.s16 %v592
      %v692 = vunpack.i.l.s16 %v595
      %v693 = vunpack.i.h.s16 %v595
      %v694 = vunpack.i.l.s16 %v599
      %v695 = vunpack.i.h.s16 %v599
      %v696 = vunpack.i.l.s16 %v602
      %v697 = vunpack.i.h.s16 %v602
      %v698 = vunpack.i.l.s16 %v605
      %v699 = vunpack.i.h.s16 %v605
      %v700 = vunpack.i.l.s16 %v608
      %v701 = vunpack.i.h.s16 %v608
      %v702 = vunpack.i.l.s16 %v612
      %v703 = vunpack.i.h.s16 %v612
      %v704 = vunpack.i.l.s16 %v615
      %v705 = vunpack.i.h.s16 %v615
      %v706 = vunpack.i.l.s16 %v618
      %v707 = vunpack.i.h.s16 %v618
      %v708 = vunpack.i.l.s16 %v621
      %v709 = vunpack.i.h.s16 %v621
      %v710 = vunpack.i.l.s16 %v625
      %v711 = vunpack.i.h.s16 %v625
      %v712 = vunpack.i.l.s16 %v628
      %v713 = vunpack.i.h.s16 %v628
      %v714 = vunpack.i.l.s16 %v631
      %v715 = vunpack.i.h.s16 %v631
      %v716 = vunpack.i.l.s16 %v634
      %v717 = vunpack.i.h.s16 %v634
      %v718 = vunpack.i.l.s16 %v638
      %v719 = vunpack.i.h.s16 %v638
      %v720 = vunpack.i.l.s16 %v641
      %v721 = vunpack.i.h.s16 %v641
      %v722 = vunpack.i.l.s16 %v644
      %v723 = vunpack.i.h.s16 %v644
      %v724 = vunpack.i.l.s16 %v647
      %v725 = vunpack.i.h.s16 %v647
      %v726 = vunpack.i.l.s16 %v651
      %v727 = vunpack.i.h.s16 %v651
      %v728 = vunpack.i.l.s16 %v654
      %v729 = vunpack.i.h.s16 %v654
      %v730 = vunpack.i.l.s16 %v657
      %v731 = vunpack.i.h.s16 %v657
      %v732 = vunpack.i.l.s16 %v660
      %v733 = vunpack.i.h.s16 %v660
      %v734 = vunpack.i.l.s16 %v664
      %v735 = vunpack.i.h.s16 %v664
      %v736 = vunpack.i.l.s16 %v667
      %v737 = vunpack.i.h.s16 %v667
      %v738 = vunpack.i.l.s16 %v670
      %v739 = vunpack.i.h.s16 %v670
      %v740 = vunpack.i.l.s16 %v673
      %v741 = vunpack.i.h.s16 %v673
      %v742 = vunpack.i.l.s16 %v677
      %v743 = vunpack.i.h.s16 %v677
      %v744 = vunpack.i.l.s16 %v680
      %v745 = vunpack.i.h.s16 %v680
      %v746 = vunpack.i.l.s16 %v683
      %v747 = vunpack.i.h.s16 %v683
      %v748 = vpack.i.b16 %v684, %v684
      %v749 = vpack.i.b16 %v685, %v685
      %v750 = vpack.i.b16 %v686, %v686
      %v751 = vpack.i.b16 %v687, %v687
      %v752 = vpack.i.b16 %v688, %v688
      %v753 = vpack.i.b16 %v689, %v689
      %v754 = vpack.i.b16 %v690, %v690
      %v755 = vpack.i.b16 %v691, %v691
      %v756 = vpack.i.b16 %v692, %v692
      %v757 = vpack.i.b16 %v693, %v693
      %v758 = vpack.i.b16 %v694, %v694
      %v759 = vpack.i.b16 %v695, %v695
      %v760 = vpack.i.b16 %v696, %v696
      %v761 = vpack.i.b16 %v697, %v697
      %v762 = vpack.i.b16 %v698, %v698
      %v763 = vpack.i.b16 %v699, %v699
      %v764 = vpack.i.b16 %v700, %v700
      %v765 = vpack.i.b16 %v701, %v701
      %v766 = vpack.i.b16 %v702, %v702
      %v767 = vpack.i.b16 %v703, %v703
      %v768 = vpack.i.b16 %v704, %v704
      %v769 = vpack.i.b16 %v705, %v705
      %v770 = vpack.i.b16 %v706, %v706
      %v771 = vpack.i.b16 %v707, %v707
      %v772 = vpack.i.b16 %v708, %v708
      %v773 = vpack.i.b16 %v709, %v709
      %v774 = vpack.i.b16 %v710, %v710
      %v775 = vpack.i.b16 %v711, %v711
      %v776 = vpack.i.b16 %v712, %v712
      %v777 = vpack.i.b16 %v713, %v713
      %v778 = vpack.i.b16 %v714, %v714
      %v779 = vpack.i.b16 %v715, %v715
      %v780 = vpack.i.b16 %v716, %v716
      %v781 = vpack.i.b16 %v717, %v717
      %v782 = vpack.i.b16 %v718, %v718
      %v783 = vpack.i.b16 %v719, %v719
      %v784 = vpack.i.b16 %v720, %v720
      %v785 = vpack.i.b16 %v721, %v721
      %v786 = vpack.i.b16 %v722, %v722
      %v787 = vpack.i.b16 %v723, %v723
      %v788 = vpack.i.b16 %v724, %v724
      %v789 = vpack.i.b16 %v725, %v725
      %v790 = vpack.i.b16 %v726, %v726
      %v791 = vpack.i.b16 %v727, %v727
      %v792 = vpack.i.b16 %v728, %v728
      %v793 = vpack.i.b16 %v729, %v729
      %v794 = vpack.i.b16 %v730, %v730
      %v795 = vpack.i.b16 %v731, %v731
      %v796 = vpack.i.b16 %v732, %v732
      %v797 = vpack.i.b16 %v733, %v733
      %v798 = vpack.i.b16 %v734, %v734
      %v799 = vpack.i.b16 %v735, %v735
      %v800 = vpack.i.b16 %v736, %v736
      %v801 = vpack.i.b16 %v737, %v737
      %v802 = vpack.i.b16 %v738, %v738
      %v803 = vpack.i.b16 %v739, %v739
      %v804 = vpack.i.b16 %v740, %v740
      %v805 = vpack.i.b16 %v741, %v741
      %v806 = vpack.i.b16 %v742, %v742
      %v807 = vpack.i.b16 %v743, %v743
      %v808 = vpack.i.b16 %v744, %v744
      %v809 = vpack.i.b16 %v745, %v745
      %v810 = vpack.i.b16 %v746, %v746
      %v811 = vpack.i.b16 %v747, %v747
      %v812 = vperm.slane %v748, 0
      %v813 = vperm.slane %v749, 0
      %v814 = vperm.slane %v750, 0
      %v815 = vperm.slane %v751, 0
      %v816 = vperm.slane %v752, 0
      %v817 = vperm.slane %v753, 0
      %v818 = vperm.slane %v754, 0
      %v819 = vperm.slane %v755, 0
      %v820 = vperm.slane %v756, 0
      %v821 = vperm.slane %v757, 0
      %v822 = vperm.slane %v758, 0
      %v823 = vperm.slane %v759, 0
      %v824 = vperm.slane %v760, 0
      %v825 = vperm.slane %v761, 0
      %v826 = vperm.slane %v762, 0
      %v827 = vperm.slane %v763, 0
      %v828 = vperm.slane %v764, 0
      %v829 = vperm.slane %v765, 0
      %v830 = vperm.slane %v766, 0
      %v831 = vperm.slane %v767, 0
      %v832 = vperm.slane %v768, 0
      %v833 = vperm.slane %v769, 0
      %v834 = vperm.slane %v770, 0
      %v835 = vperm.slane %v771, 0
      %v836 = vperm.slane %v772, 0
      %v837 = vperm.slane %v773, 0
      %v838 = vperm.slane %v774, 0
      %v839 = vperm.slane %v775, 0
      %v840 = vperm.slane %v776, 0
      %v841 = vperm.slane %v777, 0
      %v842 = vperm.slane %v778, 0
      %v843 = vperm.slane %v779, 0
      %v844 = vperm.slane %v780, 0
      %v845 = vperm.slane %v781, 0
      %v846 = vperm.slane %v782, 0
      %v847 = vperm.slane %v783, 0
      %v848 = vperm.slane %v784, 0
      %v849 = vperm.slane %v785, 0
      %v850 = vperm.slane %v786, 0
      %v851 = vperm.slane %v787, 0
      %v852 = vperm.slane %v788, 0
      %v853 = vperm.slane %v789, 0
      %v854 = vperm.slane %v790, 0
      %v855 = vperm.slane %v791, 0
      %v856 = vperm.slane %v792, 0
      %v857 = vperm.slane %v793, 0
      %v858 = vperm.slane %v794, 0
      %v859 = vperm.slane %v795, 0
      %v860 = vperm.slane %v796, 0
      %v861 = vperm.slane %v797, 0
      %v862 = vperm.slane %v798, 0
      %v863 = vperm.slane %v799, 0
      %v864 = vperm.slane %v800, 0
      %v865 = vperm.slane %v801, 0
      %v866 = vperm.slane %v802, 0
      %v867 = vperm.slane %v803, 0
      %v868 = vperm.slane %v804, 0
      %v869 = vperm.slane %v805, 0
      %v870 = vperm.slane %v806, 0
      %v871 = vperm.slane %v807, 0
      %v872 = vperm.slane %v808, 0
      %v873 = vperm.slane %v809, 0
      %v874 = vperm.slane %v810, 0
      %v875 = vperm.slane %v811, 0
      %v877 = vpack.i.b16 %v812, %v812
      %v879 = vperm.slane %v877, 0
      %v881 = vpack.i.b16 %v813, %v813
      %v883 = vperm.slane %v881, 0
      %v885 = vpack.i.b16 %v814, %v814
      %v887 = vperm.slane %v885, 0
      %v889 = vpack.i.b16 %v815, %v815
      %v891 = vperm.slane %v889, 0
      %v893 = vpack.i.b16 %v816, %v816
      %v895 = vperm.slane %v893, 0
      %v897 = vpack.i.b16 %v817, %v817
      %v899 = vperm.slane %v897, 0
      %v901 = vpack.i.b16 %v818, %v818
      %v903 = vperm.slane %v901, 0
      %v905 = vpack.i.b16 %v819, %v819
      %v907 = vperm.slane %v905, 0
      %v909 = vpack.i.b16 %v820, %v820
      %v911 = vperm.slane %v909, 0
      %v913 = vpack.i.b16 %v821, %v821
      %v915 = vperm.slane %v913, 0
      %v917 = vpack.i.b16 %v822, %v822
      %v919 = vperm.slane %v917, 0
      %v921 = vpack.i.b16 %v823, %v823
      %v923 = vperm.slane %v921, 0
      %v925 = vpack.i.b16 %v824, %v824
      %v927 = vperm.slane %v925, 0
      %v929 = vpack.i.b16 %v825, %v825
      %v931 = vperm.slane %v929, 0
      %v933 = vpack.i.b16 %v826, %v826
      %v935 = vperm.slane %v933, 0
      %v937 = vpack.i.b16 %v827, %v827
      %v939 = vperm.slane %v937, 0
      %v941 = vpack.i.b16 %v828, %v828
      %v943 = vperm.slane %v941, 0
      %v945 = vpack.i.b16 %v829, %v829
      %v947 = vperm.slane %v945, 0
      %v949 = vpack.i.b16 %v830, %v830
      %v951 = vperm.slane %v949, 0
      %v953 = vpack.i.b16 %v831, %v831
      %v955 = vperm.slane %v953, 0
      %v957 = vpack.i.b16 %v832, %v832
      %v959 = vperm.slane %v957, 0
      %v961 = vpack.i.b16 %v833, %v833
      %v963 = vperm.slane %v961, 0
      %v965 = vpack.i.b16 %v834, %v834
      %v967 = vperm.slane %v965, 0
      %v969 = vpack.i.b16 %v835, %v835
      %v971 = vperm.slane %v969, 0
      %v973 = vpack.i.b16 %v836, %v836
      %v975 = vperm.slane %v973, 0
      %v977 = vpack.i.b16 %v837, %v837
      %v979 = vperm.slane %v977, 0
      %v981 = vpack.i.b16 %v838, %v838
      %v983 = vperm.slane %v981, 0
      %v985 = vpack.i.b16 %v839, %v839
      %v987 = vperm.slane %v985, 0
      %v989 = vpack.i.b16 %v840, %v840
      %v991 = vperm.slane %v989, 0
      %v993 = vpack.i.b16 %v841, %v841
      %v995 = vperm.slane %v993, 0
      %v997 = vpack.i.b16 %v842, %v842
      %v999 = vperm.slane %v997, 0
      %v1001 = vpack.i.b16 %v843, %v843
      %v1003 = vperm.slane %v1001, 0
      %v1005 = vpack.i.b16 %v844, %v844
      %v1007 = vperm.slane %v1005, 0
      %v1009 = vpack.i.b16 %v845, %v845
      %v1011 = vperm.slane %v1009, 0
      %v1013 = vpack.i.b16 %v846, %v846
      %v1015 = vperm.slane %v1013, 0
      %v1017 = vpack.i.b16 %v847, %v847
      %v1019 = vperm.slane %v1017, 0
      %v1021 = vpack.i.b16 %v848, %v848
      %v1023 = vperm.slane %v1021, 0
      %v1025 = vpack.i.b16 %v849, %v849
      %v1027 = vperm.slane %v1025, 0
      %v1029 = vpack.i.b16 %v850, %v850
      %v1031 = vperm.slane %v1029, 0
      %v1033 = vpack.i.b16 %v851, %v851
      %v1035 = vperm.slane %v1033, 0
      %v1037 = vpack.i.b16 %v852, %v852
      %v1039 = vperm.slane %v1037, 0
      %v1041 = vpack.i.b16 %v853, %v853
      %v1043 = vperm.slane %v1041, 0
      %v1045 = vpack.i.b16 %v854, %v854
      %v1047 = vperm.slane %v1045, 0
      %v1049 = vpack.i.b16 %v855, %v855
      %v1051 = vperm.slane %v1049, 0
      %v1053 = vpack.i.b16 %v856, %v856
      %v1055 = vperm.slane %v1053, 0
      %v1057 = vpack.i.b16 %v857, %v857
      %v1059 = vperm.slane %v1057, 0
      %v1061 = vpack.i.b16 %v858, %v858
      %v1063 = vperm.slane %v1061, 0
      %v1065 = vpack.i.b16 %v859, %v859
      %v1067 = vperm.slane %v1065, 0
      %v1069 = vpack.i.b16 %v860, %v860
      %v1071 = vperm.slane %v1069, 0
      %v1073 = vpack.i.b16 %v861, %v861
      %v1075 = vperm.slane %v1073, 0
      %v1077 = vpack.i.b16 %v862, %v862
      %v1079 = vperm.slane %v1077, 0
      %v1081 = vpack.i.b16 %v863, %v863
      %v1083 = vperm.slane %v1081, 0
      %v1085 = vpack.i.b16 %v864, %v864
      %v1087 = vperm.slane %v1085, 0
      %v1089 = vpack.i.b16 %v865, %v865
      %v1091 = vperm.slane %v1089, 0
      %v1093 = vpack.i.b16 %v866, %v866
      %v1095 = vperm.slane %v1093, 0
      %v1097 = vpack.i.b16 %v867, %v867
      %v1099 = vperm.slane %v1097, 0
      %v1101 = vpack.i.b16 %v868, %v868
      %v1103 = vperm.slane %v1101, 0
      %v1105 = vpack.i.b16 %v869, %v869
      %v1107 = vperm.slane %v1105, 0
      %v1109 = vpack.i.b16 %v870, %v870
      %v1111 = vperm.slane %v1109, 0
      %v1113 = vpack.i.b16 %v871, %v871
      %v1115 = vperm.slane %v1113, 0
      %v1117 = vpack.i.b16 %v872, %v872
      %v1119 = vperm.slane %v1117, 0
      %v1121 = vpack.i.b16 %v873, %v873
      %v1123 = vperm.slane %v1121, 0
      %v1125 = vpack.i.b16 %v874, %v874
      %v1127 = vperm.slane %v1125, 0
      %v1129 = vpack.i.b16 %v875, %v875
      %v1131 = vperm.slane %v1129, 0
      %1133 = vst [vmem:[#allocation1] ss:$4 sm:$0xff] %v879
      %s1135 = scalar_lea.vmem [#allocation1], 1
      %1136 = vst [vmem:[%s1135] ss:$4 sm:$0xff] %v883
      %s1138 = scalar_lea.vmem [#allocation1], 2
      %1139 = vst [vmem:[%s1138] ss:$4 sm:$0xff] %v887
      %s1141 = scalar_lea.vmem [#allocation1], 3
      %1142 = vst [vmem:[%s1141] ss:$4 sm:$0xff] %v891
      %s1144 = scalar_lea.vmem [#allocation1], 32
      %1145 = vst [vmem:[%s1144] ss:$4 sm:$0xff] %v895
      %s1147 = scalar_lea.vmem [#allocation1], 33
      %1148 = vst [vmem:[%s1147] ss:$4 sm:$0xff] %v899
      %s1150 = scalar_lea.vmem [#allocation1], 34
      %1151 = vst [vmem:[%s1150] ss:$4 sm:$0xff] %v903
      %s1153 = scalar_lea.vmem [#allocation1], 35
      %1154 = vst [vmem:[%s1153] ss:$4 sm:$0xff] %v907
      %v1155 = vld [vmem:[#allocation1] sm:$0xff]
      %v1156 = vld [vmem:[#allocation1 + $0x20] sm:$0xff]
      %1157 = vst [vmem:[#allocation1] ss:$4 sm:$0xff] %v879
      %1158 = vst [vmem:[%s1135] ss:$4 sm:$0xff] %v883
      %1159 = vst [vmem:[%s1138] ss:$4 sm:$0xff] %v887
      %1160 = vst [vmem:[%s1141] ss:$4 sm:$0xff] %v891
      %1161 = vst [vmem:[%s1144] ss:$4 sm:$0xff] %v895
      %1162 = vst [vmem:[%s1147] ss:$4 sm:$0xff] %v899
      %1163 = vst [vmem:[%s1150] ss:$4 sm:$0xff] %v903
      %1164 = vst [vmem:[%s1153] ss:$4 sm:$0xff] %v907
      %v1165 = vld [vmem:[#allocation1] sm:$0xff]
      %v1166 = vld [vmem:[#allocation1 + $0x20] sm:$0xff]
      %1168 = vst [vmem:[#allocation1] ss:$4 sm:$0xff] %v911
      %1170 = vst [vmem:[%s1135] ss:$4 sm:$0xff] %v915
      %1172 = vst [vmem:[%s1138] ss:$4 sm:$0xff] %v919
      %1174 = vst [vmem:[%s1141] ss:$4 sm:$0xff] %v923
      %1176 = vst [vmem:[%s1144] ss:$4 sm:$0xff] %v927
      %1178 = vst [vmem:[%s1147] ss:$4 sm:$0xff] %v931
      %1180 = vst [vmem:[%s1150] ss:$4 sm:$0xff] %v935
      %1182 = vst [vmem:[%s1153] ss:$4 sm:$0xff] %v939
      %v1183 = vld [vmem:[#allocation1] sm:$0xff]
      %v1184 = vld [vmem:[#allocation1 + $0x20] sm:$0xff]
      %1185 = vst [vmem:[#allocation1] ss:$4 sm:$0xff] %v911
      %1186 = vst [vmem:[%s1135] ss:$4 sm:$0xff] %v915
      %1187 = vst [vmem:[%s1138] ss:$4 sm:$0xff] %v919
      %1188 = vst [vmem:[%s1141] ss:$4 sm:$0xff] %v923
      %1189 = vst [vmem:[%s1144] ss:$4 sm:$0xff] %v927
      %1190 = vst [vmem:[%s1147] ss:$4 sm:$0xff] %v931
      %1191 = vst [vmem:[%s1150] ss:$4 sm:$0xff] %v935
      %1192 = vst [vmem:[%s1153] ss:$4 sm:$0xff] %v939
      %v1193 = vld [vmem:[#allocation1] sm:$0xff]
      %v1194 = vld [vmem:[#allocation1 + $0x20] sm:$0xff]
      %1196 = vst [vmem:[#allocation1] ss:$4 sm:$0xff] %v943
      %1198 = vst [vmem:[%s1135] ss:$4 sm:$0xff] %v947
      %1200 = vst [vmem:[%s1138] ss:$4 sm:$0xff] %v951
      %1202 = vst [vmem:[%s1141] ss:$4 sm:$0xff] %v955
      %1204 = vst [vmem:[%s1144] ss:$4 sm:$0xff] %v959
      %1206 = vst [vmem:[%s1147] ss:$4 sm:$0xff] %v963
      %1208 = vst [vmem:[%s1150] ss:$4 sm:$0xff] %v967
      %1210 = vst [vmem:[%s1153] ss:$4 sm:$0xff] %v971
      %v1211 = vld [vmem:[#allocation1] sm:$0xff]
      %v1212 = vld [vmem:[#allocation1 + $0x20] sm:$0xff]
      %1213 = vst [vmem:[#allocation1] ss:$4 sm:$0xff] %v943
      %1214 = vst [vmem:[%s1135] ss:$4 sm:$0xff] %v947
      %1215 = vst [vmem:[%s1138] ss:$4 sm:$0xff] %v951
      %1216 = vst [vmem:[%s1141] ss:$4 sm:$0xff] %v955
      %1217 = vst [vmem:[%s1144] ss:$4 sm:$0xff] %v959
      %1218 = vst [vmem:[%s1147] ss:$4 sm:$0xff] %v963
      %1219 = vst [vmem:[%s1150] ss:$4 sm:$0xff] %v967
      %1220 = vst [vmem:[%s1153] ss:$4 sm:$0xff] %v971
      %v1221 = vld [vmem:[#allocation1] sm:$0xff]
      %v1222 = vld [vmem:[#allocation1 + $0x20] sm:$0xff]
      %1224 = vst [vmem:[#allocation1] ss:$4 sm:$0xff] %v975
      %1226 = vst [vmem:[%s1135] ss:$4 sm:$0xff] %v979
      %1228 = vst [vmem:[%s1138] ss:$4 sm:$0xff] %v983
      %1230 = vst [vmem:[%s1141] ss:$4 sm:$0xff] %v987
      %1232 = vst [vmem:[%s1144] ss:$4 sm:$0xff] %v991
      %1234 = vst [vmem:[%s1147] ss:$4 sm:$0xff] %v995
      %1236 = vst [vmem:[%s1150] ss:$4 sm:$0xff] %v999
      %1238 = vst [vmem:[%s1153] ss:$4 sm:$0xff] %v1003
      %v1239 = vld [vmem:[#allocation1] sm:$0xff]
      %v1240 = vld [vmem:[#allocation1 + $0x20] sm:$0xff]
      %1241 = vst [vmem:[#allocation1] ss:$4 sm:$0xff] %v975
      %1242 = vst [vmem:[%s1135] ss:$4 sm:$0xff] %v979
      %1243 = vst [vmem:[%s1138] ss:$4 sm:$0xff] %v983
      %1244 = vst [vmem:[%s1141] ss:$4 sm:$0xff] %v987
      %1245 = vst [vmem:[%s1144] ss:$4 sm:$0xff] %v991
      %1246 = vst [vmem:[%s1147] ss:$4 sm:$0xff] %v995
      %1247 = vst [vmem:[%s1150] ss:$4 sm:$0xff] %v999
      %1248 = vst [vmem:[%s1153] ss:$4 sm:$0xff] %v1003
      %v1249 = vld [vmem:[#allocation1] sm:$0xff]
      %v1250 = vld [vmem:[#allocation1 + $0x20] sm:$0xff]
      %1252 = vst [vmem:[#allocation1] ss:$4 sm:$0xff] %v1007
      %1254 = vst [vmem:[%s1135] ss:$4 sm:$0xff] %v1011
      %1256 = vst [vmem:[%s1138] ss:$4 sm:$0xff] %v1015
      %1258 = vst [vmem:[%s1141] ss:$4 sm:$0xff] %v1019
      %1260 = vst [vmem:[%s1144] ss:$4 sm:$0xff] %v1023
      %1262 = vst [vmem:[%s1147] ss:$4 sm:$0xff] %v1027
      %1264 = vst [vmem:[%s1150] ss:$4 sm:$0xff] %v1031
      %1266 = vst [vmem:[%s1153] ss:$4 sm:$0xff] %v1035
      %v1267 = vld [vmem:[#allocation1] sm:$0xff]
      %v1268 = vld [vmem:[#allocation1 + $0x20] sm:$0xff]
      %1269 = vst [vmem:[#allocation1] ss:$4 sm:$0xff] %v1007
      %1270 = vst [vmem:[%s1135] ss:$4 sm:$0xff] %v1011
      %1271 = vst [vmem:[%s1138] ss:$4 sm:$0xff] %v1015
      %1272 = vst [vmem:[%s1141] ss:$4 sm:$0xff] %v1019
      %1273 = vst [vmem:[%s1144] ss:$4 sm:$0xff] %v1023
      %1274 = vst [vmem:[%s1147] ss:$4 sm:$0xff] %v1027
      %1275 = vst [vmem:[%s1150] ss:$4 sm:$0xff] %v1031
      %1276 = vst [vmem:[%s1153] ss:$4 sm:$0xff] %v1035
      %v1277 = vld [vmem:[#allocation1] sm:$0xff]
      %v1278 = vld [vmem:[#allocation1 + $0x20] sm:$0xff]
      %1280 = vst [vmem:[#allocation1] ss:$4 sm:$0xff] %v1039
      %1282 = vst [vmem:[%s1135] ss:$4 sm:$0xff] %v1043
      %1284 = vst [vmem:[%s1138] ss:$4 sm:$0xff] %v1047
      %1286 = vst [vmem:[%s1141] ss:$4 sm:$0xff] %v1051
      %1288 = vst [vmem:[%s1144] ss:$4 sm:$0xff] %v1055
      %1290 = vst [vmem:[%s1147] ss:$4 sm:$0xff] %v1059
      %1292 = vst [vmem:[%s1150] ss:$4 sm:$0xff] %v1063
      %1294 = vst [vmem:[%s1153] ss:$4 sm:$0xff] %v1067
      %v1295 = vld [vmem:[#allocation1] sm:$0xff]
      %v1296 = vld [vmem:[#allocation1 + $0x20] sm:$0xff]
      %1297 = vst [vmem:[#allocation1] ss:$4 sm:$0xff] %v1039
      %1298 = vst [vmem:[%s1135] ss:$4 sm:$0xff] %v1043
      %1299 = vst [vmem:[%s1138] ss:$4 sm:$0xff] %v1047
      %1300 = vst [vmem:[%s1141] ss:$4 sm:$0xff] %v1051
      %1301 = vst [vmem:[%s1144] ss:$4 sm:$0xff] %v1055
      %1302 = vst [vmem:[%s1147] ss:$4 sm:$0xff] %v1059
      %1303 = vst [vmem:[%s1150] ss:$4 sm:$0xff] %v1063
      %1304 = vst [vmem:[%s1153] ss:$4 sm:$0xff] %v1067
      %v1305 = vld [vmem:[#allocation1] sm:$0xff]
      %v1306 = vld [vmem:[#allocation1 + $0x20] sm:$0xff]
      %1308 = vst [vmem:[#allocation1] ss:$4 sm:$0xff] %v1071
      %1310 = vst [vmem:[%s1135] ss:$4 sm:$0xff] %v1075
      %1312 = vst [vmem:[%s1138] ss:$4 sm:$0xff] %v1079
      %1314 = vst [vmem:[%s1141] ss:$4 sm:$0xff] %v1083
      %1316 = vst [vmem:[%s1144] ss:$4 sm:$0xff] %v1087
      %1318 = vst [vmem:[%s1147] ss:$4 sm:$0xff] %v1091
      %1320 = vst [vmem:[%s1150] ss:$4 sm:$0xff] %v1095
      %1322 = vst [vmem:[%s1153] ss:$4 sm:$0xff] %v1099
      %v1323 = vld [vmem:[#allocation1] sm:$0xff]
      %v1324 = vld [vmem:[#allocation1 + $0x20] sm:$0xff]
      %1325 = vst [vmem:[#allocation1] ss:$4 sm:$0xff] %v1071
      %1326 = vst [vmem:[%s1135] ss:$4 sm:$0xff] %v1075
      %1327 = vst [vmem:[%s1138] ss:$4 sm:$0xff] %v1079
      %1328 = vst [vmem:[%s1141] ss:$4 sm:$0xff] %v1083
      %1329 = vst [vmem:[%s1144] ss:$4 sm:$0xff] %v1087
      %1330 = vst [vmem:[%s1147] ss:$4 sm:$0xff] %v1091
      %1331 = vst [vmem:[%s1150] ss:$4 sm:$0xff] %v1095
      %1332 = vst [vmem:[%s1153] ss:$4 sm:$0xff] %v1099
      %v1333 = vld [vmem:[#allocation1] sm:$0xff]
      %v1334 = vld [vmem:[#allocation1 + $0x20] sm:$0xff]
      %1336 = vst [vmem:[#allocation1] ss:$4 sm:$0xff] %v1103
      %1338 = vst [vmem:[%s1135] ss:$4 sm:$0xff] %v1107
      %1340 = vst [vmem:[%s1138] ss:$4 sm:$0xff] %v1111
      %1342 = vst [vmem:[%s1141] ss:$4 sm:$0xff] %v1115
      %1344 = vst [vmem:[%s1144] ss:$4 sm:$0xff] %v1119
      %1346 = vst [vmem:[%s1147] ss:$4 sm:$0xff] %v1123
      %1348 = vst [vmem:[%s1150] ss:$4 sm:$0xff] %v1127
      %1350 = vst [vmem:[%s1153] ss:$4 sm:$0xff] %v1131
      %v1351 = vld [vmem:[#allocation1] sm:$0xff]
      %v1352 = vld [vmem:[#allocation1 + $0x20] sm:$0xff]
      %1353 = vst [vmem:[#allocation1] ss:$4 sm:$0xff] %v1103
      %1354 = vst [vmem:[%s1135] ss:$4 sm:$0xff] %v1107
      %1355 = vst [vmem:[%s1138] ss:$4 sm:$0xff] %v1111
      %1356 = vst [vmem:[%s1141] ss:$4 sm:$0xff] %v1115
      %1357 = vst [vmem:[%s1144] ss:$4 sm:$0xff] %v1119
      %1358 = vst [vmem:[%s1147] ss:$4 sm:$0xff] %v1123
      %1359 = vst [vmem:[%s1150] ss:$4 sm:$0xff] %v1127
      %1360 = vst [vmem:[%s1153] ss:$4 sm:$0xff] %v1131
      %v1361 = vld [vmem:[#allocation1] sm:$0xff]
      %v1362 = vld [vmem:[#allocation1 + $0x20] sm:$0xff]
      %vm1363 = vsmask.f32 256
      %vm1364 = vsmask.f32 4368
      %vm1365 = vmor %vm1363, %vm1364
      %v1366 = vshrl.u32 %v1155, 16
      %v1368 = vrot.slane %v1366, 7
      %v1369 = vshll.u32 %v1155, 16
      %v1371 = vor.u32 %v1368, %v1369
      %v1372 = vrot.slane %v1368, 4
      %v1373 = vshrl.u32 %v1156, 16
      %v1375 = vrot.slane %v1373, 7
      %v1376 = vshll.u32 %v1156, 16
      %v1378 = vor.u32 %v1375, %v1376
      %v1379 = vsel %vm1365, %v1372, %v1378
      %v1380 = vrot.slane %v1375, 4
      %v1381 = vshrl.u32 %v1165, 16
      %v1383 = vrot.slane %v1381, 7
      %v1384 = vshll.u32 %v1165, 16
      %v1386 = vor.u32 %v1383, %v1384
      %v1387 = vrot.slane %v1383, 4
      %v1388 = vshrl.u32 %v1166, 16
      %v1390 = vrot.slane %v1388, 7
      %v1391 = vshll.u32 %v1166, 16
      %v1393 = vor.u32 %v1390, %v1391
      %v1394 = vsel %vm1365, %v1387, %v1393
      %v1395 = vrot.slane %v1390, 4
      %v1396 = vshrl.u32 %v1183, 16
      %v1398 = vrot.slane %v1396, 7
      %v1399 = vshll.u32 %v1183, 16
      %v1401 = vor.u32 %v1398, %v1399
      %v1402 = vrot.slane %v1398, 4
      %v1403 = vshrl.u32 %v1184, 16
      %v1405 = vrot.slane %v1403, 7
      %v1406 = vshll.u32 %v1184, 16
      %v1408 = vor.u32 %v1405, %v1406
      %v1409 = vsel %vm1365, %v1402, %v1408
      %v1410 = vrot.slane %v1405, 4
      %v1411 = vshrl.u32 %v1193, 16
      %v1413 = vrot.slane %v1411, 7
      %v1414 = vshll.u32 %v1193, 16
      %v1416 = vor.u32 %v1413, %v1414
      %v1417 = vrot.slane %v1413, 4
      %v1418 = vshrl.u32 %v1194, 16
      %v1420 = vrot.slane %v1418, 7
      %v1421 = vshll.u32 %v1194, 16
      %v1423 = vor.u32 %v1420, %v1421
      %v1424 = vsel %vm1365, %v1417, %v1423
      %v1425 = vrot.slane %v1420, 4
      %v1426 = vshrl.u32 %v1211, 16
      %v1428 = vrot.slane %v1426, 7
      %v1429 = vshll.u32 %v1211, 16
      %v1431 = vor.u32 %v1428, %v1429
      %v1432 = vrot.slane %v1428, 4
      %v1433 = vshrl.u32 %v1212, 16
      %v1435 = vrot.slane %v1433, 7
      %v1436 = vshll.u32 %v1212, 16
      %v1438 = vor.u32 %v1435, %v1436
      %v1439 = vsel %vm1365, %v1432, %v1438
      %v1440 = vrot.slane %v1435, 4
      %v1441 = vshrl.u32 %v1221, 16
      %v1443 = vrot.slane %v1441, 7
      %v1444 = vshll.u32 %v1221, 16
      %v1446 = vor.u32 %v1443, %v1444
      %v1447 = vrot.slane %v1443, 4
      %v1448 = vshrl.u32 %v1222, 16
      %v1450 = vrot.slane %v1448, 7
      %v1451 = vshll.u32 %v1222, 16
      %v1453 = vor.u32 %v1450, %v1451
      %v1454 = vsel %vm1365, %v1447, %v1453
      %v1455 = vrot.slane %v1450, 4
      %v1456 = vshrl.u32 %v1239, 16
      %v1458 = vrot.slane %v1456, 7
      %v1459 = vshll.u32 %v1239, 16
      %v1461 = vor.u32 %v1458, %v1459
      %v1462 = vrot.slane %v1458, 4
      %v1463 = vshrl.u32 %v1240, 16
      %v1465 = vrot.slane %v1463, 7
      %v1466 = vshll.u32 %v1240, 16
      %v1468 = vor.u32 %v1465, %v1466
      %v1469 = vsel %vm1365, %v1462, %v1468
      %v1470 = vrot.slane %v1465, 4
      %v1471 = vshrl.u32 %v1249, 16
      %v1473 = vrot.slane %v1471, 7
      %v1474 = vshll.u32 %v1249, 16
      %v1476 = vor.u32 %v1473, %v1474
      %v1477 = vrot.slane %v1473, 4
      %v1478 = vshrl.u32 %v1250, 16
      %v1480 = vrot.slane %v1478, 7
      %v1481 = vshll.u32 %v1250, 16
      %v1483 = vor.u32 %v1480, %v1481
      %v1484 = vsel %vm1365, %v1477, %v1483
      %v1485 = vrot.slane %v1480, 4
      %v1486 = vshrl.u32 %v1267, 16
      %v1488 = vrot.slane %v1486, 7
      %v1489 = vshll.u32 %v1267, 16
      %v1491 = vor.u32 %v1488, %v1489
      %v1492 = vrot.slane %v1488, 4
      %v1493 = vshrl.u32 %v1268, 16
      %v1495 = vrot.slane %v1493, 7
      %v1496 = vshll.u32 %v1268, 16
      %v1498 = vor.u32 %v1495, %v1496
      %v1499 = vsel %vm1365, %v1492, %v1498
      %v1500 = vrot.slane %v1495, 4
      %v1501 = vshrl.u32 %v1277, 16
      %v1503 = vrot.slane %v1501, 7
      %v1504 = vshll.u32 %v1277, 16
      %v1506 = vor.u32 %v1503, %v1504
      %v1507 = vrot.slane %v1503, 4
      %v1508 = vshrl.u32 %v1278, 16
      %v1510 = vrot.slane %v1508, 7
      %v1511 = vshll.u32 %v1278, 16
      %v1513 = vor.u32 %v1510, %v1511
      %v1514 = vsel %vm1365, %v1507, %v1513
      %v1515 = vrot.slane %v1510, 4
      %v1516 = vshrl.u32 %v1295, 16
      %v1518 = vrot.slane %v1516, 7
      %v1519 = vshll.u32 %v1295, 16
      %v1521 = vor.u32 %v1518, %v1519
      %v1522 = vrot.slane %v1518, 4
      %v1523 = vshrl.u32 %v1296, 16
      %v1525 = vrot.slane %v1523, 7
      %v1526 = vshll.u32 %v1296, 16
      %v1528 = vor.u32 %v1525, %v1526
      %v1529 = vsel %vm1365, %v1522, %v1528
      %v1530 = vrot.slane %v1525, 4
      %v1531 = vshrl.u32 %v1305, 16
      %v1533 = vrot.slane %v1531, 7
      %v1534 = vshll.u32 %v1305, 16
      %v1536 = vor.u32 %v1533, %v1534
      %v1537 = vrot.slane %v1533, 4
      %v1538 = vshrl.u32 %v1306, 16
      %v1540 = vrot.slane %v1538, 7
      %v1541 = vshll.u32 %v1306, 16
      %v1543 = vor.u32 %v1540, %v1541
      %v1544 = vsel %vm1365, %v1537, %v1543
      %v1545 = vrot.slane %v1540, 4
      %v1546 = vshrl.u32 %v1323, 16
      %v1548 = vrot.slane %v1546, 7
      %v1549 = vshll.u32 %v1323, 16
      %v1551 = vor.u32 %v1548, %v1549
      %v1552 = vrot.slane %v1548, 4
      %v1553 = vshrl.u32 %v1324, 16
      %v1555 = vrot.slane %v1553, 7
      %v1556 = vshll.u32 %v1324, 16
      %v1558 = vor.u32 %v1555, %v1556
      %v1559 = vsel %vm1365, %v1552, %v1558
      %v1560 = vrot.slane %v1555, 4
      %v1561 = vshrl.u32 %v1333, 16
      %v1563 = vrot.slane %v1561, 7
      %v1564 = vshll.u32 %v1333, 16
      %v1566 = vor.u32 %v1563, %v1564
      %v1567 = vrot.slane %v1563, 4
      %v1568 = vshrl.u32 %v1334, 16
      %v1570 = vrot.slane %v1568, 7
      %v1571 = vshll.u32 %v1334, 16
      %v1573 = vor.u32 %v1570, %v1571
      %v1574 = vsel %vm1365, %v1567, %v1573
      %v1575 = vrot.slane %v1570, 4
      %v1576 = vshrl.u32 %v1351, 16
      %v1578 = vrot.slane %v1576, 7
      %v1579 = vshll.u32 %v1351, 16
      %v1581 = vor.u32 %v1578, %v1579
      %v1582 = vrot.slane %v1578, 4
      %v1583 = vshrl.u32 %v1352, 16
      %v1585 = vrot.slane %v1583, 7
      %v1586 = vshll.u32 %v1352, 16
      %v1588 = vor.u32 %v1585, %v1586
      %v1589 = vsel %vm1365, %v1582, %v1588
      %v1590 = vrot.slane %v1585, 4
      %v1591 = vshrl.u32 %v1361, 16
      %v1593 = vrot.slane %v1591, 7
      %v1594 = vshll.u32 %v1361, 16
      %v1596 = vor.u32 %v1593, %v1594
      %v1597 = vrot.slane %v1593, 4
      %v1598 = vshrl.u32 %v1362, 16
      %v1600 = vrot.slane %v1598, 7
      %v1601 = vshll.u32 %v1362, 16
      %v1603 = vor.u32 %v1600, %v1601
      %v1604 = vsel %vm1365, %v1597, %v1603
      %v1605 = vrot.slane %v1600, 4
      %1606 = vrot.lane.b32.xlu0 %v1371, 4
      %v1607 = vpop.permute.xlu0 %1606
      %1608 = vrot.lane.b32.xlu0 %v1379, 4
      %v1609 = vpop.permute.xlu0 %1608
      %1610 = vrot.lane.b32.xlu0 %v1380, 4
      %v1611 = vpop.permute.xlu0 %1610
      %1612 = vrot.lane.b32.xlu0 %v1386, 4
      %v1613 = vpop.permute.xlu0 %1612
      %1614 = vrot.lane.b32.xlu0 %v1394, 4
      %v1615 = vpop.permute.xlu0 %1614
      %1616 = vrot.lane.b32.xlu0 %v1395, 4
      %v1617 = vpop.permute.xlu0 %1616
      %1618 = vrot.lane.b32.xlu0 %v1401, 4
      %v1619 = vpop.permute.xlu0 %1618
      %1620 = vrot.lane.b32.xlu0 %v1409, 4
      %v1621 = vpop.permute.xlu0 %1620
      %1622 = vrot.lane.b32.xlu0 %v1410, 4
      %v1623 = vpop.permute.xlu0 %1622
      %1624 = vrot.lane.b32.xlu0 %v1416, 4
      %v1625 = vpop.permute.xlu0 %1624
      %1626 = vrot.lane.b32.xlu0 %v1424, 4
      %v1627 = vpop.permute.xlu0 %1626
      %1628 = vrot.lane.b32.xlu0 %v1425, 4
      %v1629 = vpop.permute.xlu0 %1628
      %1630 = vrot.lane.b32.xlu0 %v1431, 4
      %v1631 = vpop.permute.xlu0 %1630
      %1632 = vrot.lane.b32.xlu0 %v1439, 4
      %v1633 = vpop.permute.xlu0 %1632
      %1634 = vrot.lane.b32.xlu0 %v1440, 4
      %v1635 = vpop.permute.xlu0 %1634
      %1636 = vrot.lane.b32.xlu0 %v1446, 4
      %v1637 = vpop.permute.xlu0 %1636
      %1638 = vrot.lane.b32.xlu0 %v1454, 4
      %v1639 = vpop.permute.xlu0 %1638
      %1640 = vrot.lane.b32.xlu0 %v1455, 4
      %v1641 = vpop.permute.xlu0 %1640
      %1642 = vrot.lane.b32.xlu0 %v1461, 4
      %v1643 = vpop.permute.xlu0 %1642
      %1644 = vrot.lane.b32.xlu0 %v1469, 4
      %v1645 = vpop.permute.xlu0 %1644
      %1646 = vrot.lane.b32.xlu0 %v1470, 4
      %v1647 = vpop.permute.xlu0 %1646
      %1648 = vrot.lane.b32.xlu0 %v1476, 4
      %v1649 = vpop.permute.xlu0 %1648
      %1650 = vrot.lane.b32.xlu0 %v1484, 4
      %v1651 = vpop.permute.xlu0 %1650
      %1652 = vrot.lane.b32.xlu0 %v1485, 4
      %v1653 = vpop.permute.xlu0 %1652
      %1654 = vrot.lane.b32.xlu0 %v1491, 4
      %v1655 = vpop.permute.xlu0 %1654
      %1656 = vrot.lane.b32.xlu0 %v1499, 4
      %v1657 = vpop.permute.xlu0 %1656
      %1658 = vrot.lane.b32.xlu0 %v1500, 4
      %v1659 = vpop.permute.xlu0 %1658
      %1660 = vrot.lane.b32.xlu0 %v1506, 4
      %v1661 = vpop.permute.xlu0 %1660
      %1662 = vrot.lane.b32.xlu0 %v1514, 4
      %v1663 = vpop.permute.xlu0 %1662
      %1664 = vrot.lane.b32.xlu0 %v1515, 4
      %v1665 = vpop.permute.xlu0 %1664
      %1666 = vrot.lane.b32.xlu0 %v1521, 4
      %v1667 = vpop.permute.xlu0 %1666
      %1668 = vrot.lane.b32.xlu0 %v1529, 4
      %v1669 = vpop.permute.xlu0 %1668
      %1670 = vrot.lane.b32.xlu0 %v1530, 4
      %v1671 = vpop.permute.xlu0 %1670
      %1672 = vrot.lane.b32.xlu0 %v1536, 4
      %v1673 = vpop.permute.xlu0 %1672
      %1674 = vrot.lane.b32.xlu0 %v1544, 4
      %v1675 = vpop.permute.xlu0 %1674
      %1676 = vrot.lane.b32.xlu0 %v1545, 4
      %v1677 = vpop.permute.xlu0 %1676
      %1678 = vrot.lane.b32.xlu0 %v1551, 4
      %v1679 = vpop.permute.xlu0 %1678
      %1680 = vrot.lane.b32.xlu0 %v1559, 4
      %v1681 = vpop.permute.xlu0 %1680
      %1682 = vrot.lane.b32.xlu0 %v1560, 4
      %v1683 = vpop.permute.xlu0 %1682
      %1684 = vrot.lane.b32.xlu0 %v1566, 4
      %v1685 = vpop.permute.xlu0 %1684
      %1686 = vrot.lane.b32.xlu0 %v1574, 4
      %v1687 = vpop.permute.xlu0 %1686
      %1688 = vrot.lane.b32.xlu0 %v1575, 4
      %v1689 = vpop.permute.xlu0 %1688
      %1690 = vrot.lane.b32.xlu0 %v1581, 4
      %v1691 = vpop.permute.xlu0 %1690
      %1692 = vrot.lane.b32.xlu0 %v1589, 4
      %v1693 = vpop.permute.xlu0 %1692
      %1694 = vrot.lane.b32.xlu0 %v1590, 4
      %v1695 = vpop.permute.xlu0 %1694
      %1696 = vrot.lane.b32.xlu0 %v1596, 4
      %v1697 = vpop.permute.xlu0 %1696
      %1698 = vrot.lane.b32.xlu0 %v1604, 4
      %v1699 = vpop.permute.xlu0 %1698
      %1700 = vrot.lane.b32.xlu0 %v1605, 4
      %v1701 = vpop.permute.xlu0 %1700
      %s1750 = scalar_lea.vmem [#allocation2], 12
      %vm1751 = vcmask 60448
      %vm1752 = vsmask.f32 7938
      %vm1753 = vmand %vm1751, %vm1752
      %v1754 = vld [vmem:[%s1750] sm:$0xf]
      %v1755 = vsel %vm1753, %v1607, %v1754
      %1756 = vst [vmem:[%s1750] sm:$0xf] %v1755
      %vm1757 = vcmask 60448
      %1758 = vst.msk [vmem:[%s1750 + $0x4] sm:$0xf] %vm1757, %v1609
      %vm1759 = vcmask 57376
      %vm1760 = vmand %vm1759, %vm1363
      %v1761 = vld [vmem:[%s1750 + $0x8] sm:$0x1]
      %v1762 = vsel %vm1760, %v1611, %v1761
      %1763 = vst [vmem:[%s1750 + $0x8] sm:$0x1] %v1762
      %v1764 = vld [vmem:[%s1750 + $0xc] sm:$0xf]
      %v1765 = vsel %vm1753, %v1613, %v1764
      %1766 = vst [vmem:[%s1750 + $0xc] sm:$0xf] %v1765
      %1767 = vst.msk [vmem:[%s1750 + $0x10] sm:$0xf] %vm1757, %v1615
      %v1768 = vld [vmem:[%s1750 + $0x14] sm:$0x1]
      %v1769 = vsel %vm1760, %v1617, %v1768
      %1770 = vst [vmem:[%s1750 + $0x14] sm:$0x1] %v1769
      %v1771 = vld [vmem:[%s1750 + $0x18] sm:$0xf]
      %v1772 = vsel %vm1753, %v1619, %v1771
      %1773 = vst [vmem:[%s1750 + $0x18] sm:$0xf] %v1772
      %1774 = vst.msk [vmem:[%s1750 + $0x1c] sm:$0xf] %vm1757, %v1621
      %v1775 = vld [vmem:[%s1750 + $0x20] sm:$0x1]
      %v1776 = vsel %vm1760, %v1623, %v1775
      %1777 = vst [vmem:[%s1750 + $0x20] sm:$0x1] %v1776
      %v1778 = vld [vmem:[%s1750 + $0x24] sm:$0xf]
      %v1779 = vsel %vm1753, %v1625, %v1778
      %1780 = vst [vmem:[%s1750 + $0x24] sm:$0xf] %v1779
      %1781 = vst.msk [vmem:[%s1750 + $0x28] sm:$0xf] %vm1757, %v1627
      %v1782 = vld [vmem:[%s1750 + $0x2c] sm:$0x1]
      %v1783 = vsel %vm1760, %v1629, %v1782
      %1784 = vst [vmem:[%s1750 + $0x2c] sm:$0x1] %v1783
      %v1785 = vld [vmem:[%s1750 + $0x30] sm:$0xf]
      %v1786 = vsel %vm1753, %v1631, %v1785
      %1787 = vst [vmem:[%s1750 + $0x30] sm:$0xf] %v1786
      %1788 = vst.msk [vmem:[%s1750 + $0x34] sm:$0xf] %vm1757, %v1633
      %v1789 = vld [vmem:[%s1750 + $0x38] sm:$0x1]
      %v1790 = vsel %vm1760, %v1635, %v1789
      %1791 = vst [vmem:[%s1750 + $0x38] sm:$0x1] %v1790
      %v1792 = vld [vmem:[%s1750 + $0x3c] sm:$0xf]
      %v1793 = vsel %vm1753, %v1637, %v1792
      %1794 = vst [vmem:[%s1750 + $0x3c] sm:$0xf] %v1793
      %1795 = vst.msk [vmem:[%s1750 + $0x40] sm:$0xf] %vm1757, %v1639
      %v1796 = vld [vmem:[%s1750 + $0x44] sm:$0x1]
      %v1797 = vsel %vm1760, %v1641, %v1796
      %1798 = vst [vmem:[%s1750 + $0x44] sm:$0x1] %v1797
      %v1799 = vld [vmem:[%s1750 + $0x48] sm:$0xf]
      %v1800 = vsel %vm1753, %v1643, %v1799
      %1801 = vst [vmem:[%s1750 + $0x48] sm:$0xf] %v1800
      %1802 = vst.msk [vmem:[%s1750 + $0x4c] sm:$0xf] %vm1757, %v1645
      %v1803 = vld [vmem:[%s1750 + $0x50] sm:$0x1]
      %v1804 = vsel %vm1760, %v1647, %v1803
      %1805 = vst [vmem:[%s1750 + $0x50] sm:$0x1] %v1804
      %v1806 = vld [vmem:[%s1750 + $0x54] sm:$0xf]
      %v1807 = vsel %vm1753, %v1649, %v1806
      %1808 = vst [vmem:[%s1750 + $0x54] sm:$0xf] %v1807
      %1809 = vst.msk [vmem:[%s1750 + $0x58] sm:$0xf] %vm1757, %v1651
      %v1810 = vld [vmem:[%s1750 + $0x5c] sm:$0x1]
      %v1811 = vsel %vm1760, %v1653, %v1810
      %1812 = vst [vmem:[%s1750 + $0x5c] sm:$0x1] %v1811
      %v1813 = vld [vmem:[%s1750 + $0x60] sm:$0xf]
      %v1814 = vsel %vm1753, %v1655, %v1813
      %1815 = vst [vmem:[%s1750 + $0x60] sm:$0xf] %v1814
      %1816 = vst.msk [vmem:[%s1750 + $0x64] sm:$0xf] %vm1757, %v1657
      %v1817 = vld [vmem:[%s1750 + $0x68] sm:$0x1]
      %v1818 = vsel %vm1760, %v1659, %v1817
      %1819 = vst [vmem:[%s1750 + $0x68] sm:$0x1] %v1818
      %v1820 = vld [vmem:[%s1750 + $0x6c] sm:$0xf]
      %v1821 = vsel %vm1753, %v1661, %v1820
      %1822 = vst [vmem:[%s1750 + $0x6c] sm:$0xf] %v1821
      %1823 = vst.msk [vmem:[%s1750 + $0x70] sm:$0xf] %vm1757, %v1663
      %v1824 = vld [vmem:[%s1750 + $0x74] sm:$0x1]
      %v1825 = vsel %vm1760, %v1665, %v1824
      %1826 = vst [vmem:[%s1750 + $0x74] sm:$0x1] %v1825
      %v1827 = vld [vmem:[%s1750 + $0x78] sm:$0xf]
      %v1828 = vsel %vm1753, %v1667, %v1827
      %1829 = vst [vmem:[%s1750 + $0x78] sm:$0xf] %v1828
      %1830 = vst.msk [vmem:[%s1750 + $0x7c] sm:$0xf] %vm1757, %v1669
      %v1831 = vld [vmem:[%s1750 + $0x80] sm:$0x1]
      %v1832 = vsel %vm1760, %v1671, %v1831
      %1833 = vst [vmem:[%s1750 + $0x80] sm:$0x1] %v1832
      %v1834 = vld [vmem:[%s1750 + $0x84] sm:$0xf]
      %v1835 = vsel %vm1753, %v1673, %v1834
      %1836 = vst [vmem:[%s1750 + $0x84] sm:$0xf] %v1835
      %1837 = vst.msk [vmem:[%s1750 + $0x88] sm:$0xf] %vm1757, %v1675
      %v1838 = vld [vmem:[%s1750 + $0x8c] sm:$0x1]
      %v1839 = vsel %vm1760, %v1677, %v1838
      %1840 = vst [vmem:[%s1750 + $0x8c] sm:$0x1] %v1839
      %v1841 = vld [vmem:[%s1750 + $0x90] sm:$0xf]
      %v1842 = vsel %vm1753, %v1679, %v1841
      %1843 = vst [vmem:[%s1750 + $0x90] sm:$0xf] %v1842
      %1844 = vst.msk [vmem:[%s1750 + $0x94] sm:$0xf] %vm1757, %v1681
      %v1845 = vld [vmem:[%s1750 + $0x98] sm:$0x1]
      %v1846 = vsel %vm1760, %v1683, %v1845
      %1847 = vst [vmem:[%s1750 + $0x98] sm:$0x1] %v1846
      %v1848 = vld [vmem:[%s1750 + $0x9c] sm:$0xf]
      %v1849 = vsel %vm1753, %v1685, %v1848
      %1850 = vst [vmem:[%s1750 + $0x9c] sm:$0xf] %v1849
      %1851 = vst.msk [vmem:[%s1750 + $0xa0] sm:$0xf] %vm1757, %v1687
      %v1852 = vld [vmem:[%s1750 + $0xa4] sm:$0x1]
      %v1853 = vsel %vm1760, %v1689, %v1852
      %1854 = vst [vmem:[%s1750 + $0xa4] sm:$0x1] %v1853
      %v1855 = vld [vmem:[%s1750 + $0xa8] sm:$0xf]
      %v1856 = vsel %vm1753, %v1691, %v1855
      %1857 = vst [vmem:[%s1750 + $0xa8] sm:$0xf] %v1856
      %1858 = vst.msk [vmem:[%s1750 + $0xac] sm:$0xf] %vm1757, %v1693
      %v1859 = vld [vmem:[%s1750 + $0xb0] sm:$0x1]
      %v1860 = vsel %vm1760, %v1695, %v1859
      %1861 = vst [vmem:[%s1750 + $0xb0] sm:$0x1] %v1860
      %v1862 = vld [vmem:[%s1750 + $0xb4] sm:$0xf]
      %v1863 = vsel %vm1753, %v1697, %v1862
      %1864 = vst [vmem:[%s1750 + $0xb4] sm:$0xf] %v1863
      %1865 = vst.msk [vmem:[%s1750 + $0xb8] sm:$0xf] %vm1757, %v1699
      %v1866 = vld [vmem:[%s1750 + $0xbc] sm:$0x1]
      %v1867 = vsel %vm1760, %v1701, %v1866
      %1868 = vst [vmem:[%s1750 + $0xbc] sm:$0x1] %v1867
      %v1869 = vld [vmem:[#allocation2] sm:$0xf]
      %v1870 = vld [vmem:[#allocation2 + $0x4] sm:$0xf]
      %v1871 = vld [vmem:[#allocation2 + $0x8] sm:$0x1]
      %v1872 = vld [vmem:[#allocation2 + $0xc] sm:$0xf]
      %v1873 = vld [vmem:[#allocation2 + $0x10] sm:$0xf]
      %v1874 = vld [vmem:[#allocation2 + $0x14] sm:$0x1]
      %v1875 = vld [vmem:[#allocation2 + $0x18] sm:$0xf]
      %v1876 = vld [vmem:[#allocation2 + $0x1c] sm:$0xf]
      %v1877 = vld [vmem:[#allocation2 + $0x20] sm:$0x1]
      %v1878 = vld [vmem:[#allocation2 + $0x24] sm:$0xf]
      %v1879 = vld [vmem:[#allocation2 + $0x28] sm:$0xf]
      %v1880 = vld [vmem:[#allocation2 + $0x2c] sm:$0x1]
      %v1881 = vld [vmem:[#allocation2 + $0x30] sm:$0xf]
      %v1882 = vld [vmem:[#allocation2 + $0x34] sm:$0xf]
      %v1883 = vld [vmem:[#allocation2 + $0x38] sm:$0x1]
      %v1884 = vld [vmem:[#allocation2 + $0x3c] sm:$0xf]
      %v1885 = vld [vmem:[#allocation2 + $0x40] sm:$0xf]
      %v1886 = vld [vmem:[#allocation2 + $0x44] sm:$0x1]
      %v1887 = vld [vmem:[#allocation2 + $0x48] sm:$0xf]
      %v1888 = vld [vmem:[#allocation2 + $0x4c] sm:$0xf]
      %v1889 = vld [vmem:[#allocation2 + $0x50] sm:$0x1]
      %v1890 = vld [vmem:[#allocation2 + $0x54] sm:$0xf]
      %v1891 = vld [vmem:[#allocation2 + $0x58] sm:$0xf]
      %v1892 = vld [vmem:[#allocation2 + $0x5c] sm:$0x1]
      %v1893 = vld [vmem:[#allocation2 + $0x60] sm:$0xf]
      %v1894 = vld [vmem:[#allocation2 + $0x64] sm:$0xf]
      %v1895 = vld [vmem:[#allocation2 + $0x68] sm:$0x1]
      %v1896 = vld [vmem:[#allocation2 + $0x6c] sm:$0xf]
      %v1897 = vld [vmem:[#allocation2 + $0x70] sm:$0xf]
      %v1898 = vld [vmem:[#allocation2 + $0x74] sm:$0x1]
      %v1899 = vld [vmem:[#allocation2 + $0x78] sm:$0xf]
      %v1900 = vld [vmem:[#allocation2 + $0x7c] sm:$0xf]
      %v1901 = vld [vmem:[#allocation2 + $0x80] sm:$0x1]
      %v1902 = vld [vmem:[#allocation2 + $0x84] sm:$0xf]
      %v1903 = vld [vmem:[#allocation2 + $0x88] sm:$0xf]
      %v1904 = vld [vmem:[#allocation2 + $0x8c] sm:$0x1]
      %v1905 = vld [vmem:[#allocation2 + $0x90] sm:$0xf]
      %v1906 = vld [vmem:[#allocation2 + $0x94] sm:$0xf]
      %v1907 = vld [vmem:[#allocation2 + $0x98] sm:$0x1]
      %v1908 = vld [vmem:[#allocation2 + $0x9c] sm:$0xf]
      %v1909 = vld [vmem:[#allocation2 + $0xa0] sm:$0xf]
      %v1910 = vld [vmem:[#allocation2 + $0xa4] sm:$0x1]
      %v1911 = vld [vmem:[#allocation2 + $0xa8] sm:$0xf]
      %v1912 = vld [vmem:[#allocation2 + $0xac] sm:$0xf]
      %v1913 = vld [vmem:[#allocation2 + $0xb0] sm:$0x1]
      %v1914 = vld [vmem:[#allocation2 + $0xb4] sm:$0xf]
      %v1915 = vld [vmem:[#allocation2 + $0xb8] sm:$0xf]
      %v1916 = vld [vmem:[#allocation2 + $0xbc] sm:$0x1]
      %v1917 = vld [vmem:[#allocation2 + $0xc0] sm:$0xf]
      %v1918 = vld [vmem:[#allocation2 + $0xc4] sm:$0xf]
      %v1919 = vld [vmem:[#allocation2 + $0xc8] sm:$0x1]
      %v1920 = vld [vmem:[#allocation2 + $0xcc] sm:$0xf]
      %v1921 = vld [vmem:[#allocation2 + $0xd0] sm:$0xf]
      %v1922 = vld [vmem:[#allocation2 + $0xd4] sm:$0x1]
      %v1955 = vunpack.c.l.b16 %v1869
      %v1956 = vunpack.c.l.b16 %v1870
      %v1957 = vunpack.c.l.b16 %v1872
      %v1958 = vunpack.c.l.b16 %v1873
      %v1959 = vunpack.c.l.b16 %v1875
      %v1960 = vunpack.c.l.b16 %v1876
      %v1961 = vunpack.c.l.b16 %v1878
      %v1962 = vunpack.c.l.b16 %v1879
      %v1963 = vunpack.c.l.b16 %v1881
      %v1964 = vunpack.c.l.b16 %v1882
      %v1965 = vunpack.c.l.b16 %v1884
      %v1966 = vunpack.c.l.b16 %v1885
      %v1967 = vunpack.c.l.b16 %v1887
      %v1968 = vunpack.c.l.b16 %v1888
      %v1969 = vunpack.c.l.b16 %v1890
      %v1970 = vunpack.c.l.b16 %v1891
      %v1971 = vunpack.c.l.b16 %v1893
      %v1972 = vunpack.c.l.b16 %v1894
      %v1973 = vunpack.c.l.b16 %v1896
      %v1974 = vunpack.c.l.b16 %v1897
      %v1975 = vunpack.c.l.b16 %v1899
      %v1976 = vunpack.c.l.b16 %v1900
      %v1977 = vunpack.c.l.b16 %v1902
      %v1978 = vunpack.c.l.b16 %v1903
      %v1979 = vunpack.c.l.b16 %v1905
      %v1980 = vunpack.c.l.b16 %v1906
      %v1981 = vunpack.c.l.b16 %v1908
      %v1982 = vunpack.c.l.b16 %v1909
      %v1983 = vunpack.c.l.b16 %v1911
      %v1984 = vunpack.c.l.b16 %v1912
      %v1985 = vunpack.c.l.b16 %v1914
      %v1986 = vunpack.c.l.b16 %v1915
      %v1987 = vpack.c.b16 %v1956, %v1955
      %v1988 = vpack.c.b16 %v1958, %v1957
      %v1989 = vpack.c.b16 %v1960, %v1959
      %v1990 = vpack.c.b16 %v1962, %v1961
      %v1991 = vpack.c.b16 %v1964, %v1963
      %v1992 = vpack.c.b16 %v1966, %v1965
      %v1993 = vpack.c.b16 %v1968, %v1967
      %v1994 = vpack.c.b16 %v1970, %v1969
      %v1995 = vpack.c.b16 %v1972, %v1971
      %v1996 = vpack.c.b16 %v1974, %v1973
      %v1997 = vpack.c.b16 %v1976, %v1975
      %v1998 = vpack.c.b16 %v1978, %v1977
      %v1999 = vpack.c.b16 %v1980, %v1979
      %v2000 = vpack.c.b16 %v1982, %v1981
      %v2001 = vpack.c.b16 %v1984, %v1983
      %v2002 = vpack.c.b16 %v1986, %v1985
      %v2019 = vunpack.c.l.b16 %v1871
      %v2020 = vunpack.c.l.b16 %v1874
      %v2021 = vunpack.c.l.b16 %v1877
      %v2022 = vunpack.c.l.b16 %v1880
      %v2023 = vunpack.c.l.b16 %v1883
      %v2024 = vunpack.c.l.b16 %v1886
      %v2025 = vunpack.c.l.b16 %v1889
      %v2026 = vunpack.c.l.b16 %v1892
      %v2027 = vunpack.c.l.b16 %v1895
      %v2028 = vunpack.c.l.b16 %v1898
      %v2029 = vunpack.c.l.b16 %v1901
      %v2030 = vunpack.c.l.b16 %v1904
      %v2031 = vunpack.c.l.b16 %v1907
      %v2032 = vunpack.c.l.b16 %v1910
      %v2033 = vunpack.c.l.b16 %v1913
      %v2034 = vunpack.c.l.b16 %v1916
      %v2035 = vpack.c.b16 %v2019, %v2019
      %v2036 = vpack.c.b16 %v2020, %v2020
      %v2037 = vpack.c.b16 %v2021, %v2021
      %v2038 = vpack.c.b16 %v2022, %v2022
      %v2039 = vpack.c.b16 %v2023, %v2023
      %v2040 = vpack.c.b16 %v2024, %v2024
      %v2041 = vpack.c.b16 %v2025, %v2025
      %v2042 = vpack.c.b16 %v2026, %v2026
      %v2043 = vpack.c.b16 %v2027, %v2027
      %v2044 = vpack.c.b16 %v2028, %v2028
      %v2045 = vpack.c.b16 %v2029, %v2029
      %v2046 = vpack.c.b16 %v2030, %v2030
      %v2047 = vpack.c.b16 %v2031, %v2031
      %v2048 = vpack.c.b16 %v2032, %v2032
      %v2049 = vpack.c.b16 %v2033, %v2033
      %v2050 = vpack.c.b16 %v2034, %v2034
      %vm2051 = vsmask.f32 7424
      %v2053 = vshrl.u32 %v1987, 16
      %v2055 = vshll.u32 %v1987, 16
      %v2057 = vrot.slane %v2055, 1
      %v2058 = vor.u32 %v2053, %v2057
      %v2060 = vshll.u32 %v2035, 16
      %v2062 = vrot.slane %v2060, 1
      %v2063 = vsel %vm2051, %v2058, %v2062
      %v2065 = vshrl.u32 %v1988, 16
      %v2067 = vshll.u32 %v1988, 16
      %v2069 = vrot.slane %v2067, 1
      %v2070 = vor.u32 %v2065, %v2069
      %v2072 = vshll.u32 %v2036, 16
      %v2074 = vrot.slane %v2072, 1
      %v2075 = vsel %vm2051, %v2070, %v2074
      %v2077 = vshrl.u32 %v1989, 16
      %v2079 = vshll.u32 %v1989, 16
      %v2081 = vrot.slane %v2079, 1
      %v2082 = vor.u32 %v2077, %v2081
      %v2084 = vshll.u32 %v2037, 16
      %v2086 = vrot.slane %v2084, 1
      %v2087 = vsel %vm2051, %v2082, %v2086
      %v2089 = vshrl.u32 %v1990, 16
      %v2091 = vshll.u32 %v1990, 16
      %v2093 = vrot.slane %v2091, 1
      %v2094 = vor.u32 %v2089, %v2093
      %v2096 = vshll.u32 %v2038, 16
      %v2098 = vrot.slane %v2096, 1
      %v2099 = vsel %vm2051, %v2094, %v2098
      %v2101 = vshrl.u32 %v1991, 16
      %v2103 = vshll.u32 %v1991, 16
      %v2105 = vrot.slane %v2103, 1
      %v2106 = vor.u32 %v2101, %v2105
      %v2108 = vshll.u32 %v2039, 16
      %v2110 = vrot.slane %v2108, 1
      %v2111 = vsel %vm2051, %v2106, %v2110
      %v2113 = vshrl.u32 %v1992, 16
      %v2115 = vshll.u32 %v1992, 16
      %v2117 = vrot.slane %v2115, 1
      %v2118 = vor.u32 %v2113, %v2117
      %v2120 = vshll.u32 %v2040, 16
      %v2122 = vrot.slane %v2120, 1
      %v2123 = vsel %vm2051, %v2118, %v2122
      %v2125 = vshrl.u32 %v1993, 16
      %v2127 = vshll.u32 %v1993, 16
      %v2129 = vrot.slane %v2127, 1
      %v2130 = vor.u32 %v2125, %v2129
      %v2132 = vshll.u32 %v2041, 16
      %v2134 = vrot.slane %v2132, 1
      %v2135 = vsel %vm2051, %v2130, %v2134
      %v2137 = vshrl.u32 %v1994, 16
      %v2139 = vshll.u32 %v1994, 16
      %v2141 = vrot.slane %v2139, 1
      %v2142 = vor.u32 %v2137, %v2141
      %v2144 = vshll.u32 %v2042, 16
      %v2146 = vrot.slane %v2144, 1
      %v2147 = vsel %vm2051, %v2142, %v2146
      %v2149 = vshrl.u32 %v1995, 16
      %v2151 = vshll.u32 %v1995, 16
      %v2153 = vrot.slane %v2151, 1
      %v2154 = vor.u32 %v2149, %v2153
      %v2156 = vshll.u32 %v2043, 16
      %v2158 = vrot.slane %v2156, 1
      %v2159 = vsel %vm2051, %v2154, %v2158
      %v2161 = vshrl.u32 %v1996, 16
      %v2163 = vshll.u32 %v1996, 16
      %v2165 = vrot.slane %v2163, 1
      %v2166 = vor.u32 %v2161, %v2165
      %v2168 = vshll.u32 %v2044, 16
      %v2170 = vrot.slane %v2168, 1
      %v2171 = vsel %vm2051, %v2166, %v2170
      %v2173 = vshrl.u32 %v1997, 16
      %v2175 = vshll.u32 %v1997, 16
      %v2177 = vrot.slane %v2175, 1
      %v2178 = vor.u32 %v2173, %v2177
      %v2180 = vshll.u32 %v2045, 16
      %v2182 = vrot.slane %v2180, 1
      %v2183 = vsel %vm2051, %v2178, %v2182
      %v2185 = vshrl.u32 %v1998, 16
      %v2187 = vshll.u32 %v1998, 16
      %v2189 = vrot.slane %v2187, 1
      %v2190 = vor.u32 %v2185, %v2189
      %v2192 = vshll.u32 %v2046, 16
      %v2194 = vrot.slane %v2192, 1
      %v2195 = vsel %vm2051, %v2190, %v2194
      %v2197 = vshrl.u32 %v1999, 16
      %v2199 = vshll.u32 %v1999, 16
      %v2201 = vrot.slane %v2199, 1
      %v2202 = vor.u32 %v2197, %v2201
      %v2204 = vshll.u32 %v2047, 16
      %v2206 = vrot.slane %v2204, 1
      %v2207 = vsel %vm2051, %v2202, %v2206
      %v2209 = vshrl.u32 %v2000, 16
      %v2211 = vshll.u32 %v2000, 16
      %v2213 = vrot.slane %v2211, 1
      %v2214 = vor.u32 %v2209, %v2213
      %v2216 = vshll.u32 %v2048, 16
      %v2218 = vrot.slane %v2216, 1
      %v2219 = vsel %vm2051, %v2214, %v2218
      %v2221 = vshrl.u32 %v2001, 16
      %v2223 = vshll.u32 %v2001, 16
      %v2225 = vrot.slane %v2223, 1
      %v2226 = vor.u32 %v2221, %v2225
      %v2228 = vshll.u32 %v2049, 16
      %v2230 = vrot.slane %v2228, 1
      %v2231 = vsel %vm2051, %v2226, %v2230
      %v2233 = vshrl.u32 %v2002, 16
      %v2235 = vshll.u32 %v2002, 16
      %v2237 = vrot.slane %v2235, 1
      %v2238 = vor.u32 %v2233, %v2237
      %v2240 = vshll.u32 %v2050, 16
      %v2242 = vrot.slane %v2240, 1
      %v2243 = vsel %vm2051, %v2238, %v2242
      %2244 = vrot.lane.b32.xlu0 %v2063, 8
      %v2245 = vpop.permute.xlu0 %2244
      %2246 = vrot.lane.b32.xlu0 %v2075, 8
      %v2247 = vpop.permute.xlu0 %2246
      %2248 = vrot.lane.b32.xlu0 %v2087, 8
      %v2249 = vpop.permute.xlu0 %2248
      %2250 = vrot.lane.b32.xlu0 %v2099, 8
      %v2251 = vpop.permute.xlu0 %2250
      %2252 = vrot.lane.b32.xlu0 %v2111, 8
      %v2253 = vpop.permute.xlu0 %2252
      %2254 = vrot.lane.b32.xlu0 %v2123, 8
      %v2255 = vpop.permute.xlu0 %2254
      %2256 = vrot.lane.b32.xlu0 %v2135, 8
      %v2257 = vpop.permute.xlu0 %2256
      %2258 = vrot.lane.b32.xlu0 %v2147, 8
      %v2259 = vpop.permute.xlu0 %2258
      %2260 = vrot.lane.b32.xlu0 %v2159, 8
      %v2261 = vpop.permute.xlu0 %2260
      %2262 = vrot.lane.b32.xlu0 %v2171, 8
      %v2263 = vpop.permute.xlu0 %2262
      %2264 = vrot.lane.b32.xlu0 %v2183, 8
      %v2265 = vpop.permute.xlu0 %2264
      %2266 = vrot.lane.b32.xlu0 %v2195, 8
      %v2267 = vpop.permute.xlu0 %2266
      %2268 = vrot.lane.b32.xlu0 %v2207, 8
      %v2269 = vpop.permute.xlu0 %2268
      %2270 = vrot.lane.b32.xlu0 %v2219, 8
      %v2271 = vpop.permute.xlu0 %2270
      %2272 = vrot.lane.b32.xlu0 %v2231, 8
      %v2273 = vpop.permute.xlu0 %2272
      %2274 = vrot.lane.b32.xlu0 %v2243, 8
      %v2275 = vpop.permute.xlu0 %2274
      %vm2276 = vcmask 1046528
      %v2277 = vrot.slane %v1987, 1
      %v2278 = vrot.slane %v2035, 1
      %v2279 = vsel %vm2276, %v2277, %v2278
      %v2280 = vrot.slane %v1988, 1
      %v2281 = vrot.slane %v2036, 1
      %v2282 = vsel %vm2276, %v2280, %v2281
      %v2283 = vrot.slane %v1989, 1
      %v2284 = vrot.slane %v2037, 1
      %v2285 = vsel %vm2276, %v2283, %v2284
      %v2286 = vrot.slane %v1990, 1
      %v2287 = vrot.slane %v2038, 1
      %v2288 = vsel %vm2276, %v2286, %v2287
      %v2289 = vrot.slane %v1991, 1
      %v2290 = vrot.slane %v2039, 1
      %v2291 = vsel %vm2276, %v2289, %v2290
      %v2292 = vrot.slane %v1992, 1
      %v2293 = vrot.slane %v2040, 1
      %v2294 = vsel %vm2276, %v2292, %v2293
      %v2295 = vrot.slane %v1993, 1
      %v2296 = vrot.slane %v2041, 1
      %v2297 = vsel %vm2276, %v2295, %v2296
      %v2298 = vrot.slane %v1994, 1
      %v2299 = vrot.slane %v2042, 1
      %v2300 = vsel %vm2276, %v2298, %v2299
      %v2301 = vrot.slane %v1995, 1
      %v2302 = vrot.slane %v2043, 1
      %v2303 = vsel %vm2276, %v2301, %v2302
      %v2304 = vrot.slane %v1996, 1
      %v2305 = vrot.slane %v2044, 1
      %v2306 = vsel %vm2276, %v2304, %v2305
      %v2307 = vrot.slane %v1997, 1
      %v2308 = vrot.slane %v2045, 1
      %v2309 = vsel %vm2276, %v2307, %v2308
      %v2310 = vrot.slane %v1998, 1
      %v2311 = vrot.slane %v2046, 1
      %v2312 = vsel %vm2276, %v2310, %v2311
      %v2313 = vrot.slane %v1999, 1
      %v2314 = vrot.slane %v2047, 1
      %v2315 = vsel %vm2276, %v2313, %v2314
      %v2316 = vrot.slane %v2000, 1
      %v2317 = vrot.slane %v2048, 1
      %v2318 = vsel %vm2276, %v2316, %v2317
      %v2319 = vrot.slane %v2001, 1
      %v2320 = vrot.slane %v2049, 1
      %v2321 = vsel %vm2276, %v2319, %v2320
      %v2322 = vrot.slane %v2002, 1
      %v2323 = vrot.slane %v2050, 1
      %v2324 = vsel %vm2276, %v2322, %v2323
      %2325 = vrot.lane.b32.xlu0 %v2279, 16
      %v2326 = vpop.permute.xlu0 %2325
      %2327 = vrot.lane.b32.xlu0 %v2282, 16
      %v2328 = vpop.permute.xlu0 %2327
      %2329 = vrot.lane.b32.xlu0 %v2285, 16
      %v2330 = vpop.permute.xlu0 %2329
      %2331 = vrot.lane.b32.xlu0 %v2288, 16
      %v2332 = vpop.permute.xlu0 %2331
      %2333 = vrot.lane.b32.xlu0 %v2291, 16
      %v2334 = vpop.permute.xlu0 %2333
      %2335 = vrot.lane.b32.xlu0 %v2294, 16
      %v2336 = vpop.permute.xlu0 %2335
      %2337 = vrot.lane.b32.xlu0 %v2297, 16
      %v2338 = vpop.permute.xlu0 %2337
      %2339 = vrot.lane.b32.xlu0 %v2300, 16
      %v2340 = vpop.permute.xlu0 %2339
      %2341 = vrot.lane.b32.xlu0 %v2303, 16
      %v2342 = vpop.permute.xlu0 %2341
      %2343 = vrot.lane.b32.xlu0 %v2306, 16
      %v2344 = vpop.permute.xlu0 %2343
      %2345 = vrot.lane.b32.xlu0 %v2309, 16
      %v2346 = vpop.permute.xlu0 %2345
      %2347 = vrot.lane.b32.xlu0 %v2312, 16
      %v2348 = vpop.permute.xlu0 %2347
      %2349 = vrot.lane.b32.xlu0 %v2315, 16
      %v2350 = vpop.permute.xlu0 %2349
      %2351 = vrot.lane.b32.xlu0 %v2318, 16
      %v2352 = vpop.permute.xlu0 %2351
      %2353 = vrot.lane.b32.xlu0 %v2321, 16
      %v2354 = vpop.permute.xlu0 %2353
      %2355 = vrot.lane.b32.xlu0 %v2324, 16
      %v2356 = vpop.permute.xlu0 %2355
      %v2359 = vunpack.c.l.b16 %v1917
      %v2360 = vunpack.c.l.b16 %v1918
      %v2361 = vpack.c.b16 %v2360, %v2359
      %2362 = vrot.lane.b32.xlu0 %v1988, 24
      %v2363 = vpop.permute.xlu0 %2362
      %2364 = vrot.lane.b32.xlu0 %v1989, 24
      %v2365 = vpop.permute.xlu0 %2364
      %2366 = vrot.lane.b32.xlu0 %v1990, 24
      %v2367 = vpop.permute.xlu0 %2366
      %2368 = vrot.lane.b32.xlu0 %v1991, 24
      %v2369 = vpop.permute.xlu0 %2368
      %2370 = vrot.lane.b32.xlu0 %v1992, 24
      %v2371 = vpop.permute.xlu0 %2370
      %2372 = vrot.lane.b32.xlu0 %v1993, 24
      %v2373 = vpop.permute.xlu0 %2372
      %2374 = vrot.lane.b32.xlu0 %v1994, 24
      %v2375 = vpop.permute.xlu0 %2374
      %2376 = vrot.lane.b32.xlu0 %v1995, 24
      %v2377 = vpop.permute.xlu0 %2376
      %2378 = vrot.lane.b32.xlu0 %v1996, 24
      %v2379 = vpop.permute.xlu0 %2378
      %2380 = vrot.lane.b32.xlu0 %v1997, 24
      %v2381 = vpop.permute.xlu0 %2380
      %2382 = vrot.lane.b32.xlu0 %v1998, 24
      %v2383 = vpop.permute.xlu0 %2382
      %2384 = vrot.lane.b32.xlu0 %v1999, 24
      %v2385 = vpop.permute.xlu0 %2384
      %2386 = vrot.lane.b32.xlu0 %v2000, 24
      %v2387 = vpop.permute.xlu0 %2386
      %2388 = vrot.lane.b32.xlu0 %v2001, 24
      %v2389 = vpop.permute.xlu0 %2388
      %2390 = vrot.lane.b32.xlu0 %v2002, 24
      %v2391 = vpop.permute.xlu0 %2390
      %2392 = vrot.lane.b32.xlu0 %v2361, 24
      %v2393 = vpop.permute.xlu0 %2392
      %v2395 = vunpack.c.l.b16 %v1919
      %v2396 = vpack.c.b16 %v2395, %v2395
      %v2398 = vshrl.u32 %v2361, 16
      %v2400 = vshll.u32 %v2361, 16
      %v2402 = vrot.slane %v2400, 1
      %v2403 = vor.u32 %v2398, %v2402
      %v2405 = vshll.u32 %v2396, 16
      %v2407 = vrot.slane %v2405, 1
      %v2408 = vsel %vm2051, %v2403, %v2407
      %2409 = vrot.lane.b32.xlu0 %v2075, 32
      %v2410 = vpop.permute.xlu0 %2409
      %2411 = vrot.lane.b32.xlu0 %v2087, 32
      %v2412 = vpop.permute.xlu0 %2411
      %2413 = vrot.lane.b32.xlu0 %v2099, 32
      %v2414 = vpop.permute.xlu0 %2413
      %2415 = vrot.lane.b32.xlu0 %v2111, 32
      %v2416 = vpop.permute.xlu0 %2415
      %2417 = vrot.lane.b32.xlu0 %v2123, 32
      %v2418 = vpop.permute.xlu0 %2417
      %2419 = vrot.lane.b32.xlu0 %v2135, 32
      %v2420 = vpop.permute.xlu0 %2419
      %2421 = vrot.lane.b32.xlu0 %v2147, 32
      %v2422 = vpop.permute.xlu0 %2421
      %2423 = vrot.lane.b32.xlu0 %v2159, 32
      %v2424 = vpop.permute.xlu0 %2423
      %2425 = vrot.lane.b32.xlu0 %v2171, 32
      %v2426 = vpop.permute.xlu0 %2425
      %2427 = vrot.lane.b32.xlu0 %v2183, 32
      %v2428 = vpop.permute.xlu0 %2427
      %2429 = vrot.lane.b32.xlu0 %v2195, 32
      %v2430 = vpop.permute.xlu0 %2429
      %2431 = vrot.lane.b32.xlu0 %v2207, 32
      %v2432 = vpop.permute.xlu0 %2431
      %2433 = vrot.lane.b32.xlu0 %v2219, 32
      %v2434 = vpop.permute.xlu0 %2433
      %2435 = vrot.lane.b32.xlu0 %v2231, 32
      %v2436 = vpop.permute.xlu0 %2435
      %2437 = vrot.lane.b32.xlu0 %v2243, 32
      %v2438 = vpop.permute.xlu0 %2437
      %2439 = vrot.lane.b32.xlu0 %v2408, 32
      %v2440 = vpop.permute.xlu0 %2439
      %v2441 = vrot.slane %v2361, 1
      %v2442 = vrot.slane %v2396, 1
      %v2443 = vsel %vm2276, %v2441, %v2442
      %2444 = vrot.lane.b32.xlu0 %v2282, 40
      %v2445 = vpop.permute.xlu0 %2444
      %2446 = vrot.lane.b32.xlu0 %v2285, 40
      %v2447 = vpop.permute.xlu0 %2446
      %2448 = vrot.lane.b32.xlu0 %v2288, 40
      %v2449 = vpop.permute.xlu0 %2448
      %2450 = vrot.lane.b32.xlu0 %v2291, 40
      %v2451 = vpop.permute.xlu0 %2450
      %2452 = vrot.lane.b32.xlu0 %v2294, 40
      %v2453 = vpop.permute.xlu0 %2452
      %2454 = vrot.lane.b32.xlu0 %v2297, 40
      %v2455 = vpop.permute.xlu0 %2454
      %2456 = vrot.lane.b32.xlu0 %v2300, 40
      %v2457 = vpop.permute.xlu0 %2456
      %2458 = vrot.lane.b32.xlu0 %v2303, 40
      %v2459 = vpop.permute.xlu0 %2458
      %2460 = vrot.lane.b32.xlu0 %v2306, 40
      %v2461 = vpop.permute.xlu0 %2460
      %2462 = vrot.lane.b32.xlu0 %v2309, 40
      %v2463 = vpop.permute.xlu0 %2462
      %2464 = vrot.lane.b32.xlu0 %v2312, 40
      %v2465 = vpop.permute.xlu0 %2464
      %2466 = vrot.lane.b32.xlu0 %v2315, 40
      %v2467 = vpop.permute.xlu0 %2466
      %2468 = vrot.lane.b32.xlu0 %v2318, 40
      %v2469 = vpop.permute.xlu0 %2468
      %2470 = vrot.lane.b32.xlu0 %v2321, 40
      %v2471 = vpop.permute.xlu0 %2470
      %2472 = vrot.lane.b32.xlu0 %v2324, 40
      %v2473 = vpop.permute.xlu0 %2472
      %2474 = vrot.lane.b32.xlu0 %v2443, 40
      %v2475 = vpop.permute.xlu0 %2474
      %v2478 = vunpack.c.l.b16 %v1920
      %v2479 = vunpack.c.l.b16 %v1921
      %v2480 = vpack.c.b16 %v2479, %v2478
      %2481 = vrot.lane.b32.xlu0 %v1989, 48
      %v2482 = vpop.permute.xlu0 %2481
      %2483 = vrot.lane.b32.xlu0 %v1990, 48
      %v2484 = vpop.permute.xlu0 %2483
      %2485 = vrot.lane.b32.xlu0 %v1991, 48
      %v2486 = vpop.permute.xlu0 %2485
      %2487 = vrot.lane.b32.xlu0 %v1992, 48
      %v2488 = vpop.permute.xlu0 %2487
      %2489 = vrot.lane.b32.xlu0 %v1993, 48
      %v2490 = vpop.permute.xlu0 %2489
      %2491 = vrot.lane.b32.xlu0 %v1994, 48
      %v2492 = vpop.permute.xlu0 %2491
      %2493 = vrot.lane.b32.xlu0 %v1995, 48
      %v2494 = vpop.permute.xlu0 %2493
      %2495 = vrot.lane.b32.xlu0 %v1996, 48
      %v2496 = vpop.permute.xlu0 %2495
      %2497 = vrot.lane.b32.xlu0 %v1997, 48
      %v2498 = vpop.permute.xlu0 %2497
      %2499 = vrot.lane.b32.xlu0 %v1998, 48
      %v2500 = vpop.permute.xlu0 %2499
      %2501 = vrot.lane.b32.xlu0 %v1999, 48
      %v2502 = vpop.permute.xlu0 %2501
      %2503 = vrot.lane.b32.xlu0 %v2000, 48
      %v2504 = vpop.permute.xlu0 %2503
      %2505 = vrot.lane.b32.xlu0 %v2001, 48
      %v2506 = vpop.permute.xlu0 %2505
      %2507 = vrot.lane.b32.xlu0 %v2002, 48
      %v2508 = vpop.permute.xlu0 %2507
      %2509 = vrot.lane.b32.xlu0 %v2361, 48
      %v2510 = vpop.permute.xlu0 %2509
      %2511 = vrot.lane.b32.xlu0 %v2480, 48
      %v2512 = vpop.permute.xlu0 %2511
      %v2514 = vunpack.c.l.b16 %v1922
      %v2515 = vpack.c.b16 %v2514, %v2514
      %v2517 = vshrl.u32 %v2480, 16
      %v2519 = vshll.u32 %v2480, 16
      %v2521 = vrot.slane %v2519, 1
      %v2522 = vor.u32 %v2517, %v2521
      %v2524 = vshll.u32 %v2515, 16
      %v2526 = vrot.slane %v2524, 1
      %v2527 = vsel %vm2051, %v2522, %v2526
      %2528 = vrot.lane.b32.xlu0 %v2087, 56
      %v2529 = vpop.permute.xlu0 %2528
      %2530 = vrot.lane.b32.xlu0 %v2099, 56
      %v2531 = vpop.permute.xlu0 %2530
      %2532 = vrot.lane.b32.xlu0 %v2111, 56
      %v2533 = vpop.permute.xlu0 %2532
      %2534 = vrot.lane.b32.xlu0 %v2123, 56
      %v2535 = vpop.permute.xlu0 %2534
      %2536 = vrot.lane.b32.xlu0 %v2135, 56
      %v2537 = vpop.permute.xlu0 %2536
      %2538 = vrot.lane.b32.xlu0 %v2147, 56
      %v2539 = vpop.permute.xlu0 %2538
      %2540 = vrot.lane.b32.xlu0 %v2159, 56
      %v2541 = vpop.permute.xlu0 %2540
      %2542 = vrot.lane.b32.xlu0 %v2171, 56
      %v2543 = vpop.permute.xlu0 %2542
      %2544 = vrot.lane.b32.xlu0 %v2183, 56
      %v2545 = vpop.permute.xlu0 %2544
      %2546 = vrot.lane.b32.xlu0 %v2195, 56
      %v2547 = vpop.permute.xlu0 %2546
      %2548 = vrot.lane.b32.xlu0 %v2207, 56
      %v2549 = vpop.permute.xlu0 %2548
      %2550 = vrot.lane.b32.xlu0 %v2219, 56
      %v2551 = vpop.permute.xlu0 %2550
      %2552 = vrot.lane.b32.xlu0 %v2231, 56
      %v2553 = vpop.permute.xlu0 %2552
      %2554 = vrot.lane.b32.xlu0 %v2243, 56
      %v2555 = vpop.permute.xlu0 %2554
      %2556 = vrot.lane.b32.xlu0 %v2408, 56
      %v2557 = vpop.permute.xlu0 %2556
      %2558 = vrot.lane.b32.xlu0 %v2527, 56
      %v2559 = vpop.permute.xlu0 %2558
      %v2560 = vrot.slane %v2480, 1
      %v2561 = vrot.slane %v2515, 1
      %v2562 = vsel %vm2276, %v2560, %v2561
      %2563 = vrot.lane.b32.xlu0 %v2285, 64
      %v2564 = vpop.permute.xlu0 %2563
      %2565 = vrot.lane.b32.xlu0 %v2288, 64
      %v2566 = vpop.permute.xlu0 %2565
      %2567 = vrot.lane.b32.xlu0 %v2291, 64
      %v2568 = vpop.permute.xlu0 %2567
      %2569 = vrot.lane.b32.xlu0 %v2294, 64
      %v2570 = vpop.permute.xlu0 %2569
      %2571 = vrot.lane.b32.xlu0 %v2297, 64
      %v2572 = vpop.permute.xlu0 %2571
      %2573 = vrot.lane.b32.xlu0 %v2300, 64
      %v2574 = vpop.permute.xlu0 %2573
      %2575 = vrot.lane.b32.xlu0 %v2303, 64
      %v2576 = vpop.permute.xlu0 %2575
      %2577 = vrot.lane.b32.xlu0 %v2306, 64
      %v2578 = vpop.permute.xlu0 %2577
      %2579 = vrot.lane.b32.xlu0 %v2309, 64
      %v2580 = vpop.permute.xlu0 %2579
      %2581 = vrot.lane.b32.xlu0 %v2312, 64
      %v2582 = vpop.permute.xlu0 %2581
      %2583 = vrot.lane.b32.xlu0 %v2315, 64
      %v2584 = vpop.permute.xlu0 %2583
      %2585 = vrot.lane.b32.xlu0 %v2318, 64
      %v2586 = vpop.permute.xlu0 %2585
      %2587 = vrot.lane.b32.xlu0 %v2321, 64
      %v2588 = vpop.permute.xlu0 %2587
      %2589 = vrot.lane.b32.xlu0 %v2324, 64
      %v2590 = vpop.permute.xlu0 %2589
      %2591 = vrot.lane.b32.xlu0 %v2443, 64
      %v2592 = vpop.permute.xlu0 %2591
      %2593 = vrot.lane.b32.xlu0 %v2562, 64
      %v2594 = vpop.permute.xlu0 %2593
      %vm2595 = vcmask 64512
      %v2597 = vsel %vm2595, %v1987, %v2245
      %v2599 = vsel %vm2595, %v1988, %v2247
      %v2601 = vsel %vm2595, %v1989, %v2249
      %v2603 = vsel %vm2595, %v1990, %v2251
      %v2605 = vsel %vm2595, %v1991, %v2253
      %v2607 = vsel %vm2595, %v1992, %v2255
      %v2609 = vsel %vm2595, %v1993, %v2257
      %v2611 = vsel %vm2595, %v1994, %v2259
      %v2613 = vsel %vm2595, %v1995, %v2261
      %v2615 = vsel %vm2595, %v1996, %v2263
      %v2617 = vsel %vm2595, %v1997, %v2265
      %v2619 = vsel %vm2595, %v1998, %v2267
      %v2621 = vsel %vm2595, %v1999, %v2269
      %v2623 = vsel %vm2595, %v2000, %v2271
      %v2625 = vsel %vm2595, %v2001, %v2273
      %v2627 = vsel %vm2595, %v2002, %v2275
      %vm2628 = vcmask 130048
      %v2630 = vsel %vm2628, %v2597, %v2326
      %v2632 = vsel %vm2628, %v2599, %v2328
      %v2634 = vsel %vm2628, %v2601, %v2330
      %v2636 = vsel %vm2628, %v2603, %v2332
      %v2638 = vsel %vm2628, %v2605, %v2334
      %v2640 = vsel %vm2628, %v2607, %v2336
      %v2642 = vsel %vm2628, %v2609, %v2338
      %v2644 = vsel %vm2628, %v2611, %v2340
      %v2646 = vsel %vm2628, %v2613, %v2342
      %v2648 = vsel %vm2628, %v2615, %v2344
      %v2650 = vsel %vm2628, %v2617, %v2346
      %v2652 = vsel %vm2628, %v2619, %v2348
      %v2654 = vsel %vm2628, %v2621, %v2350
      %v2656 = vsel %vm2628, %v2623, %v2352
      %v2658 = vsel %vm2628, %v2625, %v2354
      %v2660 = vsel %vm2628, %v2627, %v2356
      %vm2661 = vcmask 195584
      %v2663 = vsel %vm2661, %v2630, %v2363
      %v2665 = vsel %vm2661, %v2632, %v2365
      %v2667 = vsel %vm2661, %v2634, %v2367
      %v2669 = vsel %vm2661, %v2636, %v2369
      %v2671 = vsel %vm2661, %v2638, %v2371
      %v2673 = vsel %vm2661, %v2640, %v2373
      %v2675 = vsel %vm2661, %v2642, %v2375
      %v2677 = vsel %vm2661, %v2644, %v2377
      %v2679 = vsel %vm2661, %v2646, %v2379
      %v2681 = vsel %vm2661, %v2648, %v2381
      %v2683 = vsel %vm2661, %v2650, %v2383
      %v2685 = vsel %vm2661, %v2652, %v2385
      %v2687 = vsel %vm2661, %v2654, %v2387
      %v2689 = vsel %vm2661, %v2656, %v2389
      %v2691 = vsel %vm2661, %v2658, %v2391
      %v2693 = vsel %vm2661, %v2660, %v2393
      %vm2694 = vcmask 261120
      %v2696 = vsel %vm2694, %v2663, %v2410
      %v2698 = vsel %vm2694, %v2665, %v2412
      %v2700 = vsel %vm2694, %v2667, %v2414
      %v2702 = vsel %vm2694, %v2669, %v2416
      %v2704 = vsel %vm2694, %v2671, %v2418
      %v2706 = vsel %vm2694, %v2673, %v2420
      %v2708 = vsel %vm2694, %v2675, %v2422
      %v2710 = vsel %vm2694, %v2677, %v2424
      %v2712 = vsel %vm2694, %v2679, %v2426
      %v2714 = vsel %vm2694, %v2681, %v2428
      %v2716 = vsel %vm2694, %v2683, %v2430
      %v2718 = vsel %vm2694, %v2685, %v2432
      %v2720 = vsel %vm2694, %v2687, %v2434
      %v2722 = vsel %vm2694, %v2689, %v2436
      %v2724 = vsel %vm2694, %v2691, %v2438
      %v2726 = vsel %vm2694, %v2693, %v2440
      %vm2727 = vcmask 326656
      %v2729 = vsel %vm2727, %v2696, %v2445
      %v2731 = vsel %vm2727, %v2698, %v2447
      %v2733 = vsel %vm2727, %v2700, %v2449
      %v2735 = vsel %vm2727, %v2702, %v2451
      %v2737 = vsel %vm2727, %v2704, %v2453
      %v2739 = vsel %vm2727, %v2706, %v2455
      %v2741 = vsel %vm2727, %v2708, %v2457
      %v2743 = vsel %vm2727, %v2710, %v2459
      %v2745 = vsel %vm2727, %v2712, %v2461
      %v2747 = vsel %vm2727, %v2714, %v2463
      %v2749 = vsel %vm2727, %v2716, %v2465
      %v2751 = vsel %vm2727, %v2718, %v2467
      %v2753 = vsel %vm2727, %v2720, %v2469
      %v2755 = vsel %vm2727, %v2722, %v2471
      %v2757 = vsel %vm2727, %v2724, %v2473
      %v2759 = vsel %vm2727, %v2726, %v2475
      %vm2760 = vcmask 392192
      %v2762 = vsel %vm2760, %v2729, %v2482
      %v2764 = vsel %vm2760, %v2731, %v2484
      %v2766 = vsel %vm2760, %v2733, %v2486
      %v2768 = vsel %vm2760, %v2735, %v2488
      %v2770 = vsel %vm2760, %v2737, %v2490
      %v2772 = vsel %vm2760, %v2739, %v2492
      %v2774 = vsel %vm2760, %v2741, %v2494
      %v2776 = vsel %vm2760, %v2743, %v2496
      %v2778 = vsel %vm2760, %v2745, %v2498
      %v2780 = vsel %vm2760, %v2747, %v2500
      %v2782 = vsel %vm2760, %v2749, %v2502
      %v2784 = vsel %vm2760, %v2751, %v2504
      %v2786 = vsel %vm2760, %v2753, %v2506
      %v2788 = vsel %vm2760, %v2755, %v2508
      %v2790 = vsel %vm2760, %v2757, %v2510
      %v2792 = vsel %vm2760, %v2759, %v2512
      %vm2793 = vcmask 457728
      %v2795 = vsel %vm2793, %v2762, %v2529
      %v2797 = vsel %vm2793, %v2764, %v2531
      %v2799 = vsel %vm2793, %v2766, %v2533
      %v2801 = vsel %vm2793, %v2768, %v2535
      %v2803 = vsel %vm2793, %v2770, %v2537
      %v2805 = vsel %vm2793, %v2772, %v2539
      %v2807 = vsel %vm2793, %v2774, %v2541
      %v2809 = vsel %vm2793, %v2776, %v2543
      %v2811 = vsel %vm2793, %v2778, %v2545
      %v2813 = vsel %vm2793, %v2780, %v2547
      %v2815 = vsel %vm2793, %v2782, %v2549
      %v2817 = vsel %vm2793, %v2784, %v2551
      %v2819 = vsel %vm2793, %v2786, %v2553
      %v2821 = vsel %vm2793, %v2788, %v2555
      %v2823 = vsel %vm2793, %v2790, %v2557
      %v2825 = vsel %vm2793, %v2792, %v2559
      %vm2826 = vcmask 523264
      %v2828 = vsel %vm2826, %v2795, %v2564
      %v2830 = vsel %vm2826, %v2797, %v2566
      %v2832 = vsel %vm2826, %v2799, %v2568
      %v2834 = vsel %vm2826, %v2801, %v2570
      %v2836 = vsel %vm2826, %v2803, %v2572
      %v2838 = vsel %vm2826, %v2805, %v2574
      %v2840 = vsel %vm2826, %v2807, %v2576
      %v2842 = vsel %vm2826, %v2809, %v2578
      %v2844 = vsel %vm2826, %v2811, %v2580
      %v2846 = vsel %vm2826, %v2813, %v2582
      %v2848 = vsel %vm2826, %v2815, %v2584
      %v2850 = vsel %vm2826, %v2817, %v2586
      %v2852 = vsel %vm2826, %v2819, %v2588
      %v2854 = vsel %vm2826, %v2821, %v2590
      %v2856 = vsel %vm2826, %v2823, %v2592
      %v2858 = vsel %vm2826, %v2825, %v2594
      %v2859 = vld [vmem:[%s2] sm:$0xf]
      %v2860 = vld [vmem:[%s2 + $0x4] sm:$0xf]
      %v2861 = vld [vmem:[%s2 + $0x8] sm:$0xf]
      %v2862 = vld [vmem:[%s2 + $0xc] sm:$0xf]
      %v2863 = vld [vmem:[%s2 + $0x10] sm:$0xf]
      %v2864 = vld [vmem:[%s2 + $0x14] sm:$0xf]
      %v2865 = vld [vmem:[%s2 + $0x18] sm:$0xf]
      %v2866 = vld [vmem:[%s2 + $0x1c] sm:$0xf]
      %v2867 = vld [vmem:[%s2 + $0x20] sm:$0xf]
      %v2877 = vunpack.c.l.b16 %v2859
      %v2878 = vunpack.c.l.b16 %v2860
      %v2879 = vunpack.c.l.b16 %v2861
      %v2880 = vunpack.c.l.b16 %v2862
      %v2881 = vunpack.c.l.b16 %v2863
      %v2882 = vunpack.c.l.b16 %v2864
      %v2883 = vunpack.c.l.b16 %v2865
      %v2884 = vunpack.c.l.b16 %v2866
      %v2885 = vunpack.c.l.b16 %v2867
      %v2886 = vpack.c.b16 %v2878, %v2877
      %v2887 = vpack.c.b16 %v2880, %v2879
      %v2888 = vpack.c.b16 %v2882, %v2881
      %v2889 = vpack.c.b16 %v2884, %v2883
      %v2890 = vpack.c.b16 %v2885, %v2885
      %vm2895 = vcmask 588800
      %v2896 = vsel %vm2895, %v2828, 0
      %v2898 = vsel %vm2895, %v2830, 0
      %v2900 = vsel %vm2895, %v2832, 0
      %v2902 = vsel %vm2895, %v2834, 0
      %v2904 = vsel %vm2895, %v2836, 0
      %v2906 = vsel %vm2895, %v2838, 0
      %v2908 = vsel %vm2895, %v2840, 0
      %v2910 = vsel %vm2895, %v2842, 0
      %v2912 = vsel %vm2895, %v2844, 0
      %v2914 = vsel %vm2895, %v2846, 0
      %v2916 = vsel %vm2895, %v2848, 0
      %v2918 = vsel %vm2895, %v2850, 0
      %v2920 = vsel %vm2895, %v2852, 0
      %v2922 = vsel %vm2895, %v2854, 0
      %v2924 = vsel %vm2895, %v2856, 0
      %v2926 = vsel %vm2895, %v2858, 0
      %vm2928 = vcmask 1043456
      %v2930 = vsel %vm2928, %v2890, 0
      %2932 = vmatpush.bf16.msra.mxu0 0
      %2933 = vmatpush.bf16.msra.mxu0 0
      %2934 = vmatpush.bf16.msra.mxu0 0
      %2935 = vmatpush.bf16.msra.mxu0 %v2930
      %2936 = vmatpush.bf16.msra.mxu0 %v2889
      %2937 = vmatpush.bf16.msra.mxu0 %v2888
      %2938 = vmatpush.bf16.msra.mxu0 %v2887
      %2939 = vmatpush.bf16.msra.mxu0 %v2886
      %2940 = vmatmul.bf16.gmra.mxu0 %v2896
      %v2941 = vpop.f32.mrf.mxu0
      %v2942 = vadd.f32 0.0, %v2941
      %v2943 = vpop.f32.mrf.mxu0
      %v2944 = vadd.f32 0.0, %v2943
      %2945 = vmatmul.bf16.gmra.mxu0 %v2898
      %v2946 = vpop.f32.mrf.mxu0
      %v2947 = vadd.f32 0.0, %v2946
      %v2948 = vpop.f32.mrf.mxu0
      %v2949 = vadd.f32 0.0, %v2948
      %2950 = vmatmul.bf16.gmra.mxu0 %v2900
      %v2951 = vpop.f32.mrf.mxu0
      %v2952 = vadd.f32 0.0, %v2951
      %v2953 = vpop.f32.mrf.mxu0
      %v2954 = vadd.f32 0.0, %v2953
      %2955 = vmatmul.bf16.gmra.mxu0 %v2902
      %v2956 = vpop.f32.mrf.mxu0
      %v2957 = vadd.f32 0.0, %v2956
      %v2958 = vpop.f32.mrf.mxu0
      %v2959 = vadd.f32 0.0, %v2958
      %2960 = vmatmul.bf16.gmra.mxu0 %v2904
      %v2961 = vpop.f32.mrf.mxu0
      %v2962 = vadd.f32 0.0, %v2961
      %v2963 = vpop.f32.mrf.mxu0
      %v2964 = vadd.f32 0.0, %v2963
      %2965 = vmatmul.bf16.gmra.mxu0 %v2906
      %v2966 = vpop.f32.mrf.mxu0
      %v2967 = vadd.f32 0.0, %v2966
      %v2968 = vpop.f32.mrf.mxu0
      %v2969 = vadd.f32 0.0, %v2968
      %2970 = vmatmul.bf16.gmra.mxu0 %v2908
      %v2971 = vpop.f32.mrf.mxu0
      %v2972 = vadd.f32 0.0, %v2971
      %v2973 = vpop.f32.mrf.mxu0
      %v2974 = vadd.f32 0.0, %v2973
      %2975 = vmatmul.bf16.gmra.mxu0 %v2910
      %v2976 = vpop.f32.mrf.mxu0
      %v2977 = vadd.f32 0.0, %v2976
      %v2978 = vpop.f32.mrf.mxu0
      %v2979 = vadd.f32 0.0, %v2978
      %2980 = vmatmul.bf16.gmra.mxu0 %v2912
      %v2981 = vpop.f32.mrf.mxu0
      %v2982 = vadd.f32 0.0, %v2981
      %v2983 = vpop.f32.mrf.mxu0
      %v2984 = vadd.f32 0.0, %v2983
      %2985 = vmatmul.bf16.gmra.mxu0 %v2914
      %v2986 = vpop.f32.mrf.mxu0
      %v2987 = vadd.f32 0.0, %v2986
      %v2988 = vpop.f32.mrf.mxu0
      %v2989 = vadd.f32 0.0, %v2988
      %2990 = vmatmul.bf16.gmra.mxu0 %v2916
      %v2991 = vpop.f32.mrf.mxu0
      %v2992 = vadd.f32 0.0, %v2991
      %v2993 = vpop.f32.mrf.mxu0
      %v2994 = vadd.f32 0.0, %v2993
      %2995 = vmatmul.bf16.gmra.mxu0 %v2918
      %v2996 = vpop.f32.mrf.mxu0
      %v2997 = vadd.f32 0.0, %v2996
      %v2998 = vpop.f32.mrf.mxu0
      %v2999 = vadd.f32 0.0, %v2998
      %3000 = vmatmul.bf16.gmra.mxu0 %v2920
      %v3001 = vpop.f32.mrf.mxu0
      %v3002 = vadd.f32 0.0, %v3001
      %v3003 = vpop.f32.mrf.mxu0
      %v3004 = vadd.f32 0.0, %v3003
      %3005 = vmatmul.bf16.gmra.mxu0 %v2922
      %v3006 = vpop.f32.mrf.mxu0
      %v3007 = vadd.f32 0.0, %v3006
      %v3008 = vpop.f32.mrf.mxu0
      %v3009 = vadd.f32 0.0, %v3008
      %3010 = vmatmul.bf16.gmra.mxu0 %v2924
      %v3011 = vpop.f32.mrf.mxu0
      %v3012 = vadd.f32 0.0, %v3011
      %v3013 = vpop.f32.mrf.mxu0
      %v3014 = vadd.f32 0.0, %v3013
      %3015 = vmatmul.bf16.gmra.mxu0 %v2926
      %v3016 = vpop.f32.mrf.mxu0
      %v3017 = vadd.f32 0.0, %v3016
      %v3018 = vpop.f32.mrf.mxu0
      %v3019 = vadd.f32 0.0, %v3018
      %3020 = vdwg.mxu0
      %v3021 = vld [vmem:[%s4] sm:$0x1]
      %v3023 = vperm.slane %v3021, 0
      %v3025 = vmul.f32 %v2942, %v3023
      %v3026 = vmul.f32 %v2944, %v3023
      %v3027 = vmul.f32 %v2947, %v3023
      %v3028 = vmul.f32 %v2949, %v3023
      %v3029 = vmul.f32 %v2952, %v3023
      %v3030 = vmul.f32 %v2954, %v3023
      %v3031 = vmul.f32 %v2957, %v3023
      %v3032 = vmul.f32 %v2959, %v3023
      %v3033 = vmul.f32 %v2962, %v3023
      %v3034 = vmul.f32 %v2964, %v3023
      %v3035 = vmul.f32 %v2967, %v3023
      %v3036 = vmul.f32 %v2969, %v3023
      %v3037 = vmul.f32 %v2972, %v3023
      %v3038 = vmul.f32 %v2974, %v3023
      %v3039 = vmul.f32 %v2977, %v3023
      %v3040 = vmul.f32 %v2979, %v3023
      %v3041 = vmul.f32 %v2982, %v3023
      %v3042 = vmul.f32 %v2984, %v3023
      %v3043 = vmul.f32 %v2987, %v3023
      %v3044 = vmul.f32 %v2989, %v3023
      %v3045 = vmul.f32 %v2992, %v3023
      %v3046 = vmul.f32 %v2994, %v3023
      %v3047 = vmul.f32 %v2997, %v3023
      %v3048 = vmul.f32 %v2999, %v3023
      %v3049 = vmul.f32 %v3002, %v3023
      %v3050 = vmul.f32 %v3004, %v3023
      %v3051 = vmul.f32 %v3007, %v3023
      %v3052 = vmul.f32 %v3009, %v3023
      %v3053 = vmul.f32 %v3012, %v3023
      %v3054 = vmul.f32 %v3014, %v3023
      %v3055 = vmul.f32 %v3017, %v3023
      %v3056 = vmul.f32 %v3019, %v3023
      %v3057 = vld [vmem:[%s5] sm:$0x1]
      %v3059 = vperm.slane %v3057, 0
      %v3061 = vadd.f32 %v3025, %v3059
      %v3062 = vadd.f32 %v3026, %v3059
      %v3063 = vadd.f32 %v3027, %v3059
      %v3064 = vadd.f32 %v3028, %v3059
      %v3065 = vadd.f32 %v3029, %v3059
      %v3066 = vadd.f32 %v3030, %v3059
      %v3067 = vadd.f32 %v3031, %v3059
      %v3068 = vadd.f32 %v3032, %v3059
      %v3069 = vadd.f32 %v3033, %v3059
      %v3070 = vadd.f32 %v3034, %v3059
      %v3071 = vadd.f32 %v3035, %v3059
      %v3072 = vadd.f32 %v3036, %v3059
      %v3073 = vadd.f32 %v3037, %v3059
      %v3074 = vadd.f32 %v3038, %v3059
      %v3075 = vadd.f32 %v3039, %v3059
      %v3076 = vadd.f32 %v3040, %v3059
      %v3077 = vadd.f32 %v3041, %v3059
      %v3078 = vadd.f32 %v3042, %v3059
      %v3079 = vadd.f32 %v3043, %v3059
      %v3080 = vadd.f32 %v3044, %v3059
      %v3081 = vadd.f32 %v3045, %v3059
      %v3082 = vadd.f32 %v3046, %v3059
      %v3083 = vadd.f32 %v3047, %v3059
      %v3084 = vadd.f32 %v3048, %v3059
      %v3085 = vadd.f32 %v3049, %v3059
      %v3086 = vadd.f32 %v3050, %v3059
      %v3087 = vadd.f32 %v3051, %v3059
      %v3088 = vadd.f32 %v3052, %v3059
      %v3089 = vadd.f32 %v3053, %v3059
      %v3090 = vadd.f32 %v3054, %v3059
      %v3091 = vadd.f32 %v3055, %v3059
      %v3092 = vadd.f32 %v3056, %v3059
      %v3093 = vmax.f32 %v3061, 0.0
      %v3094 = vmax.f32 %v3062, 0.0
      %v3095 = vmax.f32 %v3063, 0.0
      %v3096 = vmax.f32 %v3064, 0.0
      %v3097 = vmax.f32 %v3065, 0.0
      %v3098 = vmax.f32 %v3066, 0.0
      %v3099 = vmax.f32 %v3067, 0.0
      %v3100 = vmax.f32 %v3068, 0.0
      %v3101 = vmax.f32 %v3069, 0.0
      %v3102 = vmax.f32 %v3070, 0.0
      %v3103 = vmax.f32 %v3071, 0.0
      %v3104 = vmax.f32 %v3072, 0.0
      %v3105 = vmax.f32 %v3073, 0.0
      %v3106 = vmax.f32 %v3074, 0.0
      %v3107 = vmax.f32 %v3075, 0.0
      %v3108 = vmax.f32 %v3076, 0.0
      %v3109 = vmax.f32 %v3077, 0.0
      %v3110 = vmax.f32 %v3078, 0.0
      %v3111 = vmax.f32 %v3079, 0.0
      %v3112 = vmax.f32 %v3080, 0.0
      %v3113 = vmax.f32 %v3081, 0.0
      %v3114 = vmax.f32 %v3082, 0.0
      %v3115 = vmax.f32 %v3083, 0.0
      %v3116 = vmax.f32 %v3084, 0.0
      %v3117 = vmax.f32 %v3085, 0.0
      %v3118 = vmax.f32 %v3086, 0.0
      %v3119 = vmax.f32 %v3087, 0.0
      %v3120 = vmax.f32 %v3088, 0.0
      %v3121 = vmax.f32 %v3089, 0.0
      %v3122 = vmax.f32 %v3090, 0.0
      %v3123 = vmax.f32 %v3091, 0.0
      %v3124 = vmax.f32 %v3092, 0.0
      %3125 = vst.msk [vmem:[#allocation3] sm:$0xf] %vm327, 0
      %3126 = vst.msk [vmem:[#allocation3 + $0x4] sm:$0xf] %vm327, 0
      %3127 = vst.msk [vmem:[#allocation3 + $0x8] sm:$0x1] %vm330, 0
      %s3128 = scalar_lea.vmem [#allocation3], 204
      %3129 = vst.msk [vmem:[%s3128] sm:$0xf] %vm327, 0
      %3130 = vst.msk [vmem:[%s3128 + $0x4] sm:$0xf] %vm327, 0
      %3131 = vst.msk [vmem:[%s3128 + $0x8] sm:$0x1] %vm330, 0
      %vm3132 = vcmask 57344
      %vm3133 = vmand %vm3132, %vm1363
      %v3134 = vld [vmem:[#allocation3] sm:$0x1]
      %v3135 = vsel %vm3133, 0, %v3134
      %3136 = vst [vmem:[#allocation3] sm:$0x1] %v3135
      %v3137 = vld [vmem:[#allocation3 + $0xc] sm:$0x1]
      %v3138 = vsel %vm3133, 0, %v3137
      %3139 = vst [vmem:[#allocation3 + $0xc] sm:$0x1] %v3138
      %v3140 = vld [vmem:[#allocation3 + $0x18] sm:$0x1]
      %v3141 = vsel %vm3133, 0, %v3140
      %3142 = vst [vmem:[#allocation3 + $0x18] sm:$0x1] %v3141
      %v3143 = vld [vmem:[#allocation3 + $0x24] sm:$0x1]
      %v3144 = vsel %vm3133, 0, %v3143
      %3145 = vst [vmem:[#allocation3 + $0x24] sm:$0x1] %v3144
      %v3146 = vld [vmem:[#allocation3 + $0x30] sm:$0x1]
      %v3147 = vsel %vm3133, 0, %v3146
      %3148 = vst [vmem:[#allocation3 + $0x30] sm:$0x1] %v3147
      %v3149 = vld [vmem:[#allocation3 + $0x3c] sm:$0x1]
      %v3150 = vsel %vm3133, 0, %v3149
      %3151 = vst [vmem:[#allocation3 + $0x3c] sm:$0x1] %v3150
      %v3152 = vld [vmem:[#allocation3 + $0x48] sm:$0x1]
      %v3153 = vsel %vm3133, 0, %v3152
      %3154 = vst [vmem:[#allocation3 + $0x48] sm:$0x1] %v3153
      %v3155 = vld [vmem:[#allocation3 + $0x54] sm:$0x1]
      %v3156 = vsel %vm3133, 0, %v3155
      %3157 = vst [vmem:[#allocation3 + $0x54] sm:$0x1] %v3156
      %v3158 = vld [vmem:[#allocation3 + $0x60] sm:$0x1]
      %v3159 = vsel %vm3133, 0, %v3158
      %3160 = vst [vmem:[#allocation3 + $0x60] sm:$0x1] %v3159
      %v3161 = vld [vmem:[#allocation3 + $0x6c] sm:$0x1]
      %v3162 = vsel %vm3133, 0, %v3161
      %3163 = vst [vmem:[#allocation3 + $0x6c] sm:$0x1] %v3162
      %v3164 = vld [vmem:[#allocation3 + $0x78] sm:$0x1]
      %v3165 = vsel %vm3133, 0, %v3164
      %3166 = vst [vmem:[#allocation3 + $0x78] sm:$0x1] %v3165
      %v3167 = vld [vmem:[#allocation3 + $0x84] sm:$0x1]
      %v3168 = vsel %vm3133, 0, %v3167
      %3169 = vst [vmem:[#allocation3 + $0x84] sm:$0x1] %v3168
      %v3170 = vld [vmem:[#allocation3 + $0x90] sm:$0x1]
      %v3171 = vsel %vm3133, 0, %v3170
      %3172 = vst [vmem:[#allocation3 + $0x90] sm:$0x1] %v3171
      %v3173 = vld [vmem:[#allocation3 + $0x9c] sm:$0x1]
      %v3174 = vsel %vm3133, 0, %v3173
      %3175 = vst [vmem:[#allocation3 + $0x9c] sm:$0x1] %v3174
      %v3176 = vld [vmem:[#allocation3 + $0xa8] sm:$0x1]
      %v3177 = vsel %vm3133, 0, %v3176
      %3178 = vst [vmem:[#allocation3 + $0xa8] sm:$0x1] %v3177
      %v3179 = vld [vmem:[#allocation3 + $0xb4] sm:$0x1]
      %v3180 = vsel %vm3133, 0, %v3179
      %3181 = vst [vmem:[#allocation3 + $0xb4] sm:$0x1] %v3180
      %v3182 = vld [vmem:[#allocation3 + $0xc0] sm:$0x1]
      %v3183 = vsel %vm3133, 0, %v3182
      %3184 = vst [vmem:[#allocation3 + $0xc0] sm:$0x1] %v3183
      %v3185 = vld [vmem:[#allocation3 + $0xcc] sm:$0x1]
      %v3186 = vsel %vm3133, 0, %v3185
      %3187 = vst [vmem:[#allocation3 + $0xcc] sm:$0x1] %v3186
      %vm3188 = vmand %vm3132, %vm1752
      %v3189 = vld [vmem:[#allocation3 + $0x8] sm:$0x1]
      %v3190 = vsel %vm3188, 0, %v3189
      %3191 = vst [vmem:[#allocation3 + $0x8] sm:$0x1] %v3190
      %v3192 = vld [vmem:[#allocation3 + $0x14] sm:$0x1]
      %v3193 = vsel %vm3188, 0, %v3192
      %3194 = vst [vmem:[#allocation3 + $0x14] sm:$0x1] %v3193
      %v3195 = vld [vmem:[#allocation3 + $0x20] sm:$0x1]
      %v3196 = vsel %vm3188, 0, %v3195
      %3197 = vst [vmem:[#allocation3 + $0x20] sm:$0x1] %v3196
      %v3198 = vld [vmem:[#allocation3 + $0x2c] sm:$0x1]
      %v3199 = vsel %vm3188, 0, %v3198
      %3200 = vst [vmem:[#allocation3 + $0x2c] sm:$0x1] %v3199
      %v3201 = vld [vmem:[#allocation3 + $0x38] sm:$0x1]
      %v3202 = vsel %vm3188, 0, %v3201
      %3203 = vst [vmem:[#allocation3 + $0x38] sm:$0x1] %v3202
      %v3204 = vld [vmem:[#allocation3 + $0x44] sm:$0x1]
      %v3205 = vsel %vm3188, 0, %v3204
      %3206 = vst [vmem:[#allocation3 + $0x44] sm:$0x1] %v3205
      %v3207 = vld [vmem:[#allocation3 + $0x50] sm:$0x1]
      %v3208 = vsel %vm3188, 0, %v3207
      %3209 = vst [vmem:[#allocation3 + $0x50] sm:$0x1] %v3208
      %v3210 = vld [vmem:[#allocation3 + $0x5c] sm:$0x1]
      %v3211 = vsel %vm3188, 0, %v3210
      %3212 = vst [vmem:[#allocation3 + $0x5c] sm:$0x1] %v3211
      %v3213 = vld [vmem:[#allocation3 + $0x68] sm:$0x1]
      %v3214 = vsel %vm3188, 0, %v3213
      %3215 = vst [vmem:[#allocation3 + $0x68] sm:$0x1] %v3214
      %v3216 = vld [vmem:[#allocation3 + $0x74] sm:$0x1]
      %v3217 = vsel %vm3188, 0, %v3216
      %3218 = vst [vmem:[#allocation3 + $0x74] sm:$0x1] %v3217
      %v3219 = vld [vmem:[#allocation3 + $0x80] sm:$0x1]
      %v3220 = vsel %vm3188, 0, %v3219
      %3221 = vst [vmem:[#allocation3 + $0x80] sm:$0x1] %v3220
      %v3222 = vld [vmem:[#allocation3 + $0x8c] sm:$0x1]
      %v3223 = vsel %vm3188, 0, %v3222
      %3224 = vst [vmem:[#allocation3 + $0x8c] sm:$0x1] %v3223
      %v3225 = vld [vmem:[#allocation3 + $0x98] sm:$0x1]
      %v3226 = vsel %vm3188, 0, %v3225
      %3227 = vst [vmem:[#allocation3 + $0x98] sm:$0x1] %v3226
      %v3228 = vld [vmem:[#allocation3 + $0xa4] sm:$0x1]
      %v3229 = vsel %vm3188, 0, %v3228
      %3230 = vst [vmem:[#allocation3 + $0xa4] sm:$0x1] %v3229
      %v3231 = vld [vmem:[#allocation3 + $0xb0] sm:$0x1]
      %v3232 = vsel %vm3188, 0, %v3231
      %3233 = vst [vmem:[#allocation3 + $0xb0] sm:$0x1] %v3232
      %v3234 = vld [vmem:[#allocation3 + $0xbc] sm:$0x1]
      %v3235 = vsel %vm3188, 0, %v3234
      %3236 = vst [vmem:[#allocation3 + $0xbc] sm:$0x1] %v3235
      %v3237 = vld [vmem:[#allocation3 + $0xc8] sm:$0x1]
      %v3238 = vsel %vm3188, 0, %v3237
      %3239 = vst [vmem:[#allocation3 + $0xc8] sm:$0x1] %v3238
      %v3240 = vld [vmem:[#allocation3 + $0xd4] sm:$0x1]
      %v3241 = vsel %vm3188, 0, %v3240
      %3242 = vst [vmem:[#allocation3 + $0xd4] sm:$0x1] %v3241
      %v3243 = vpack.c.bf16 %v3093, %v3093
      %v3244 = vpack.c.bf16 %v3094, %v3094
      %v3245 = vpack.c.bf16 %v3095, %v3095
      %v3246 = vpack.c.bf16 %v3096, %v3096
      %v3247 = vpack.c.bf16 %v3097, %v3097
      %v3248 = vpack.c.bf16 %v3098, %v3098
      %v3249 = vpack.c.bf16 %v3099, %v3099
      %v3250 = vpack.c.bf16 %v3100, %v3100
      %v3251 = vpack.c.bf16 %v3101, %v3101
      %v3252 = vpack.c.bf16 %v3102, %v3102
      %v3253 = vpack.c.bf16 %v3103, %v3103
      %v3254 = vpack.c.bf16 %v3104, %v3104
      %v3255 = vpack.c.bf16 %v3105, %v3105
      %v3256 = vpack.c.bf16 %v3106, %v3106
      %v3257 = vpack.c.bf16 %v3107, %v3107
      %v3258 = vpack.c.bf16 %v3108, %v3108
      %v3259 = vpack.c.bf16 %v3109, %v3109
      %v3260 = vpack.c.bf16 %v3110, %v3110
      %v3261 = vpack.c.bf16 %v3111, %v3111
      %v3262 = vpack.c.bf16 %v3112, %v3112
      %v3263 = vpack.c.bf16 %v3113, %v3113
      %v3264 = vpack.c.bf16 %v3114, %v3114
      %v3265 = vpack.c.bf16 %v3115, %v3115
      %v3266 = vpack.c.bf16 %v3116, %v3116
      %v3267 = vpack.c.bf16 %v3117, %v3117
      %v3268 = vpack.c.bf16 %v3118, %v3118
      %v3269 = vpack.c.bf16 %v3119, %v3119
      %v3270 = vpack.c.bf16 %v3120, %v3120
      %v3271 = vpack.c.bf16 %v3121, %v3121
      %v3272 = vpack.c.bf16 %v3122, %v3122
      %v3273 = vpack.c.bf16 %v3123, %v3123
      %v3274 = vpack.c.bf16 %v3124, %v3124
      %v3276 = vshrl.u32 %v3243, 16
      %v3278 = vrot.slane %v3276, 7
      %v3279 = vshll.u32 %v3243, 16
      %v3281 = vor.u32 %v3278, %v3279
      %v3282 = vrot.slane %v3278, 4
      %v3284 = vshrl.u32 %v3244, 16
      %v3286 = vrot.slane %v3284, 7
      %v3287 = vshll.u32 %v3244, 16
      %v3289 = vor.u32 %v3286, %v3287
      %v3290 = vsel %vm1365, %v3282, %v3289
      %v3291 = vrot.slane %v3286, 4
      %v3293 = vshrl.u32 %v3245, 16
      %v3295 = vrot.slane %v3293, 7
      %v3296 = vshll.u32 %v3245, 16
      %v3298 = vor.u32 %v3295, %v3296
      %v3299 = vrot.slane %v3295, 4
      %v3301 = vshrl.u32 %v3246, 16
      %v3303 = vrot.slane %v3301, 7
      %v3304 = vshll.u32 %v3246, 16
      %v3306 = vor.u32 %v3303, %v3304
      %v3307 = vsel %vm1365, %v3299, %v3306
      %v3308 = vrot.slane %v3303, 4
      %v3310 = vshrl.u32 %v3247, 16
      %v3312 = vrot.slane %v3310, 7
      %v3313 = vshll.u32 %v3247, 16
      %v3315 = vor.u32 %v3312, %v3313
      %v3316 = vrot.slane %v3312, 4
      %v3318 = vshrl.u32 %v3248, 16
      %v3320 = vrot.slane %v3318, 7
      %v3321 = vshll.u32 %v3248, 16
      %v3323 = vor.u32 %v3320, %v3321
      %v3324 = vsel %vm1365, %v3316, %v3323
      %v3325 = vrot.slane %v3320, 4
      %v3327 = vshrl.u32 %v3249, 16
      %v3329 = vrot.slane %v3327, 7
      %v3330 = vshll.u32 %v3249, 16
      %v3332 = vor.u32 %v3329, %v3330
      %v3333 = vrot.slane %v3329, 4
      %v3335 = vshrl.u32 %v3250, 16
      %v3337 = vrot.slane %v3335, 7
      %v3338 = vshll.u32 %v3250, 16
      %v3340 = vor.u32 %v3337, %v3338
      %v3341 = vsel %vm1365, %v3333, %v3340
      %v3342 = vrot.slane %v3337, 4
      %v3344 = vshrl.u32 %v3251, 16
      %v3346 = vrot.slane %v3344, 7
      %v3347 = vshll.u32 %v3251, 16
      %v3349 = vor.u32 %v3346, %v3347
      %v3350 = vrot.slane %v3346, 4
      %v3352 = vshrl.u32 %v3252, 16
      %v3354 = vrot.slane %v3352, 7
      %v3355 = vshll.u32 %v3252, 16
      %v3357 = vor.u32 %v3354, %v3355
      %v3358 = vsel %vm1365, %v3350, %v3357
      %v3359 = vrot.slane %v3354, 4
      %v3361 = vshrl.u32 %v3253, 16
      %v3363 = vrot.slane %v3361, 7
      %v3364 = vshll.u32 %v3253, 16
      %v3366 = vor.u32 %v3363, %v3364
      %v3367 = vrot.slane %v3363, 4
      %v3369 = vshrl.u32 %v3254, 16
      %v3371 = vrot.slane %v3369, 7
      %v3372 = vshll.u32 %v3254, 16
      %v3374 = vor.u32 %v3371, %v3372
      %v3375 = vsel %vm1365, %v3367, %v3374
      %v3376 = vrot.slane %v3371, 4
      %v3378 = vshrl.u32 %v3255, 16
      %v3380 = vrot.slane %v3378, 7
      %v3381 = vshll.u32 %v3255, 16
      %v3383 = vor.u32 %v3380, %v3381
      %v3384 = vrot.slane %v3380, 4
      %v3386 = vshrl.u32 %v3256, 16
      %v3388 = vrot.slane %v3386, 7
      %v3389 = vshll.u32 %v3256, 16
      %v3391 = vor.u32 %v3388, %v3389
      %v3392 = vsel %vm1365, %v3384, %v3391
      %v3393 = vrot.slane %v3388, 4
      %v3395 = vshrl.u32 %v3257, 16
      %v3397 = vrot.slane %v3395, 7
      %v3398 = vshll.u32 %v3257, 16
      %v3400 = vor.u32 %v3397, %v3398
      %v3401 = vrot.slane %v3397, 4
      %v3403 = vshrl.u32 %v3258, 16
      %v3405 = vrot.slane %v3403, 7
      %v3406 = vshll.u32 %v3258, 16
      %v3408 = vor.u32 %v3405, %v3406
      %v3409 = vsel %vm1365, %v3401, %v3408
      %v3410 = vrot.slane %v3405, 4
      %v3412 = vshrl.u32 %v3259, 16
      %v3414 = vrot.slane %v3412, 7
      %v3415 = vshll.u32 %v3259, 16
      %v3417 = vor.u32 %v3414, %v3415
      %v3418 = vrot.slane %v3414, 4
      %v3420 = vshrl.u32 %v3260, 16
      %v3422 = vrot.slane %v3420, 7
      %v3423 = vshll.u32 %v3260, 16
      %v3425 = vor.u32 %v3422, %v3423
      %v3426 = vsel %vm1365, %v3418, %v3425
      %v3427 = vrot.slane %v3422, 4
      %v3429 = vshrl.u32 %v3261, 16
      %v3431 = vrot.slane %v3429, 7
      %v3432 = vshll.u32 %v3261, 16
      %v3434 = vor.u32 %v3431, %v3432
      %v3435 = vrot.slane %v3431, 4
      %v3437 = vshrl.u32 %v3262, 16
      %v3439 = vrot.slane %v3437, 7
      %v3440 = vshll.u32 %v3262, 16
      %v3442 = vor.u32 %v3439, %v3440
      %v3443 = vsel %vm1365, %v3435, %v3442
      %v3444 = vrot.slane %v3439, 4
      %v3446 = vshrl.u32 %v3263, 16
      %v3448 = vrot.slane %v3446, 7
      %v3449 = vshll.u32 %v3263, 16
      %v3451 = vor.u32 %v3448, %v3449
      %v3452 = vrot.slane %v3448, 4
      %v3454 = vshrl.u32 %v3264, 16
      %v3456 = vrot.slane %v3454, 7
      %v3457 = vshll.u32 %v3264, 16
      %v3459 = vor.u32 %v3456, %v3457
      %v3460 = vsel %vm1365, %v3452, %v3459
      %v3461 = vrot.slane %v3456, 4
      %v3463 = vshrl.u32 %v3265, 16
      %v3465 = vrot.slane %v3463, 7
      %v3466 = vshll.u32 %v3265, 16
      %v3468 = vor.u32 %v3465, %v3466
      %v3469 = vrot.slane %v3465, 4
      %v3471 = vshrl.u32 %v3266, 16
      %v3473 = vrot.slane %v3471, 7
      %v3474 = vshll.u32 %v3266, 16
      %v3476 = vor.u32 %v3473, %v3474
      %v3477 = vsel %vm1365, %v3469, %v3476
      %v3478 = vrot.slane %v3473, 4
      %v3480 = vshrl.u32 %v3267, 16
      %v3482 = vrot.slane %v3480, 7
      %v3483 = vshll.u32 %v3267, 16
      %v3485 = vor.u32 %v3482, %v3483
      %v3486 = vrot.slane %v3482, 4
      %v3488 = vshrl.u32 %v3268, 16
      %v3490 = vrot.slane %v3488, 7
      %v3491 = vshll.u32 %v3268, 16
      %v3493 = vor.u32 %v3490, %v3491
      %v3494 = vsel %vm1365, %v3486, %v3493
      %v3495 = vrot.slane %v3490, 4
      %v3497 = vshrl.u32 %v3269, 16
      %v3499 = vrot.slane %v3497, 7
      %v3500 = vshll.u32 %v3269, 16
      %v3502 = vor.u32 %v3499, %v3500
      %v3503 = vrot.slane %v3499, 4
      %v3505 = vshrl.u32 %v3270, 16
      %v3507 = vrot.slane %v3505, 7
      %v3508 = vshll.u32 %v3270, 16
      %v3510 = vor.u32 %v3507, %v3508
      %v3511 = vsel %vm1365, %v3503, %v3510
      %v3512 = vrot.slane %v3507, 4
      %v3514 = vshrl.u32 %v3271, 16
      %v3516 = vrot.slane %v3514, 7
      %v3517 = vshll.u32 %v3271, 16
      %v3519 = vor.u32 %v3516, %v3517
      %v3520 = vrot.slane %v3516, 4
      %v3522 = vshrl.u32 %v3272, 16
      %v3524 = vrot.slane %v3522, 7
      %v3525 = vshll.u32 %v3272, 16
      %v3527 = vor.u32 %v3524, %v3525
      %v3528 = vsel %vm1365, %v3520, %v3527
      %v3529 = vrot.slane %v3524, 4
      %v3531 = vshrl.u32 %v3273, 16
      %v3533 = vrot.slane %v3531, 7
      %v3534 = vshll.u32 %v3273, 16
      %v3536 = vor.u32 %v3533, %v3534
      %v3537 = vrot.slane %v3533, 4
      %v3539 = vshrl.u32 %v3274, 16
      %v3541 = vrot.slane %v3539, 7
      %v3542 = vshll.u32 %v3274, 16
      %v3544 = vor.u32 %v3541, %v3542
      %v3545 = vsel %vm1365, %v3537, %v3544
      %v3546 = vrot.slane %v3541, 4
      %s3595 = scalar_lea.vmem [#allocation3], 12
      %vm3596 = vcmask 60416
      %vm3597 = vmand %vm3596, %vm1752
      %v3598 = vld [vmem:[%s3595] sm:$0xf]
      %v3599 = vsel %vm3597, %v3281, %v3598
      %3600 = vst [vmem:[%s3595] sm:$0xf] %v3599
      %3601 = vst.msk [vmem:[%s3595 + $0x4] sm:$0xf] %vm327, %v3290
      %v3602 = vld [vmem:[%s3595 + $0x8] sm:$0x1]
      %v3603 = vsel %vm3133, %v3291, %v3602
      %3604 = vst [vmem:[%s3595 + $0x8] sm:$0x1] %v3603
      %v3605 = vld [vmem:[%s3595 + $0xc] sm:$0xf]
      %v3606 = vsel %vm3597, %v3298, %v3605
      %3607 = vst [vmem:[%s3595 + $0xc] sm:$0xf] %v3606
      %3608 = vst.msk [vmem:[%s3595 + $0x10] sm:$0xf] %vm327, %v3307
      %v3609 = vld [vmem:[%s3595 + $0x14] sm:$0x1]
      %v3610 = vsel %vm3133, %v3308, %v3609
      %3611 = vst [vmem:[%s3595 + $0x14] sm:$0x1] %v3610
      %v3612 = vld [vmem:[%s3595 + $0x18] sm:$0xf]
      %v3613 = vsel %vm3597, %v3315, %v3612
      %3614 = vst [vmem:[%s3595 + $0x18] sm:$0xf] %v3613
      %3615 = vst.msk [vmem:[%s3595 + $0x1c] sm:$0xf] %vm327, %v3324
      %v3616 = vld [vmem:[%s3595 + $0x20] sm:$0x1]
      %v3617 = vsel %vm3133, %v3325, %v3616
      %3618 = vst [vmem:[%s3595 + $0x20] sm:$0x1] %v3617
      %v3619 = vld [vmem:[%s3595 + $0x24] sm:$0xf]
      %v3620 = vsel %vm3597, %v3332, %v3619
      %3621 = vst [vmem:[%s3595 + $0x24] sm:$0xf] %v3620
      %3622 = vst.msk [vmem:[%s3595 + $0x28] sm:$0xf] %vm327, %v3341
      %v3623 = vld [vmem:[%s3595 + $0x2c] sm:$0x1]
      %v3624 = vsel %vm3133, %v3342, %v3623
      %3625 = vst [vmem:[%s3595 + $0x2c] sm:$0x1] %v3624
      %v3626 = vld [vmem:[%s3595 + $0x30] sm:$0xf]
      %v3627 = vsel %vm3597, %v3349, %v3626
      %3628 = vst [vmem:[%s3595 + $0x30] sm:$0xf] %v3627
      %3629 = vst.msk [vmem:[%s3595 + $0x34] sm:$0xf] %vm327, %v3358
      %v3630 = vld [vmem:[%s3595 + $0x38] sm:$0x1]
      %v3631 = vsel %vm3133, %v3359, %v3630
      %3632 = vst [vmem:[%s3595 + $0x38] sm:$0x1] %v3631
      %v3633 = vld [vmem:[%s3595 + $0x3c] sm:$0xf]
      %v3634 = vsel %vm3597, %v3366, %v3633
      %3635 = vst [vmem:[%s3595 + $0x3c] sm:$0xf] %v3634
      %3636 = vst.msk [vmem:[%s3595 + $0x40] sm:$0xf] %vm327, %v3375
      %v3637 = vld [vmem:[%s3595 + $0x44] sm:$0x1]
      %v3638 = vsel %vm3133, %v3376, %v3637
      %3639 = vst [vmem:[%s3595 + $0x44] sm:$0x1] %v3638
      %v3640 = vld [vmem:[%s3595 + $0x48] sm:$0xf]
      %v3641 = vsel %vm3597, %v3383, %v3640
      %3642 = vst [vmem:[%s3595 + $0x48] sm:$0xf] %v3641
      %3643 = vst.msk [vmem:[%s3595 + $0x4c] sm:$0xf] %vm327, %v3392
      %v3644 = vld [vmem:[%s3595 + $0x50] sm:$0x1]
      %v3645 = vsel %vm3133, %v3393, %v3644
      %3646 = vst [vmem:[%s3595 + $0x50] sm:$0x1] %v3645
      %v3647 = vld [vmem:[%s3595 + $0x54] sm:$0xf]
      %v3648 = vsel %vm3597, %v3400, %v3647
      %3649 = vst [vmem:[%s3595 + $0x54] sm:$0xf] %v3648
      %3650 = vst.msk [vmem:[%s3595 + $0x58] sm:$0xf] %vm327, %v3409
      %v3651 = vld [vmem:[%s3595 + $0x5c] sm:$0x1]
      %v3652 = vsel %vm3133, %v3410, %v3651
      %3653 = vst [vmem:[%s3595 + $0x5c] sm:$0x1] %v3652
      %v3654 = vld [vmem:[%s3595 + $0x60] sm:$0xf]
      %v3655 = vsel %vm3597, %v3417, %v3654
      %3656 = vst [vmem:[%s3595 + $0x60] sm:$0xf] %v3655
      %3657 = vst.msk [vmem:[%s3595 + $0x64] sm:$0xf] %vm327, %v3426
      %v3658 = vld [vmem:[%s3595 + $0x68] sm:$0x1]
      %v3659 = vsel %vm3133, %v3427, %v3658
      %3660 = vst [vmem:[%s3595 + $0x68] sm:$0x1] %v3659
      %v3661 = vld [vmem:[%s3595 + $0x6c] sm:$0xf]
      %v3662 = vsel %vm3597, %v3434, %v3661
      %3663 = vst [vmem:[%s3595 + $0x6c] sm:$0xf] %v3662
      %3664 = vst.msk [vmem:[%s3595 + $0x70] sm:$0xf] %vm327, %v3443
      %v3665 = vld [vmem:[%s3595 + $0x74] sm:$0x1]
      %v3666 = vsel %vm3133, %v3444, %v3665
      %3667 = vst [vmem:[%s3595 + $0x74] sm:$0x1] %v3666
      %v3668 = vld [vmem:[%s3595 + $0x78] sm:$0xf]
      %v3669 = vsel %vm3597, %v3451, %v3668
      %3670 = vst [vmem:[%s3595 + $0x78] sm:$0xf] %v3669
      %3671 = vst.msk [vmem:[%s3595 + $0x7c] sm:$0xf] %vm327, %v3460
      %v3672 = vld [vmem:[%s3595 + $0x80] sm:$0x1]
      %v3673 = vsel %vm3133, %v3461, %v3672
      %3674 = vst [vmem:[%s3595 + $0x80] sm:$0x1] %v3673
      %v3675 = vld [vmem:[%s3595 + $0x84] sm:$0xf]
      %v3676 = vsel %vm3597, %v3468, %v3675
      %3677 = vst [vmem:[%s3595 + $0x84] sm:$0xf] %v3676
      %3678 = vst.msk [vmem:[%s3595 + $0x88] sm:$0xf] %vm327, %v3477
      %v3679 = vld [vmem:[%s3595 + $0x8c] sm:$0x1]
      %v3680 = vsel %vm3133, %v3478, %v3679
      %3681 = vst [vmem:[%s3595 + $0x8c] sm:$0x1] %v3680
      %v3682 = vld [vmem:[%s3595 + $0x90] sm:$0xf]
      %v3683 = vsel %vm3597, %v3485, %v3682
      %3684 = vst [vmem:[%s3595 + $0x90] sm:$0xf] %v3683
      %3685 = vst.msk [vmem:[%s3595 + $0x94] sm:$0xf] %vm327, %v3494
      %v3686 = vld [vmem:[%s3595 + $0x98] sm:$0x1]
      %v3687 = vsel %vm3133, %v3495, %v3686
      %3688 = vst [vmem:[%s3595 + $0x98] sm:$0x1] %v3687
      %v3689 = vld [vmem:[%s3595 + $0x9c] sm:$0xf]
      %v3690 = vsel %vm3597, %v3502, %v3689
      %3691 = vst [vmem:[%s3595 + $0x9c] sm:$0xf] %v3690
      %3692 = vst.msk [vmem:[%s3595 + $0xa0] sm:$0xf] %vm327, %v3511
      %v3693 = vld [vmem:[%s3595 + $0xa4] sm:$0x1]
      %v3694 = vsel %vm3133, %v3512, %v3693
      %3695 = vst [vmem:[%s3595 + $0xa4] sm:$0x1] %v3694
      %v3696 = vld [vmem:[%s3595 + $0xa8] sm:$0xf]
      %v3697 = vsel %vm3597, %v3519, %v3696
      %3698 = vst [vmem:[%s3595 + $0xa8] sm:$0xf] %v3697
      %3699 = vst.msk [vmem:[%s3595 + $0xac] sm:$0xf] %vm327, %v3528
      %v3700 = vld [vmem:[%s3595 + $0xb0] sm:$0x1]
      %v3701 = vsel %vm3133, %v3529, %v3700
      %3702 = vst [vmem:[%s3595 + $0xb0] sm:$0x1] %v3701
      %v3703 = vld [vmem:[%s3595 + $0xb4] sm:$0xf]
      %v3704 = vsel %vm3597, %v3536, %v3703
      %3705 = vst [vmem:[%s3595 + $0xb4] sm:$0xf] %v3704
      %3706 = vst.msk [vmem:[%s3595 + $0xb8] sm:$0xf] %vm327, %v3545
      %v3707 = vld [vmem:[%s3595 + $0xbc] sm:$0x1]
      %v3708 = vsel %vm3133, %v3546, %v3707
      %3709 = vst [vmem:[%s3595 + $0xbc] sm:$0x1] %v3708
      %v3710 = vld [vmem:[#allocation3] sm:$0xf]
      %v3711 = vld [vmem:[#allocation3 + $0x4] sm:$0xf]
      %v3712 = vld [vmem:[#allocation3 + $0x8] sm:$0x1]
      %v3713 = vld [vmem:[#allocation3 + $0xc] sm:$0xf]
      %v3714 = vld [vmem:[#allocation3 + $0x10] sm:$0xf]
      %v3715 = vld [vmem:[#allocation3 + $0x14] sm:$0x1]
      %v3716 = vld [vmem:[#allocation3 + $0x18] sm:$0xf]
      %v3717 = vld [vmem:[#allocation3 + $0x1c] sm:$0xf]
      %v3718 = vld [vmem:[#allocation3 + $0x20] sm:$0x1]
      %v3719 = vld [vmem:[#allocation3 + $0x24] sm:$0xf]
      %v3720 = vld [vmem:[#allocation3 + $0x28] sm:$0xf]
      %v3721 = vld [vmem:[#allocation3 + $0x2c] sm:$0x1]
      %v3722 = vld [vmem:[#allocation3 + $0x30] sm:$0xf]
      %v3723 = vld [vmem:[#allocation3 + $0x34] sm:$0xf]
      %v3724 = vld [vmem:[#allocation3 + $0x38] sm:$0x1]
      %v3725 = vld [vmem:[#allocation3 + $0x3c] sm:$0xf]
      %v3726 = vld [vmem:[#allocation3 + $0x40] sm:$0xf]
      %v3727 = vld [vmem:[#allocation3 + $0x44] sm:$0x1]
      %v3728 = vld [vmem:[#allocation3 + $0x48] sm:$0xf]
      %v3729 = vld [vmem:[#allocation3 + $0x4c] sm:$0xf]
      %v3730 = vld [vmem:[#allocation3 + $0x50] sm:$0x1]
      %v3731 = vld [vmem:[#allocation3 + $0x54] sm:$0xf]
      %v3732 = vld [vmem:[#allocation3 + $0x58] sm:$0xf]
      %v3733 = vld [vmem:[#allocation3 + $0x5c] sm:$0x1]
      %v3734 = vld [vmem:[#allocation3 + $0x60] sm:$0xf]
      %v3735 = vld [vmem:[#allocation3 + $0x64] sm:$0xf]
      %v3736 = vld [vmem:[#allocation3 + $0x68] sm:$0x1]
      %v3737 = vld [vmem:[#allocation3 + $0x6c] sm:$0xf]
      %v3738 = vld [vmem:[#allocation3 + $0x70] sm:$0xf]
      %v3739 = vld [vmem:[#allocation3 + $0x74] sm:$0x1]
      %v3740 = vld [vmem:[#allocation3 + $0x78] sm:$0xf]
      %v3741 = vld [vmem:[#allocation3 + $0x7c] sm:$0xf]
      %v3742 = vld [vmem:[#allocation3 + $0x80] sm:$0x1]
      %v3743 = vld [vmem:[#allocation3 + $0x84] sm:$0xf]
      %v3744 = vld [vmem:[#allocation3 + $0x88] sm:$0xf]
      %v3745 = vld [vmem:[#allocation3 + $0x8c] sm:$0x1]
      %v3746 = vld [vmem:[#allocation3 + $0x90] sm:$0xf]
      %v3747 = vld [vmem:[#allocation3 + $0x94] sm:$0xf]
      %v3748 = vld [vmem:[#allocation3 + $0x98] sm:$0x1]
      %v3749 = vld [vmem:[#allocation3 + $0x9c] sm:$0xf]
      %v3750 = vld [vmem:[#allocation3 + $0xa0] sm:$0xf]
      %v3751 = vld [vmem:[#allocation3 + $0xa4] sm:$0x1]
      %v3752 = vld [vmem:[#allocation3 + $0xa8] sm:$0xf]
      %v3753 = vld [vmem:[#allocation3 + $0xac] sm:$0xf]
      %v3754 = vld [vmem:[#allocation3 + $0xb0] sm:$0x1]
      %v3755 = vld [vmem:[#allocation3 + $0xb4] sm:$0xf]
      %v3756 = vld [vmem:[#allocation3 + $0xb8] sm:$0xf]
      %v3757 = vld [vmem:[#allocation3 + $0xbc] sm:$0x1]
      %v3758 = vld [vmem:[#allocation3 + $0xc0] sm:$0xf]
      %v3759 = vld [vmem:[#allocation3 + $0xc4] sm:$0xf]
      %v3760 = vld [vmem:[#allocation3 + $0xc8] sm:$0x1]
      %v3761 = vld [vmem:[#allocation3 + $0xcc] sm:$0xf]
      %v3762 = vld [vmem:[#allocation3 + $0xd0] sm:$0xf]
      %v3763 = vld [vmem:[#allocation3 + $0xd4] sm:$0x1]
      %v3796 = vunpack.c.l.b16 %v3710
      %v3797 = vunpack.c.l.b16 %v3711
      %v3798 = vunpack.c.l.b16 %v3713
      %v3799 = vunpack.c.l.b16 %v3714
      %v3800 = vunpack.c.l.b16 %v3716
      %v3801 = vunpack.c.l.b16 %v3717
      %v3802 = vunpack.c.l.b16 %v3719
      %v3803 = vunpack.c.l.b16 %v3720
      %v3804 = vunpack.c.l.b16 %v3722
      %v3805 = vunpack.c.l.b16 %v3723
      %v3806 = vunpack.c.l.b16 %v3725
      %v3807 = vunpack.c.l.b16 %v3726
      %v3808 = vunpack.c.l.b16 %v3728
      %v3809 = vunpack.c.l.b16 %v3729
      %v3810 = vunpack.c.l.b16 %v3731
      %v3811 = vunpack.c.l.b16 %v3732
      %v3812 = vunpack.c.l.b16 %v3734
      %v3813 = vunpack.c.l.b16 %v3735
      %v3814 = vunpack.c.l.b16 %v3737
      %v3815 = vunpack.c.l.b16 %v3738
      %v3816 = vunpack.c.l.b16 %v3740
      %v3817 = vunpack.c.l.b16 %v3741
      %v3818 = vunpack.c.l.b16 %v3743
      %v3819 = vunpack.c.l.b16 %v3744
      %v3820 = vunpack.c.l.b16 %v3746
      %v3821 = vunpack.c.l.b16 %v3747
      %v3822 = vunpack.c.l.b16 %v3749
      %v3823 = vunpack.c.l.b16 %v3750
      %v3824 = vunpack.c.l.b16 %v3752
      %v3825 = vunpack.c.l.b16 %v3753
      %v3826 = vunpack.c.l.b16 %v3755
      %v3827 = vunpack.c.l.b16 %v3756
      %v3828 = vpack.c.b16 %v3797, %v3796
      %v3829 = vpack.c.b16 %v3799, %v3798
      %v3830 = vpack.c.b16 %v3801, %v3800
      %v3831 = vpack.c.b16 %v3803, %v3802
      %v3832 = vpack.c.b16 %v3805, %v3804
      %v3833 = vpack.c.b16 %v3807, %v3806
      %v3834 = vpack.c.b16 %v3809, %v3808
      %v3835 = vpack.c.b16 %v3811, %v3810
      %v3836 = vpack.c.b16 %v3813, %v3812
      %v3837 = vpack.c.b16 %v3815, %v3814
      %v3838 = vpack.c.b16 %v3817, %v3816
      %v3839 = vpack.c.b16 %v3819, %v3818
      %v3840 = vpack.c.b16 %v3821, %v3820
      %v3841 = vpack.c.b16 %v3823, %v3822
      %v3842 = vpack.c.b16 %v3825, %v3824
      %v3843 = vpack.c.b16 %v3827, %v3826
      %v3860 = vunpack.c.l.b16 %v3712
      %v3861 = vunpack.c.l.b16 %v3715
      %v3862 = vunpack.c.l.b16 %v3718
      %v3863 = vunpack.c.l.b16 %v3721
      %v3864 = vunpack.c.l.b16 %v3724
      %v3865 = vunpack.c.l.b16 %v3727
      %v3866 = vunpack.c.l.b16 %v3730
      %v3867 = vunpack.c.l.b16 %v3733
      %v3868 = vunpack.c.l.b16 %v3736
      %v3869 = vunpack.c.l.b16 %v3739
      %v3870 = vunpack.c.l.b16 %v3742
      %v3871 = vunpack.c.l.b16 %v3745
      %v3872 = vunpack.c.l.b16 %v3748
      %v3873 = vunpack.c.l.b16 %v3751
      %v3874 = vunpack.c.l.b16 %v3754
      %v3875 = vunpack.c.l.b16 %v3757
      %v3876 = vpack.c.b16 %v3860, %v3860
      %v3877 = vpack.c.b16 %v3861, %v3861
      %v3878 = vpack.c.b16 %v3862, %v3862
      %v3879 = vpack.c.b16 %v3863, %v3863
      %v3880 = vpack.c.b16 %v3864, %v3864
      %v3881 = vpack.c.b16 %v3865, %v3865
      %v3882 = vpack.c.b16 %v3866, %v3866
      %v3883 = vpack.c.b16 %v3867, %v3867
      %v3884 = vpack.c.b16 %v3868, %v3868
      %v3885 = vpack.c.b16 %v3869, %v3869
      %v3886 = vpack.c.b16 %v3870, %v3870
      %v3887 = vpack.c.b16 %v3871, %v3871
      %v3888 = vpack.c.b16 %v3872, %v3872
      %v3889 = vpack.c.b16 %v3873, %v3873
      %v3890 = vpack.c.b16 %v3874, %v3874
      %v3891 = vpack.c.b16 %v3875, %v3875
      %v3893 = vshrl.u32 %v3828, 16
      %v3895 = vshll.u32 %v3828, 16
      %v3897 = vrot.slane %v3895, 1
      %v3898 = vor.u32 %v3893, %v3897
      %v3900 = vshll.u32 %v3876, 16
      %v3902 = vrot.slane %v3900, 1
      %v3903 = vsel %vm2051, %v3898, %v3902
      %v3905 = vshrl.u32 %v3829, 16
      %v3907 = vshll.u32 %v3829, 16
      %v3909 = vrot.slane %v3907, 1
      %v3910 = vor.u32 %v3905, %v3909
      %v3912 = vshll.u32 %v3877, 16
      %v3914 = vrot.slane %v3912, 1
      %v3915 = vsel %vm2051, %v3910, %v3914
      %v3917 = vshrl.u32 %v3830, 16
      %v3919 = vshll.u32 %v3830, 16
      %v3921 = vrot.slane %v3919, 1
      %v3922 = vor.u32 %v3917, %v3921
      %v3924 = vshll.u32 %v3878, 16
      %v3926 = vrot.slane %v3924, 1
      %v3927 = vsel %vm2051, %v3922, %v3926
      %v3929 = vshrl.u32 %v3831, 16
      %v3931 = vshll.u32 %v3831, 16
      %v3933 = vrot.slane %v3931, 1
      %v3934 = vor.u32 %v3929, %v3933
      %v3936 = vshll.u32 %v3879, 16
      %v3938 = vrot.slane %v3936, 1
      %v3939 = vsel %vm2051, %v3934, %v3938
      %v3941 = vshrl.u32 %v3832, 16
      %v3943 = vshll.u32 %v3832, 16
      %v3945 = vrot.slane %v3943, 1
      %v3946 = vor.u32 %v3941, %v3945
      %v3948 = vshll.u32 %v3880, 16
      %v3950 = vrot.slane %v3948, 1
      %v3951 = vsel %vm2051, %v3946, %v3950
      %v3953 = vshrl.u32 %v3833, 16
      %v3955 = vshll.u32 %v3833, 16
      %v3957 = vrot.slane %v3955, 1
      %v3958 = vor.u32 %v3953, %v3957
      %v3960 = vshll.u32 %v3881, 16
      %v3962 = vrot.slane %v3960, 1
      %v3963 = vsel %vm2051, %v3958, %v3962
      %v3965 = vshrl.u32 %v3834, 16
      %v3967 = vshll.u32 %v3834, 16
      %v3969 = vrot.slane %v3967, 1
      %v3970 = vor.u32 %v3965, %v3969
      %v3972 = vshll.u32 %v3882, 16
      %v3974 = vrot.slane %v3972, 1
      %v3975 = vsel %vm2051, %v3970, %v3974
      %v3977 = vshrl.u32 %v3835, 16
      %v3979 = vshll.u32 %v3835, 16
      %v3981 = vrot.slane %v3979, 1
      %v3982 = vor.u32 %v3977, %v3981
      %v3984 = vshll.u32 %v3883, 16
      %v3986 = vrot.slane %v3984, 1
      %v3987 = vsel %vm2051, %v3982, %v3986
      %v3989 = vshrl.u32 %v3836, 16
      %v3991 = vshll.u32 %v3836, 16
      %v3993 = vrot.slane %v3991, 1
      %v3994 = vor.u32 %v3989, %v3993
      %v3996 = vshll.u32 %v3884, 16
      %v3998 = vrot.slane %v3996, 1
      %v3999 = vsel %vm2051, %v3994, %v3998
      %v4001 = vshrl.u32 %v3837, 16
      %v4003 = vshll.u32 %v3837, 16
      %v4005 = vrot.slane %v4003, 1
      %v4006 = vor.u32 %v4001, %v4005
      %v4008 = vshll.u32 %v3885, 16
      %v4010 = vrot.slane %v4008, 1
      %v4011 = vsel %vm2051, %v4006, %v4010
      %v4013 = vshrl.u32 %v3838, 16
      %v4015 = vshll.u32 %v3838, 16
      %v4017 = vrot.slane %v4015, 1
      %v4018 = vor.u32 %v4013, %v4017
      %v4020 = vshll.u32 %v3886, 16
      %v4022 = vrot.slane %v4020, 1
      %v4023 = vsel %vm2051, %v4018, %v4022
      %v4025 = vshrl.u32 %v3839, 16
      %v4027 = vshll.u32 %v3839, 16
      %v4029 = vrot.slane %v4027, 1
      %v4030 = vor.u32 %v4025, %v4029
      %v4032 = vshll.u32 %v3887, 16
      %v4034 = vrot.slane %v4032, 1
      %v4035 = vsel %vm2051, %v4030, %v4034
      %v4037 = vshrl.u32 %v3840, 16
      %v4039 = vshll.u32 %v3840, 16
      %v4041 = vrot.slane %v4039, 1
      %v4042 = vor.u32 %v4037, %v4041
      %v4044 = vshll.u32 %v3888, 16
      %v4046 = vrot.slane %v4044, 1
      %v4047 = vsel %vm2051, %v4042, %v4046
      %v4049 = vshrl.u32 %v3841, 16
      %v4051 = vshll.u32 %v3841, 16
      %v4053 = vrot.slane %v4051, 1
      %v4054 = vor.u32 %v4049, %v4053
      %v4056 = vshll.u32 %v3889, 16
      %v4058 = vrot.slane %v4056, 1
      %v4059 = vsel %vm2051, %v4054, %v4058
      %v4061 = vshrl.u32 %v3842, 16
      %v4063 = vshll.u32 %v3842, 16
      %v4065 = vrot.slane %v4063, 1
      %v4066 = vor.u32 %v4061, %v4065
      %v4068 = vshll.u32 %v3890, 16
      %v4070 = vrot.slane %v4068, 1
      %v4071 = vsel %vm2051, %v4066, %v4070
      %v4073 = vshrl.u32 %v3843, 16
      %v4075 = vshll.u32 %v3843, 16
      %v4077 = vrot.slane %v4075, 1
      %v4078 = vor.u32 %v4073, %v4077
      %v4080 = vshll.u32 %v3891, 16
      %v4082 = vrot.slane %v4080, 1
      %v4083 = vsel %vm2051, %v4078, %v4082
      %4084 = vrot.lane.b32.xlu0 %v3903, 8
      %v4085 = vpop.permute.xlu0 %4084
      %4086 = vrot.lane.b32.xlu0 %v3915, 8
      %v4087 = vpop.permute.xlu0 %4086
      %4088 = vrot.lane.b32.xlu0 %v3927, 8
      %v4089 = vpop.permute.xlu0 %4088
      %4090 = vrot.lane.b32.xlu0 %v3939, 8
      %v4091 = vpop.permute.xlu0 %4090
      %4092 = vrot.lane.b32.xlu0 %v3951, 8
      %v4093 = vpop.permute.xlu0 %4092
      %4094 = vrot.lane.b32.xlu0 %v3963, 8
      %v4095 = vpop.permute.xlu0 %4094
      %4096 = vrot.lane.b32.xlu0 %v3975, 8
      %v4097 = vpop.permute.xlu0 %4096
      %4098 = vrot.lane.b32.xlu0 %v3987, 8
      %v4099 = vpop.permute.xlu0 %4098
      %4100 = vrot.lane.b32.xlu0 %v3999, 8
      %v4101 = vpop.permute.xlu0 %4100
      %4102 = vrot.lane.b32.xlu0 %v4011, 8
      %v4103 = vpop.permute.xlu0 %4102
      %4104 = vrot.lane.b32.xlu0 %v4023, 8
      %v4105 = vpop.permute.xlu0 %4104
      %4106 = vrot.lane.b32.xlu0 %v4035, 8
      %v4107 = vpop.permute.xlu0 %4106
      %4108 = vrot.lane.b32.xlu0 %v4047, 8
      %v4109 = vpop.permute.xlu0 %4108
      %4110 = vrot.lane.b32.xlu0 %v4059, 8
      %v4111 = vpop.permute.xlu0 %4110
      %4112 = vrot.lane.b32.xlu0 %v4071, 8
      %v4113 = vpop.permute.xlu0 %4112
      %4114 = vrot.lane.b32.xlu0 %v4083, 8
      %v4115 = vpop.permute.xlu0 %4114
      %v4116 = vrot.slane %v3828, 1
      %v4117 = vrot.slane %v3876, 1
      %v4118 = vsel %vm2276, %v4116, %v4117
      %v4119 = vrot.slane %v3829, 1
      %v4120 = vrot.slane %v3877, 1
      %v4121 = vsel %vm2276, %v4119, %v4120
      %v4122 = vrot.slane %v3830, 1
      %v4123 = vrot.slane %v3878, 1
      %v4124 = vsel %vm2276, %v4122, %v4123
      %v4125 = vrot.slane %v3831, 1
      %v4126 = vrot.slane %v3879, 1
      %v4127 = vsel %vm2276, %v4125, %v4126
      %v4128 = vrot.slane %v3832, 1
      %v4129 = vrot.slane %v3880, 1
      %v4130 = vsel %vm2276, %v4128, %v4129
      %v4131 = vrot.slane %v3833, 1
      %v4132 = vrot.slane %v3881, 1
      %v4133 = vsel %vm2276, %v4131, %v4132
      %v4134 = vrot.slane %v3834, 1
      %v4135 = vrot.slane %v3882, 1
      %v4136 = vsel %vm2276, %v4134, %v4135
      %v4137 = vrot.slane %v3835, 1
      %v4138 = vrot.slane %v3883, 1
      %v4139 = vsel %vm2276, %v4137, %v4138
      %v4140 = vrot.slane %v3836, 1
      %v4141 = vrot.slane %v3884, 1
      %v4142 = vsel %vm2276, %v4140, %v4141
      %v4143 = vrot.slane %v3837, 1
      %v4144 = vrot.slane %v3885, 1
      %v4145 = vsel %vm2276, %v4143, %v4144
      %v4146 = vrot.slane %v3838, 1
      %v4147 = vrot.slane %v3886, 1
      %v4148 = vsel %vm2276, %v4146, %v4147
      %v4149 = vrot.slane %v3839, 1
      %v4150 = vrot.slane %v3887, 1
      %v4151 = vsel %vm2276, %v4149, %v4150
      %v4152 = vrot.slane %v3840, 1
      %v4153 = vrot.slane %v3888, 1
      %v4154 = vsel %vm2276, %v4152, %v4153
      %v4155 = vrot.slane %v3841, 1
      %v4156 = vrot.slane %v3889, 1
      %v4157 = vsel %vm2276, %v4155, %v4156
      %v4158 = vrot.slane %v3842, 1
      %v4159 = vrot.slane %v3890, 1
      %v4160 = vsel %vm2276, %v4158, %v4159
      %v4161 = vrot.slane %v3843, 1
      %v4162 = vrot.slane %v3891, 1
      %v4163 = vsel %vm2276, %v4161, %v4162
      %4164 = vrot.lane.b32.xlu0 %v4118, 16
      %v4165 = vpop.permute.xlu0 %4164
      %4166 = vrot.lane.b32.xlu0 %v4121, 16
      %v4167 = vpop.permute.xlu0 %4166
      %4168 = vrot.lane.b32.xlu0 %v4124, 16
      %v4169 = vpop.permute.xlu0 %4168
      %4170 = vrot.lane.b32.xlu0 %v4127, 16
      %v4171 = vpop.permute.xlu0 %4170
      %4172 = vrot.lane.b32.xlu0 %v4130, 16
      %v4173 = vpop.permute.xlu0 %4172
      %4174 = vrot.lane.b32.xlu0 %v4133, 16
      %v4175 = vpop.permute.xlu0 %4174
      %4176 = vrot.lane.b32.xlu0 %v4136, 16
      %v4177 = vpop.permute.xlu0 %4176
      %4178 = vrot.lane.b32.xlu0 %v4139, 16
      %v4179 = vpop.permute.xlu0 %4178
      %4180 = vrot.lane.b32.xlu0 %v4142, 16
      %v4181 = vpop.permute.xlu0 %4180
      %4182 = vrot.lane.b32.xlu0 %v4145, 16
      %v4183 = vpop.permute.xlu0 %4182
      %4184 = vrot.lane.b32.xlu0 %v4148, 16
      %v4185 = vpop.permute.xlu0 %4184
      %4186 = vrot.lane.b32.xlu0 %v4151, 16
      %v4187 = vpop.permute.xlu0 %4186
      %4188 = vrot.lane.b32.xlu0 %v4154, 16
      %v4189 = vpop.permute.xlu0 %4188
      %4190 = vrot.lane.b32.xlu0 %v4157, 16
      %v4191 = vpop.permute.xlu0 %4190
      %4192 = vrot.lane.b32.xlu0 %v4160, 16
      %v4193 = vpop.permute.xlu0 %4192
      %4194 = vrot.lane.b32.xlu0 %v4163, 16
      %v4195 = vpop.permute.xlu0 %4194
      %v4198 = vunpack.c.l.b16 %v3758
      %v4199 = vunpack.c.l.b16 %v3759
      %v4200 = vpack.c.b16 %v4199, %v4198
      %4201 = vrot.lane.b32.xlu0 %v3829, 24
      %v4202 = vpop.permute.xlu0 %4201
      %4203 = vrot.lane.b32.xlu0 %v3830, 24
      %v4204 = vpop.permute.xlu0 %4203
      %4205 = vrot.lane.b32.xlu0 %v3831, 24
      %v4206 = vpop.permute.xlu0 %4205
      %4207 = vrot.lane.b32.xlu0 %v3832, 24
      %v4208 = vpop.permute.xlu0 %4207
      %4209 = vrot.lane.b32.xlu0 %v3833, 24
      %v4210 = vpop.permute.xlu0 %4209
      %4211 = vrot.lane.b32.xlu0 %v3834, 24
      %v4212 = vpop.permute.xlu0 %4211
      %4213 = vrot.lane.b32.xlu0 %v3835, 24
      %v4214 = vpop.permute.xlu0 %4213
      %4215 = vrot.lane.b32.xlu0 %v3836, 24
      %v4216 = vpop.permute.xlu0 %4215
      %4217 = vrot.lane.b32.xlu0 %v3837, 24
      %v4218 = vpop.permute.xlu0 %4217
      %4219 = vrot.lane.b32.xlu0 %v3838, 24
      %v4220 = vpop.permute.xlu0 %4219
      %4221 = vrot.lane.b32.xlu0 %v3839, 24
      %v4222 = vpop.permute.xlu0 %4221
      %4223 = vrot.lane.b32.xlu0 %v3840, 24
      %v4224 = vpop.permute.xlu0 %4223
      %4225 = vrot.lane.b32.xlu0 %v3841, 24
      %v4226 = vpop.permute.xlu0 %4225
      %4227 = vrot.lane.b32.xlu0 %v3842, 24
      %v4228 = vpop.permute.xlu0 %4227
      %4229 = vrot.lane.b32.xlu0 %v3843, 24
      %v4230 = vpop.permute.xlu0 %4229
      %4231 = vrot.lane.b32.xlu0 %v4200, 24
      %v4232 = vpop.permute.xlu0 %4231
      %v4234 = vunpack.c.l.b16 %v3760
      %v4235 = vpack.c.b16 %v4234, %v4234
      %v4237 = vshrl.u32 %v4200, 16
      %v4239 = vshll.u32 %v4200, 16
      %v4241 = vrot.slane %v4239, 1
      %v4242 = vor.u32 %v4237, %v4241
      %v4244 = vshll.u32 %v4235, 16
      %v4246 = vrot.slane %v4244, 1
      %v4247 = vsel %vm2051, %v4242, %v4246
      %4248 = vrot.lane.b32.xlu0 %v3915, 32
      %v4249 = vpop.permute.xlu0 %4248
      %4250 = vrot.lane.b32.xlu0 %v3927, 32
      %v4251 = vpop.permute.xlu0 %4250
      %4252 = vrot.lane.b32.xlu0 %v3939, 32
      %v4253 = vpop.permute.xlu0 %4252
      %4254 = vrot.lane.b32.xlu0 %v3951, 32
      %v4255 = vpop.permute.xlu0 %4254
      %4256 = vrot.lane.b32.xlu0 %v3963, 32
      %v4257 = vpop.permute.xlu0 %4256
      %4258 = vrot.lane.b32.xlu0 %v3975, 32
      %v4259 = vpop.permute.xlu0 %4258
      %4260 = vrot.lane.b32.xlu0 %v3987, 32
      %v4261 = vpop.permute.xlu0 %4260
      %4262 = vrot.lane.b32.xlu0 %v3999, 32
      %v4263 = vpop.permute.xlu0 %4262
      %4264 = vrot.lane.b32.xlu0 %v4011, 32
      %v4265 = vpop.permute.xlu0 %4264
      %4266 = vrot.lane.b32.xlu0 %v4023, 32
      %v4267 = vpop.permute.xlu0 %4266
      %4268 = vrot.lane.b32.xlu0 %v4035, 32
      %v4269 = vpop.permute.xlu0 %4268
      %4270 = vrot.lane.b32.xlu0 %v4047, 32
      %v4271 = vpop.permute.xlu0 %4270
      %4272 = vrot.lane.b32.xlu0 %v4059, 32
      %v4273 = vpop.permute.xlu0 %4272
      %4274 = vrot.lane.b32.xlu0 %v4071, 32
      %v4275 = vpop.permute.xlu0 %4274
      %4276 = vrot.lane.b32.xlu0 %v4083, 32
      %v4277 = vpop.permute.xlu0 %4276
      %4278 = vrot.lane.b32.xlu0 %v4247, 32
      %v4279 = vpop.permute.xlu0 %4278
      %v4280 = vrot.slane %v4200, 1
      %v4281 = vrot.slane %v4235, 1
      %v4282 = vsel %vm2276, %v4280, %v4281
      %4283 = vrot.lane.b32.xlu0 %v4121, 40
      %v4284 = vpop.permute.xlu0 %4283
      %4285 = vrot.lane.b32.xlu0 %v4124, 40
      %v4286 = vpop.permute.xlu0 %4285
      %4287 = vrot.lane.b32.xlu0 %v4127, 40
      %v4288 = vpop.permute.xlu0 %4287
      %4289 = vrot.lane.b32.xlu0 %v4130, 40
      %v4290 = vpop.permute.xlu0 %4289
      %4291 = vrot.lane.b32.xlu0 %v4133, 40
      %v4292 = vpop.permute.xlu0 %4291
      %4293 = vrot.lane.b32.xlu0 %v4136, 40
      %v4294 = vpop.permute.xlu0 %4293
      %4295 = vrot.lane.b32.xlu0 %v4139, 40
      %v4296 = vpop.permute.xlu0 %4295
      %4297 = vrot.lane.b32.xlu0 %v4142, 40
      %v4298 = vpop.permute.xlu0 %4297
      %4299 = vrot.lane.b32.xlu0 %v4145, 40
      %v4300 = vpop.permute.xlu0 %4299
      %4301 = vrot.lane.b32.xlu0 %v4148, 40
      %v4302 = vpop.permute.xlu0 %4301
      %4303 = vrot.lane.b32.xlu0 %v4151, 40
      %v4304 = vpop.permute.xlu0 %4303
      %4305 = vrot.lane.b32.xlu0 %v4154, 40
      %v4306 = vpop.permute.xlu0 %4305
      %4307 = vrot.lane.b32.xlu0 %v4157, 40
      %v4308 = vpop.permute.xlu0 %4307
      %4309 = vrot.lane.b32.xlu0 %v4160, 40
      %v4310 = vpop.permute.xlu0 %4309
      %4311 = vrot.lane.b32.xlu0 %v4163, 40
      %v4312 = vpop.permute.xlu0 %4311
      %4313 = vrot.lane.b32.xlu0 %v4282, 40
      %v4314 = vpop.permute.xlu0 %4313
      %v4317 = vunpack.c.l.b16 %v3761
      %v4318 = vunpack.c.l.b16 %v3762
      %v4319 = vpack.c.b16 %v4318, %v4317
      %4320 = vrot.lane.b32.xlu0 %v3830, 48
      %v4321 = vpop.permute.xlu0 %4320
      %4322 = vrot.lane.b32.xlu0 %v3831, 48
      %v4323 = vpop.permute.xlu0 %4322
      %4324 = vrot.lane.b32.xlu0 %v3832, 48
      %v4325 = vpop.permute.xlu0 %4324
      %4326 = vrot.lane.b32.xlu0 %v3833, 48
      %v4327 = vpop.permute.xlu0 %4326
      %4328 = vrot.lane.b32.xlu0 %v3834, 48
      %v4329 = vpop.permute.xlu0 %4328
      %4330 = vrot.lane.b32.xlu0 %v3835, 48
      %v4331 = vpop.permute.xlu0 %4330
      %4332 = vrot.lane.b32.xlu0 %v3836, 48
      %v4333 = vpop.permute.xlu0 %4332
      %4334 = vrot.lane.b32.xlu0 %v3837, 48
      %v4335 = vpop.permute.xlu0 %4334
      %4336 = vrot.lane.b32.xlu0 %v3838, 48
      %v4337 = vpop.permute.xlu0 %4336
      %4338 = vrot.lane.b32.xlu0 %v3839, 48
      %v4339 = vpop.permute.xlu0 %4338
      %4340 = vrot.lane.b32.xlu0 %v3840, 48
      %v4341 = vpop.permute.xlu0 %4340
      %4342 = vrot.lane.b32.xlu0 %v3841, 48
      %v4343 = vpop.permute.xlu0 %4342
      %4344 = vrot.lane.b32.xlu0 %v3842, 48
      %v4345 = vpop.permute.xlu0 %4344
      %4346 = vrot.lane.b32.xlu0 %v3843, 48
      %v4347 = vpop.permute.xlu0 %4346
      %4348 = vrot.lane.b32.xlu0 %v4200, 48
      %v4349 = vpop.permute.xlu0 %4348
      %4350 = vrot.lane.b32.xlu0 %v4319, 48
      %v4351 = vpop.permute.xlu0 %4350
      %v4353 = vunpack.c.l.b16 %v3763
      %v4354 = vpack.c.b16 %v4353, %v4353
      %v4356 = vshrl.u32 %v4319, 16
      %v4358 = vshll.u32 %v4319, 16
      %v4360 = vrot.slane %v4358, 1
      %v4361 = vor.u32 %v4356, %v4360
      %v4363 = vshll.u32 %v4354, 16
      %v4365 = vrot.slane %v4363, 1
      %v4366 = vsel %vm2051, %v4361, %v4365
      %4367 = vrot.lane.b32.xlu0 %v3927, 56
      %v4368 = vpop.permute.xlu0 %4367
      %4369 = vrot.lane.b32.xlu0 %v3939, 56
      %v4370 = vpop.permute.xlu0 %4369
      %4371 = vrot.lane.b32.xlu0 %v3951, 56
      %v4372 = vpop.permute.xlu0 %4371
      %4373 = vrot.lane.b32.xlu0 %v3963, 56
      %v4374 = vpop.permute.xlu0 %4373
      %4375 = vrot.lane.b32.xlu0 %v3975, 56
      %v4376 = vpop.permute.xlu0 %4375
      %4377 = vrot.lane.b32.xlu0 %v3987, 56
      %v4378 = vpop.permute.xlu0 %4377
      %4379 = vrot.lane.b32.xlu0 %v3999, 56
      %v4380 = vpop.permute.xlu0 %4379
      %4381 = vrot.lane.b32.xlu0 %v4011, 56
      %v4382 = vpop.permute.xlu0 %4381
      %4383 = vrot.lane.b32.xlu0 %v4023, 56
      %v4384 = vpop.permute.xlu0 %4383
      %4385 = vrot.lane.b32.xlu0 %v4035, 56
      %v4386 = vpop.permute.xlu0 %4385
      %4387 = vrot.lane.b32.xlu0 %v4047, 56
      %v4388 = vpop.permute.xlu0 %4387
      %4389 = vrot.lane.b32.xlu0 %v4059, 56
      %v4390 = vpop.permute.xlu0 %4389
      %4391 = vrot.lane.b32.xlu0 %v4071, 56
      %v4392 = vpop.permute.xlu0 %4391
      %4393 = vrot.lane.b32.xlu0 %v4083, 56
      %v4394 = vpop.permute.xlu0 %4393
      %4395 = vrot.lane.b32.xlu0 %v4247, 56
      %v4396 = vpop.permute.xlu0 %4395
      %4397 = vrot.lane.b32.xlu0 %v4366, 56
      %v4398 = vpop.permute.xlu0 %4397
      %v4399 = vrot.slane %v4319, 1
      %v4400 = vrot.slane %v4354, 1
      %v4401 = vsel %vm2276, %v4399, %v4400
      %4402 = vrot.lane.b32.xlu0 %v4124, 64
      %v4403 = vpop.permute.xlu0 %4402
      %4404 = vrot.lane.b32.xlu0 %v4127, 64
      %v4405 = vpop.permute.xlu0 %4404
      %4406 = vrot.lane.b32.xlu0 %v4130, 64
      %v4407 = vpop.permute.xlu0 %4406
      %4408 = vrot.lane.b32.xlu0 %v4133, 64
      %v4409 = vpop.permute.xlu0 %4408
      %4410 = vrot.lane.b32.xlu0 %v4136, 64
      %v4411 = vpop.permute.xlu0 %4410
      %4412 = vrot.lane.b32.xlu0 %v4139, 64
      %v4413 = vpop.permute.xlu0 %4412
      %4414 = vrot.lane.b32.xlu0 %v4142, 64
      %v4415 = vpop.permute.xlu0 %4414
      %4416 = vrot.lane.b32.xlu0 %v4145, 64
      %v4417 = vpop.permute.xlu0 %4416
      %4418 = vrot.lane.b32.xlu0 %v4148, 64
      %v4419 = vpop.permute.xlu0 %4418
      %4420 = vrot.lane.b32.xlu0 %v4151, 64
      %v4421 = vpop.permute.xlu0 %4420
      %4422 = vrot.lane.b32.xlu0 %v4154, 64
      %v4423 = vpop.permute.xlu0 %4422
      %4424 = vrot.lane.b32.xlu0 %v4157, 64
      %v4425 = vpop.permute.xlu0 %4424
      %4426 = vrot.lane.b32.xlu0 %v4160, 64
      %v4427 = vpop.permute.xlu0 %4426
      %4428 = vrot.lane.b32.xlu0 %v4163, 64
      %v4429 = vpop.permute.xlu0 %4428
      %4430 = vrot.lane.b32.xlu0 %v4282, 64
      %v4431 = vpop.permute.xlu0 %4430
      %4432 = vrot.lane.b32.xlu0 %v4401, 64
      %v4433 = vpop.permute.xlu0 %4432
      %v4435 = vsel %vm2595, %v3828, %v4085
      %v4437 = vsel %vm2595, %v3829, %v4087
      %v4439 = vsel %vm2595, %v3830, %v4089
      %v4441 = vsel %vm2595, %v3831, %v4091
      %v4443 = vsel %vm2595, %v3832, %v4093
      %v4445 = vsel %vm2595, %v3833, %v4095
      %v4447 = vsel %vm2595, %v3834, %v4097
      %v4449 = vsel %vm2595, %v3835, %v4099
      %v4451 = vsel %vm2595, %v3836, %v4101
      %v4453 = vsel %vm2595, %v3837, %v4103
      %v4455 = vsel %vm2595, %v3838, %v4105
      %v4457 = vsel %vm2595, %v3839, %v4107
      %v4459 = vsel %vm2595, %v3840, %v4109
      %v4461 = vsel %vm2595, %v3841, %v4111
      %v4463 = vsel %vm2595, %v3842, %v4113
      %v4465 = vsel %vm2595, %v3843, %v4115
      %v4467 = vsel %vm2628, %v4435, %v4165
      %v4469 = vsel %vm2628, %v4437, %v4167
      %v4471 = vsel %vm2628, %v4439, %v4169
      %v4473 = vsel %vm2628, %v4441, %v4171
      %v4475 = vsel %vm2628, %v4443, %v4173
      %v4477 = vsel %vm2628, %v4445, %v4175
      %v4479 = vsel %vm2628, %v4447, %v4177
      %v4481 = vsel %vm2628, %v4449, %v4179
      %v4483 = vsel %vm2628, %v4451, %v4181
      %v4485 = vsel %vm2628, %v4453, %v4183
      %v4487 = vsel %vm2628, %v4455, %v4185
      %v4489 = vsel %vm2628, %v4457, %v4187
      %v4491 = vsel %vm2628, %v4459, %v4189
      %v4493 = vsel %vm2628, %v4461, %v4191
      %v4495 = vsel %vm2628, %v4463, %v4193
      %v4497 = vsel %vm2628, %v4465, %v4195
      %v4499 = vsel %vm2661, %v4467, %v4202
      %v4501 = vsel %vm2661, %v4469, %v4204
      %v4503 = vsel %vm2661, %v4471, %v4206
      %v4505 = vsel %vm2661, %v4473, %v4208
      %v4507 = vsel %vm2661, %v4475, %v4210
      %v4509 = vsel %vm2661, %v4477, %v4212
      %v4511 = vsel %vm2661, %v4479, %v4214
      %v4513 = vsel %vm2661, %v4481, %v4216
      %v4515 = vsel %vm2661, %v4483, %v4218
      %v4517 = vsel %vm2661, %v4485, %v4220
      %v4519 = vsel %vm2661, %v4487, %v4222
      %v4521 = vsel %vm2661, %v4489, %v4224
      %v4523 = vsel %vm2661, %v4491, %v4226
      %v4525 = vsel %vm2661, %v4493, %v4228
      %v4527 = vsel %vm2661, %v4495, %v4230
      %v4529 = vsel %vm2661, %v4497, %v4232
      %v4531 = vsel %vm2694, %v4499, %v4249
      %v4533 = vsel %vm2694, %v4501, %v4251
      %v4535 = vsel %vm2694, %v4503, %v4253
      %v4537 = vsel %vm2694, %v4505, %v4255
      %v4539 = vsel %vm2694, %v4507, %v4257
      %v4541 = vsel %vm2694, %v4509, %v4259
      %v4543 = vsel %vm2694, %v4511, %v4261
      %v4545 = vsel %vm2694, %v4513, %v4263
      %v4547 = vsel %vm2694, %v4515, %v4265
      %v4549 = vsel %vm2694, %v4517, %v4267
      %v4551 = vsel %vm2694, %v4519, %v4269
      %v4553 = vsel %vm2694, %v4521, %v4271
      %v4555 = vsel %vm2694, %v4523, %v4273
      %v4557 = vsel %vm2694, %v4525, %v4275
      %v4559 = vsel %vm2694, %v4527, %v4277
      %v4561 = vsel %vm2694, %v4529, %v4279
      %v4563 = vsel %vm2727, %v4531, %v4284
      %v4565 = vsel %vm2727, %v4533, %v4286
      %v4567 = vsel %vm2727, %v4535, %v4288
      %v4569 = vsel %vm2727, %v4537, %v4290
      %v4571 = vsel %vm2727, %v4539, %v4292
      %v4573 = vsel %vm2727, %v4541, %v4294
      %v4575 = vsel %vm2727, %v4543, %v4296
      %v4577 = vsel %vm2727, %v4545, %v4298
      %v4579 = vsel %vm2727, %v4547, %v4300
      %v4581 = vsel %vm2727, %v4549, %v4302
      %v4583 = vsel %vm2727, %v4551, %v4304
      %v4585 = vsel %vm2727, %v4553, %v4306
      %v4587 = vsel %vm2727, %v4555, %v4308
      %v4589 = vsel %vm2727, %v4557, %v4310
      %v4591 = vsel %vm2727, %v4559, %v4312
      %v4593 = vsel %vm2727, %v4561, %v4314
      %v4595 = vsel %vm2760, %v4563, %v4321
      %v4597 = vsel %vm2760, %v4565, %v4323
      %v4599 = vsel %vm2760, %v4567, %v4325
      %v4601 = vsel %vm2760, %v4569, %v4327
      %v4603 = vsel %vm2760, %v4571, %v4329
      %v4605 = vsel %vm2760, %v4573, %v4331
      %v4607 = vsel %vm2760, %v4575, %v4333
      %v4609 = vsel %vm2760, %v4577, %v4335
      %v4611 = vsel %vm2760, %v4579, %v4337
      %v4613 = vsel %vm2760, %v4581, %v4339
      %v4615 = vsel %vm2760, %v4583, %v4341
      %v4617 = vsel %vm2760, %v4585, %v4343
      %v4619 = vsel %vm2760, %v4587, %v4345
      %v4621 = vsel %vm2760, %v4589, %v4347
      %v4623 = vsel %vm2760, %v4591, %v4349
      %v4625 = vsel %vm2760, %v4593, %v4351
      %v4627 = vsel %vm2793, %v4595, %v4368
      %v4629 = vsel %vm2793, %v4597, %v4370
      %v4631 = vsel %vm2793, %v4599, %v4372
      %v4633 = vsel %vm2793, %v4601, %v4374
      %v4635 = vsel %vm2793, %v4603, %v4376
      %v4637 = vsel %vm2793, %v4605, %v4378
      %v4639 = vsel %vm2793, %v4607, %v4380
      %v4641 = vsel %vm2793, %v4609, %v4382
      %v4643 = vsel %vm2793, %v4611, %v4384
      %v4645 = vsel %vm2793, %v4613, %v4386
      %v4647 = vsel %vm2793, %v4615, %v4388
      %v4649 = vsel %vm2793, %v4617, %v4390
      %v4651 = vsel %vm2793, %v4619, %v4392
      %v4653 = vsel %vm2793, %v4621, %v4394
      %v4655 = vsel %vm2793, %v4623, %v4396
      %v4657 = vsel %vm2793, %v4625, %v4398
      %v4659 = vsel %vm2826, %v4627, %v4403
      %v4661 = vsel %vm2826, %v4629, %v4405
      %v4663 = vsel %vm2826, %v4631, %v4407
      %v4665 = vsel %vm2826, %v4633, %v4409
      %v4667 = vsel %vm2826, %v4635, %v4411
      %v4669 = vsel %vm2826, %v4637, %v4413
      %v4671 = vsel %vm2826, %v4639, %v4415
      %v4673 = vsel %vm2826, %v4641, %v4417
      %v4675 = vsel %vm2826, %v4643, %v4419
      %v4677 = vsel %vm2826, %v4645, %v4421
      %v4679 = vsel %vm2826, %v4647, %v4423
      %v4681 = vsel %vm2826, %v4649, %v4425
      %v4683 = vsel %vm2826, %v4651, %v4427
      %v4685 = vsel %vm2826, %v4653, %v4429
      %v4687 = vsel %vm2826, %v4655, %v4431
      %v4689 = vsel %vm2826, %v4657, %v4433
      %v4690 = vld [vmem:[%s3] sm:$0xf]
      %v4691 = vld [vmem:[%s3 + $0x4] sm:$0xf]
      %v4692 = vld [vmem:[%s3 + $0x8] sm:$0xf]
      %v4693 = vld [vmem:[%s3 + $0xc] sm:$0xf]
      %v4694 = vld [vmem:[%s3 + $0x10] sm:$0xf]
      %v4695 = vld [vmem:[%s3 + $0x14] sm:$0xf]
      %v4696 = vld [vmem:[%s3 + $0x18] sm:$0xf]
      %v4697 = vld [vmem:[%s3 + $0x1c] sm:$0xf]
      %v4698 = vld [vmem:[%s3 + $0x20] sm:$0xf]
      %v4708 = vunpack.c.l.b16 %v4690
      %v4709 = vunpack.c.l.b16 %v4691
      %v4710 = vunpack.c.l.b16 %v4692
      %v4711 = vunpack.c.l.b16 %v4693
      %v4712 = vunpack.c.l.b16 %v4694
      %v4713 = vunpack.c.l.b16 %v4695
      %v4714 = vunpack.c.l.b16 %v4696
      %v4715 = vunpack.c.l.b16 %v4697
      %v4716 = vunpack.c.l.b16 %v4698
      %v4717 = vpack.c.b16 %v4709, %v4708
      %v4718 = vpack.c.b16 %v4711, %v4710
      %v4719 = vpack.c.b16 %v4713, %v4712
      %v4720 = vpack.c.b16 %v4715, %v4714
      %v4721 = vpack.c.b16 %v4716, %v4716
      %v4726 = vsel %vm2895, %v4659, 0
      %v4728 = vsel %vm2895, %v4661, 0
      %v4730 = vsel %vm2895, %v4663, 0
      %v4732 = vsel %vm2895, %v4665, 0
      %v4734 = vsel %vm2895, %v4667, 0
      %v4736 = vsel %vm2895, %v4669, 0
      %v4738 = vsel %vm2895, %v4671, 0
      %v4740 = vsel %vm2895, %v4673, 0
      %v4742 = vsel %vm2895, %v4675, 0
      %v4744 = vsel %vm2895, %v4677, 0
      %v4746 = vsel %vm2895, %v4679, 0
      %v4748 = vsel %vm2895, %v4681, 0
      %v4750 = vsel %vm2895, %v4683, 0
      %v4752 = vsel %vm2895, %v4685, 0
      %v4754 = vsel %vm2895, %v4687, 0
      %v4756 = vsel %vm2895, %v4689, 0
      %v4759 = vsel %vm2928, %v4721, 0
      %4761 = vmatpush.bf16.msra.mxu0 0
      %4762 = vmatpush.bf16.msra.mxu0 0
      %4763 = vmatpush.bf16.msra.mxu0 0
      %4764 = vmatpush.bf16.msra.mxu0 %v4759
      %4765 = vmatpush.bf16.msra.mxu0 %v4720
      %4766 = vmatpush.bf16.msra.mxu0 %v4719
      %4767 = vmatpush.bf16.msra.mxu0 %v4718
      %4768 = vmatpush.bf16.msra.mxu0 %v4717
      %4769 = vmatmul.bf16.gmra.mxu0 %v4726
      %v4770 = vpop.f32.mrf.mxu0
      %v4771 = vadd.f32 0.0, %v4770
      %v4772 = vpop.f32.mrf.mxu0
      %v4773 = vadd.f32 0.0, %v4772
      %4774 = vmatmul.bf16.gmra.mxu0 %v4728
      %v4775 = vpop.f32.mrf.mxu0
      %v4776 = vadd.f32 0.0, %v4775
      %v4777 = vpop.f32.mrf.mxu0
      %v4778 = vadd.f32 0.0, %v4777
      %4779 = vmatmul.bf16.gmra.mxu0 %v4730
      %v4780 = vpop.f32.mrf.mxu0
      %v4781 = vadd.f32 0.0, %v4780
      %v4782 = vpop.f32.mrf.mxu0
      %v4783 = vadd.f32 0.0, %v4782
      %4784 = vmatmul.bf16.gmra.mxu0 %v4732
      %v4785 = vpop.f32.mrf.mxu0
      %v4786 = vadd.f32 0.0, %v4785
      %v4787 = vpop.f32.mrf.mxu0
      %v4788 = vadd.f32 0.0, %v4787
      %4789 = vmatmul.bf16.gmra.mxu0 %v4734
      %v4790 = vpop.f32.mrf.mxu0
      %v4791 = vadd.f32 0.0, %v4790
      %v4792 = vpop.f32.mrf.mxu0
      %v4793 = vadd.f32 0.0, %v4792
      %4794 = vmatmul.bf16.gmra.mxu0 %v4736
      %v4795 = vpop.f32.mrf.mxu0
      %v4796 = vadd.f32 0.0, %v4795
      %v4797 = vpop.f32.mrf.mxu0
      %v4798 = vadd.f32 0.0, %v4797
      %4799 = vmatmul.bf16.gmra.mxu0 %v4738
      %v4800 = vpop.f32.mrf.mxu0
      %v4801 = vadd.f32 0.0, %v4800
      %v4802 = vpop.f32.mrf.mxu0
      %v4803 = vadd.f32 0.0, %v4802
      %4804 = vmatmul.bf16.gmra.mxu0 %v4740
      %v4805 = vpop.f32.mrf.mxu0
      %v4806 = vadd.f32 0.0, %v4805
      %v4807 = vpop.f32.mrf.mxu0
      %v4808 = vadd.f32 0.0, %v4807
      %4809 = vmatmul.bf16.gmra.mxu0 %v4742
      %v4810 = vpop.f32.mrf.mxu0
      %v4811 = vadd.f32 0.0, %v4810
      %v4812 = vpop.f32.mrf.mxu0
      %v4813 = vadd.f32 0.0, %v4812
      %4814 = vmatmul.bf16.gmra.mxu0 %v4744
      %v4815 = vpop.f32.mrf.mxu0
      %v4816 = vadd.f32 0.0, %v4815
      %v4817 = vpop.f32.mrf.mxu0
      %v4818 = vadd.f32 0.0, %v4817
      %4819 = vmatmul.bf16.gmra.mxu0 %v4746
      %v4820 = vpop.f32.mrf.mxu0
      %v4821 = vadd.f32 0.0, %v4820
      %v4822 = vpop.f32.mrf.mxu0
      %v4823 = vadd.f32 0.0, %v4822
      %4824 = vmatmul.bf16.gmra.mxu0 %v4748
      %v4825 = vpop.f32.mrf.mxu0
      %v4826 = vadd.f32 0.0, %v4825
      %v4827 = vpop.f32.mrf.mxu0
      %v4828 = vadd.f32 0.0, %v4827
      %4829 = vmatmul.bf16.gmra.mxu0 %v4750
      %v4830 = vpop.f32.mrf.mxu0
      %v4831 = vadd.f32 0.0, %v4830
      %v4832 = vpop.f32.mrf.mxu0
      %v4833 = vadd.f32 0.0, %v4832
      %4834 = vmatmul.bf16.gmra.mxu0 %v4752
      %v4835 = vpop.f32.mrf.mxu0
      %v4836 = vadd.f32 0.0, %v4835
      %v4837 = vpop.f32.mrf.mxu0
      %v4838 = vadd.f32 0.0, %v4837
      %4839 = vmatmul.bf16.gmra.mxu0 %v4754
      %v4840 = vpop.f32.mrf.mxu0
      %v4841 = vadd.f32 0.0, %v4840
      %v4842 = vpop.f32.mrf.mxu0
      %v4843 = vadd.f32 0.0, %v4842
      %4844 = vmatmul.bf16.gmra.mxu0 %v4756
      %v4845 = vpop.f32.mrf.mxu0
      %v4846 = vadd.f32 0.0, %v4845
      %v4847 = vpop.f32.mrf.mxu0
      %v4848 = vadd.f32 0.0, %v4847
      %4849 = vdwg.mxu0
      %v4850 = vld [vmem:[%s6] sm:$0x1]
      %v4852 = vperm.slane %v4850, 0
      %v4854 = vmul.f32 %v4771, %v4852
      %v4855 = vmul.f32 %v4773, %v4852
      %v4856 = vmul.f32 %v4776, %v4852
      %v4857 = vmul.f32 %v4778, %v4852
      %v4858 = vmul.f32 %v4781, %v4852
      %v4859 = vmul.f32 %v4783, %v4852
      %v4860 = vmul.f32 %v4786, %v4852
      %v4861 = vmul.f32 %v4788, %v4852
      %v4862 = vmul.f32 %v4791, %v4852
      %v4863 = vmul.f32 %v4793, %v4852
      %v4864 = vmul.f32 %v4796, %v4852
      %v4865 = vmul.f32 %v4798, %v4852
      %v4866 = vmul.f32 %v4801, %v4852
      %v4867 = vmul.f32 %v4803, %v4852
      %v4868 = vmul.f32 %v4806, %v4852
      %v4869 = vmul.f32 %v4808, %v4852
      %v4870 = vmul.f32 %v4811, %v4852
      %v4871 = vmul.f32 %v4813, %v4852
      %v4872 = vmul.f32 %v4816, %v4852
      %v4873 = vmul.f32 %v4818, %v4852
      %v4874 = vmul.f32 %v4821, %v4852
      %v4875 = vmul.f32 %v4823, %v4852
      %v4876 = vmul.f32 %v4826, %v4852
      %v4877 = vmul.f32 %v4828, %v4852
      %v4878 = vmul.f32 %v4831, %v4852
      %v4879 = vmul.f32 %v4833, %v4852
      %v4880 = vmul.f32 %v4836, %v4852
      %v4881 = vmul.f32 %v4838, %v4852
      %v4882 = vmul.f32 %v4841, %v4852
      %v4883 = vmul.f32 %v4843, %v4852
      %v4884 = vmul.f32 %v4846, %v4852
      %v4885 = vmul.f32 %v4848, %v4852
      %v4886 = vld [vmem:[%s7] sm:$0x1]
      %v4888 = vperm.slane %v4886, 0
      %v4890 = vadd.f32 %v4854, %v4888
      %v4891 = vadd.f32 %v4855, %v4888
      %v4892 = vadd.f32 %v4856, %v4888
      %v4893 = vadd.f32 %v4857, %v4888
      %v4894 = vadd.f32 %v4858, %v4888
      %v4895 = vadd.f32 %v4859, %v4888
      %v4896 = vadd.f32 %v4860, %v4888
      %v4897 = vadd.f32 %v4861, %v4888
      %v4898 = vadd.f32 %v4862, %v4888
      %v4899 = vadd.f32 %v4863, %v4888
      %v4900 = vadd.f32 %v4864, %v4888
      %v4901 = vadd.f32 %v4865, %v4888
      %v4902 = vadd.f32 %v4866, %v4888
      %v4903 = vadd.f32 %v4867, %v4888
      %v4904 = vadd.f32 %v4868, %v4888
      %v4905 = vadd.f32 %v4869, %v4888
      %v4906 = vadd.f32 %v4870, %v4888
      %v4907 = vadd.f32 %v4871, %v4888
      %v4908 = vadd.f32 %v4872, %v4888
      %v4909 = vadd.f32 %v4873, %v4888
      %v4910 = vadd.f32 %v4874, %v4888
      %v4911 = vadd.f32 %v4875, %v4888
      %v4912 = vadd.f32 %v4876, %v4888
      %v4913 = vadd.f32 %v4877, %v4888
      %v4914 = vadd.f32 %v4878, %v4888
      %v4915 = vadd.f32 %v4879, %v4888
      %v4916 = vadd.f32 %v4880, %v4888
      %v4917 = vadd.f32 %v4881, %v4888
      %v4918 = vadd.f32 %v4882, %v4888
      %v4919 = vadd.f32 %v4883, %v4888
      %v4920 = vadd.f32 %v4884, %v4888
      %v4921 = vadd.f32 %v4885, %v4888
      %v4922 = vmax.f32 %v4890, 0.0
      %v4923 = vmax.f32 %v4891, 0.0
      %v4924 = vmax.f32 %v4892, 0.0
      %v4925 = vmax.f32 %v4893, 0.0
      %v4926 = vmax.f32 %v4894, 0.0
      %v4927 = vmax.f32 %v4895, 0.0
      %v4928 = vmax.f32 %v4896, 0.0
      %v4929 = vmax.f32 %v4897, 0.0
      %v4930 = vmax.f32 %v4898, 0.0
      %v4931 = vmax.f32 %v4899, 0.0
      %v4932 = vmax.f32 %v4900, 0.0
      %v4933 = vmax.f32 %v4901, 0.0
      %v4934 = vmax.f32 %v4902, 0.0
      %v4935 = vmax.f32 %v4903, 0.0
      %v4936 = vmax.f32 %v4904, 0.0
      %v4937 = vmax.f32 %v4905, 0.0
      %v4938 = vmax.f32 %v4906, 0.0
      %v4939 = vmax.f32 %v4907, 0.0
      %v4940 = vmax.f32 %v4908, 0.0
      %v4941 = vmax.f32 %v4909, 0.0
      %v4942 = vmax.f32 %v4910, 0.0
      %v4943 = vmax.f32 %v4911, 0.0
      %v4944 = vmax.f32 %v4912, 0.0
      %v4945 = vmax.f32 %v4913, 0.0
      %v4946 = vmax.f32 %v4914, 0.0
      %v4947 = vmax.f32 %v4915, 0.0
      %v4948 = vmax.f32 %v4916, 0.0
      %v4949 = vmax.f32 %v4917, 0.0
      %v4950 = vmax.f32 %v4918, 0.0
      %v4951 = vmax.f32 %v4919, 0.0
      %v4952 = vmax.f32 %v4920, 0.0
      %v4953 = vmax.f32 %v4921, 0.0
      %v4954 = vpack.c.bf16 %v4922, %v4922
      %v4955 = vpack.c.bf16 %v4923, %v4923
      %v4956 = vpack.c.bf16 %v4924, %v4924
      %v4957 = vpack.c.bf16 %v4925, %v4925
      %v4958 = vpack.c.bf16 %v4926, %v4926
      %v4959 = vpack.c.bf16 %v4927, %v4927
      %v4960 = vpack.c.bf16 %v4928, %v4928
      %v4961 = vpack.c.bf16 %v4929, %v4929
      %v4962 = vpack.c.bf16 %v4930, %v4930
      %v4963 = vpack.c.bf16 %v4931, %v4931
      %v4964 = vpack.c.bf16 %v4932, %v4932
      %v4965 = vpack.c.bf16 %v4933, %v4933
      %v4966 = vpack.c.bf16 %v4934, %v4934
      %v4967 = vpack.c.bf16 %v4935, %v4935
      %v4968 = vpack.c.bf16 %v4936, %v4936
      %v4969 = vpack.c.bf16 %v4937, %v4937
      %v4970 = vpack.c.bf16 %v4938, %v4938
      %v4971 = vpack.c.bf16 %v4939, %v4939
      %v4972 = vpack.c.bf16 %v4940, %v4940
      %v4973 = vpack.c.bf16 %v4941, %v4941
      %v4974 = vpack.c.bf16 %v4942, %v4942
      %v4975 = vpack.c.bf16 %v4943, %v4943
      %v4976 = vpack.c.bf16 %v4944, %v4944
      %v4977 = vpack.c.bf16 %v4945, %v4945
      %v4978 = vpack.c.bf16 %v4946, %v4946
      %v4979 = vpack.c.bf16 %v4947, %v4947
      %v4980 = vpack.c.bf16 %v4948, %v4948
      %v4981 = vpack.c.bf16 %v4949, %v4949
      %v4982 = vpack.c.bf16 %v4950, %v4950
      %v4983 = vpack.c.bf16 %v4951, %v4951
      %v4984 = vpack.c.bf16 %v4952, %v4952
      %v4985 = vpack.c.bf16 %v4953, %v4953
      %4986 = vst [vmem:[%s325] sm:$0xf] %v4954
      %4987 = vst [vmem:[%s325 + $0x4] sm:$0xf] %v4955
      %4988 = vst [vmem:[%s325 + $0x8] sm:$0xf] %v4956
      %4989 = vst [vmem:[%s325 + $0xc] sm:$0xf] %v4957
      %4990 = vst [vmem:[%s325 + $0x10] sm:$0xf] %v4958
      %4991 = vst [vmem:[%s325 + $0x14] sm:$0xf] %v4959
      %4992 = vst [vmem:[%s325 + $0x18] sm:$0xf] %v4960
      %4993 = vst [vmem:[%s325 + $0x1c] sm:$0xf] %v4961
      %4994 = vst [vmem:[%s325 + $0x20] sm:$0xf] %v4962
      %4995 = vst [vmem:[%s325 + $0x24] sm:$0xf] %v4963
      %4996 = vst [vmem:[%s325 + $0x28] sm:$0xf] %v4964
      %4997 = vst [vmem:[%s325 + $0x2c] sm:$0xf] %v4965
      %4998 = vst [vmem:[%s325 + $0x30] sm:$0xf] %v4966
      %4999 = vst [vmem:[%s325 + $0x34] sm:$0xf] %v4967
      %5000 = vst [vmem:[%s325 + $0x38] sm:$0xf] %v4968
      %5001 = vst [vmem:[%s325 + $0x3c] sm:$0xf] %v4969
      %5002 = vst [vmem:[%s325 + $0x40] sm:$0xf] %v4970
      %5003 = vst [vmem:[%s325 + $0x44] sm:$0xf] %v4971
      %5004 = vst [vmem:[%s325 + $0x48] sm:$0xf] %v4972
      %5005 = vst [vmem:[%s325 + $0x4c] sm:$0xf] %v4973
      %5006 = vst [vmem:[%s325 + $0x50] sm:$0xf] %v4974
      %5007 = vst [vmem:[%s325 + $0x54] sm:$0xf] %v4975
      %5008 = vst [vmem:[%s325 + $0x58] sm:$0xf] %v4976
      %5009 = vst [vmem:[%s325 + $0x5c] sm:$0xf] %v4977
      %5010 = vst [vmem:[%s325 + $0x60] sm:$0xf] %v4978
      %5011 = vst [vmem:[%s325 + $0x64] sm:$0xf] %v4979
      %5012 = vst [vmem:[%s325 + $0x68] sm:$0xf] %v4980
      %5013 = vst [vmem:[%s325 + $0x6c] sm:$0xf] %v4981
      %5014 = vst [vmem:[%s325 + $0x70] sm:$0xf] %v4982
      %5015 = vst [vmem:[%s325 + $0x74] sm:$0xf] %v4983
      %5016 = vst [vmem:[%s325 + $0x78] sm:$0xf] %v4984
      %5017 = vst [vmem:[%s325 + $0x7c] sm:$0xf] %v4985
      %p5018 = scmp.lt.s32.totalorder %s19, 1
      %s5019 = scalar_select %p5018, %s19, 1
      %s5020 = smul.addr %s5019, 32
      %s5021 = smul.addr %s5020, 4
      %s5022 = scalar_lea.vmem %s8, %s5021
      // Predicated region
      $region53: #{up_forward.1} parent=51 // pred_check
        %p5023 = pneg %p215
      $region54: #{up_forward.1} parent=51 // pred_check_branch
        %5025 = sbr.rel (%p5023) target = $region56
      $region55: #{up_forward.1} parent=51 // pred_region
        _
      $region56: #{up_forward.1} parent=51 // pred_fallthru
        _
    $region52: #{up_forward.1} parent=5 // pred_fallthru
      _
    %p5026 = scmp.le.s32.totalorder 2, %s14
    // Predicated region
    $region57: #{up_forward.1} parent=5 // pred_check
      %p5027 = pneg %p5026
    $region58: #{up_forward.1} parent=5 // pred_check_branch
      %5029 = sbr.rel (%p5027) target = $region60
    $region59: #{up_forward.1} parent=5 // pred_region
      %s5030 = ssub.s32 %s14, 2
      // Predicated region
      $region61: #{up_forward.1} parent=59 // pred_check
        %p5031 = pneg %p221
      $region62: #{up_forward.1} parent=59 // pred_check_branch
        %5033 = sbr.rel (%p5031) target = $region64
      $region63: #{up_forward.1} parent=59 // pred_region
        %p5034 = scmp.lt.s32.totalorder %s20, 1
        %s5035 = scalar_select %p5034, %s20, 1
        %s5036 = smul.addr %s5035, 32
        %s5037 = smul.addr %s5036, 4
        %s5038 = scalar_lea.vmem %s8, %s5037
      $region64: #{up_forward.1} parent=59 // pred_fallthru
        _
    $region60: #{up_forward.1} parent=5 // pred_fallthru
      _
  $region6: #{up_forward.1} parent=0 // loop_footer
    %s18 = sadd.s32 1, %s14
  $region7: #{up_forward.1} parent=0 // loop_footer_branch
    %13 = sbr.rel target = $region3
  $region8: #{up_forward.1} parent=0 // loop_exit
    _

// kernel: up_forward.1
$region0: #{up_forward.1}
  #allocation0 [shape = 'u32[]', space=smem, size = 0x4, offset = 0x4, fixed_abs, tag = 'smem constant byte address 0x4 - core index']
  #allocation1 [shape = 'u32[72,128]{1,0:T(1,128)}', space=vmem, size = 0x9000, scoped, tag = 'internal scratch']
  #allocation2 [shape = 'bf16[18,18,8]{2,1,0:T(8,128)(2,1)}', space=vmem, size = 0x1b000, scoped, tag = 'scratch operand']
  #allocation3 [shape = 'bf16[18,18,8]{2,1,0:T(8,128)(2,1)}', space=vmem, size = 0x1b000, scoped, tag = 'scratch operand']
  %s0 = inlined_call_operand.vmem [shape: bf16[2,16,16,4], index: 0, kind: input, shape index: {}]
  %s1 = inlined_call_operand.vmem [shape: bf16[2,14,14,4], index: 1, kind: input, shape index: {}]
  %s2 = inlined_call_operand.vmem [shape: bf16[72,8], index: 2, kind: input, shape index: {}]
  %s3 = inlined_call_operand.vmem [shape: bf16[72,128], index: 3, kind: input, shape index: {}]
  %s4 = inlined_call_operand.vmem [shape: f32[1,8], index: 4, kind: input, shape index: {}]
  %s5 = inlined_call_operand.vmem [shape: f32[1,8], index: 5, kind: input, shape index: {}]
  %s6 = inlined_call_operand.vmem [shape: f32[1,128], index: 6, kind: input, shape index: {}]
  %s7 = inlined_call_operand.vmem [shape: f32[1,128], index: 7, kind: input, shape index: {}]
  %s8 = inlined_call_operand.vmem [shape: bf16[2,16,16,128], index: 8, kind: output, shape index: {}]
  %s9 = sld [smem:[#allocation0]]
  $region65: #{up_forward.1} parent=0
    _
  %s11 = ssub.s32 1, %s9
  %s12 = scalar_select 0, %s11, %s9
  loop: start=0, step=1, limit=4
  $region2: #{up_forward.1} parent=0 // loop_pre_header
    _
  $region3: #{up_forward.1} parent=0 // loop_header
    %s14 = sphi 0, %s18
    %p15 = scmp.ge.s32.totalorder %s14, 4
    %s24 = sphi 0, %s26
    %s27 = sphi 0, %s24
    %s28 = sphi 0, %s27
    %s44 = sphi 0, %s28
    %s50 = sphi 0, %s52
    %s53 = sphi 0, %s50
    %s54 = sphi 0, %s53
    %s70 = sphi 0, %s54
    %s74 = sphi 0, %s74
    %s76 = sphi 0, %s74
    %s77 = sphi 0, %s76
    %s91 = sphi 0, %s77
    %s95 = sphi 0, %s95
    %s97 = sphi 0, %s95
    %s98 = sphi 0, %s97
    %s112 = sphi 0, %s98
    %s116 = sphi 0, %s116
    %s118 = sphi 0, %s116
    %s119 = sphi 0, %s118
    %s133 = sphi 0, %s119
    %s137 = sphi 0, %s137
    %s139 = sphi 0, %s137
    %s140 = sphi 0, %s139
    %s154 = sphi 0, %s140
    %s158 = sphi 0, %s158
    %s160 = sphi 0, %s158
    %s161 = sphi 0, %s160
    %s175 = sphi 0, %s161
    %s179 = sphi 0, %s179
    %s181 = sphi 0, %s179
    %s182 = sphi 0, %s181
    %s196 = sphi 0, %s182
    %s202 = sphi 0, %s204
    %s205 = sphi 0, %s202
    %s206 = sphi 0, %s205
    %s222 = sphi 0, %s206
  $region4: #{up_forward.1} parent=0 // loop_header_branch
    %17 = sbr.rel (%p15) target = $region8
  $region5: #{up_forward.1} parent=0 // loop_body
    %s19 = ssub.s32 %s14, 1
    %s20 = ssub.s32 %s14, 2
    %s21 = sadd.s32 %s14, 1
    %s22 = ssub.s32 %s14, %s21
    %p23 = scmp.eq.s32.totalorder %s22, 0
    %s25 = sadd.s32 %s24, 1
    %s26 = scalar_select %p23, %s24, %s25
    %p29 = pneg %p23
    %p30 = scmp.eq.s32.totalorder %s14, 1
    %p31 = por %p29, %p30
    %p32 = scmp.ne.s32.totalorder %s24, %s27
    %p33 = scmp.eq.s32.totalorder %s14, 0
    %p34 = por %p32, %p33
    %p35 = scmp.ne.s32.totalorder %s24, %s27
    %p36 = scmp.eq.s32.totalorder %s19, 1
    %p37 = por %p35, %p36
    %p38 = scmp.ne.s32.totalorder %s27, %s28
    %p39 = scmp.eq.s32.totalorder %s19, 0
    %p40 = por %p38, %p39
    %p41 = scmp.ne.s32.totalorder %s27, %s28
    %p42 = scmp.eq.s32.totalorder %s20, 1
    %p43 = por %p41, %p42
    %p45 = scmp.ne.s32.totalorder %s28, %s44
    %p46 = scmp.eq.s32.totalorder %s20, 0
    %p47 = por %p45, %p46
    %s48 = ssub.s32 %s14, %s21
    %p49 = scmp.eq.s32.totalorder %s48, 0
    %s51 = sadd.s32 %s50, 1
    %s52 = scalar_select %p49, %s50, %s51
    %p55 = pneg %p49
    %p56 = scmp.eq.s32.totalorder %s14, 1
    %p57 = por %p55, %p56
    %p58 = scmp.ne.s32.totalorder %s50, %s53
    %p59 = scmp.eq.s32.totalorder %s14, 0
    %p60 = por %p58, %p59
    %p61 = scmp.ne.s32.totalorder %s50, %s53
    %p62 = scmp.eq.s32.totalorder %s19, 1
    %p63 = por %p61, %p62
    %p64 = scmp.ne.s32.totalorder %s53, %s54
    %p65 = scmp.eq.s32.totalorder %s19, 0
    %p66 = por %p64, %p65
    %p67 = scmp.ne.s32.totalorder %s53, %s54
    %p68 = scmp.eq.s32.totalorder %s20, 1
    %p69 = por %p67, %p68
    %p71 = scmp.ne.s32.totalorder %s54, %s70
    %p72 = scmp.eq.s32.totalorder %s20, 0
    %p73 = por %p71, %p72
    %s75 = sadd.s32 %s74, 1
    %p78 = scmp.eq.s32.totalorder %s14, 1
    %p79 = scmp.ne.s32.totalorder %s74, %s76
    %p80 = scmp.eq.s32.totalorder %s14, 0
    %p81 = por %p79, %p80
    %p82 = scmp.ne.s32.totalorder %s74, %s76
    %p83 = scmp.eq.s32.totalorder %s19, 1
    %p84 = por %p82, %p83
    %p85 = scmp.ne.s32.totalorder %s76, %s77
    %p86 = scmp.eq.s32.totalorder %s19, 0
    %p87 = por %p85, %p86
    %p88 = scmp.ne.s32.totalorder %s76, %s77
    %p89 = scmp.eq.s32.totalorder %s20, 1
    %p90 = por %p88, %p89
    %p92 = scmp.ne.s32.totalorder %s77, %s91
    %p93 = scmp.eq.s32.totalorder %s20, 0
    %p94 = por %p92, %p93
    %s96 = sadd.s32 %s95, 1
    %p99 = scmp.eq.s32.totalorder %s14, 1
    %p100 = scmp.ne.s32.totalorder %s95, %s97
    %p101 = scmp.eq.s32.totalorder %s14, 0
    %p102 = por %p100, %p101
    %p103 = scmp.ne.s32.totalorder %s95, %s97
    %p104 = scmp.eq.s32.totalorder %s19, 1
    %p105 = por %p103, %p104
    %p106 = scmp.ne.s32.totalorder %s97, %s98
    %p107 = scmp.eq.s32.totalorder %s19, 0
    %p108 = por %p106, %p107
    %p109 = scmp.ne.s32.totalorder %s97, %s98
    %p110 = scmp.eq.s32.totalorder %s20, 1
    %p111 = por %p109, %p110
    %p113 = scmp.ne.s32.totalorder %s98, %s112
    %p114 = scmp.eq.s32.totalorder %s20, 0
    %p115 = por %p113, %p114
    %s117 = sadd.s32 %s116, 1
    %p120 = scmp.eq.s32.totalorder %s14, 1
    %p121 = scmp.ne.s32.totalorder %s116, %s118
    %p122 = scmp.eq.s32.totalorder %s14, 0
    %p123 = por %p121, %p122
    %p124 = scmp.ne.s32.totalorder %s116, %s118
    %p125 = scmp.eq.s32.totalorder %s19, 1
    %p126 = por %p124, %p125
    %p127 = scmp.ne.s32.totalorder %s118, %s119
    %p128 = scmp.eq.s32.totalorder %s19, 0
    %p129 = por %p127, %p128
    %p130 = scmp.ne.s32.totalorder %s118, %s119
    %p131 = scmp.eq.s32.totalorder %s20, 1
    %p132 = por %p130, %p131
    %p134 = scmp.ne.s32.totalorder %s119, %s133
    %p135 = scmp.eq.s32.totalorder %s20, 0
    %p136 = por %p134, %p135
    %s138 = sadd.s32 %s137, 1
    %p141 = scmp.eq.s32.totalorder %s14, 1
    %p142 = scmp.ne.s32.totalorder %s137, %s139
    %p143 = scmp.eq.s32.totalorder %s14, 0
    %p144 = por %p142, %p143
    %p145 = scmp.ne.s32.totalorder %s137, %s139
    %p146 = scmp.eq.s32.totalorder %s19, 1
    %p147 = por %p145, %p146
    %p148 = scmp.ne.s32.totalorder %s139, %s140
    %p149 = scmp.eq.s32.totalorder %s19, 0
    %p150 = por %p148, %p149
    %p151 = scmp.ne.s32.totalorder %s139, %s140
    %p152 = scmp.eq.s32.totalorder %s20, 1
    %p153 = por %p151, %p152
    %p155 = scmp.ne.s32.totalorder %s140, %s154
    %p156 = scmp.eq.s32.totalorder %s20, 0
    %p157 = por %p155, %p156
    %s159 = sadd.s32 %s158, 1
    %p162 = scmp.eq.s32.totalorder %s14, 1
    %p163 = scmp.ne.s32.totalorder %s158, %s160
    %p164 = scmp.eq.s32.totalorder %s14, 0
    %p165 = por %p163, %p164
    %p166 = scmp.ne.s32.totalorder %s158, %s160
    %p167 = scmp.eq.s32.totalorder %s19, 1
    %p168 = por %p166, %p167
    %p169 = scmp.ne.s32.totalorder %s160, %s161
    %p170 = scmp.eq.s32.totalorder %s19, 0
    %p171 = por %p169, %p170
    %p172 = scmp.ne.s32.totalorder %s160, %s161
    %p173 = scmp.eq.s32.totalorder %s20, 1
    %p174 = por %p172, %p173
    %p176 = scmp.ne.s32.totalorder %s161, %s175
    %p177 = scmp.eq.s32.totalorder %s20, 0
    %p178 = por %p176, %p177
    %s180 = sadd.s32 %s179, 1
    %p183 = scmp.eq.s32.totalorder %s14, 1
    %p184 = scmp.ne.s32.totalorder %s179, %s181
    %p185 = scmp.eq.s32.totalorder %s14, 0
    %p186 = por %p184, %p185
    %p187 = scmp.ne.s32.totalorder %s179, %s181
    %p188 = scmp.eq.s32.totalorder %s19, 1
    %p189 = por %p187, %p188
    %p190 = scmp.ne.s32.totalorder %s181, %s182
    %p191 = scmp.eq.s32.totalorder %s19, 0
    %p192 = por %p190, %p191
    %p193 = scmp.ne.s32.totalorder %s181, %s182
    %p194 = scmp.eq.s32.totalorder %s20, 1
    %p195 = por %p193, %p194
    %p197 = scmp.ne.s32.totalorder %s182, %s196
    %p198 = scmp.eq.s32.totalorder %s20, 0
    %p199 = por %p197, %p198
    %s200 = ssub.s32 %s14, %s21
    %p201 = scmp.eq.s32.totalorder %s200, 0
    %s203 = sadd.s32 %s202, 1
    %s204 = scalar_select %p201, %s202, %s203
    %p207 = pneg %p201
    %p208 = scmp.eq.s32.totalorder %s14, 1
    %p209 = por %p207, %p208
    %p210 = scmp.ne.s32.totalorder %s202, %s205
    %p211 = scmp.eq.s32.totalorder %s14, 0
    %p212 = por %p210, %p211
    %p213 = scmp.ne.s32.totalorder %s202, %s205
    %p214 = scmp.eq.s32.totalorder %s19, 1
    %p215 = por %p213, %p214
    %p216 = scmp.ne.s32.totalorder %s205, %s206
    %p217 = scmp.eq.s32.totalorder %s19, 0
    %p218 = por %p216, %p217
    %p219 = scmp.ne.s32.totalorder %s205, %s206
    %p220 = scmp.eq.s32.totalorder %s20, 1
    %p221 = por %p219, %p220
    %p223 = scmp.ne.s32.totalorder %s206, %s222
    %p224 = scmp.eq.s32.totalorder %s20, 0
    %p225 = por %p223, %p224
    %p226 = scmp.le.s32.totalorder 1, %s14
    %p227 = scmp.lt.s32.totalorder %s14, 3
    %p228 = pnand %p226, %p227
    %p229 = pneg %p228
    // Predicated region
    $region9: #{up_forward.1} parent=5 // pred_check
      _
    $region10: #{up_forward.1} parent=5 // pred_check_branch
      %231 = sbr.rel (%p228) target = $region12
    $region11: #{up_forward.1} parent=5 // pred_region
      %s232 = ssub.s32 %s14, 1
      // Predicated region
      $region13: #{up_forward.1} parent=11 // pred_check
        %p233 = pneg %p87
      $region14: #{up_forward.1} parent=11 // pred_check_branch
        %235 = sbr.rel (%p233) target = $region16
      $region15: #{up_forward.1} parent=11 // pred_region
        _
      $region16: #{up_forward.1} parent=11 // pred_fallthru
        _
      // Predicated region
      $region17: #{up_forward.1} parent=11 // pred_check
        %p236 = pneg %p108
      $region18: #{up_forward.1} parent=11 // pred_check_branch
        %238 = sbr.rel (%p236) target = $region20
      $region19: #{up_forward.1} parent=11 // pred_region
        _
      $region20: #{up_forward.1} parent=11 // pred_fallthru
        _
      // Predicated region
      $region21: #{up_forward.1} parent=11 // pred_check
        %p239 = pneg %p129
      $region22: #{up_forward.1} parent=11 // pred_check_branch
        %241 = sbr.rel (%p239) target = $region24
      $region23: #{up_forward.1} parent=11 // pred_region
        _
      $region24: #{up_forward.1} parent=11 // pred_fallthru
        _
      // Predicated region
      $region25: #{up_forward.1} parent=11 // pred_check
        %p242 = pneg %p150
      $region26: #{up_forward.1} parent=11 // pred_check_branch
        %244 = sbr.rel (%p242) target = $region28
      $region27: #{up_forward.1} parent=11 // pred_region
        _
      $region28: #{up_forward.1} parent=11 // pred_fallthru
        _
      // Predicated region
      $region29: #{up_forward.1} parent=11 // pred_check
        %p245 = pneg %p171
      $region30: #{up_forward.1} parent=11 // pred_check_branch
        %247 = sbr.rel (%p245) target = $region32
      $region31: #{up_forward.1} parent=11 // pred_region
        _
      $region32: #{up_forward.1} parent=11 // pred_fallthru
        _
      // Predicated region
      $region33: #{up_forward.1} parent=11 // pred_check
        %p248 = pneg %p192
      $region34: #{up_forward.1} parent=11 // pred_check_branch
        %250 = sbr.rel (%p248) target = $region36
      $region35: #{up_forward.1} parent=11 // pred_region
        _
      $region36: #{up_forward.1} parent=11 // pred_fallthru
        _
    $region12: #{up_forward.1} parent=5 // pred_fallthru
      _
    %p251 = scmp.lt.s32.totalorder %s14, 2
    // Predicated region
    $region37: #{up_forward.1} parent=5 // pred_check
      %p252 = pneg %p251
    $region38: #{up_forward.1} parent=5 // pred_check_branch
      %254 = sbr.rel (%p252) target = $region40
    $region39: #{up_forward.1} parent=5 // pred_region
      // Predicated region
      $region41: #{up_forward.1} parent=39 // pred_check
        %p255 = pneg %p34
      $region42: #{up_forward.1} parent=39 // pred_check_branch
        %257 = sbr.rel (%p255) target = $region44
      $region43: #{up_forward.1} parent=39 // pred_region
        %p258 = scmp.lt.s32.totalorder %s14, 1
        %s259 = scalar_select %p258, %s14, 1
        %s260 = smul.addr %s259, 32
        %s261 = smul.addr %s260, 4
        %s262 = scalar_lea.vmem %s0, %s261
      $region44: #{up_forward.1} parent=39 // pred_fallthru
        _
      // Predicated region
      $region45: #{up_forward.1} parent=39 // pred_check
        %p263 = pneg %p60
      $region46: #{up_forward.1} parent=39 // pred_check_branch
        %265 = sbr.rel (%p263) target = $region48
      $region47: #{up_forward.1} parent=39 // pred_region
        %p266 = scmp.lt.s32.totalorder %s14, 1
        %s267 = scalar_select %p266, %s14, 1
        %s268 = smul.addr %s267, 28
        %s269 = smul.addr %s268, 4
        %s270 = scalar_lea.vmem %s1, %s269
      $region48: #{up_forward.1} parent=39 // pred_fallthru
        _
    $region40: #{up_forward.1} parent=5 // pred_fallthru
      _
    %p271 = scmp.le.s32.totalorder 1, %s14
    %p272 = scmp.lt.s32.totalorder %s14, 3
    %p273 = pnand %p271, %p272
    %p274 = pneg %p273
    // Predicated region
    $region49: #{up_forward.1} parent=5 // pred_check
      _
    $region50: #{up_forward.1} parent=5 // pred_check_branch
      %276 = sbr.rel (%p273) target = $region52
    $region51: #{up_forward.1} parent=5 // pred_region
      %s277 = ssub.s32 %s14, 1
      %p278 = scmp.lt.s32.totalorder %s19, 1
      %s279 = scalar_select %p278, %s19, 1
      %s280 = smul.addr %s279, 32
      %s281 = smul.addr %s280, 4
      %s282 = scalar_lea.vmem %s0, %s281
      %p283 = pneg %p40
      %p284 = pneg %p37
      %p285 = scmp.lt.s32.totalorder %s19, 1
      %s286 = scalar_select %p285, %s19, 1
      %s287 = smul.addr %s286, 28
      %s288 = smul.addr %s287, 4
      %s289 = scalar_lea.vmem %s1, %s288
      %p290 = pneg %p66
      %p291 = pneg %p63
      %p292 = pneg %p87
      %p293 = pneg %p84
      %p294 = pneg %p108
      %p295 = pneg %p105
      %p296 = pneg %p129
      %p297 = pneg %p126
      %p298 = pneg %p150
      %p299 = pneg %p147
      %p300 = pneg %p171
      %p301 = pneg %p168
      %p302 = pneg %p192
      %p303 = pneg %p189
      %p304 = pneg %p218
      %p305 = pneg %p215
      %p306 = scmp.lt.s32.totalorder %s19, 1
      %s307 = scalar_select %p306, %s19, 1
      %s308 = smul.addr %s307, 32
      %s309 = smul.addr %s308, 4
      %s310 = scalar_lea.vmem %s8, %s309
      %p311 = scmp.lt.s32.totalorder %s19, 1
      %s312 = scalar_select %p311, %s19, 1
      %s313 = smul.addr %s312, 32
      %s314 = smul.addr %s313, 4
      %s315 = scalar_lea.vmem %s0, %s314
      %p316 = scmp.lt.s32.totalorder %s19, 1
      %s317 = scalar_select %p316, %s19, 1
      %s318 = smul.addr %s317, 28
      %s319 = smul.addr %s318, 4
      %s320 = scalar_lea.vmem %s1, %s319
      %p321 = scmp.lt.s32.totalorder %s19, 1
      %s322 = scalar_select %p321, %s19, 1
      %s323 = smul.addr %s322, 32
      %s324 = smul.addr %s323, 4
      %s325 = scalar_lea.vmem %s8, %s324
      %vm327 = vcmask 60416
      %328 = vst.msk [vmem:[#allocation2] sm:$0xf] %vm327, 0
      %329 = vst.msk [vmem:[#allocation2 + $0x4] sm:$0xf] %vm327, 0
      %vm330 = vcmask 57344
      %331 = vst.msk [vmem:[#allocation2 + $0x8] sm:$0x1] %vm330, 0
      %332 = vst.msk [vmem:[#allocation2 + $0xc] sm:$0xf] %vm327, 0
      %333 = vst.msk [vmem:[#allocation2 + $0x10] sm:$0xf] %vm327, 0
      %334 = vst.msk [vmem:[#allocation2 + $0x14] sm:$0x1] %vm330, 0
      %s335 = scalar_lea.vmem [#allocation2], 192
      %336 = vst.msk [vmem:[%s335] sm:$0xf] %vm327, 0
      %337 = vst.msk [vmem:[%s335 + $0x4] sm:$0xf] %vm327, 0
      %338 = vst.msk [vmem:[%s335 + $0x8] sm:$0x1] %vm330, 0
      %339 = vst.msk [vmem:[%s335 + $0xc] sm:$0xf] %vm327, 0
      %340 = vst.msk [vmem:[%s335 + $0x10] sm:$0xf] %vm327, 0
      %341 = vst.msk [vmem:[%s335 + $0x14] sm:$0x1] %vm330, 0
      %342 = vst.msk [vmem:[#allocation2] sm:$0x1] %vm330, 0
      %343 = vst.msk [vmem:[#allocation2 + $0xc] sm:$0x1] %vm330, 0
      %344 = vst.msk [vmem:[#allocation2 + $0x18] sm:$0x1] %vm330, 0
      %345 = vst.msk [vmem:[#allocation2 + $0x24] sm:$0x1] %vm330, 0
      %346 = vst.msk [vmem:[#allocation2 + $0x30] sm:$0x1] %vm330, 0
      %347 = vst.msk [vmem:[#allocation2 + $0x3c] sm:$0x1] %vm330, 0
      %348 = vst.msk [vmem:[#allocation2 + $0x48] sm:$0x1] %vm330, 0
      %349 = vst.msk [vmem:[#allocation2 + $0x54] sm:$0x1] %vm330, 0
      %350 = vst.msk [vmem:[#allocation2 + $0x60] sm:$0x1] %vm330, 0
      %351 = vst.msk [vmem:[#allocation2 + $0x6c] sm:$0x1] %vm330, 0
      %352 = vst.msk [vmem:[#allocation2 + $0x78] sm:$0x1] %vm330, 0
      %353 = vst.msk [vmem:[#allocation2 + $0x84] sm:$0x1] %vm330, 0
      %354 = vst.msk [vmem:[#allocation2 + $0x90] sm:$0x1] %vm330, 0
      %355 = vst.msk [vmem:[#allocation2 + $0x9c] sm:$0x1] %vm330, 0
      %356 = vst.msk [vmem:[#allocation2 + $0xa8] sm:$0x1] %vm330, 0
      %357 = vst.msk [vmem:[#allocation2 + $0xb4] sm:$0x1] %vm330, 0
      %358 = vst.msk [vmem:[#allocation2 + $0xc0] sm:$0x1] %vm330, 0
      %359 = vst.msk [vmem:[#allocation2 + $0xcc] sm:$0x1] %vm330, 0
      %360 = vst.msk [vmem:[#allocation2 + $0x8] sm:$0x1] %vm330, 0
      %361 = vst.msk [vmem:[#allocation2 + $0x14] sm:$0x1] %vm330, 0
      %362 = vst.msk [vmem:[#allocation2 + $0x20] sm:$0x1] %vm330, 0
      %363 = vst.msk [vmem:[#allocation2 + $0x2c] sm:$0x1] %vm330, 0
      %364 = vst.msk [vmem:[#allocation2 + $0x38] sm:$0x1] %vm330, 0
      %365 = vst.msk [vmem:[#allocation2 + $0x44] sm:$0x1] %vm330, 0
      %366 = vst.msk [vmem:[#allocation2 + $0x50] sm:$0x1] %vm330, 0
      %367 = vst.msk [vmem:[#allocation2 + $0x5c] sm:$0x1] %vm330, 0
      %368 = vst.msk [vmem:[#allocation2 + $0x68] sm:$0x1] %vm330, 0
      %369 = vst.msk [vmem:[#allocation2 + $0x74] sm:$0x1] %vm330, 0
      %370 = vst.msk [vmem:[#allocation2 + $0x80] sm:$0x1] %vm330, 0
      %371 = vst.msk [vmem:[#allocation2 + $0x8c] sm:$0x1] %vm330, 0
      %372 = vst.msk [vmem:[#allocation2 + $0x98] sm:$0x1] %vm330, 0
      %373 = vst.msk [vmem:[#allocation2 + $0xa4] sm:$0x1] %vm330, 0
      %374 = vst.msk [vmem:[#allocation2 + $0xb0] sm:$0x1] %vm330, 0
      %375 = vst.msk [vmem:[#allocation2 + $0xbc] sm:$0x1] %vm330, 0
      %376 = vst.msk [vmem:[#allocation2 + $0xc8] sm:$0x1] %vm330, 0
      %377 = vst.msk [vmem:[#allocation2 + $0xd4] sm:$0x1] %vm330, 0
      %v378 = vld [vmem:[%s320] sm:$0xf]
      %v379 = vld [vmem:[%s320 + $0x4] sm:$0x7]
      %v380 = vld [vmem:[%s320 + $0x8] sm:$0xf]
      %v381 = vld [vmem:[%s320 + $0xc] sm:$0x7]
      %v382 = vld [vmem:[%s320 + $0x10] sm:$0xf]
      %v383 = vld [vmem:[%s320 + $0x14] sm:$0x7]
      %v384 = vld [vmem:[%s320 + $0x18] sm:$0xf]
      %v385 = vld [vmem:[%s320 + $0x1c] sm:$0x7]
      %v386 = vld [vmem:[%s320 + $0x20] sm:$0xf]
      %v387 = vld [vmem:[%s320 + $0x24] sm:$0x7]
      %v388 = vld [vmem:[%s320 + $0x28] sm:$0xf]
      %v389 = vld [vmem:[%s320 + $0x2c] sm:$0x7]
      %v390 = vld [vmem:[%s320 + $0x30] sm:$0xf]
      %v391 = vld [vmem:[%s320 + $0x34] sm:$0x7]
      %v392 = vld [vmem:[%s320 + $0x38] sm:$0xf]
      %v393 = vld [vmem:[%s320 + $0x3c] sm:$0x7]
      %v394 = vld [vmem:[%s320 + $0x40] sm:$0xf]
      %v395 = vld [vmem:[%s320 + $0x44] sm:$0x7]
      %v396 = vld [vmem:[%s320 + $0x48] sm:$0xf]
      %v397 = vld [vmem:[%s320 + $0x4c] sm:$0x7]
      %v398 = vld [vmem:[%s320 + $0x50] sm:$0xf]
      %v399 = vld [vmem:[%s320 + $0x54] sm:$0x7]
      %v400 = vld [vmem:[%s320 + $0x58] sm:$0xf]
      %v401 = vld [vmem:[%s320 + $0x5c] sm:$0x7]
      %v402 = vld [vmem:[%s320 + $0x60] sm:$0xf]
      %v403 = vld [vmem:[%s320 + $0x64] sm:$0x7]
      %v404 = vld [vmem:[%s320 + $0x68] sm:$0xf]
      %v405 = vld [vmem:[%s320 + $0x6c] sm:$0x7]
      %vm434 = vcmask 1040384
      %vm435 = vcmask 1044484
      %vm436 = vmor %vm434, %vm435
      %v437 = vrot.slane %v378, 7
      %v438 = vrot.slane %v437, 4
      %v439 = vrot.slane %v379, 7
      %v440 = vsel %vm436, %v438, %v439
      %v441 = vrot.slane %v380, 7
      %v442 = vrot.slane %v441, 4
      %v443 = vrot.slane %v381, 7
      %v444 = vsel %vm436, %v442, %v443
      %v445 = vrot.slane %v382, 7
      %v446 = vrot.slane %v445, 4
      %v447 = vrot.slane %v383, 7
      %v448 = vsel %vm436, %v446, %v447
      %v449 = vrot.slane %v384, 7
      %v450 = vrot.slane %v449, 4
      %v451 = vrot.slane %v385, 7
      %v452 = vsel %vm436, %v450, %v451
      %v453 = vrot.slane %v386, 7
      %v454 = vrot.slane %v453, 4
      %v455 = vrot.slane %v387, 7
      %v456 = vsel %vm436, %v454, %v455
      %v457 = vrot.slane %v388, 7
      %v458 = vrot.slane %v457, 4
      %v459 = vrot.slane %v389, 7
      %v460 = vsel %vm436, %v458, %v459
      %v461 = vrot.slane %v390, 7
      %v462 = vrot.slane %v461, 4
      %v463 = vrot.slane %v391, 7
      %v464 = vsel %vm436, %v462, %v463
      %v465 = vrot.slane %v392, 7
      %v466 = vrot.slane %v465, 4
      %v467 = vrot.slane %v393, 7
      %v468 = vsel %vm436, %v466, %v467
      %v469 = vrot.slane %v394, 7
      %v470 = vrot.slane %v469, 4
      %v471 = vrot.slane %v395, 7
      %v472 = vsel %vm436, %v470, %v471
      %v473 = vrot.slane %v396, 7
      %v474 = vrot.slane %v473, 4
      %v475 = vrot.slane %v397, 7
      %v476 = vsel %vm436, %v474, %v475
      %v477 = vrot.slane %v398, 7
      %v478 = vrot.slane %v477, 4
      %v479 = vrot.slane %v399, 7
      %v480 = vsel %vm436, %v478, %v479
      %v481 = vrot.slane %v400, 7
      %v482 = vrot.slane %v481, 4
      %v483 = vrot.slane %v401, 7
      %v484 = vsel %vm436, %v482, %v483
      %v485 = vrot.slane %v402, 7
      %v486 = vrot.slane %v485, 4
      %v487 = vrot.slane %v403, 7
      %v488 = vsel %vm436, %v486, %v487
      %v489 = vrot.slane %v404, 7
      %v490 = vrot.slane %v489, 4
      %v491 = vrot.slane %v405, 7
      %v492 = vsel %vm436, %v490, %v491
      %s521 = scalar_lea.vmem [#allocation2], 24
      %vm522 = vcmask 27649
      %523 = vst.msk [vmem:[%s521] sm:$0xe] %vm522, %v437
      %vm524 = vcmask 27648
      %525 = vst.msk [vmem:[%s521 + $0x4] sm:$0xf] %vm524, %v440
      %526 = vst.msk [vmem:[%s521 + $0xc] sm:$0xe] %vm522, %v441
      %527 = vst.msk [vmem:[%s521 + $0x10] sm:$0xf] %vm524, %v444
      %528 = vst.msk [vmem:[%s521 + $0x18] sm:$0xe] %vm522, %v445
      %529 = vst.msk [vmem:[%s521 + $0x1c] sm:$0xf] %vm524, %v448
      %530 = vst.msk [vmem:[%s521 + $0x24] sm:$0xe] %vm522, %v449
      %531 = vst.msk [vmem:[%s521 + $0x28] sm:$0xf] %vm524, %v452
      %532 = vst.msk [vmem:[%s521 + $0x30] sm:$0xe] %vm522, %v453
      %533 = vst.msk [vmem:[%s521 + $0x34] sm:$0xf] %vm524, %v456
      %534 = vst.msk [vmem:[%s521 + $0x3c] sm:$0xe] %vm522, %v457
      %535 = vst.msk [vmem:[%s521 + $0x40] sm:$0xf] %vm524, %v460
      %536 = vst.msk [vmem:[%s521 + $0x48] sm:$0xe] %vm522, %v461
      %537 = vst.msk [vmem:[%s521 + $0x4c] sm:$0xf] %vm524, %v464
      %538 = vst.msk [vmem:[%s521 + $0x54] sm:$0xe] %vm522, %v465
      %539 = vst.msk [vmem:[%s521 + $0x58] sm:$0xf] %vm524, %v468
      %540 = vst.msk [vmem:[%s521 + $0x60] sm:$0xe] %vm522, %v469
      %541 = vst.msk [vmem:[%s521 + $0x64] sm:$0xf] %vm524, %v472
      %542 = vst.msk [vmem:[%s521 + $0x6c] sm:$0xe] %vm522, %v473
      %543 = vst.msk [vmem:[%s521 + $0x70] sm:$0xf] %vm524, %v476
      %544 = vst.msk [vmem:[%s521 + $0x78] sm:$0xe] %vm522, %v477
      %545 = vst.msk [vmem:[%s521 + $0x7c] sm:$0xf] %vm524, %v480
      %546 = vst.msk [vmem:[%s521 + $0x84] sm:$0xe] %vm522, %v481
      %547 = vst.msk [vmem:[%s521 + $0x88] sm:$0xf] %vm524, %v484
      %548 = vst.msk [vmem:[%s521 + $0x90] sm:$0xe] %vm522, %v485
      %549 = vst.msk [vmem:[%s521 + $0x94] sm:$0xf] %vm524, %v488
      %550 = vst.msk [vmem:[%s521 + $0x9c] sm:$0xe] %vm522, %v489
      %551 = vst.msk [vmem:[%s521 + $0xa0] sm:$0xf] %vm524, %v492
      %v552 = vld [vmem:[%s315] sm:$0xf]
      %v553 = vld [vmem:[%s315 + $0x4] sm:$0xf]
      %v554 = vld [vmem:[%s315 + $0x8] sm:$0xf]
      %v555 = vld [vmem:[%s315 + $0xc] sm:$0xf]
      %v556 = vld [vmem:[%s315 + $0x10] sm:$0xf]
      %v557 = vld [vmem:[%s315 + $0x14] sm:$0xf]
      %v558 = vld [vmem:[%s315 + $0x18] sm:$0xf]
      %v559 = vld [vmem:[%s315 + $0x1c] sm:$0xf]
      %v560 = vld [vmem:[%s315 + $0x20] sm:$0xf]
      %v561 = vld [vmem:[%s315 + $0x24] sm:$0xf]
      %v562 = vld [vmem:[%s315 + $0x28] sm:$0xf]
      %v563 = vld [vmem:[%s315 + $0x2c] sm:$0xf]
      %v564 = vld [vmem:[%s315 + $0x30] sm:$0xf]
      %v565 = vld [vmem:[%s315 + $0x34] sm:$0xf]
      %v566 = vld [vmem:[%s315 + $0x38] sm:$0xf]
      %v567 = vld [vmem:[%s315 + $0x3c] sm:$0xf]
      %v568 = vld [vmem:[%s315 + $0x40] sm:$0xf]
      %v569 = vld [vmem:[%s315 + $0x44] sm:$0xf]
      %v570 = vld [vmem:[%s315 + $0x48] sm:$0xf]
      %v571 = vld [vmem:[%s315 + $0x4c] sm:$0xf]
      %v572 = vld [vmem:[%s315 + $0x50] sm:$0xf]
      %v573 = vld [vmem:[%s315 + $0x54] sm:$0xf]
      %v574 = vld [vmem:[%s315 + $0x58] sm:$0xf]
      %v575 = vld [vmem:[%s315 + $0x5c] sm:$0xf]
      %v576 = vld [vmem:[%s315 + $0x60] sm:$0xf]
      %v577 = vld [vmem:[%s315 + $0x64] sm:$0xf]
      %v578 = vld [vmem:[%s315 + $0x68] sm:$0xf]
      %v579 = vld [vmem:[%s315 + $0x6c] sm:$0xf]
      %v580 = vld [vmem:[%s315 + $0x70] sm:$0xf]
      %v581 = vld [vmem:[%s315 + $0x74] sm:$0xf]
      %v582 = vld [vmem:[%s315 + $0x78] sm:$0xf]
      %v583 = vld [vmem:[%s315 + $0x7c] sm:$0xf]
      %vm584 = vsmask.f32 256
      %vm585 = vsmask.f32 4368
      %vm586 = vmor %vm584, %vm585
      %v588 = vshrl.u32 %v552, 16
      %v590 = vrot.slane %v588, 7
      %v591 = vshll.u32 %v552, 16
      %v593 = vor.u32 %v590, %v591
      %v594 = vrot.slane %v590, 4
      %v596 = vshrl.u32 %v553, 16
      %v598 = vrot.slane %v596, 7
      %v599 = vshll.u32 %v553, 16
      %v601 = vor.u32 %v598, %v599
      %v602 = vsel %vm586, %v594, %v601
      %v603 = vrot.slane %v598, 4
      %v605 = vshrl.u32 %v554, 16
      %v607 = vrot.slane %v605, 7
      %v608 = vshll.u32 %v554, 16
      %v610 = vor.u32 %v607, %v608
      %v611 = vrot.slane %v607, 4
      %v613 = vshrl.u32 %v555, 16
      %v615 = vrot.slane %v613, 7
      %v616 = vshll.u32 %v555, 16
      %v618 = vor.u32 %v615, %v616
      %v619 = vsel %vm586, %v611, %v618
      %v620 = vrot.slane %v615, 4
      %v622 = vshrl.u32 %v556, 16
      %v624 = vrot.slane %v622, 7
      %v625 = vshll.u32 %v556, 16
      %v627 = vor.u32 %v624, %v625
      %v628 = vrot.slane %v624, 4
      %v630 = vshrl.u32 %v557, 16
      %v632 = vrot.slane %v630, 7
      %v633 = vshll.u32 %v557, 16
      %v635 = vor.u32 %v632, %v633
      %v636 = vsel %vm586, %v628, %v635
      %v637 = vrot.slane %v632, 4
      %v639 = vshrl.u32 %v558, 16
      %v641 = vrot.slane %v639, 7
      %v642 = vshll.u32 %v558, 16
      %v644 = vor.u32 %v641, %v642
      %v645 = vrot.slane %v641, 4
      %v647 = vshrl.u32 %v559, 16
      %v649 = vrot.slane %v647, 7
      %v650 = vshll.u32 %v559, 16
      %v652 = vor.u32 %v649, %v650
      %v653 = vsel %vm586, %v645, %v652
      %v654 = vrot.slane %v649, 4
      %v656 = vshrl.u32 %v560, 16
      %v658 = vrot.slane %v656, 7
      %v659 = vshll.u32 %v560, 16
      %v661 = vor.u32 %v658, %v659
      %v662 = vrot.slane %v658, 4
      %v664 = vshrl.u32 %v561, 16
      %v666 = vrot.slane %v664, 7
      %v667 = vshll.u32 %v561, 16
      %v669 = vor.u32 %v666, %v667
      %v670 = vsel %vm586, %v662, %v669
      %v671 = vrot.slane %v666, 4
      %v673 = vshrl.u32 %v562, 16
      %v675 = vrot.slane %v673, 7
      %v676 = vshll.u32 %v562, 16
      %v678 = vor.u32 %v675, %v676
      %v679 = vrot.slane %v675, 4
      %v681 = vshrl.u32 %v563, 16
      %v683 = vrot.slane %v681, 7
      %v684 = vshll.u32 %v563, 16
      %v686 = vor.u32 %v683, %v684
      %v687 = vsel %vm586, %v679, %v686
      %v688 = vrot.slane %v683, 4
      %v690 = vshrl.u32 %v564, 16
      %v692 = vrot.slane %v690, 7
      %v693 = vshll.u32 %v564, 16
      %v695 = vor.u32 %v692, %v693
      %v696 = vrot.slane %v692, 4
      %v698 = vshrl.u32 %v565, 16
      %v700 = vrot.slane %v698, 7
      %v701 = vshll.u32 %v565, 16
      %v703 = vor.u32 %v700, %v701
      %v704 = vsel %vm586, %v696, %v703
      %v705 = vrot.slane %v700, 4
      %v707 = vshrl.u32 %v566, 16
      %v709 = vrot.slane %v707, 7
      %v710 = vshll.u32 %v566, 16
      %v712 = vor.u32 %v709, %v710
      %v713 = vrot.slane %v709, 4
      %v715 = vshrl.u32 %v567, 16
      %v717 = vrot.slane %v715, 7
      %v718 = vshll.u32 %v567, 16
      %v720 = vor.u32 %v717, %v718
      %v721 = vsel %vm586, %v713, %v720
      %v722 = vrot.slane %v717, 4
      %v724 = vshrl.u32 %v568, 16
      %v726 = vrot.slane %v724, 7
      %v727 = vshll.u32 %v568, 16
      %v729 = vor.u32 %v726, %v727
      %v730 = vrot.slane %v726, 4
      %v732 = vshrl.u32 %v569, 16
      %v734 = vrot.slane %v732, 7
      %v735 = vshll.u32 %v569, 16
      %v737 = vor.u32 %v734, %v735
      %v738 = vsel %vm586, %v730, %v737
      %v739 = vrot.slane %v734, 4
      %v741 = vshrl.u32 %v570, 16
      %v743 = vrot.slane %v741, 7
      %v744 = vshll.u32 %v570, 16
      %v746 = vor.u32 %v743, %v744
      %v747 = vrot.slane %v743, 4
      %v749 = vshrl.u32 %v571, 16
      %v751 = vrot.slane %v749, 7
      %v752 = vshll.u32 %v571, 16
      %v754 = vor.u32 %v751, %v752
      %v755 = vsel %vm586, %v747, %v754
      %v756 = vrot.slane %v751, 4
      %v758 = vshrl.u32 %v572, 16
      %v760 = vrot.slane %v758, 7
      %v761 = vshll.u32 %v572, 16
      %v763 = vor.u32 %v760, %v761
      %v764 = vrot.slane %v760, 4
      %v766 = vshrl.u32 %v573, 16
      %v768 = vrot.slane %v766, 7
      %v769 = vshll.u32 %v573, 16
      %v771 = vor.u32 %v768, %v769
      %v772 = vsel %vm586, %v764, %v771
      %v773 = vrot.slane %v768, 4
      %v775 = vshrl.u32 %v574, 16
      %v777 = vrot.slane %v775, 7
      %v778 = vshll.u32 %v574, 16
      %v780 = vor.u32 %v777, %v778
      %v781 = vrot.slane %v777, 4
      %v783 = vshrl.u32 %v575, 16
      %v785 = vrot.slane %v783, 7
      %v786 = vshll.u32 %v575, 16
      %v788 = vor.u32 %v785, %v786
      %v789 = vsel %vm586, %v781, %v788
      %v790 = vrot.slane %v785, 4
      %v792 = vshrl.u32 %v576, 16
      %v794 = vrot.slane %v792, 7
      %v795 = vshll.u32 %v576, 16
      %v797 = vor.u32 %v794, %v795
      %v798 = vrot.slane %v794, 4
      %v800 = vshrl.u32 %v577, 16
      %v802 = vrot.slane %v800, 7
      %v803 = vshll.u32 %v577, 16
      %v805 = vor.u32 %v802, %v803
      %v806 = vsel %vm586, %v798, %v805
      %v807 = vrot.slane %v802, 4
      %v809 = vshrl.u32 %v578, 16
      %v811 = vrot.slane %v809, 7
      %v812 = vshll.u32 %v578, 16
      %v814 = vor.u32 %v811, %v812
      %v815 = vrot.slane %v811, 4
      %v817 = vshrl.u32 %v579, 16
      %v819 = vrot.slane %v817, 7
      %v820 = vshll.u32 %v579, 16
      %v822 = vor.u32 %v819, %v820
      %v823 = vsel %vm586, %v815, %v822
      %v824 = vrot.slane %v819, 4
      %v826 = vshrl.u32 %v580, 16
      %v828 = vrot.slane %v826, 7
      %v829 = vshll.u32 %v580, 16
      %v831 = vor.u32 %v828, %v829
      %v832 = vrot.slane %v828, 4
      %v834 = vshrl.u32 %v581, 16
      %v836 = vrot.slane %v834, 7
      %v837 = vshll.u32 %v581, 16
      %v839 = vor.u32 %v836, %v837
      %v840 = vsel %vm586, %v832, %v839
      %v841 = vrot.slane %v836, 4
      %v843 = vshrl.u32 %v582, 16
      %v845 = vrot.slane %v843, 7
      %v846 = vshll.u32 %v582, 16
      %v848 = vor.u32 %v845, %v846
      %v849 = vrot.slane %v845, 4
      %v851 = vshrl.u32 %v583, 16
      %v853 = vrot.slane %v851, 7
      %v854 = vshll.u32 %v583, 16
      %v856 = vor.u32 %v853, %v854
      %v857 = vsel %vm586, %v849, %v856
      %v858 = vrot.slane %v853, 4
      %859 = vrot.lane.b32.xlu0 %v593, 4
      %v860 = vpop.permute.xlu0 %859
      %861 = vrot.lane.b32.xlu0 %v602, 4
      %v862 = vpop.permute.xlu0 %861
      %863 = vrot.lane.b32.xlu0 %v603, 4
      %v864 = vpop.permute.xlu0 %863
      %865 = vrot.lane.b32.xlu0 %v610, 4
      %v866 = vpop.permute.xlu0 %865
      %867 = vrot.lane.b32.xlu0 %v619, 4
      %v868 = vpop.permute.xlu0 %867
      %869 = vrot.lane.b32.xlu0 %v620, 4
      %v870 = vpop.permute.xlu0 %869
      %871 = vrot.lane.b32.xlu0 %v627, 4
      %v872 = vpop.permute.xlu0 %871
      %873 = vrot.lane.b32.xlu0 %v636, 4
      %v874 = vpop.permute.xlu0 %873
      %875 = vrot.lane.b32.xlu0 %v637, 4
      %v876 = vpop.permute.xlu0 %875
      %877 = vrot.lane.b32.xlu0 %v644, 4
      %v878 = vpop.permute.xlu0 %877
      %879 = vrot.lane.b32.xlu0 %v653, 4
      %v880 = vpop.permute.xlu0 %879
      %881 = vrot.lane.b32.xlu0 %v654, 4
      %v882 = vpop.permute.xlu0 %881
      %883 = vrot.lane.b32.xlu0 %v661, 4
      %v884 = vpop.permute.xlu0 %883
      %885 = vrot.lane.b32.xlu0 %v670, 4
      %v886 = vpop.permute.xlu0 %885
      %887 = vrot.lane.b32.xlu0 %v671, 4
      %v888 = vpop.permute.xlu0 %887
      %889 = vrot.lane.b32.xlu0 %v678, 4
      %v890 = vpop.permute.xlu0 %889
      %891 = vrot.lane.b32.xlu0 %v687, 4
      %v892 = vpop.permute.xlu0 %891
      %893 = vrot.lane.b32.xlu0 %v688, 4
      %v894 = vpop.permute.xlu0 %893
      %895 = vrot.lane.b32.xlu0 %v695, 4
      %v896 = vpop.permute.xlu0 %895
      %897 = vrot.lane.b32.xlu0 %v704, 4
      %v898 = vpop.permute.xlu0 %897
      %899 = vrot.lane.b32.xlu0 %v705, 4
      %v900 = vpop.permute.xlu0 %899
      %901 = vrot.lane.b32.xlu0 %v712, 4
      %v902 = vpop.permute.xlu0 %901
      %903 = vrot.lane.b32.xlu0 %v721, 4
      %v904 = vpop.permute.xlu0 %903
      %905 = vrot.lane.b32.xlu0 %v722, 4
      %v906 = vpop.permute.xlu0 %905
      %907 = vrot.lane.b32.xlu0 %v729, 4
      %v908 = vpop.permute.xlu0 %907
      %909 = vrot.lane.b32.xlu0 %v738, 4
      %v910 = vpop.permute.xlu0 %909
      %911 = vrot.lane.b32.xlu0 %v739, 4
      %v912 = vpop.permute.xlu0 %911
      %913 = vrot.lane.b32.xlu0 %v746, 4
      %v914 = vpop.permute.xlu0 %913
      %915 = vrot.lane.b32.xlu0 %v755, 4
      %v916 = vpop.permute.xlu0 %915
      %917 = vrot.lane.b32.xlu0 %v756, 4
      %v918 = vpop.permute.xlu0 %917
      %919 = vrot.lane.b32.xlu0 %v763, 4
      %v920 = vpop.permute.xlu0 %919
      %921 = vrot.lane.b32.xlu0 %v772, 4
      %v922 = vpop.permute.xlu0 %921
      %923 = vrot.lane.b32.xlu0 %v773, 4
      %v924 = vpop.permute.xlu0 %923
      %925 = vrot.lane.b32.xlu0 %v780, 4
      %v926 = vpop.permute.xlu0 %925
      %927 = vrot.lane.b32.xlu0 %v789, 4
      %v928 = vpop.permute.xlu0 %927
      %929 = vrot.lane.b32.xlu0 %v790, 4
      %v930 = vpop.permute.xlu0 %929
      %931 = vrot.lane.b32.xlu0 %v797, 4
      %v932 = vpop.permute.xlu0 %931
      %933 = vrot.lane.b32.xlu0 %v806, 4
      %v934 = vpop.permute.xlu0 %933
      %935 = vrot.lane.b32.xlu0 %v807, 4
      %v936 = vpop.permute.xlu0 %935
      %937 = vrot.lane.b32.xlu0 %v814, 4
      %v938 = vpop.permute.xlu0 %937
      %939 = vrot.lane.b32.xlu0 %v823, 4
      %v940 = vpop.permute.xlu0 %939
      %941 = vrot.lane.b32.xlu0 %v824, 4
      %v942 = vpop.permute.xlu0 %941
      %943 = vrot.lane.b32.xlu0 %v831, 4
      %v944 = vpop.permute.xlu0 %943
      %945 = vrot.lane.b32.xlu0 %v840, 4
      %v946 = vpop.permute.xlu0 %945
      %947 = vrot.lane.b32.xlu0 %v841, 4
      %v948 = vpop.permute.xlu0 %947
      %949 = vrot.lane.b32.xlu0 %v848, 4
      %v950 = vpop.permute.xlu0 %949
      %951 = vrot.lane.b32.xlu0 %v857, 4
      %v952 = vpop.permute.xlu0 %951
      %953 = vrot.lane.b32.xlu0 %v858, 4
      %v954 = vpop.permute.xlu0 %953
      %s1003 = scalar_lea.vmem [#allocation2], 12
      %vm1004 = vcmask 60448
      %vm1005 = vsmask.f32 7938
      %vm1006 = vmand %vm1004, %vm1005
      %v1007 = vld [vmem:[%s1003] sm:$0xf]
      %v1008 = vsel %vm1006, %v860, %v1007
      %1009 = vst [vmem:[%s1003] sm:$0xf] %v1008
      %vm1010 = vcmask 60448
      %1011 = vst.msk [vmem:[%s1003 + $0x4] sm:$0xf] %vm1010, %v862
      %vm1012 = vcmask 57376
      %vm1013 = vmand %vm1012, %vm584
      %v1014 = vld [vmem:[%s1003 + $0x8] sm:$0x1]
      %v1015 = vsel %vm1013, %v864, %v1014
      %1016 = vst [vmem:[%s1003 + $0x8] sm:$0x1] %v1015
      %v1017 = vld [vmem:[%s1003 + $0xc] sm:$0xf]
      %v1018 = vsel %vm1006, %v866, %v1017
      %1019 = vst [vmem:[%s1003 + $0xc] sm:$0xf] %v1018
      %1020 = vst.msk [vmem:[%s1003 + $0x10] sm:$0xf] %vm1010, %v868
      %v1021 = vld [vmem:[%s1003 + $0x14] sm:$0x1]
      %v1022 = vsel %vm1013, %v870, %v1021
      %1023 = vst [vmem:[%s1003 + $0x14] sm:$0x1] %v1022
      %v1024 = vld [vmem:[%s1003 + $0x18] sm:$0xf]
      %v1025 = vsel %vm1006, %v872, %v1024
      %1026 = vst [vmem:[%s1003 + $0x18] sm:$0xf] %v1025
      %1027 = vst.msk [vmem:[%s1003 + $0x1c] sm:$0xf] %vm1010, %v874
      %v1028 = vld [vmem:[%s1003 + $0x20] sm:$0x1]
      %v1029 = vsel %vm1013, %v876, %v1028
      %1030 = vst [vmem:[%s1003 + $0x20] sm:$0x1] %v1029
      %v1031 = vld [vmem:[%s1003 + $0x24] sm:$0xf]
      %v1032 = vsel %vm1006, %v878, %v1031
      %1033 = vst [vmem:[%s1003 + $0x24] sm:$0xf] %v1032
      %1034 = vst.msk [vmem:[%s1003 + $0x28] sm:$0xf] %vm1010, %v880
      %v1035 = vld [vmem:[%s1003 + $0x2c] sm:$0x1]
      %v1036 = vsel %vm1013, %v882, %v1035
      %1037 = vst [vmem:[%s1003 + $0x2c] sm:$0x1] %v1036
      %v1038 = vld [vmem:[%s1003 + $0x30] sm:$0xf]
      %v1039 = vsel %vm1006, %v884, %v1038
      %1040 = vst [vmem:[%s1003 + $0x30] sm:$0xf] %v1039
      %1041 = vst.msk [vmem:[%s1003 + $0x34] sm:$0xf] %vm1010, %v886
      %v1042 = vld [vmem:[%s1003 + $0x38] sm:$0x1]
      %v1043 = vsel %vm1013, %v888, %v1042
      %1044 = vst [vmem:[%s1003 + $0x38] sm:$0x1] %v1043
      %v1045 = vld [vmem:[%s1003 + $0x3c] sm:$0xf]
      %v1046 = vsel %vm1006, %v890, %v1045
      %1047 = vst [vmem:[%s1003 + $0x3c] sm:$0xf] %v1046
      %1048 = vst.msk [vmem:[%s1003 + $0x40] sm:$0xf] %vm1010, %v892
      %v1049 = vld [vmem:[%s1003 + $0x44] sm:$0x1]
      %v1050 = vsel %vm1013, %v894, %v1049
      %1051 = vst [vmem:[%s1003 + $0x44] sm:$0x1] %v1050
      %v1052 = vld [vmem:[%s1003 + $0x48] sm:$0xf]
      %v1053 = vsel %vm1006, %v896, %v1052
      %1054 = vst [vmem:[%s1003 + $0x48] sm:$0xf] %v1053
      %1055 = vst.msk [vmem:[%s1003 + $0x4c] sm:$0xf] %vm1010, %v898
      %v1056 = vld [vmem:[%s1003 + $0x50] sm:$0x1]
      %v1057 = vsel %vm1013, %v900, %v1056
      %1058 = vst [vmem:[%s1003 + $0x50] sm:$0x1] %v1057
      %v1059 = vld [vmem:[%s1003 + $0x54] sm:$0xf]
      %v1060 = vsel %vm1006, %v902, %v1059
      %1061 = vst [vmem:[%s1003 + $0x54] sm:$0xf] %v1060
      %1062 = vst.msk [vmem:[%s1003 + $0x58] sm:$0xf] %vm1010, %v904
      %v1063 = vld [vmem:[%s1003 + $0x5c] sm:$0x1]
      %v1064 = vsel %vm1013, %v906, %v1063
      %1065 = vst [vmem:[%s1003 + $0x5c] sm:$0x1] %v1064
      %v1066 = vld [vmem:[%s1003 + $0x60] sm:$0xf]
      %v1067 = vsel %vm1006, %v908, %v1066
      %1068 = vst [vmem:[%s1003 + $0x60] sm:$0xf] %v1067
      %1069 = vst.msk [vmem:[%s1003 + $0x64] sm:$0xf] %vm1010, %v910
      %v1070 = vld [vmem:[%s1003 + $0x68] sm:$0x1]
      %v1071 = vsel %vm1013, %v912, %v1070
      %1072 = vst [vmem:[%s1003 + $0x68] sm:$0x1] %v1071
      %v1073 = vld [vmem:[%s1003 + $0x6c] sm:$0xf]
      %v1074 = vsel %vm1006, %v914, %v1073
      %1075 = vst [vmem:[%s1003 + $0x6c] sm:$0xf] %v1074
      %1076 = vst.msk [vmem:[%s1003 + $0x70] sm:$0xf] %vm1010, %v916
      %v1077 = vld [vmem:[%s1003 + $0x74] sm:$0x1]
      %v1078 = vsel %vm1013, %v918, %v1077
      %1079 = vst [vmem:[%s1003 + $0x74] sm:$0x1] %v1078
      %v1080 = vld [vmem:[%s1003 + $0x78] sm:$0xf]
      %v1081 = vsel %vm1006, %v920, %v1080
      %1082 = vst [vmem:[%s1003 + $0x78] sm:$0xf] %v1081
      %1083 = vst.msk [vmem:[%s1003 + $0x7c] sm:$0xf] %vm1010, %v922
      %v1084 = vld [vmem:[%s1003 + $0x80] sm:$0x1]
      %v1085 = vsel %vm1013, %v924, %v1084
      %1086 = vst [vmem:[%s1003 + $0x80] sm:$0x1] %v1085
      %v1087 = vld [vmem:[%s1003 + $0x84] sm:$0xf]
      %v1088 = vsel %vm1006, %v926, %v1087
      %1089 = vst [vmem:[%s1003 + $0x84] sm:$0xf] %v1088
      %1090 = vst.msk [vmem:[%s1003 + $0x88] sm:$0xf] %vm1010, %v928
      %v1091 = vld [vmem:[%s1003 + $0x8c] sm:$0x1]
      %v1092 = vsel %vm1013, %v930, %v1091
      %1093 = vst [vmem:[%s1003 + $0x8c] sm:$0x1] %v1092
      %v1094 = vld [vmem:[%s1003 + $0x90] sm:$0xf]
      %v1095 = vsel %vm1006, %v932, %v1094
      %1096 = vst [vmem:[%s1003 + $0x90] sm:$0xf] %v1095
      %1097 = vst.msk [vmem:[%s1003 + $0x94] sm:$0xf] %vm1010, %v934
      %v1098 = vld [vmem:[%s1003 + $0x98] sm:$0x1]
      %v1099 = vsel %vm1013, %v936, %v1098
      %1100 = vst [vmem:[%s1003 + $0x98] sm:$0x1] %v1099
      %v1101 = vld [vmem:[%s1003 + $0x9c] sm:$0xf]
      %v1102 = vsel %vm1006, %v938, %v1101
      %1103 = vst [vmem:[%s1003 + $0x9c] sm:$0xf] %v1102
      %1104 = vst.msk [vmem:[%s1003 + $0xa0] sm:$0xf] %vm1010, %v940
      %v1105 = vld [vmem:[%s1003 + $0xa4] sm:$0x1]
      %v1106 = vsel %vm1013, %v942, %v1105
      %1107 = vst [vmem:[%s1003 + $0xa4] sm:$0x1] %v1106
      %v1108 = vld [vmem:[%s1003 + $0xa8] sm:$0xf]
      %v1109 = vsel %vm1006, %v944, %v1108
      %1110 = vst [vmem:[%s1003 + $0xa8] sm:$0xf] %v1109
      %1111 = vst.msk [vmem:[%s1003 + $0xac] sm:$0xf] %vm1010, %v946
      %v1112 = vld [vmem:[%s1003 + $0xb0] sm:$0x1]
      %v1113 = vsel %vm1013, %v948, %v1112
      %1114 = vst [vmem:[%s1003 + $0xb0] sm:$0x1] %v1113
      %v1115 = vld [vmem:[%s1003 + $0xb4] sm:$0xf]
      %v1116 = vsel %vm1006, %v950, %v1115
      %1117 = vst [vmem:[%s1003 + $0xb4] sm:$0xf] %v1116
      %1118 = vst.msk [vmem:[%s1003 + $0xb8] sm:$0xf] %vm1010, %v952
      %v1119 = vld [vmem:[%s1003 + $0xbc] sm:$0x1]
      %v1120 = vsel %vm1013, %v954, %v1119
      %1121 = vst [vmem:[%s1003 + $0xbc] sm:$0x1] %v1120
      %v1122 = vld [vmem:[#allocation2] sm:$0xf]
      %v1123 = vld [vmem:[#allocation2 + $0x4] sm:$0xf]
      %v1124 = vld [vmem:[#allocation2 + $0x8] sm:$0x1]
      %v1125 = vld [vmem:[#allocation2 + $0xc] sm:$0xf]
      %v1126 = vld [vmem:[#allocation2 + $0x10] sm:$0xf]
      %v1127 = vld [vmem:[#allocation2 + $0x14] sm:$0x1]
      %v1128 = vld [vmem:[#allocation2 + $0x18] sm:$0xf]
      %v1129 = vld [vmem:[#allocation2 + $0x1c] sm:$0xf]
      %v1130 = vld [vmem:[#allocation2 + $0x20] sm:$0x1]
      %v1131 = vld [vmem:[#allocation2 + $0x24] sm:$0xf]
      %v1132 = vld [vmem:[#allocation2 + $0x28] sm:$0xf]
      %v1133 = vld [vmem:[#allocation2 + $0x2c] sm:$0x1]
      %v1134 = vld [vmem:[#allocation2 + $0x30] sm:$0xf]
      %v1135 = vld [vmem:[#allocation2 + $0x34] sm:$0xf]
      %v1136 = vld [vmem:[#allocation2 + $0x38] sm:$0x1]
      %v1137 = vld [vmem:[#allocation2 + $0x3c] sm:$0xf]
      %v1138 = vld [vmem:[#allocation2 + $0x40] sm:$0xf]
      %v1139 = vld [vmem:[#allocation2 + $0x44] sm:$0x1]
      %v1140 = vld [vmem:[#allocation2 + $0x48] sm:$0xf]
      %v1141 = vld [vmem:[#allocation2 + $0x4c] sm:$0xf]
      %v1142 = vld [vmem:[#allocation2 + $0x50] sm:$0x1]
      %v1143 = vld [vmem:[#allocation2 + $0x54] sm:$0xf]
      %v1144 = vld [vmem:[#allocation2 + $0x58] sm:$0xf]
      %v1145 = vld [vmem:[#allocation2 + $0x5c] sm:$0x1]
      %v1146 = vld [vmem:[#allocation2 + $0x60] sm:$0xf]
      %v1147 = vld [vmem:[#allocation2 + $0x64] sm:$0xf]
      %v1148 = vld [vmem:[#allocation2 + $0x68] sm:$0x1]
      %v1149 = vld [vmem:[#allocation2 + $0x6c] sm:$0xf]
      %v1150 = vld [vmem:[#allocation2 + $0x70] sm:$0xf]
      %v1151 = vld [vmem:[#allocation2 + $0x74] sm:$0x1]
      %v1152 = vld [vmem:[#allocation2 + $0x78] sm:$0xf]
      %v1153 = vld [vmem:[#allocation2 + $0x7c] sm:$0xf]
      %v1154 = vld [vmem:[#allocation2 + $0x80] sm:$0x1]
      %v1155 = vld [vmem:[#allocation2 + $0x84] sm:$0xf]
      %v1156 = vld [vmem:[#allocation2 + $0x88] sm:$0xf]
      %v1157 = vld [vmem:[#allocation2 + $0x8c] sm:$0x1]
      %v1158 = vld [vmem:[#allocation2 + $0x90] sm:$0xf]
      %v1159 = vld [vmem:[#allocation2 + $0x94] sm:$0xf]
      %v1160 = vld [vmem:[#allocation2 + $0x98] sm:$0x1]
      %v1161 = vld [vmem:[#allocation2 + $0x9c] sm:$0xf]
      %v1162 = vld [vmem:[#allocation2 + $0xa0] sm:$0xf]
      %v1163 = vld [vmem:[#allocation2 + $0xa4] sm:$0x1]
      %v1164 = vld [vmem:[#allocation2 + $0xa8] sm:$0xf]
      %v1165 = vld [vmem:[#allocation2 + $0xac] sm:$0xf]
      %v1166 = vld [vmem:[#allocation2 + $0xb0] sm:$0x1]
      %v1167 = vld [vmem:[#allocation2 + $0xb4] sm:$0xf]
      %v1168 = vld [vmem:[#allocation2 + $0xb8] sm:$0xf]
      %v1169 = vld [vmem:[#allocation2 + $0xbc] sm:$0x1]
      %v1170 = vld [vmem:[#allocation2 + $0xc0] sm:$0xf]
      %v1171 = vld [vmem:[#allocation2 + $0xc4] sm:$0xf]
      %v1172 = vld [vmem:[#allocation2 + $0xc8] sm:$0x1]
      %v1173 = vld [vmem:[#allocation2 + $0xcc] sm:$0xf]
      %v1174 = vld [vmem:[#allocation2 + $0xd0] sm:$0xf]
      %v1175 = vld [vmem:[#allocation2 + $0xd4] sm:$0x1]
      %v1208 = vunpack.c.l.b16 %v1122
      %v1209 = vunpack.c.l.b16 %v1123
      %v1210 = vunpack.c.l.b16 %v1125
      %v1211 = vunpack.c.l.b16 %v1126
      %v1212 = vunpack.c.l.b16 %v1128
      %v1213 = vunpack.c.l.b16 %v1129
      %v1214 = vunpack.c.l.b16 %v1131
      %v1215 = vunpack.c.l.b16 %v1132
      %v1216 = vunpack.c.l.b16 %v1134
      %v1217 = vunpack.c.l.b16 %v1135
      %v1218 = vunpack.c.l.b16 %v1137
      %v1219 = vunpack.c.l.b16 %v1138
      %v1220 = vunpack.c.l.b16 %v1140
      %v1221 = vunpack.c.l.b16 %v1141
      %v1222 = vunpack.c.l.b16 %v1143
      %v1223 = vunpack.c.l.b16 %v1144
      %v1224 = vunpack.c.l.b16 %v1146
      %v1225 = vunpack.c.l.b16 %v1147
      %v1226 = vunpack.c.l.b16 %v1149
      %v1227 = vunpack.c.l.b16 %v1150
      %v1228 = vunpack.c.l.b16 %v1152
      %v1229 = vunpack.c.l.b16 %v1153
      %v1230 = vunpack.c.l.b16 %v1155
      %v1231 = vunpack.c.l.b16 %v1156
      %v1232 = vunpack.c.l.b16 %v1158
      %v1233 = vunpack.c.l.b16 %v1159
      %v1234 = vunpack.c.l.b16 %v1161
      %v1235 = vunpack.c.l.b16 %v1162
      %v1236 = vunpack.c.l.b16 %v1164
      %v1237 = vunpack.c.l.b16 %v1165
      %v1238 = vunpack.c.l.b16 %v1167
      %v1239 = vunpack.c.l.b16 %v1168
      %v1240 = vpack.c.b16 %v1209, %v1208
      %v1241 = vpack.c.b16 %v1211, %v1210
      %v1242 = vpack.c.b16 %v1213, %v1212
      %v1243 = vpack.c.b16 %v1215, %v1214
      %v1244 = vpack.c.b16 %v1217, %v1216
      %v1245 = vpack.c.b16 %v1219, %v1218
      %v1246 = vpack.c.b16 %v1221, %v1220
      %v1247 = vpack.c.b16 %v1223, %v1222
      %v1248 = vpack.c.b16 %v1225, %v1224
      %v1249 = vpack.c.b16 %v1227, %v1226
      %v1250 = vpack.c.b16 %v1229, %v1228
      %v1251 = vpack.c.b16 %v1231, %v1230
      %v1252 = vpack.c.b16 %v1233, %v1232
      %v1253 = vpack.c.b16 %v1235, %v1234
      %v1254 = vpack.c.b16 %v1237, %v1236
      %v1255 = vpack.c.b16 %v1239, %v1238
      %v1272 = vunpack.c.l.b16 %v1124
      %v1273 = vunpack.c.l.b16 %v1127
      %v1274 = vunpack.c.l.b16 %v1130
      %v1275 = vunpack.c.l.b16 %v1133
      %v1276 = vunpack.c.l.b16 %v1136
      %v1277 = vunpack.c.l.b16 %v1139
      %v1278 = vunpack.c.l.b16 %v1142
      %v1279 = vunpack.c.l.b16 %v1145
      %v1280 = vunpack.c.l.b16 %v1148
      %v1281 = vunpack.c.l.b16 %v1151
      %v1282 = vunpack.c.l.b16 %v1154
      %v1283 = vunpack.c.l.b16 %v1157
      %v1284 = vunpack.c.l.b16 %v1160
      %v1285 = vunpack.c.l.b16 %v1163
      %v1286 = vunpack.c.l.b16 %v1166
      %v1287 = vunpack.c.l.b16 %v1169
      %v1288 = vpack.c.b16 %v1272, %v1272
      %v1289 = vpack.c.b16 %v1273, %v1273
      %v1290 = vpack.c.b16 %v1274, %v1274
      %v1291 = vpack.c.b16 %v1275, %v1275
      %v1292 = vpack.c.b16 %v1276, %v1276
      %v1293 = vpack.c.b16 %v1277, %v1277
      %v1294 = vpack.c.b16 %v1278, %v1278
      %v1295 = vpack.c.b16 %v1279, %v1279
      %v1296 = vpack.c.b16 %v1280, %v1280
      %v1297 = vpack.c.b16 %v1281, %v1281
      %v1298 = vpack.c.b16 %v1282, %v1282
      %v1299 = vpack.c.b16 %v1283, %v1283
      %v1300 = vpack.c.b16 %v1284, %v1284
      %v1301 = vpack.c.b16 %v1285, %v1285
      %v1302 = vpack.c.b16 %v1286, %v1286
      %v1303 = vpack.c.b16 %v1287, %v1287
      %vm1304 = vsmask.f32 7424
      %v1306 = vshrl.u32 %v1240, 16
      %v1308 = vshll.u32 %v1240, 16
      %v1310 = vrot.slane %v1308, 1
      %v1311 = vor.u32 %v1306, %v1310
      %v1313 = vshll.u32 %v1288, 16
      %v1315 = vrot.slane %v1313, 1
      %v1316 = vsel %vm1304, %v1311, %v1315
      %v1318 = vshrl.u32 %v1241, 16
      %v1320 = vshll.u32 %v1241, 16
      %v1322 = vrot.slane %v1320, 1
      %v1323 = vor.u32 %v1318, %v1322
      %v1325 = vshll.u32 %v1289, 16
      %v1327 = vrot.slane %v1325, 1
      %v1328 = vsel %vm1304, %v1323, %v1327
      %v1330 = vshrl.u32 %v1242, 16
      %v1332 = vshll.u32 %v1242, 16
      %v1334 = vrot.slane %v1332, 1
      %v1335 = vor.u32 %v1330, %v1334
      %v1337 = vshll.u32 %v1290, 16
      %v1339 = vrot.slane %v1337, 1
      %v1340 = vsel %vm1304, %v1335, %v1339
      %v1342 = vshrl.u32 %v1243, 16
      %v1344 = vshll.u32 %v1243, 16
      %v1346 = vrot.slane %v1344, 1
      %v1347 = vor.u32 %v1342, %v1346
      %v1349 = vshll.u32 %v1291, 16
      %v1351 = vrot.slane %v1349, 1
      %v1352 = vsel %vm1304, %v1347, %v1351
      %v1354 = vshrl.u32 %v1244, 16
      %v1356 = vshll.u32 %v1244, 16
      %v1358 = vrot.slane %v1356, 1
      %v1359 = vor.u32 %v1354, %v1358
      %v1361 = vshll.u32 %v1292, 16
      %v1363 = vrot.slane %v1361, 1
      %v1364 = vsel %vm1304, %v1359, %v1363
      %v1366 = vshrl.u32 %v1245, 16
      %v1368 = vshll.u32 %v1245, 16
      %v1370 = vrot.slane %v1368, 1
      %v1371 = vor.u32 %v1366, %v1370
      %v1373 = vshll.u32 %v1293, 16
      %v1375 = vrot.slane %v1373, 1
      %v1376 = vsel %vm1304, %v1371, %v1375
      %v1378 = vshrl.u32 %v1246, 16
      %v1380 = vshll.u32 %v1246, 16
      %v1382 = vrot.slane %v1380, 1
      %v1383 = vor.u32 %v1378, %v1382
      %v1385 = vshll.u32 %v1294, 16
      %v1387 = vrot.slane %v1385, 1
      %v1388 = vsel %vm1304, %v1383, %v1387
      %v1390 = vshrl.u32 %v1247, 16
      %v1392 = vshll.u32 %v1247, 16
      %v1394 = vrot.slane %v1392, 1
      %v1395 = vor.u32 %v1390, %v1394
      %v1397 = vshll.u32 %v1295, 16
      %v1399 = vrot.slane %v1397, 1
      %v1400 = vsel %vm1304, %v1395, %v1399
      %v1402 = vshrl.u32 %v1248, 16
      %v1404 = vshll.u32 %v1248, 16
      %v1406 = vrot.slane %v1404, 1
      %v1407 = vor.u32 %v1402, %v1406
      %v1409 = vshll.u32 %v1296, 16
      %v1411 = vrot.slane %v1409, 1
      %v1412 = vsel %vm1304, %v1407, %v1411
      %v1414 = vshrl.u32 %v1249, 16
      %v1416 = vshll.u32 %v1249, 16
      %v1418 = vrot.slane %v1416, 1
      %v1419 = vor.u32 %v1414, %v1418
      %v1421 = vshll.u32 %v1297, 16
      %v1423 = vrot.slane %v1421, 1
      %v1424 = vsel %vm1304, %v1419, %v1423
      %v1426 = vshrl.u32 %v1250, 16
      %v1428 = vshll.u32 %v1250, 16
      %v1430 = vrot.slane %v1428, 1
      %v1431 = vor.u32 %v1426, %v1430
      %v1433 = vshll.u32 %v1298, 16
      %v1435 = vrot.slane %v1433, 1
      %v1436 = vsel %vm1304, %v1431, %v1435
      %v1438 = vshrl.u32 %v1251, 16
      %v1440 = vshll.u32 %v1251, 16
      %v1442 = vrot.slane %v1440, 1
      %v1443 = vor.u32 %v1438, %v1442
      %v1445 = vshll.u32 %v1299, 16
      %v1447 = vrot.slane %v1445, 1
      %v1448 = vsel %vm1304, %v1443, %v1447
      %v1450 = vshrl.u32 %v1252, 16
      %v1452 = vshll.u32 %v1252, 16
      %v1454 = vrot.slane %v1452, 1
      %v1455 = vor.u32 %v1450, %v1454
      %v1457 = vshll.u32 %v1300, 16
      %v1459 = vrot.slane %v1457, 1
      %v1460 = vsel %vm1304, %v1455, %v1459
      %v1462 = vshrl.u32 %v1253, 16
      %v1464 = vshll.u32 %v1253, 16
      %v1466 = vrot.slane %v1464, 1
      %v1467 = vor.u32 %v1462, %v1466
      %v1469 = vshll.u32 %v1301, 16
      %v1471 = vrot.slane %v1469, 1
      %v1472 = vsel %vm1304, %v1467, %v1471
      %v1474 = vshrl.u32 %v1254, 16
      %v1476 = vshll.u32 %v1254, 16
      %v1478 = vrot.slane %v1476, 1
      %v1479 = vor.u32 %v1474, %v1478
      %v1481 = vshll.u32 %v1302, 16
      %v1483 = vrot.slane %v1481, 1
      %v1484 = vsel %vm1304, %v1479, %v1483
      %v1486 = vshrl.u32 %v1255, 16
      %v1488 = vshll.u32 %v1255, 16
      %v1490 = vrot.slane %v1488, 1
      %v1491 = vor.u32 %v1486, %v1490
      %v1493 = vshll.u32 %v1303, 16
      %v1495 = vrot.slane %v1493, 1
      %v1496 = vsel %vm1304, %v1491, %v1495
      %1497 = vrot.lane.b32.xlu0 %v1316, 8
      %v1498 = vpop.permute.xlu0 %1497
      %1499 = vrot.lane.b32.xlu0 %v1328, 8
      %v1500 = vpop.permute.xlu0 %1499
      %1501 = vrot.lane.b32.xlu0 %v1340, 8
      %v1502 = vpop.permute.xlu0 %1501
      %1503 = vrot.lane.b32.xlu0 %v1352, 8
      %v1504 = vpop.permute.xlu0 %1503
      %1505 = vrot.lane.b32.xlu0 %v1364, 8
      %v1506 = vpop.permute.xlu0 %1505
      %1507 = vrot.lane.b32.xlu0 %v1376, 8
      %v1508 = vpop.permute.xlu0 %1507
      %1509 = vrot.lane.b32.xlu0 %v1388, 8
      %v1510 = vpop.permute.xlu0 %1509
      %1511 = vrot.lane.b32.xlu0 %v1400, 8
      %v1512 = vpop.permute.xlu0 %1511
      %1513 = vrot.lane.b32.xlu0 %v1412, 8
      %v1514 = vpop.permute.xlu0 %1513
      %1515 = vrot.lane.b32.xlu0 %v1424, 8
      %v1516 = vpop.permute.xlu0 %1515
      %1517 = vrot.lane.b32.xlu0 %v1436, 8
      %v1518 = vpop.permute.xlu0 %1517
      %1519 = vrot.lane.b32.xlu0 %v1448, 8
      %v1520 = vpop.permute.xlu0 %1519
      %1521 = vrot.lane.b32.xlu0 %v1460, 8
      %v1522 = vpop.permute.xlu0 %1521
      %1523 = vrot.lane.b32.xlu0 %v1472, 8
      %v1524 = vpop.permute.xlu0 %1523
      %1525 = vrot.lane.b32.xlu0 %v1484, 8
      %v1526 = vpop.permute.xlu0 %1525
      %1527 = vrot.lane.b32.xlu0 %v1496, 8
      %v1528 = vpop.permute.xlu0 %1527
      %vm1529 = vcmask 1046528
      %v1530 = vrot.slane %v1240, 1
      %v1531 = vrot.slane %v1288, 1
      %v1532 = vsel %vm1529, %v1530, %v1531
      %v1533 = vrot.slane %v1241, 1
      %v1534 = vrot.slane %v1289, 1
      %v1535 = vsel %vm1529, %v1533, %v1534
      %v1536 = vrot.slane %v1242, 1
      %v1537 = vrot.slane %v1290, 1
      %v1538 = vsel %vm1529, %v1536, %v1537
      %v1539 = vrot.slane %v1243, 1
      %v1540 = vrot.slane %v1291, 1
      %v1541 = vsel %vm1529, %v1539, %v1540
      %v1542 = vrot.slane %v1244, 1
      %v1543 = vrot.slane %v1292, 1
      %v1544 = vsel %vm1529, %v1542, %v1543
      %v1545 = vrot.slane %v1245, 1
      %v1546 = vrot.slane %v1293, 1
      %v1547 = vsel %vm1529, %v1545, %v1546
      %v1548 = vrot.slane %v1246, 1
      %v1549 = vrot.slane %v1294, 1
      %v1550 = vsel %vm1529, %v1548, %v1549
      %v1551 = vrot.slane %v1247, 1
      %v1552 = vrot.slane %v1295, 1
      %v1553 = vsel %vm1529, %v1551, %v1552
      %v1554 = vrot.slane %v1248, 1
      %v1555 = vrot.slane %v1296, 1
      %v1556 = vsel %vm1529, %v1554, %v1555
      %v1557 = vrot.slane %v1249, 1
      %v1558 = vrot.slane %v1297, 1
      %v1559 = vsel %vm1529, %v1557, %v1558
      %v1560 = vrot.slane %v1250, 1
      %v1561 = vrot.slane %v1298, 1
      %v1562 = vsel %vm1529, %v1560, %v1561
      %v1563 = vrot.slane %v1251, 1
      %v1564 = vrot.slane %v1299, 1
      %v1565 = vsel %vm1529, %v1563, %v1564
      %v1566 = vrot.slane %v1252, 1
      %v1567 = vrot.slane %v1300, 1
      %v1568 = vsel %vm1529, %v1566, %v1567
      %v1569 = vrot.slane %v1253, 1
      %v1570 = vrot.slane %v1301, 1
      %v1571 = vsel %vm1529, %v1569, %v1570
      %v1572 = vrot.slane %v1254, 1
      %v1573 = vrot.slane %v1302, 1
      %v1574 = vsel %vm1529, %v1572, %v1573
      %v1575 = vrot.slane %v1255, 1
      %v1576 = vrot.slane %v1303, 1
      %v1577 = vsel %vm1529, %v1575, %v1576
      %1578 = vrot.lane.b32.xlu0 %v1532, 16
      %v1579 = vpop.permute.xlu0 %1578
      %1580 = vrot.lane.b32.xlu0 %v1535, 16
      %v1581 = vpop.permute.xlu0 %1580
      %1582 = vrot.lane.b32.xlu0 %v1538, 16
      %v1583 = vpop.permute.xlu0 %1582
      %1584 = vrot.lane.b32.xlu0 %v1541, 16
      %v1585 = vpop.permute.xlu0 %1584
      %1586 = vrot.lane.b32.xlu0 %v1544, 16
      %v1587 = vpop.permute.xlu0 %1586
      %1588 = vrot.lane.b32.xlu0 %v1547, 16
      %v1589 = vpop.permute.xlu0 %1588
      %1590 = vrot.lane.b32.xlu0 %v1550, 16
      %v1591 = vpop.permute.xlu0 %1590
      %1592 = vrot.lane.b32.xlu0 %v1553, 16
      %v1593 = vpop.permute.xlu0 %1592
      %1594 = vrot.lane.b32.xlu0 %v1556, 16
      %v1595 = vpop.permute.xlu0 %1594
      %1596 = vrot.lane.b32.xlu0 %v1559, 16
      %v1597 = vpop.permute.xlu0 %1596
      %1598 = vrot.lane.b32.xlu0 %v1562, 16
      %v1599 = vpop.permute.xlu0 %1598
      %1600 = vrot.lane.b32.xlu0 %v1565, 16
      %v1601 = vpop.permute.xlu0 %1600
      %1602 = vrot.lane.b32.xlu0 %v1568, 16
      %v1603 = vpop.permute.xlu0 %1602
      %1604 = vrot.lane.b32.xlu0 %v1571, 16
      %v1605 = vpop.permute.xlu0 %1604
      %1606 = vrot.lane.b32.xlu0 %v1574, 16
      %v1607 = vpop.permute.xlu0 %1606
      %1608 = vrot.lane.b32.xlu0 %v1577, 16
      %v1609 = vpop.permute.xlu0 %1608
      %v1612 = vunpack.c.l.b16 %v1170
      %v1613 = vunpack.c.l.b16 %v1171
      %v1614 = vpack.c.b16 %v1613, %v1612
      %1615 = vrot.lane.b32.xlu0 %v1241, 24
      %v1616 = vpop.permute.xlu0 %1615
      %1617 = vrot.lane.b32.xlu0 %v1242, 24
      %v1618 = vpop.permute.xlu0 %1617
      %1619 = vrot.lane.b32.xlu0 %v1243, 24
      %v1620 = vpop.permute.xlu0 %1619
      %1621 = vrot.lane.b32.xlu0 %v1244, 24
      %v1622 = vpop.permute.xlu0 %1621
      %1623 = vrot.lane.b32.xlu0 %v1245, 24
      %v1624 = vpop.permute.xlu0 %1623
      %1625 = vrot.lane.b32.xlu0 %v1246, 24
      %v1626 = vpop.permute.xlu0 %1625
      %1627 = vrot.lane.b32.xlu0 %v1247, 24
      %v1628 = vpop.permute.xlu0 %1627
      %1629 = vrot.lane.b32.xlu0 %v1248, 24
      %v1630 = vpop.permute.xlu0 %1629
      %1631 = vrot.lane.b32.xlu0 %v1249, 24
      %v1632 = vpop.permute.xlu0 %1631
      %1633 = vrot.lane.b32.xlu0 %v1250, 24
      %v1634 = vpop.permute.xlu0 %1633
      %1635 = vrot.lane.b32.xlu0 %v1251, 24
      %v1636 = vpop.permute.xlu0 %1635
      %1637 = vrot.lane.b32.xlu0 %v1252, 24
      %v1638 = vpop.permute.xlu0 %1637
      %1639 = vrot.lane.b32.xlu0 %v1253, 24
      %v1640 = vpop.permute.xlu0 %1639
      %1641 = vrot.lane.b32.xlu0 %v1254, 24
      %v1642 = vpop.permute.xlu0 %1641
      %1643 = vrot.lane.b32.xlu0 %v1255, 24
      %v1644 = vpop.permute.xlu0 %1643
      %1645 = vrot.lane.b32.xlu0 %v1614, 24
      %v1646 = vpop.permute.xlu0 %1645
      %v1648 = vunpack.c.l.b16 %v1172
      %v1649 = vpack.c.b16 %v1648, %v1648
      %v1651 = vshrl.u32 %v1614, 16
      %v1653 = vshll.u32 %v1614, 16
      %v1655 = vrot.slane %v1653, 1
      %v1656 = vor.u32 %v1651, %v1655
      %v1658 = vshll.u32 %v1649, 16
      %v1660 = vrot.slane %v1658, 1
      %v1661 = vsel %vm1304, %v1656, %v1660
      %1662 = vrot.lane.b32.xlu0 %v1328, 32
      %v1663 = vpop.permute.xlu0 %1662
      %1664 = vrot.lane.b32.xlu0 %v1340, 32
      %v1665 = vpop.permute.xlu0 %1664
      %1666 = vrot.lane.b32.xlu0 %v1352, 32
      %v1667 = vpop.permute.xlu0 %1666
      %1668 = vrot.lane.b32.xlu0 %v1364, 32
      %v1669 = vpop.permute.xlu0 %1668
      %1670 = vrot.lane.b32.xlu0 %v1376, 32
      %v1671 = vpop.permute.xlu0 %1670
      %1672 = vrot.lane.b32.xlu0 %v1388, 32
      %v1673 = vpop.permute.xlu0 %1672
      %1674 = vrot.lane.b32.xlu0 %v1400, 32
      %v1675 = vpop.permute.xlu0 %1674
      %1676 = vrot.lane.b32.xlu0 %v1412, 32
      %v1677 = vpop.permute.xlu0 %1676
      %1678 = vrot.lane.b32.xlu0 %v1424, 32
      %v1679 = vpop.permute.xlu0 %1678
      %1680 = vrot.lane.b32.xlu0 %v1436, 32
      %v1681 = vpop.permute.xlu0 %1680
      %1682 = vrot.lane.b32.xlu0 %v1448, 32
      %v1683 = vpop.permute.xlu0 %1682
      %1684 = vrot.lane.b32.xlu0 %v1460, 32
      %v1685 = vpop.permute.xlu0 %1684
      %1686 = vrot.lane.b32.xlu0 %v1472, 32
      %v1687 = vpop.permute.xlu0 %1686
      %1688 = vrot.lane.b32.xlu0 %v1484, 32
      %v1689 = vpop.permute.xlu0 %1688
      %1690 = vrot.lane.b32.xlu0 %v1496, 32
      %v1691 = vpop.permute.xlu0 %1690
      %1692 = vrot.lane.b32.xlu0 %v1661, 32
      %v1693 = vpop.permute.xlu0 %1692
      %v1694 = vrot.slane %v1614, 1
      %v1695 = vrot.slane %v1649, 1
      %v1696 = vsel %vm1529, %v1694, %v1695
      %1697 = vrot.lane.b32.xlu0 %v1535, 40
      %v1698 = vpop.permute.xlu0 %1697
      %1699 = vrot.lane.b32.xlu0 %v1538, 40
      %v1700 = vpop.permute.xlu0 %1699
      %1701 = vrot.lane.b32.xlu0 %v1541, 40
      %v1702 = vpop.permute.xlu0 %1701
      %1703 = vrot.lane.b32.xlu0 %v1544, 40
      %v1704 = vpop.permute.xlu0 %1703
      %1705 = vrot.lane.b32.xlu0 %v1547, 40
      %v1706 = vpop.permute.xlu0 %1705
      %1707 = vrot.lane.b32.xlu0 %v1550, 40
      %v1708 = vpop.permute.xlu0 %1707
      %1709 = vrot.lane.b32.xlu0 %v1553, 40
      %v1710 = vpop.permute.xlu0 %1709
      %1711 = vrot.lane.b32.xlu0 %v1556, 40
      %v1712 = vpop.permute.xlu0 %1711
      %1713 = vrot.lane.b32.xlu0 %v1559, 40
      %v1714 = vpop.permute.xlu0 %1713
      %1715 = vrot.lane.b32.xlu0 %v1562, 40
      %v1716 = vpop.permute.xlu0 %1715
      %1717 = vrot.lane.b32.xlu0 %v1565, 40
      %v1718 = vpop.permute.xlu0 %1717
      %1719 = vrot.lane.b32.xlu0 %v1568, 40
      %v1720 = vpop.permute.xlu0 %1719
      %1721 = vrot.lane.b32.xlu0 %v1571, 40
      %v1722 = vpop.permute.xlu0 %1721
      %1723 = vrot.lane.b32.xlu0 %v1574, 40
      %v1724 = vpop.permute.xlu0 %1723
      %1725 = vrot.lane.b32.xlu0 %v1577, 40
      %v1726 = vpop.permute.xlu0 %1725
      %1727 = vrot.lane.b32.xlu0 %v1696, 40
      %v1728 = vpop.permute.xlu0 %1727
      %v1731 = vunpack.c.l.b16 %v1173
      %v1732 = vunpack.c.l.b16 %v1174
      %v1733 = vpack.c.b16 %v1732, %v1731
      %1734 = vrot.lane.b32.xlu0 %v1242, 48
      %v1735 = vpop.permute.xlu0 %1734
      %1736 = vrot.lane.b32.xlu0 %v1243, 48
      %v1737 = vpop.permute.xlu0 %1736
      %1738 = vrot.lane.b32.xlu0 %v1244, 48
      %v1739 = vpop.permute.xlu0 %1738
      %1740 = vrot.lane.b32.xlu0 %v1245, 48
      %v1741 = vpop.permute.xlu0 %1740
      %1742 = vrot.lane.b32.xlu0 %v1246, 48
      %v1743 = vpop.permute.xlu0 %1742
      %1744 = vrot.lane.b32.xlu0 %v1247, 48
      %v1745 = vpop.permute.xlu0 %1744
      %1746 = vrot.lane.b32.xlu0 %v1248, 48
      %v1747 = vpop.permute.xlu0 %1746
      %1748 = vrot.lane.b32.xlu0 %v1249, 48
      %v1749 = vpop.permute.xlu0 %1748
      %1750 = vrot.lane.b32.xlu0 %v1250, 48
      %v1751 = vpop.permute.xlu0 %1750
      %1752 = vrot.lane.b32.xlu0 %v1251, 48
      %v1753 = vpop.permute.xlu0 %1752
      %1754 = vrot.lane.b32.xlu0 %v1252, 48
      %v1755 = vpop.permute.xlu0 %1754
      %1756 = vrot.lane.b32.xlu0 %v1253, 48
      %v1757 = vpop.permute.xlu0 %1756
      %1758 = vrot.lane.b32.xlu0 %v1254, 48
      %v1759 = vpop.permute.xlu0 %1758
      %1760 = vrot.lane.b32.xlu0 %v1255, 48
      %v1761 = vpop.permute.xlu0 %1760
      %1762 = vrot.lane.b32.xlu0 %v1614, 48
      %v1763 = vpop.permute.xlu0 %1762
      %1764 = vrot.lane.b32.xlu0 %v1733, 48
      %v1765 = vpop.permute.xlu0 %1764
      %v1767 = vunpack.c.l.b16 %v1175
      %v1768 = vpack.c.b16 %v1767, %v1767
      %v1770 = vshrl.u32 %v1733, 16
      %v1772 = vshll.u32 %v1733, 16
      %v1774 = vrot.slane %v1772, 1
      %v1775 = vor.u32 %v1770, %v1774
      %v1777 = vshll.u32 %v1768, 16
      %v1779 = vrot.slane %v1777, 1
      %v1780 = vsel %vm1304, %v1775, %v1779
      %1781 = vrot.lane.b32.xlu0 %v1340, 56
      %v1782 = vpop.permute.xlu0 %1781
      %1783 = vrot.lane.b32.xlu0 %v1352, 56
      %v1784 = vpop.permute.xlu0 %1783
      %1785 = vrot.lane.b32.xlu0 %v1364, 56
      %v1786 = vpop.permute.xlu0 %1785
      %1787 = vrot.lane.b32.xlu0 %v1376, 56
      %v1788 = vpop.permute.xlu0 %1787
      %1789 = vrot.lane.b32.xlu0 %v1388, 56
      %v1790 = vpop.permute.xlu0 %1789
      %1791 = vrot.lane.b32.xlu0 %v1400, 56
      %v1792 = vpop.permute.xlu0 %1791
      %1793 = vrot.lane.b32.xlu0 %v1412, 56
      %v1794 = vpop.permute.xlu0 %1793
      %1795 = vrot.lane.b32.xlu0 %v1424, 56
      %v1796 = vpop.permute.xlu0 %1795
      %1797 = vrot.lane.b32.xlu0 %v1436, 56
      %v1798 = vpop.permute.xlu0 %1797
      %1799 = vrot.lane.b32.xlu0 %v1448, 56
      %v1800 = vpop.permute.xlu0 %1799
      %1801 = vrot.lane.b32.xlu0 %v1460, 56
      %v1802 = vpop.permute.xlu0 %1801
      %1803 = vrot.lane.b32.xlu0 %v1472, 56
      %v1804 = vpop.permute.xlu0 %1803
      %1805 = vrot.lane.b32.xlu0 %v1484, 56
      %v1806 = vpop.permute.xlu0 %1805
      %1807 = vrot.lane.b32.xlu0 %v1496, 56
      %v1808 = vpop.permute.xlu0 %1807
      %1809 = vrot.lane.b32.xlu0 %v1661, 56
      %v1810 = vpop.permute.xlu0 %1809
      %1811 = vrot.lane.b32.xlu0 %v1780, 56
      %v1812 = vpop.permute.xlu0 %1811
      %v1813 = vrot.slane %v1733, 1
      %v1814 = vrot.slane %v1768, 1
      %v1815 = vsel %vm1529, %v1813, %v1814
      %1816 = vrot.lane.b32.xlu0 %v1538, 64
      %v1817 = vpop.permute.xlu0 %1816
      %1818 = vrot.lane.b32.xlu0 %v1541, 64
      %v1819 = vpop.permute.xlu0 %1818
      %1820 = vrot.lane.b32.xlu0 %v1544, 64
      %v1821 = vpop.permute.xlu0 %1820
      %1822 = vrot.lane.b32.xlu0 %v1547, 64
      %v1823 = vpop.permute.xlu0 %1822
      %1824 = vrot.lane.b32.xlu0 %v1550, 64
      %v1825 = vpop.permute.xlu0 %1824
      %1826 = vrot.lane.b32.xlu0 %v1553, 64
      %v1827 = vpop.permute.xlu0 %1826
      %1828 = vrot.lane.b32.xlu0 %v1556, 64
      %v1829 = vpop.permute.xlu0 %1828
      %1830 = vrot.lane.b32.xlu0 %v1559, 64
      %v1831 = vpop.permute.xlu0 %1830
      %1832 = vrot.lane.b32.xlu0 %v1562, 64
      %v1833 = vpop.permute.xlu0 %1832
      %1834 = vrot.lane.b32.xlu0 %v1565, 64
      %v1835 = vpop.permute.xlu0 %1834
      %1836 = vrot.lane.b32.xlu0 %v1568, 64
      %v1837 = vpop.permute.xlu0 %1836
      %1838 = vrot.lane.b32.xlu0 %v1571, 64
      %v1839 = vpop.permute.xlu0 %1838
      %1840 = vrot.lane.b32.xlu0 %v1574, 64
      %v1841 = vpop.permute.xlu0 %1840
      %1842 = vrot.lane.b32.xlu0 %v1577, 64
      %v1843 = vpop.permute.xlu0 %1842
      %1844 = vrot.lane.b32.xlu0 %v1696, 64
      %v1845 = vpop.permute.xlu0 %1844
      %1846 = vrot.lane.b32.xlu0 %v1815, 64
      %v1847 = vpop.permute.xlu0 %1846
      %vm1848 = vcmask 64512
      %v1850 = vsel %vm1848, %v1240, %v1498
      %v1852 = vsel %vm1848, %v1241, %v1500
      %v1854 = vsel %vm1848, %v1242, %v1502
      %v1856 = vsel %vm1848, %v1243, %v1504
      %v1858 = vsel %vm1848, %v1244, %v1506
      %v1860 = vsel %vm1848, %v1245, %v1508
      %v1862 = vsel %vm1848, %v1246, %v1510
      %v1864 = vsel %vm1848, %v1247, %v1512
      %v1866 = vsel %vm1848, %v1248, %v1514
      %v1868 = vsel %vm1848, %v1249, %v1516
      %v1870 = vsel %vm1848, %v1250, %v1518
      %v1872 = vsel %vm1848, %v1251, %v1520
      %v1874 = vsel %vm1848, %v1252, %v1522
      %v1876 = vsel %vm1848, %v1253, %v1524
      %v1878 = vsel %vm1848, %v1254, %v1526
      %v1880 = vsel %vm1848, %v1255, %v1528
      %vm1881 = vcmask 130048
      %v1883 = vsel %vm1881, %v1850, %v1579
      %v1885 = vsel %vm1881, %v1852, %v1581
      %v1887 = vsel %vm1881, %v1854, %v1583
      %v1889 = vsel %vm1881, %v1856, %v1585
      %v1891 = vsel %vm1881, %v1858, %v1587
      %v1893 = vsel %vm1881, %v1860, %v1589
      %v1895 = vsel %vm1881, %v1862, %v1591
      %v1897 = vsel %vm1881, %v1864, %v1593
      %v1899 = vsel %vm1881, %v1866, %v1595
      %v1901 = vsel %vm1881, %v1868, %v1597
      %v1903 = vsel %vm1881, %v1870, %v1599
      %v1905 = vsel %vm1881, %v1872, %v1601
      %v1907 = vsel %vm1881, %v1874, %v1603
      %v1909 = vsel %vm1881, %v1876, %v1605
      %v1911 = vsel %vm1881, %v1878, %v1607
      %v1913 = vsel %vm1881, %v1880, %v1609
      %vm1914 = vcmask 195584
      %v1916 = vsel %vm1914, %v1883, %v1616
      %v1918 = vsel %vm1914, %v1885, %v1618
      %v1920 = vsel %vm1914, %v1887, %v1620
      %v1922 = vsel %vm1914, %v1889, %v1622
      %v1924 = vsel %vm1914, %v1891, %v1624
      %v1926 = vsel %vm1914, %v1893, %v1626
      %v1928 = vsel %vm1914, %v1895, %v1628
      %v1930 = vsel %vm1914, %v1897, %v1630
      %v1932 = vsel %vm1914, %v1899, %v1632
      %v1934 = vsel %vm1914, %v1901, %v1634
      %v1936 = vsel %vm1914, %v1903, %v1636
      %v1938 = vsel %vm1914, %v1905, %v1638
      %v1940 = vsel %vm1914, %v1907, %v1640
      %v1942 = vsel %vm1914, %v1909, %v1642
      %v1944 = vsel %vm1914, %v1911, %v1644
      %v1946 = vsel %vm1914, %v1913, %v1646
      %vm1947 = vcmask 261120
      %v1949 = vsel %vm1947, %v1916, %v1663
      %v1951 = vsel %vm1947, %v1918, %v1665
      %v1953 = vsel %vm1947, %v1920, %v1667
      %v1955 = vsel %vm1947, %v1922, %v1669
      %v1957 = vsel %vm1947, %v1924, %v1671
      %v1959 = vsel %vm1947, %v1926, %v1673
      %v1961 = vsel %vm1947, %v1928, %v1675
      %v1963 = vsel %vm1947, %v1930, %v1677
      %v1965 = vsel %vm1947, %v1932, %v1679
      %v1967 = vsel %vm1947, %v1934, %v1681
      %v1969 = vsel %vm1947, %v1936, %v1683
      %v1971 = vsel %vm1947, %v1938, %v1685
      %v1973 = vsel %vm1947, %v1940, %v1687
      %v1975 = vsel %vm1947, %v1942, %v1689
      %v1977 = vsel %vm1947, %v1944, %v1691
      %v1979 = vsel %vm1947, %v1946, %v1693
      %vm1980 = vcmask 326656
      %v1982 = vsel %vm1980, %v1949, %v1698
      %v1984 = vsel %vm1980, %v1951, %v1700
      %v1986 = vsel %vm1980, %v1953, %v1702
      %v1988 = vsel %vm1980, %v1955, %v1704
      %v1990 = vsel %vm1980, %v1957, %v1706
      %v1992 = vsel %vm1980, %v1959, %v1708
      %v1994 = vsel %vm1980, %v1961, %v1710
      %v1996 = vsel %vm1980, %v1963, %v1712
      %v1998 = vsel %vm1980, %v1965, %v1714
      %v2000 = vsel %vm1980, %v1967, %v1716
      %v2002 = vsel %vm1980, %v1969, %v1718
      %v2004 = vsel %vm1980, %v1971, %v1720
      %v2006 = vsel %vm1980, %v1973, %v1722
      %v2008 = vsel %vm1980, %v1975, %v1724
      %v2010 = vsel %vm1980, %v1977, %v1726
      %v2012 = vsel %vm1980, %v1979, %v1728
      %vm2013 = vcmask 392192
      %v2015 = vsel %vm2013, %v1982, %v1735
      %v2017 = vsel %vm2013, %v1984, %v1737
      %v2019 = vsel %vm2013, %v1986, %v1739
      %v2021 = vsel %vm2013, %v1988, %v1741
      %v2023 = vsel %vm2013, %v1990, %v1743
      %v2025 = vsel %vm2013, %v1992, %v1745
      %v2027 = vsel %vm2013, %v1994, %v1747
      %v2029 = vsel %vm2013, %v1996, %v1749
      %v2031 = vsel %vm2013, %v1998, %v1751
      %v2033 = vsel %vm2013, %v2000, %v1753
      %v2035 = vsel %vm2013, %v2002, %v1755
      %v2037 = vsel %vm2013, %v2004, %v1757
      %v2039 = vsel %vm2013, %v2006, %v1759
      %v2041 = vsel %vm2013, %v2008, %v1761
      %v2043 = vsel %vm2013, %v2010, %v1763
      %v2045 = vsel %vm2013, %v2012, %v1765
      %vm2046 = vcmask 457728
      %v2048 = vsel %vm2046, %v2015, %v1782
      %v2050 = vsel %vm2046, %v2017, %v1784
      %v2052 = vsel %vm2046, %v2019, %v1786
      %v2054 = vsel %vm2046, %v2021, %v1788
      %v2056 = vsel %vm2046, %v2023, %v1790
      %v2058 = vsel %vm2046, %v2025, %v1792
      %v2060 = vsel %vm2046, %v2027, %v1794
      %v2062 = vsel %vm2046, %v2029, %v1796
      %v2064 = vsel %vm2046, %v2031, %v1798
      %v2066 = vsel %vm2046, %v2033, %v1800
      %v2068 = vsel %vm2046, %v2035, %v1802
      %v2070 = vsel %vm2046, %v2037, %v1804
      %v2072 = vsel %vm2046, %v2039, %v1806
      %v2074 = vsel %vm2046, %v2041, %v1808
      %v2076 = vsel %vm2046, %v2043, %v1810
      %v2078 = vsel %vm2046, %v2045, %v1812
      %vm2079 = vcmask 523264
      %v2081 = vsel %vm2079, %v2048, %v1817
      %v2083 = vsel %vm2079, %v2050, %v1819
      %v2085 = vsel %vm2079, %v2052, %v1821
      %v2087 = vsel %vm2079, %v2054, %v1823
      %v2089 = vsel %vm2079, %v2056, %v1825
      %v2091 = vsel %vm2079, %v2058, %v1827
      %v2093 = vsel %vm2079, %v2060, %v1829
      %v2095 = vsel %vm2079, %v2062, %v1831
      %v2097 = vsel %vm2079, %v2064, %v1833
      %v2099 = vsel %vm2079, %v2066, %v1835
      %v2101 = vsel %vm2079, %v2068, %v1837
      %v2103 = vsel %vm2079, %v2070, %v1839
      %v2105 = vsel %vm2079, %v2072, %v1841
      %v2107 = vsel %vm2079, %v2074, %v1843
      %v2109 = vsel %vm2079, %v2076, %v1845
      %v2111 = vsel %vm2079, %v2078, %v1847
      %v2112 = vld [vmem:[%s2] sm:$0xf]
      %v2113 = vld [vmem:[%s2 + $0x4] sm:$0xf]
      %v2114 = vld [vmem:[%s2 + $0x8] sm:$0xf]
      %v2115 = vld [vmem:[%s2 + $0xc] sm:$0xf]
      %v2116 = vld [vmem:[%s2 + $0x10] sm:$0xf]
      %v2117 = vld [vmem:[%s2 + $0x14] sm:$0xf]
      %v2118 = vld [vmem:[%s2 + $0x18] sm:$0xf]
      %v2119 = vld [vmem:[%s2 + $0x1c] sm:$0xf]
      %v2120 = vld [vmem:[%s2 + $0x20] sm:$0xf]
      %v2130 = vunpack.c.l.b16 %v2112
      %v2131 = vunpack.c.l.b16 %v2113
      %v2132 = vunpack.c.l.b16 %v2114
      %v2133 = vunpack.c.l.b16 %v2115
      %v2134 = vunpack.c.l.b16 %v2116
      %v2135 = vunpack.c.l.b16 %v2117
      %v2136 = vunpack.c.l.b16 %v2118
      %v2137 = vunpack.c.l.b16 %v2119
      %v2138 = vunpack.c.l.b16 %v2120
      %v2139 = vpack.c.b16 %v2131, %v2130
      %v2140 = vpack.c.b16 %v2133, %v2132
      %v2141 = vpack.c.b16 %v2135, %v2134
      %v2142 = vpack.c.b16 %v2137, %v2136
      %v2143 = vpack.c.b16 %v2138, %v2138
      %vm2148 = vcmask 588800
      %v2149 = vsel %vm2148, %v2081, 0
      %v2151 = vsel %vm2148, %v2083, 0
      %v2153 = vsel %vm2148, %v2085, 0
      %v2155 = vsel %vm2148, %v2087, 0
      %v2157 = vsel %vm2148, %v2089, 0
      %v2159 = vsel %vm2148, %v2091, 0
      %v2161 = vsel %vm2148, %v2093, 0
      %v2163 = vsel %vm2148, %v2095, 0
      %v2165 = vsel %vm2148, %v2097, 0
      %v2167 = vsel %vm2148, %v2099, 0
      %v2169 = vsel %vm2148, %v2101, 0
      %v2171 = vsel %vm2148, %v2103, 0
      %v2173 = vsel %vm2148, %v2105, 0
      %v2175 = vsel %vm2148, %v2107, 0
      %v2177 = vsel %vm2148, %v2109, 0
      %v2179 = vsel %vm2148, %v2111, 0
      %vm2181 = vcmask 1043456
      %v2183 = vsel %vm2181, %v2143, 0
      %2185 = vmatpush.bf16.msra.mxu0 0
      %2186 = vmatpush.bf16.msra.mxu0 0
      %2187 = vmatpush.bf16.msra.mxu0 0
      %2188 = vmatpush.bf16.msra.mxu0 %v2183
      %2189 = vmatpush.bf16.msra.mxu0 %v2142
      %2190 = vmatpush.bf16.msra.mxu0 %v2141
      %2191 = vmatpush.bf16.msra.mxu0 %v2140
      %2192 = vmatpush.bf16.msra.mxu0 %v2139
      %2193 = vmatmul.bf16.gmra.mxu0 %v2149
      %v2194 = vpop.f32.mrf.mxu0
      %v2195 = vadd.f32 0.0, %v2194
      %v2196 = vpop.f32.mrf.mxu0
      %v2197 = vadd.f32 0.0, %v2196
      %2198 = vmatmul.bf16.gmra.mxu0 %v2151
      %v2199 = vpop.f32.mrf.mxu0
      %v2200 = vadd.f32 0.0, %v2199
      %v2201 = vpop.f32.mrf.mxu0
      %v2202 = vadd.f32 0.0, %v2201
      %2203 = vmatmul.bf16.gmra.mxu0 %v2153
      %v2204 = vpop.f32.mrf.mxu0
      %v2205 = vadd.f32 0.0, %v2204
      %v2206 = vpop.f32.mrf.mxu0
      %v2207 = vadd.f32 0.0, %v2206
      %2208 = vmatmul.bf16.gmra.mxu0 %v2155
      %v2209 = vpop.f32.mrf.mxu0
      %v2210 = vadd.f32 0.0, %v2209
      %v2211 = vpop.f32.mrf.mxu0
      %v2212 = vadd.f32 0.0, %v2211
      %2213 = vmatmul.bf16.gmra.mxu0 %v2157
      %v2214 = vpop.f32.mrf.mxu0
      %v2215 = vadd.f32 0.0, %v2214
      %v2216 = vpop.f32.mrf.mxu0
      %v2217 = vadd.f32 0.0, %v2216
      %2218 = vmatmul.bf16.gmra.mxu0 %v2159
      %v2219 = vpop.f32.mrf.mxu0
      %v2220 = vadd.f32 0.0, %v2219
      %v2221 = vpop.f32.mrf.mxu0
      %v2222 = vadd.f32 0.0, %v2221
      %2223 = vmatmul.bf16.gmra.mxu0 %v2161
      %v2224 = vpop.f32.mrf.mxu0
      %v2225 = vadd.f32 0.0, %v2224
      %v2226 = vpop.f32.mrf.mxu0
      %v2227 = vadd.f32 0.0, %v2226
      %2228 = vmatmul.bf16.gmra.mxu0 %v2163
      %v2229 = vpop.f32.mrf.mxu0
      %v2230 = vadd.f32 0.0, %v2229
      %v2231 = vpop.f32.mrf.mxu0
      %v2232 = vadd.f32 0.0, %v2231
      %2233 = vmatmul.bf16.gmra.mxu0 %v2165
      %v2234 = vpop.f32.mrf.mxu0
      %v2235 = vadd.f32 0.0, %v2234
      %v2236 = vpop.f32.mrf.mxu0
      %v2237 = vadd.f32 0.0, %v2236
      %2238 = vmatmul.bf16.gmra.mxu0 %v2167
      %v2239 = vpop.f32.mrf.mxu0
      %v2240 = vadd.f32 0.0, %v2239
      %v2241 = vpop.f32.mrf.mxu0
      %v2242 = vadd.f32 0.0, %v2241
      %2243 = vmatmul.bf16.gmra.mxu0 %v2169
      %v2244 = vpop.f32.mrf.mxu0
      %v2245 = vadd.f32 0.0, %v2244
      %v2246 = vpop.f32.mrf.mxu0
      %v2247 = vadd.f32 0.0, %v2246
      %2248 = vmatmul.bf16.gmra.mxu0 %v2171
      %v2249 = vpop.f32.mrf.mxu0
      %v2250 = vadd.f32 0.0, %v2249
      %v2251 = vpop.f32.mrf.mxu0
      %v2252 = vadd.f32 0.0, %v2251
      %2253 = vmatmul.bf16.gmra.mxu0 %v2173
      %v2254 = vpop.f32.mrf.mxu0
      %v2255 = vadd.f32 0.0, %v2254
      %v2256 = vpop.f32.mrf.mxu0
      %v2257 = vadd.f32 0.0, %v2256
      %2258 = vmatmul.bf16.gmra.mxu0 %v2175
      %v2259 = vpop.f32.mrf.mxu0
      %v2260 = vadd.f32 0.0, %v2259
      %v2261 = vpop.f32.mrf.mxu0
      %v2262 = vadd.f32 0.0, %v2261
      %2263 = vmatmul.bf16.gmra.mxu0 %v2177
      %v2264 = vpop.f32.mrf.mxu0
      %v2265 = vadd.f32 0.0, %v2264
      %v2266 = vpop.f32.mrf.mxu0
      %v2267 = vadd.f32 0.0, %v2266
      %2268 = vmatmul.bf16.gmra.mxu0 %v2179
      %v2269 = vpop.f32.mrf.mxu0
      %v2270 = vadd.f32 0.0, %v2269
      %v2271 = vpop.f32.mrf.mxu0
      %v2272 = vadd.f32 0.0, %v2271
      %2273 = vdwg.mxu0
      %v2274 = vld [vmem:[%s4] sm:$0x1]
      %v2276 = vperm.slane %v2274, 0
      %v2278 = vmul.f32 %v2195, %v2276
      %v2279 = vmul.f32 %v2197, %v2276
      %v2280 = vmul.f32 %v2200, %v2276
      %v2281 = vmul.f32 %v2202, %v2276
      %v2282 = vmul.f32 %v2205, %v2276
      %v2283 = vmul.f32 %v2207, %v2276
      %v2284 = vmul.f32 %v2210, %v2276
      %v2285 = vmul.f32 %v2212, %v2276
      %v2286 = vmul.f32 %v2215, %v2276
      %v2287 = vmul.f32 %v2217, %v2276
      %v2288 = vmul.f32 %v2220, %v2276
      %v2289 = vmul.f32 %v2222, %v2276
      %v2290 = vmul.f32 %v2225, %v2276
      %v2291 = vmul.f32 %v2227, %v2276
      %v2292 = vmul.f32 %v2230, %v2276
      %v2293 = vmul.f32 %v2232, %v2276
      %v2294 = vmul.f32 %v2235, %v2276
      %v2295 = vmul.f32 %v2237, %v2276
      %v2296 = vmul.f32 %v2240, %v2276
      %v2297 = vmul.f32 %v2242, %v2276
      %v2298 = vmul.f32 %v2245, %v2276
      %v2299 = vmul.f32 %v2247, %v2276
      %v2300 = vmul.f32 %v2250, %v2276
      %v2301 = vmul.f32 %v2252, %v2276
      %v2302 = vmul.f32 %v2255, %v2276
      %v2303 = vmul.f32 %v2257, %v2276
      %v2304 = vmul.f32 %v2260, %v2276
      %v2305 = vmul.f32 %v2262, %v2276
      %v2306 = vmul.f32 %v2265, %v2276
      %v2307 = vmul.f32 %v2267, %v2276
      %v2308 = vmul.f32 %v2270, %v2276
      %v2309 = vmul.f32 %v2272, %v2276
      %v2310 = vld [vmem:[%s5] sm:$0x1]
      %v2312 = vperm.slane %v2310, 0
      %v2314 = vadd.f32 %v2278, %v2312
      %v2315 = vadd.f32 %v2279, %v2312
      %v2316 = vadd.f32 %v2280, %v2312
      %v2317 = vadd.f32 %v2281, %v2312
      %v2318 = vadd.f32 %v2282, %v2312
      %v2319 = vadd.f32 %v2283, %v2312
      %v2320 = vadd.f32 %v2284, %v2312
      %v2321 = vadd.f32 %v2285, %v2312
      %v2322 = vadd.f32 %v2286, %v2312
      %v2323 = vadd.f32 %v2287, %v2312
      %v2324 = vadd.f32 %v2288, %v2312
      %v2325 = vadd.f32 %v2289, %v2312
      %v2326 = vadd.f32 %v2290, %v2312
      %v2327 = vadd.f32 %v2291, %v2312
      %v2328 = vadd.f32 %v2292, %v2312
      %v2329 = vadd.f32 %v2293, %v2312
      %v2330 = vadd.f32 %v2294, %v2312
      %v2331 = vadd.f32 %v2295, %v2312
      %v2332 = vadd.f32 %v2296, %v2312
      %v2333 = vadd.f32 %v2297, %v2312
      %v2334 = vadd.f32 %v2298, %v2312
      %v2335 = vadd.f32 %v2299, %v2312
      %v2336 = vadd.f32 %v2300, %v2312
      %v2337 = vadd.f32 %v2301, %v2312
      %v2338 = vadd.f32 %v2302, %v2312
      %v2339 = vadd.f32 %v2303, %v2312
      %v2340 = vadd.f32 %v2304, %v2312
      %v2341 = vadd.f32 %v2305, %v2312
      %v2342 = vadd.f32 %v2306, %v2312
      %v2343 = vadd.f32 %v2307, %v2312
      %v2344 = vadd.f32 %v2308, %v2312
      %v2345 = vadd.f32 %v2309, %v2312
      %v2346 = vmax.f32 %v2314, 0.0
      %v2347 = vmax.f32 %v2315, 0.0
      %v2348 = vmax.f32 %v2316, 0.0
      %v2349 = vmax.f32 %v2317, 0.0
      %v2350 = vmax.f32 %v2318, 0.0
      %v2351 = vmax.f32 %v2319, 0.0
      %v2352 = vmax.f32 %v2320, 0.0
      %v2353 = vmax.f32 %v2321, 0.0
      %v2354 = vmax.f32 %v2322, 0.0
      %v2355 = vmax.f32 %v2323, 0.0
      %v2356 = vmax.f32 %v2324, 0.0
      %v2357 = vmax.f32 %v2325, 0.0
      %v2358 = vmax.f32 %v2326, 0.0
      %v2359 = vmax.f32 %v2327, 0.0
      %v2360 = vmax.f32 %v2328, 0.0
      %v2361 = vmax.f32 %v2329, 0.0
      %v2362 = vmax.f32 %v2330, 0.0
      %v2363 = vmax.f32 %v2331, 0.0
      %v2364 = vmax.f32 %v2332, 0.0
      %v2365 = vmax.f32 %v2333, 0.0
      %v2366 = vmax.f32 %v2334, 0.0
      %v2367 = vmax.f32 %v2335, 0.0
      %v2368 = vmax.f32 %v2336, 0.0
      %v2369 = vmax.f32 %v2337, 0.0
      %v2370 = vmax.f32 %v2338, 0.0
      %v2371 = vmax.f32 %v2339, 0.0
      %v2372 = vmax.f32 %v2340, 0.0
      %v2373 = vmax.f32 %v2341, 0.0
      %v2374 = vmax.f32 %v2342, 0.0
      %v2375 = vmax.f32 %v2343, 0.0
      %v2376 = vmax.f32 %v2344, 0.0
      %v2377 = vmax.f32 %v2345, 0.0
      %2378 = vst.msk [vmem:[#allocation3] sm:$0xf] %vm327, 0
      %2379 = vst.msk [vmem:[#allocation3 + $0x4] sm:$0xf] %vm327, 0
      %2380 = vst.msk [vmem:[#allocation3 + $0x8] sm:$0x1] %vm330, 0
      %s2381 = scalar_lea.vmem [#allocation3], 204
      %2382 = vst.msk [vmem:[%s2381] sm:$0xf] %vm327, 0
      %2383 = vst.msk [vmem:[%s2381 + $0x4] sm:$0xf] %vm327, 0
      %2384 = vst.msk [vmem:[%s2381 + $0x8] sm:$0x1] %vm330, 0
      %vm2385 = vcmask 57344
      %vm2386 = vmand %vm2385, %vm584
      %v2387 = vld [vmem:[#allocation3] sm:$0x1]
      %v2388 = vsel %vm2386, 0, %v2387
      %2389 = vst [vmem:[#allocation3] sm:$0x1] %v2388
      %v2390 = vld [vmem:[#allocation3 + $0xc] sm:$0x1]
      %v2391 = vsel %vm2386, 0, %v2390
      %2392 = vst [vmem:[#allocation3 + $0xc] sm:$0x1] %v2391
      %v2393 = vld [vmem:[#allocation3 + $0x18] sm:$0x1]
      %v2394 = vsel %vm2386, 0, %v2393
      %2395 = vst [vmem:[#allocation3 + $0x18] sm:$0x1] %v2394
      %v2396 = vld [vmem:[#allocation3 + $0x24] sm:$0x1]
      %v2397 = vsel %vm2386, 0, %v2396
      %2398 = vst [vmem:[#allocation3 + $0x24] sm:$0x1] %v2397
      %v2399 = vld [vmem:[#allocation3 + $0x30] sm:$0x1]
      %v2400 = vsel %vm2386, 0, %v2399
      %2401 = vst [vmem:[#allocation3 + $0x30] sm:$0x1] %v2400
      %v2402 = vld [vmem:[#allocation3 + $0x3c] sm:$0x1]
      %v2403 = vsel %vm2386, 0, %v2402
      %2404 = vst [vmem:[#allocation3 + $0x3c] sm:$0x1] %v2403
      %v2405 = vld [vmem:[#allocation3 + $0x48] sm:$0x1]
      %v2406 = vsel %vm2386, 0, %v2405
      %2407 = vst [vmem:[#allocation3 + $0x48] sm:$0x1] %v2406
      %v2408 = vld [vmem:[#allocation3 + $0x54] sm:$0x1]
      %v2409 = vsel %vm2386, 0, %v2408
      %2410 = vst [vmem:[#allocation3 + $0x54] sm:$0x1] %v2409
      %v2411 = vld [vmem:[#allocation3 + $0x60] sm:$0x1]
      %v2412 = vsel %vm2386, 0, %v2411
      %2413 = vst [vmem:[#allocation3 + $0x60] sm:$0x1] %v2412
      %v2414 = vld [vmem:[#allocation3 + $0x6c] sm:$0x1]
      %v2415 = vsel %vm2386, 0, %v2414
      %2416 = vst [vmem:[#allocation3 + $0x6c] sm:$0x1] %v2415
      %v2417 = vld [vmem:[#allocation3 + $0x78] sm:$0x1]
      %v2418 = vsel %vm2386, 0, %v2417
      %2419 = vst [vmem:[#allocation3 + $0x78] sm:$0x1] %v2418
      %v2420 = vld [vmem:[#allocation3 + $0x84] sm:$0x1]
      %v2421 = vsel %vm2386, 0, %v2420
      %2422 = vst [vmem:[#allocation3 + $0x84] sm:$0x1] %v2421
      %v2423 = vld [vmem:[#allocation3 + $0x90] sm:$0x1]
      %v2424 = vsel %vm2386, 0, %v2423
      %2425 = vst [vmem:[#allocation3 + $0x90] sm:$0x1] %v2424
      %v2426 = vld [vmem:[#allocation3 + $0x9c] sm:$0x1]
      %v2427 = vsel %vm2386, 0, %v2426
      %2428 = vst [vmem:[#allocation3 + $0x9c] sm:$0x1] %v2427
      %v2429 = vld [vmem:[#allocation3 + $0xa8] sm:$0x1]
      %v2430 = vsel %vm2386, 0, %v2429
      %2431 = vst [vmem:[#allocation3 + $0xa8] sm:$0x1] %v2430
      %v2432 = vld [vmem:[#allocation3 + $0xb4] sm:$0x1]
      %v2433 = vsel %vm2386, 0, %v2432
      %2434 = vst [vmem:[#allocation3 + $0xb4] sm:$0x1] %v2433
      %v2435 = vld [vmem:[#allocation3 + $0xc0] sm:$0x1]
      %v2436 = vsel %vm2386, 0, %v2435
      %2437 = vst [vmem:[#allocation3 + $0xc0] sm:$0x1] %v2436
      %v2438 = vld [vmem:[#allocation3 + $0xcc] sm:$0x1]
      %v2439 = vsel %vm2386, 0, %v2438
      %2440 = vst [vmem:[#allocation3 + $0xcc] sm:$0x1] %v2439
      %vm2441 = vmand %vm2385, %vm1005
      %v2442 = vld [vmem:[#allocation3 + $0x8] sm:$0x1]
      %v2443 = vsel %vm2441, 0, %v2442
      %2444 = vst [vmem:[#allocation3 + $0x8] sm:$0x1] %v2443
      %v2445 = vld [vmem:[#allocation3 + $0x14] sm:$0x1]
      %v2446 = vsel %vm2441, 0, %v2445
      %2447 = vst [vmem:[#allocation3 + $0x14] sm:$0x1] %v2446
      %v2448 = vld [vmem:[#allocation3 + $0x20] sm:$0x1]
      %v2449 = vsel %vm2441, 0, %v2448
      %2450 = vst [vmem:[#allocation3 + $0x20] sm:$0x1] %v2449
      %v2451 = vld [vmem:[#allocation3 + $0x2c] sm:$0x1]
      %v2452 = vsel %vm2441, 0, %v2451
      %2453 = vst [vmem:[#allocation3 + $0x2c] sm:$0x1] %v2452
      %v2454 = vld [vmem:[#allocation3 + $0x38] sm:$0x1]
      %v2455 = vsel %vm2441, 0, %v2454
      %2456 = vst [vmem:[#allocation3 + $0x38] sm:$0x1] %v2455
      %v2457 = vld [vmem:[#allocation3 + $0x44] sm:$0x1]
      %v2458 = vsel %vm2441, 0, %v2457
      %2459 = vst [vmem:[#allocation3 + $0x44] sm:$0x1] %v2458
      %v2460 = vld [vmem:[#allocation3 + $0x50] sm:$0x1]
      %v2461 = vsel %vm2441, 0, %v2460
      %2462 = vst [vmem:[#allocation3 + $0x50] sm:$0x1] %v2461
      %v2463 = vld [vmem:[#allocation3 + $0x5c] sm:$0x1]
      %v2464 = vsel %vm2441, 0, %v2463
      %2465 = vst [vmem:[#allocation3 + $0x5c] sm:$0x1] %v2464
      %v2466 = vld [vmem:[#allocation3 + $0x68] sm:$0x1]
      %v2467 = vsel %vm2441, 0, %v2466
      %2468 = vst [vmem:[#allocation3 + $0x68] sm:$0x1] %v2467
      %v2469 = vld [vmem:[#allocation3 + $0x74] sm:$0x1]
      %v2470 = vsel %vm2441, 0, %v2469
      %2471 = vst [vmem:[#allocation3 + $0x74] sm:$0x1] %v2470
      %v2472 = vld [vmem:[#allocation3 + $0x80] sm:$0x1]
      %v2473 = vsel %vm2441, 0, %v2472
      %2474 = vst [vmem:[#allocation3 + $0x80] sm:$0x1] %v2473
      %v2475 = vld [vmem:[#allocation3 + $0x8c] sm:$0x1]
      %v2476 = vsel %vm2441, 0, %v2475
      %2477 = vst [vmem:[#allocation3 + $0x8c] sm:$0x1] %v2476
      %v2478 = vld [vmem:[#allocation3 + $0x98] sm:$0x1]
      %v2479 = vsel %vm2441, 0, %v2478
      %2480 = vst [vmem:[#allocation3 + $0x98] sm:$0x1] %v2479
      %v2481 = vld [vmem:[#allocation3 + $0xa4] sm:$0x1]
      %v2482 = vsel %vm2441, 0, %v2481
      %2483 = vst [vmem:[#allocation3 + $0xa4] sm:$0x1] %v2482
      %v2484 = vld [vmem:[#allocation3 + $0xb0] sm:$0x1]
      %v2485 = vsel %vm2441, 0, %v2484
      %2486 = vst [vmem:[#allocation3 + $0xb0] sm:$0x1] %v2485
      %v2487 = vld [vmem:[#allocation3 + $0xbc] sm:$0x1]
      %v2488 = vsel %vm2441, 0, %v2487
      %2489 = vst [vmem:[#allocation3 + $0xbc] sm:$0x1] %v2488
      %v2490 = vld [vmem:[#allocation3 + $0xc8] sm:$0x1]
      %v2491 = vsel %vm2441, 0, %v2490
      %2492 = vst [vmem:[#allocation3 + $0xc8] sm:$0x1] %v2491
      %v2493 = vld [vmem:[#allocation3 + $0xd4] sm:$0x1]
      %v2494 = vsel %vm2441, 0, %v2493
      %2495 = vst [vmem:[#allocation3 + $0xd4] sm:$0x1] %v2494
      %v2496 = vpack.c.bf16 %v2346, %v2346
      %v2497 = vpack.c.bf16 %v2347, %v2347
      %v2498 = vpack.c.bf16 %v2348, %v2348
      %v2499 = vpack.c.bf16 %v2349, %v2349
      %v2500 = vpack.c.bf16 %v2350, %v2350
      %v2501 = vpack.c.bf16 %v2351, %v2351
      %v2502 = vpack.c.bf16 %v2352, %v2352
      %v2503 = vpack.c.bf16 %v2353, %v2353
      %v2504 = vpack.c.bf16 %v2354, %v2354
      %v2505 = vpack.c.bf16 %v2355, %v2355
      %v2506 = vpack.c.bf16 %v2356, %v2356
      %v2507 = vpack.c.bf16 %v2357, %v2357
      %v2508 = vpack.c.bf16 %v2358, %v2358
      %v2509 = vpack.c.bf16 %v2359, %v2359
      %v2510 = vpack.c.bf16 %v2360, %v2360
      %v2511 = vpack.c.bf16 %v2361, %v2361
      %v2512 = vpack.c.bf16 %v2362, %v2362
      %v2513 = vpack.c.bf16 %v2363, %v2363
      %v2514 = vpack.c.bf16 %v2364, %v2364
      %v2515 = vpack.c.bf16 %v2365, %v2365
      %v2516 = vpack.c.bf16 %v2366, %v2366
      %v2517 = vpack.c.bf16 %v2367, %v2367
      %v2518 = vpack.c.bf16 %v2368, %v2368
      %v2519 = vpack.c.bf16 %v2369, %v2369
      %v2520 = vpack.c.bf16 %v2370, %v2370
      %v2521 = vpack.c.bf16 %v2371, %v2371
      %v2522 = vpack.c.bf16 %v2372, %v2372
      %v2523 = vpack.c.bf16 %v2373, %v2373
      %v2524 = vpack.c.bf16 %v2374, %v2374
      %v2525 = vpack.c.bf16 %v2375, %v2375
      %v2526 = vpack.c.bf16 %v2376, %v2376
      %v2527 = vpack.c.bf16 %v2377, %v2377
      %v2529 = vshrl.u32 %v2496, 16
      %v2531 = vrot.slane %v2529, 7
      %v2532 = vshll.u32 %v2496, 16
      %v2534 = vor.u32 %v2531, %v2532
      %v2535 = vrot.slane %v2531, 4
      %v2537 = vshrl.u32 %v2497, 16
      %v2539 = vrot.slane %v2537, 7
      %v2540 = vshll.u32 %v2497, 16
      %v2542 = vor.u32 %v2539, %v2540
      %v2543 = vsel %vm586, %v2535, %v2542
      %v2544 = vrot.slane %v2539, 4
      %v2546 = vshrl.u32 %v2498, 16
      %v2548 = vrot.slane %v2546, 7
      %v2549 = vshll.u32 %v2498, 16
      %v2551 = vor.u32 %v2548, %v2549
      %v2552 = vrot.slane %v2548, 4
      %v2554 = vshrl.u32 %v2499, 16
      %v2556 = vrot.slane %v2554, 7
      %v2557 = vshll.u32 %v2499, 16
      %v2559 = vor.u32 %v2556, %v2557
      %v2560 = vsel %vm586, %v2552, %v2559
      %v2561 = vrot.slane %v2556, 4
      %v2563 = vshrl.u32 %v2500, 16
      %v2565 = vrot.slane %v2563, 7
      %v2566 = vshll.u32 %v2500, 16
      %v2568 = vor.u32 %v2565, %v2566
      %v2569 = vrot.slane %v2565, 4
      %v2571 = vshrl.u32 %v2501, 16
      %v2573 = vrot.slane %v2571, 7
      %v2574 = vshll.u32 %v2501, 16
      %v2576 = vor.u32 %v2573, %v2574
      %v2577 = vsel %vm586, %v2569, %v2576
      %v2578 = vrot.slane %v2573, 4
      %v2580 = vshrl.u32 %v2502, 16
      %v2582 = vrot.slane %v2580, 7
      %v2583 = vshll.u32 %v2502, 16
      %v2585 = vor.u32 %v2582, %v2583
      %v2586 = vrot.slane %v2582, 4
      %v2588 = vshrl.u32 %v2503, 16
      %v2590 = vrot.slane %v2588, 7
      %v2591 = vshll.u32 %v2503, 16
      %v2593 = vor.u32 %v2590, %v2591
      %v2594 = vsel %vm586, %v2586, %v2593
      %v2595 = vrot.slane %v2590, 4
      %v2597 = vshrl.u32 %v2504, 16
      %v2599 = vrot.slane %v2597, 7
      %v2600 = vshll.u32 %v2504, 16
      %v2602 = vor.u32 %v2599, %v2600
      %v2603 = vrot.slane %v2599, 4
      %v2605 = vshrl.u32 %v2505, 16
      %v2607 = vrot.slane %v2605, 7
      %v2608 = vshll.u32 %v2505, 16
      %v2610 = vor.u32 %v2607, %v2608
      %v2611 = vsel %vm586, %v2603, %v2610
      %v2612 = vrot.slane %v2607, 4
      %v2614 = vshrl.u32 %v2506, 16
      %v2616 = vrot.slane %v2614, 7
      %v2617 = vshll.u32 %v2506, 16
      %v2619 = vor.u32 %v2616, %v2617
      %v2620 = vrot.slane %v2616, 4
      %v2622 = vshrl.u32 %v2507, 16
      %v2624 = vrot.slane %v2622, 7
      %v2625 = vshll.u32 %v2507, 16
      %v2627 = vor.u32 %v2624, %v2625
      %v2628 = vsel %vm586, %v2620, %v2627
      %v2629 = vrot.slane %v2624, 4
      %v2631 = vshrl.u32 %v2508, 16
      %v2633 = vrot.slane %v2631, 7
      %v2634 = vshll.u32 %v2508, 16
      %v2636 = vor.u32 %v2633, %v2634
      %v2637 = vrot.slane %v2633, 4
      %v2639 = vshrl.u32 %v2509, 16
      %v2641 = vrot.slane %v2639, 7
      %v2642 = vshll.u32 %v2509, 16
      %v2644 = vor.u32 %v2641, %v2642
      %v2645 = vsel %vm586, %v2637, %v2644
      %v2646 = vrot.slane %v2641, 4
      %v2648 = vshrl.u32 %v2510, 16
      %v2650 = vrot.slane %v2648, 7
      %v2651 = vshll.u32 %v2510, 16
      %v2653 = vor.u32 %v2650, %v2651
      %v2654 = vrot.slane %v2650, 4
      %v2656 = vshrl.u32 %v2511, 16
      %v2658 = vrot.slane %v2656, 7
      %v2659 = vshll.u32 %v2511, 16
      %v2661 = vor.u32 %v2658, %v2659
      %v2662 = vsel %vm586, %v2654, %v2661
      %v2663 = vrot.slane %v2658, 4
      %v2665 = vshrl.u32 %v2512, 16
      %v2667 = vrot.slane %v2665, 7
      %v2668 = vshll.u32 %v2512, 16
      %v2670 = vor.u32 %v2667, %v2668
      %v2671 = vrot.slane %v2667, 4
      %v2673 = vshrl.u32 %v2513, 16
      %v2675 = vrot.slane %v2673, 7
      %v2676 = vshll.u32 %v2513, 16
      %v2678 = vor.u32 %v2675, %v2676
      %v2679 = vsel %vm586, %v2671, %v2678
      %v2680 = vrot.slane %v2675, 4
      %v2682 = vshrl.u32 %v2514, 16
      %v2684 = vrot.slane %v2682, 7
      %v2685 = vshll.u32 %v2514, 16
      %v2687 = vor.u32 %v2684, %v2685
      %v2688 = vrot.slane %v2684, 4
      %v2690 = vshrl.u32 %v2515, 16
      %v2692 = vrot.slane %v2690, 7
      %v2693 = vshll.u32 %v2515, 16
      %v2695 = vor.u32 %v2692, %v2693
      %v2696 = vsel %vm586, %v2688, %v2695
      %v2697 = vrot.slane %v2692, 4
      %v2699 = vshrl.u32 %v2516, 16
      %v2701 = vrot.slane %v2699, 7
      %v2702 = vshll.u32 %v2516, 16
      %v2704 = vor.u32 %v2701, %v2702
      %v2705 = vrot.slane %v2701, 4
      %v2707 = vshrl.u32 %v2517, 16
      %v2709 = vrot.slane %v2707, 7
      %v2710 = vshll.u32 %v2517, 16
      %v2712 = vor.u32 %v2709, %v2710
      %v2713 = vsel %vm586, %v2705, %v2712
      %v2714 = vrot.slane %v2709, 4
      %v2716 = vshrl.u32 %v2518, 16
      %v2718 = vrot.slane %v2716, 7
      %v2719 = vshll.u32 %v2518, 16
      %v2721 = vor.u32 %v2718, %v2719
      %v2722 = vrot.slane %v2718, 4
      %v2724 = vshrl.u32 %v2519, 16
      %v2726 = vrot.slane %v2724, 7
      %v2727 = vshll.u32 %v2519, 16
      %v2729 = vor.u32 %v2726, %v2727
      %v2730 = vsel %vm586, %v2722, %v2729
      %v2731 = vrot.slane %v2726, 4
      %v2733 = vshrl.u32 %v2520, 16
      %v2735 = vrot.slane %v2733, 7
      %v2736 = vshll.u32 %v2520, 16
      %v2738 = vor.u32 %v2735, %v2736
      %v2739 = vrot.slane %v2735, 4
      %v2741 = vshrl.u32 %v2521, 16
      %v2743 = vrot.slane %v2741, 7
      %v2744 = vshll.u32 %v2521, 16
      %v2746 = vor.u32 %v2743, %v2744
      %v2747 = vsel %vm586, %v2739, %v2746
      %v2748 = vrot.slane %v2743, 4
      %v2750 = vshrl.u32 %v2522, 16
      %v2752 = vrot.slane %v2750, 7
      %v2753 = vshll.u32 %v2522, 16
      %v2755 = vor.u32 %v2752, %v2753
      %v2756 = vrot.slane %v2752, 4
      %v2758 = vshrl.u32 %v2523, 16
      %v2760 = vrot.slane %v2758, 7
      %v2761 = vshll.u32 %v2523, 16
      %v2763 = vor.u32 %v2760, %v2761
      %v2764 = vsel %vm586, %v2756, %v2763
      %v2765 = vrot.slane %v2760, 4
      %v2767 = vshrl.u32 %v2524, 16
      %v2769 = vrot.slane %v2767, 7
      %v2770 = vshll.u32 %v2524, 16
      %v2772 = vor.u32 %v2769, %v2770
      %v2773 = vrot.slane %v2769, 4
      %v2775 = vshrl.u32 %v2525, 16
      %v2777 = vrot.slane %v2775, 7
      %v2778 = vshll.u32 %v2525, 16
      %v2780 = vor.u32 %v2777, %v2778
      %v2781 = vsel %vm586, %v2773, %v2780
      %v2782 = vrot.slane %v2777, 4
      %v2784 = vshrl.u32 %v2526, 16
      %v2786 = vrot.slane %v2784, 7
      %v2787 = vshll.u32 %v2526, 16
      %v2789 = vor.u32 %v2786, %v2787
      %v2790 = vrot.slane %v2786, 4
      %v2792 = vshrl.u32 %v2527, 16
      %v2794 = vrot.slane %v2792, 7
      %v2795 = vshll.u32 %v2527, 16
      %v2797 = vor.u32 %v2794, %v2795
      %v2798 = vsel %vm586, %v2790, %v2797
      %v2799 = vrot.slane %v2794, 4
      %s2848 = scalar_lea.vmem [#allocation3], 12
      %vm2849 = vcmask 60416
      %vm2850 = vmand %vm2849, %vm1005
      %v2851 = vld [vmem:[%s2848] sm:$0xf]
      %v2852 = vsel %vm2850, %v2534, %v2851
      %2853 = vst [vmem:[%s2848] sm:$0xf] %v2852
      %2854 = vst.msk [vmem:[%s2848 + $0x4] sm:$0xf] %vm327, %v2543
      %v2855 = vld [vmem:[%s2848 + $0x8] sm:$0x1]
      %v2856 = vsel %vm2386, %v2544, %v2855
      %2857 = vst [vmem:[%s2848 + $0x8] sm:$0x1] %v2856
      %v2858 = vld [vmem:[%s2848 + $0xc] sm:$0xf]
      %v2859 = vsel %vm2850, %v2551, %v2858
      %2860 = vst [vmem:[%s2848 + $0xc] sm:$0xf] %v2859
      %2861 = vst.msk [vmem:[%s2848 + $0x10] sm:$0xf] %vm327, %v2560
      %v2862 = vld [vmem:[%s2848 + $0x14] sm:$0x1]
      %v2863 = vsel %vm2386, %v2561, %v2862
      %2864 = vst [vmem:[%s2848 + $0x14] sm:$0x1] %v2863
      %v2865 = vld [vmem:[%s2848 + $0x18] sm:$0xf]
      %v2866 = vsel %vm2850, %v2568, %v2865
      %2867 = vst [vmem:[%s2848 + $0x18] sm:$0xf] %v2866
      %2868 = vst.msk [vmem:[%s2848 + $0x1c] sm:$0xf] %vm327, %v2577
      %v2869 = vld [vmem:[%s2848 + $0x20] sm:$0x1]
      %v2870 = vsel %vm2386, %v2578, %v2869
      %2871 = vst [vmem:[%s2848 + $0x20] sm:$0x1] %v2870
      %v2872 = vld [vmem:[%s2848 + $0x24] sm:$0xf]
      %v2873 = vsel %vm2850, %v2585, %v2872
      %2874 = vst [vmem:[%s2848 + $0x24] sm:$0xf] %v2873
      %2875 = vst.msk [vmem:[%s2848 + $0x28] sm:$0xf] %vm327, %v2594
      %v2876 = vld [vmem:[%s2848 + $0x2c] sm:$0x1]
      %v2877 = vsel %vm2386, %v2595, %v2876
      %2878 = vst [vmem:[%s2848 + $0x2c] sm:$0x1] %v2877
      %v2879 = vld [vmem:[%s2848 + $0x30] sm:$0xf]
      %v2880 = vsel %vm2850, %v2602, %v2879
      %2881 = vst [vmem:[%s2848 + $0x30] sm:$0xf] %v2880
      %2882 = vst.msk [vmem:[%s2848 + $0x34] sm:$0xf] %vm327, %v2611
      %v2883 = vld [vmem:[%s2848 + $0x38] sm:$0x1]
      %v2884 = vsel %vm2386, %v2612, %v2883
      %2885 = vst [vmem:[%s2848 + $0x38] sm:$0x1] %v2884
      %v2886 = vld [vmem:[%s2848 + $0x3c] sm:$0xf]
      %v2887 = vsel %vm2850, %v2619, %v2886
      %2888 = vst [vmem:[%s2848 + $0x3c] sm:$0xf] %v2887
      %2889 = vst.msk [vmem:[%s2848 + $0x40] sm:$0xf] %vm327, %v2628
      %v2890 = vld [vmem:[%s2848 + $0x44] sm:$0x1]
      %v2891 = vsel %vm2386, %v2629, %v2890
      %2892 = vst [vmem:[%s2848 + $0x44] sm:$0x1] %v2891
      %v2893 = vld [vmem:[%s2848 + $0x48] sm:$0xf]
      %v2894 = vsel %vm2850, %v2636, %v2893
      %2895 = vst [vmem:[%s2848 + $0x48] sm:$0xf] %v2894
      %2896 = vst.msk [vmem:[%s2848 + $0x4c] sm:$0xf] %vm327, %v2645
      %v2897 = vld [vmem:[%s2848 + $0x50] sm:$0x1]
      %v2898 = vsel %vm2386, %v2646, %v2897
      %2899 = vst [vmem:[%s2848 + $0x50] sm:$0x1] %v2898
      %v2900 = vld [vmem:[%s2848 + $0x54] sm:$0xf]
      %v2901 = vsel %vm2850, %v2653, %v2900
      %2902 = vst [vmem:[%s2848 + $0x54] sm:$0xf] %v2901
      %2903 = vst.msk [vmem:[%s2848 + $0x58] sm:$0xf] %vm327, %v2662
      %v2904 = vld [vmem:[%s2848 + $0x5c] sm:$0x1]
      %v2905 = vsel %vm2386, %v2663, %v2904
      %2906 = vst [vmem:[%s2848 + $0x5c] sm:$0x1] %v2905
      %v2907 = vld [vmem:[%s2848 + $0x60] sm:$0xf]
      %v2908 = vsel %vm2850, %v2670, %v2907
      %2909 = vst [vmem:[%s2848 + $0x60] sm:$0xf] %v2908
      %2910 = vst.msk [vmem:[%s2848 + $0x64] sm:$0xf] %vm327, %v2679
      %v2911 = vld [vmem:[%s2848 + $0x68] sm:$0x1]
      %v2912 = vsel %vm2386, %v2680, %v2911
      %2913 = vst [vmem:[%s2848 + $0x68] sm:$0x1] %v2912
      %v2914 = vld [vmem:[%s2848 + $0x6c] sm:$0xf]
      %v2915 = vsel %vm2850, %v2687, %v2914
      %2916 = vst [vmem:[%s2848 + $0x6c] sm:$0xf] %v2915
      %2917 = vst.msk [vmem:[%s2848 + $0x70] sm:$0xf] %vm327, %v2696
      %v2918 = vld [vmem:[%s2848 + $0x74] sm:$0x1]
      %v2919 = vsel %vm2386, %v2697, %v2918
      %2920 = vst [vmem:[%s2848 + $0x74] sm:$0x1] %v2919
      %v2921 = vld [vmem:[%s2848 + $0x78] sm:$0xf]
      %v2922 = vsel %vm2850, %v2704, %v2921
      %2923 = vst [vmem:[%s2848 + $0x78] sm:$0xf] %v2922
      %2924 = vst.msk [vmem:[%s2848 + $0x7c] sm:$0xf] %vm327, %v2713
      %v2925 = vld [vmem:[%s2848 + $0x80] sm:$0x1]
      %v2926 = vsel %vm2386, %v2714, %v2925
      %2927 = vst [vmem:[%s2848 + $0x80] sm:$0x1] %v2926
      %v2928 = vld [vmem:[%s2848 + $0x84] sm:$0xf]
      %v2929 = vsel %vm2850, %v2721, %v2928
      %2930 = vst [vmem:[%s2848 + $0x84] sm:$0xf] %v2929
      %2931 = vst.msk [vmem:[%s2848 + $0x88] sm:$0xf] %vm327, %v2730
      %v2932 = vld [vmem:[%s2848 + $0x8c] sm:$0x1]
      %v2933 = vsel %vm2386, %v2731, %v2932
      %2934 = vst [vmem:[%s2848 + $0x8c] sm:$0x1] %v2933
      %v2935 = vld [vmem:[%s2848 + $0x90] sm:$0xf]
      %v2936 = vsel %vm2850, %v2738, %v2935
      %2937 = vst [vmem:[%s2848 + $0x90] sm:$0xf] %v2936
      %2938 = vst.msk [vmem:[%s2848 + $0x94] sm:$0xf] %vm327, %v2747
      %v2939 = vld [vmem:[%s2848 + $0x98] sm:$0x1]
      %v2940 = vsel %vm2386, %v2748, %v2939
      %2941 = vst [vmem:[%s2848 + $0x98] sm:$0x1] %v2940
      %v2942 = vld [vmem:[%s2848 + $0x9c] sm:$0xf]
      %v2943 = vsel %vm2850, %v2755, %v2942
      %2944 = vst [vmem:[%s2848 + $0x9c] sm:$0xf] %v2943
      %2945 = vst.msk [vmem:[%s2848 + $0xa0] sm:$0xf] %vm327, %v2764
      %v2946 = vld [vmem:[%s2848 + $0xa4] sm:$0x1]
      %v2947 = vsel %vm2386, %v2765, %v2946
      %2948 = vst [vmem:[%s2848 + $0xa4] sm:$0x1] %v2947
      %v2949 = vld [vmem:[%s2848 + $0xa8] sm:$0xf]
      %v2950 = vsel %vm2850, %v2772, %v2949
      %2951 = vst [vmem:[%s2848 + $0xa8] sm:$0xf] %v2950
      %2952 = vst.msk [vmem:[%s2848 + $0xac] sm:$0xf] %vm327, %v2781
      %v2953 = vld [vmem:[%s2848 + $0xb0] sm:$0x1]
      %v2954 = vsel %vm2386, %v2782, %v2953
      %2955 = vst [vmem:[%s2848 + $0xb0] sm:$0x1] %v2954
      %v2956 = vld [vmem:[%s2848 + $0xb4] sm:$0xf]
      %v2957 = vsel %vm2850, %v2789, %v2956
      %2958 = vst [vmem:[%s2848 + $0xb4] sm:$0xf] %v2957
      %2959 = vst.msk [vmem:[%s2848 + $0xb8] sm:$0xf] %vm327, %v2798
      %v2960 = vld [vmem:[%s2848 + $0xbc] sm:$0x1]
      %v2961 = vsel %vm2386, %v2799, %v2960
      %2962 = vst [vmem:[%s2848 + $0xbc] sm:$0x1] %v2961
      %v2963 = vld [vmem:[#allocation3] sm:$0xf]
      %v2964 = vld [vmem:[#allocation3 + $0x4] sm:$0xf]
      %v2965 = vld [vmem:[#allocation3 + $0x8] sm:$0x1]
      %v2966 = vld [vmem:[#allocation3 + $0xc] sm:$0xf]
      %v2967 = vld [vmem:[#allocation3 + $0x10] sm:$0xf]
      %v2968 = vld [vmem:[#allocation3 + $0x14] sm:$0x1]
      %v2969 = vld [vmem:[#allocation3 + $0x18] sm:$0xf]
      %v2970 = vld [vmem:[#allocation3 + $0x1c] sm:$0xf]
      %v2971 = vld [vmem:[#allocation3 + $0x20] sm:$0x1]
      %v2972 = vld [vmem:[#allocation3 + $0x24] sm:$0xf]
      %v2973 = vld [vmem:[#allocation3 + $0x28] sm:$0xf]
      %v2974 = vld [vmem:[#allocation3 + $0x2c] sm:$0x1]
      %v2975 = vld [vmem:[#allocation3 + $0x30] sm:$0xf]
      %v2976 = vld [vmem:[#allocation3 + $0x34] sm:$0xf]
      %v2977 = vld [vmem:[#allocation3 + $0x38] sm:$0x1]
      %v2978 = vld [vmem:[#allocation3 + $0x3c] sm:$0xf]
      %v2979 = vld [vmem:[#allocation3 + $0x40] sm:$0xf]
      %v2980 = vld [vmem:[#allocation3 + $0x44] sm:$0x1]
      %v2981 = vld [vmem:[#allocation3 + $0x48] sm:$0xf]
      %v2982 = vld [vmem:[#allocation3 + $0x4c] sm:$0xf]
      %v2983 = vld [vmem:[#allocation3 + $0x50] sm:$0x1]
      %v2984 = vld [vmem:[#allocation3 + $0x54] sm:$0xf]
      %v2985 = vld [vmem:[#allocation3 + $0x58] sm:$0xf]
      %v2986 = vld [vmem:[#allocation3 + $0x5c] sm:$0x1]
      %v2987 = vld [vmem:[#allocation3 + $0x60] sm:$0xf]
      %v2988 = vld [vmem:[#allocation3 + $0x64] sm:$0xf]
      %v2989 = vld [vmem:[#allocation3 + $0x68] sm:$0x1]
      %v2990 = vld [vmem:[#allocation3 + $0x6c] sm:$0xf]
      %v2991 = vld [vmem:[#allocation3 + $0x70] sm:$0xf]
      %v2992 = vld [vmem:[#allocation3 + $0x74] sm:$0x1]
      %v2993 = vld [vmem:[#allocation3 + $0x78] sm:$0xf]
      %v2994 = vld [vmem:[#allocation3 + $0x7c] sm:$0xf]
      %v2995 = vld [vmem:[#allocation3 + $0x80] sm:$0x1]
      %v2996 = vld [vmem:[#allocation3 + $0x84] sm:$0xf]
      %v2997 = vld [vmem:[#allocation3 + $0x88] sm:$0xf]
      %v2998 = vld [vmem:[#allocation3 + $0x8c] sm:$0x1]
      %v2999 = vld [vmem:[#allocation3 + $0x90] sm:$0xf]
      %v3000 = vld [vmem:[#allocation3 + $0x94] sm:$0xf]
      %v3001 = vld [vmem:[#allocation3 + $0x98] sm:$0x1]
      %v3002 = vld [vmem:[#allocation3 + $0x9c] sm:$0xf]
      %v3003 = vld [vmem:[#allocation3 + $0xa0] sm:$0xf]
      %v3004 = vld [vmem:[#allocation3 + $0xa4] sm:$0x1]
      %v3005 = vld [vmem:[#allocation3 + $0xa8] sm:$0xf]
      %v3006 = vld [vmem:[#allocation3 + $0xac] sm:$0xf]
      %v3007 = vld [vmem:[#allocation3 + $0xb0] sm:$0x1]
      %v3008 = vld [vmem:[#allocation3 + $0xb4] sm:$0xf]
      %v3009 = vld [vmem:[#allocation3 + $0xb8] sm:$0xf]
      %v3010 = vld [vmem:[#allocation3 + $0xbc] sm:$0x1]
      %v3011 = vld [vmem:[#allocation3 + $0xc0] sm:$0xf]
      %v3012 = vld [vmem:[#allocation3 + $0xc4] sm:$0xf]
      %v3013 = vld [vmem:[#allocation3 + $0xc8] sm:$0x1]
      %v3014 = vld [vmem:[#allocation3 + $0xcc] sm:$0xf]
      %v3015 = vld [vmem:[#allocation3 + $0xd0] sm:$0xf]
      %v3016 = vld [vmem:[#allocation3 + $0xd4] sm:$0x1]
      %v3049 = vunpack.c.l.b16 %v2963
      %v3050 = vunpack.c.l.b16 %v2964
      %v3051 = vunpack.c.l.b16 %v2966
      %v3052 = vunpack.c.l.b16 %v2967
      %v3053 = vunpack.c.l.b16 %v2969
      %v3054 = vunpack.c.l.b16 %v2970
      %v3055 = vunpack.c.l.b16 %v2972
      %v3056 = vunpack.c.l.b16 %v2973
      %v3057 = vunpack.c.l.b16 %v2975
      %v3058 = vunpack.c.l.b16 %v2976
      %v3059 = vunpack.c.l.b16 %v2978
      %v3060 = vunpack.c.l.b16 %v2979
      %v3061 = vunpack.c.l.b16 %v2981
      %v3062 = vunpack.c.l.b16 %v2982
      %v3063 = vunpack.c.l.b16 %v2984
      %v3064 = vunpack.c.l.b16 %v2985
      %v3065 = vunpack.c.l.b16 %v2987
      %v3066 = vunpack.c.l.b16 %v2988
      %v3067 = vunpack.c.l.b16 %v2990
      %v3068 = vunpack.c.l.b16 %v2991
      %v3069 = vunpack.c.l.b16 %v2993
      %v3070 = vunpack.c.l.b16 %v2994
      %v3071 = vunpack.c.l.b16 %v2996
      %v3072 = vunpack.c.l.b16 %v2997
      %v3073 = vunpack.c.l.b16 %v2999
      %v3074 = vunpack.c.l.b16 %v3000
      %v3075 = vunpack.c.l.b16 %v3002
      %v3076 = vunpack.c.l.b16 %v3003
      %v3077 = vunpack.c.l.b16 %v3005
      %v3078 = vunpack.c.l.b16 %v3006
      %v3079 = vunpack.c.l.b16 %v3008
      %v3080 = vunpack.c.l.b16 %v3009
      %v3081 = vpack.c.b16 %v3050, %v3049
      %v3082 = vpack.c.b16 %v3052, %v3051
      %v3083 = vpack.c.b16 %v3054, %v3053
      %v3084 = vpack.c.b16 %v3056, %v3055
      %v3085 = vpack.c.b16 %v3058, %v3057
      %v3086 = vpack.c.b16 %v3060, %v3059
      %v3087 = vpack.c.b16 %v3062, %v3061
      %v3088 = vpack.c.b16 %v3064, %v3063
      %v3089 = vpack.c.b16 %v3066, %v3065
      %v3090 = vpack.c.b16 %v3068, %v3067
      %v3091 = vpack.c.b16 %v3070, %v3069
      %v3092 = vpack.c.b16 %v3072, %v3071
      %v3093 = vpack.c.b16 %v3074, %v3073
      %v3094 = vpack.c.b16 %v3076, %v3075
      %v3095 = vpack.c.b16 %v3078, %v3077
      %v3096 = vpack.c.b16 %v3080, %v3079
      %v3113 = vunpack.c.l.b16 %v2965
      %v3114 = vunpack.c.l.b16 %v2968
      %v3115 = vunpack.c.l.b16 %v2971
      %v3116 = vunpack.c.l.b16 %v2974
      %v3117 = vunpack.c.l.b16 %v2977
      %v3118 = vunpack.c.l.b16 %v2980
      %v3119 = vunpack.c.l.b16 %v2983
      %v3120 = vunpack.c.l.b16 %v2986
      %v3121 = vunpack.c.l.b16 %v2989
      %v3122 = vunpack.c.l.b16 %v2992
      %v3123 = vunpack.c.l.b16 %v2995
      %v3124 = vunpack.c.l.b16 %v2998
      %v3125 = vunpack.c.l.b16 %v3001
      %v3126 = vunpack.c.l.b16 %v3004
      %v3127 = vunpack.c.l.b16 %v3007
      %v3128 = vunpack.c.l.b16 %v3010
      %v3129 = vpack.c.b16 %v3113, %v3113
      %v3130 = vpack.c.b16 %v3114, %v3114
      %v3131 = vpack.c.b16 %v3115, %v3115
      %v3132 = vpack.c.b16 %v3116, %v3116
      %v3133 = vpack.c.b16 %v3117, %v3117
      %v3134 = vpack.c.b16 %v3118, %v3118
      %v3135 = vpack.c.b16 %v3119, %v3119
      %v3136 = vpack.c.b16 %v3120, %v3120
      %v3137 = vpack.c.b16 %v3121, %v3121
      %v3138 = vpack.c.b16 %v3122, %v3122
      %v3139 = vpack.c.b16 %v3123, %v3123
      %v3140 = vpack.c.b16 %v3124, %v3124
      %v3141 = vpack.c.b16 %v3125, %v3125
      %v3142 = vpack.c.b16 %v3126, %v3126
      %v3143 = vpack.c.b16 %v3127, %v3127
      %v3144 = vpack.c.b16 %v3128, %v3128
      %v3146 = vshrl.u32 %v3081, 16
      %v3148 = vshll.u32 %v3081, 16
      %v3150 = vrot.slane %v3148, 1
      %v3151 = vor.u32 %v3146, %v3150
      %v3153 = vshll.u32 %v3129, 16
      %v3155 = vrot.slane %v3153, 1
      %v3156 = vsel %vm1304, %v3151, %v3155
      %v3158 = vshrl.u32 %v3082, 16
      %v3160 = vshll.u32 %v3082, 16
      %v3162 = vrot.slane %v3160, 1
      %v3163 = vor.u32 %v3158, %v3162
      %v3165 = vshll.u32 %v3130, 16
      %v3167 = vrot.slane %v3165, 1
      %v3168 = vsel %vm1304, %v3163, %v3167
      %v3170 = vshrl.u32 %v3083, 16
      %v3172 = vshll.u32 %v3083, 16
      %v3174 = vrot.slane %v3172, 1
      %v3175 = vor.u32 %v3170, %v3174
      %v3177 = vshll.u32 %v3131, 16
      %v3179 = vrot.slane %v3177, 1
      %v3180 = vsel %vm1304, %v3175, %v3179
      %v3182 = vshrl.u32 %v3084, 16
      %v3184 = vshll.u32 %v3084, 16
      %v3186 = vrot.slane %v3184, 1
      %v3187 = vor.u32 %v3182, %v3186
      %v3189 = vshll.u32 %v3132, 16
      %v3191 = vrot.slane %v3189, 1
      %v3192 = vsel %vm1304, %v3187, %v3191
      %v3194 = vshrl.u32 %v3085, 16
      %v3196 = vshll.u32 %v3085, 16
      %v3198 = vrot.slane %v3196, 1
      %v3199 = vor.u32 %v3194, %v3198
      %v3201 = vshll.u32 %v3133, 16
      %v3203 = vrot.slane %v3201, 1
      %v3204 = vsel %vm1304, %v3199, %v3203
      %v3206 = vshrl.u32 %v3086, 16
      %v3208 = vshll.u32 %v3086, 16
      %v3210 = vrot.slane %v3208, 1
      %v3211 = vor.u32 %v3206, %v3210
      %v3213 = vshll.u32 %v3134, 16
      %v3215 = vrot.slane %v3213, 1
      %v3216 = vsel %vm1304, %v3211, %v3215
      %v3218 = vshrl.u32 %v3087, 16
      %v3220 = vshll.u32 %v3087, 16
      %v3222 = vrot.slane %v3220, 1
      %v3223 = vor.u32 %v3218, %v3222
      %v3225 = vshll.u32 %v3135, 16
      %v3227 = vrot.slane %v3225, 1
      %v3228 = vsel %vm1304, %v3223, %v3227
      %v3230 = vshrl.u32 %v3088, 16
      %v3232 = vshll.u32 %v3088, 16
      %v3234 = vrot.slane %v3232, 1
      %v3235 = vor.u32 %v3230, %v3234
      %v3237 = vshll.u32 %v3136, 16
      %v3239 = vrot.slane %v3237, 1
      %v3240 = vsel %vm1304, %v3235, %v3239
      %v3242 = vshrl.u32 %v3089, 16
      %v3244 = vshll.u32 %v3089, 16
      %v3246 = vrot.slane %v3244, 1
      %v3247 = vor.u32 %v3242, %v3246
      %v3249 = vshll.u32 %v3137, 16
      %v3251 = vrot.slane %v3249, 1
      %v3252 = vsel %vm1304, %v3247, %v3251
      %v3254 = vshrl.u32 %v3090, 16
      %v3256 = vshll.u32 %v3090, 16
      %v3258 = vrot.slane %v3256, 1
      %v3259 = vor.u32 %v3254, %v3258
      %v3261 = vshll.u32 %v3138, 16
      %v3263 = vrot.slane %v3261, 1
      %v3264 = vsel %vm1304, %v3259, %v3263
      %v3266 = vshrl.u32 %v3091, 16
      %v3268 = vshll.u32 %v3091, 16
      %v3270 = vrot.slane %v3268, 1
      %v3271 = vor.u32 %v3266, %v3270
      %v3273 = vshll.u32 %v3139, 16
      %v3275 = vrot.slane %v3273, 1
      %v3276 = vsel %vm1304, %v3271, %v3275
      %v3278 = vshrl.u32 %v3092, 16
      %v3280 = vshll.u32 %v3092, 16
      %v3282 = vrot.slane %v3280, 1
      %v3283 = vor.u32 %v3278, %v3282
      %v3285 = vshll.u32 %v3140, 16
      %v3287 = vrot.slane %v3285, 1
      %v3288 = vsel %vm1304, %v3283, %v3287
      %v3290 = vshrl.u32 %v3093, 16
      %v3292 = vshll.u32 %v3093, 16
      %v3294 = vrot.slane %v3292, 1
      %v3295 = vor.u32 %v3290, %v3294
      %v3297 = vshll.u32 %v3141, 16
      %v3299 = vrot.slane %v3297, 1
      %v3300 = vsel %vm1304, %v3295, %v3299
      %v3302 = vshrl.u32 %v3094, 16
      %v3304 = vshll.u32 %v3094, 16
      %v3306 = vrot.slane %v3304, 1
      %v3307 = vor.u32 %v3302, %v3306
      %v3309 = vshll.u32 %v3142, 16
      %v3311 = vrot.slane %v3309, 1
      %v3312 = vsel %vm1304, %v3307, %v3311
      %v3314 = vshrl.u32 %v3095, 16
      %v3316 = vshll.u32 %v3095, 16
      %v3318 = vrot.slane %v3316, 1
      %v3319 = vor.u32 %v3314, %v3318
      %v3321 = vshll.u32 %v3143, 16
      %v3323 = vrot.slane %v3321, 1
      %v3324 = vsel %vm1304, %v3319, %v3323
      %v3326 = vshrl.u32 %v3096, 16
      %v3328 = vshll.u32 %v3096, 16
      %v3330 = vrot.slane %v3328, 1
      %v3331 = vor.u32 %v3326, %v3330
      %v3333 = vshll.u32 %v3144, 16
      %v3335 = vrot.slane %v3333, 1
      %v3336 = vsel %vm1304, %v3331, %v3335
      %3337 = vrot.lane.b32.xlu0 %v3156, 8
      %v3338 = vpop.permute.xlu0 %3337
      %3339 = vrot.lane.b32.xlu0 %v3168, 8
      %v3340 = vpop.permute.xlu0 %3339
      %3341 = vrot.lane.b32.xlu0 %v3180, 8
      %v3342 = vpop.permute.xlu0 %3341
      %3343 = vrot.lane.b32.xlu0 %v3192, 8
      %v3344 = vpop.permute.xlu0 %3343
      %3345 = vrot.lane.b32.xlu0 %v3204, 8
      %v3346 = vpop.permute.xlu0 %3345
      %3347 = vrot.lane.b32.xlu0 %v3216, 8
      %v3348 = vpop.permute.xlu0 %3347
      %3349 = vrot.lane.b32.xlu0 %v3228, 8
      %v3350 = vpop.permute.xlu0 %3349
      %3351 = vrot.lane.b32.xlu0 %v3240, 8
      %v3352 = vpop.permute.xlu0 %3351
      %3353 = vrot.lane.b32.xlu0 %v3252, 8
      %v3354 = vpop.permute.xlu0 %3353
      %3355 = vrot.lane.b32.xlu0 %v3264, 8
      %v3356 = vpop.permute.xlu0 %3355
      %3357 = vrot.lane.b32.xlu0 %v3276, 8
      %v3358 = vpop.permute.xlu0 %3357
      %3359 = vrot.lane.b32.xlu0 %v3288, 8
      %v3360 = vpop.permute.xlu0 %3359
      %3361 = vrot.lane.b32.xlu0 %v3300, 8
      %v3362 = vpop.permute.xlu0 %3361
      %3363 = vrot.lane.b32.xlu0 %v3312, 8
      %v3364 = vpop.permute.xlu0 %3363
      %3365 = vrot.lane.b32.xlu0 %v3324, 8
      %v3366 = vpop.permute.xlu0 %3365
      %3367 = vrot.lane.b32.xlu0 %v3336, 8
      %v3368 = vpop.permute.xlu0 %3367
      %v3369 = vrot.slane %v3081, 1
      %v3370 = vrot.slane %v3129, 1
      %v3371 = vsel %vm1529, %v3369, %v3370
      %v3372 = vrot.slane %v3082, 1
      %v3373 = vrot.slane %v3130, 1
      %v3374 = vsel %vm1529, %v3372, %v3373
      %v3375 = vrot.slane %v3083, 1
      %v3376 = vrot.slane %v3131, 1
      %v3377 = vsel %vm1529, %v3375, %v3376
      %v3378 = vrot.slane %v3084, 1
      %v3379 = vrot.slane %v3132, 1
      %v3380 = vsel %vm1529, %v3378, %v3379
      %v3381 = vrot.slane %v3085, 1
      %v3382 = vrot.slane %v3133, 1
      %v3383 = vsel %vm1529, %v3381, %v3382
      %v3384 = vrot.slane %v3086, 1
      %v3385 = vrot.slane %v3134, 1
      %v3386 = vsel %vm1529, %v3384, %v3385
      %v3387 = vrot.slane %v3087, 1
      %v3388 = vrot.slane %v3135, 1
      %v3389 = vsel %vm1529, %v3387, %v3388
      %v3390 = vrot.slane %v3088, 1
      %v3391 = vrot.slane %v3136, 1
      %v3392 = vsel %vm1529, %v3390, %v3391
      %v3393 = vrot.slane %v3089, 1
      %v3394 = vrot.slane %v3137, 1
      %v3395 = vsel %vm1529, %v3393, %v3394
      %v3396 = vrot.slane %v3090, 1
      %v3397 = vrot.slane %v3138, 1
      %v3398 = vsel %vm1529, %v3396, %v3397
      %v3399 = vrot.slane %v3091, 1
      %v3400 = vrot.slane %v3139, 1
      %v3401 = vsel %vm1529, %v3399, %v3400
      %v3402 = vrot.slane %v3092, 1
      %v3403 = vrot.slane %v3140, 1
      %v3404 = vsel %vm1529, %v3402, %v3403
      %v3405 = vrot.slane %v3093, 1
      %v3406 = vrot.slane %v3141, 1
      %v3407 = vsel %vm1529, %v3405, %v3406
      %v3408 = vrot.slane %v3094, 1
      %v3409 = vrot.slane %v3142, 1
      %v3410 = vsel %vm1529, %v3408, %v3409
      %v3411 = vrot.slane %v3095, 1
      %v3412 = vrot.slane %v3143, 1
      %v3413 = vsel %vm1529, %v3411, %v3412
      %v3414 = vrot.slane %v3096, 1
      %v3415 = vrot.slane %v3144, 1
      %v3416 = vsel %vm1529, %v3414, %v3415
      %3417 = vrot.lane.b32.xlu0 %v3371, 16
      %v3418 = vpop.permute.xlu0 %3417
      %3419 = vrot.lane.b32.xlu0 %v3374, 16
      %v3420 = vpop.permute.xlu0 %3419
      %3421 = vrot.lane.b32.xlu0 %v3377, 16
      %v3422 = vpop.permute.xlu0 %3421
      %3423 = vrot.lane.b32.xlu0 %v3380, 16
      %v3424 = vpop.permute.xlu0 %3423
      %3425 = vrot.lane.b32.xlu0 %v3383, 16
      %v3426 = vpop.permute.xlu0 %3425
      %3427 = vrot.lane.b32.xlu0 %v3386, 16
      %v3428 = vpop.permute.xlu0 %3427
      %3429 = vrot.lane.b32.xlu0 %v3389, 16
      %v3430 = vpop.permute.xlu0 %3429
      %3431 = vrot.lane.b32.xlu0 %v3392, 16
      %v3432 = vpop.permute.xlu0 %3431
      %3433 = vrot.lane.b32.xlu0 %v3395, 16
      %v3434 = vpop.permute.xlu0 %3433
      %3435 = vrot.lane.b32.xlu0 %v3398, 16
      %v3436 = vpop.permute.xlu0 %3435
      %3437 = vrot.lane.b32.xlu0 %v3401, 16
      %v3438 = vpop.permute.xlu0 %3437
      %3439 = vrot.lane.b32.xlu0 %v3404, 16
      %v3440 = vpop.permute.xlu0 %3439
      %3441 = vrot.lane.b32.xlu0 %v3407, 16
      %v3442 = vpop.permute.xlu0 %3441
      %3443 = vrot.lane.b32.xlu0 %v3410, 16
      %v3444 = vpop.permute.xlu0 %3443
      %3445 = vrot.lane.b32.xlu0 %v3413, 16
      %v3446 = vpop.permute.xlu0 %3445
      %3447 = vrot.lane.b32.xlu0 %v3416, 16
      %v3448 = vpop.permute.xlu0 %3447
      %v3451 = vunpack.c.l.b16 %v3011
      %v3452 = vunpack.c.l.b16 %v3012
      %v3453 = vpack.c.b16 %v3452, %v3451
      %3454 = vrot.lane.b32.xlu0 %v3082, 24
      %v3455 = vpop.permute.xlu0 %3454
      %3456 = vrot.lane.b32.xlu0 %v3083, 24
      %v3457 = vpop.permute.xlu0 %3456
      %3458 = vrot.lane.b32.xlu0 %v3084, 24
      %v3459 = vpop.permute.xlu0 %3458
      %3460 = vrot.lane.b32.xlu0 %v3085, 24
      %v3461 = vpop.permute.xlu0 %3460
      %3462 = vrot.lane.b32.xlu0 %v3086, 24
      %v3463 = vpop.permute.xlu0 %3462
      %3464 = vrot.lane.b32.xlu0 %v3087, 24
      %v3465 = vpop.permute.xlu0 %3464
      %3466 = vrot.lane.b32.xlu0 %v3088, 24
      %v3467 = vpop.permute.xlu0 %3466
      %3468 = vrot.lane.b32.xlu0 %v3089, 24
      %v3469 = vpop.permute.xlu0 %3468
      %3470 = vrot.lane.b32.xlu0 %v3090, 24
      %v3471 = vpop.permute.xlu0 %3470
      %3472 = vrot.lane.b32.xlu0 %v3091, 24
      %v3473 = vpop.permute.xlu0 %3472
      %3474 = vrot.lane.b32.xlu0 %v3092, 24
      %v3475 = vpop.permute.xlu0 %3474
      %3476 = vrot.lane.b32.xlu0 %v3093, 24
      %v3477 = vpop.permute.xlu0 %3476
      %3478 = vrot.lane.b32.xlu0 %v3094, 24
      %v3479 = vpop.permute.xlu0 %3478
      %3480 = vrot.lane.b32.xlu0 %v3095, 24
      %v3481 = vpop.permute.xlu0 %3480
      %3482 = vrot.lane.b32.xlu0 %v3096, 24
      %v3483 = vpop.permute.xlu0 %3482
      %3484 = vrot.lane.b32.xlu0 %v3453, 24
      %v3485 = vpop.permute.xlu0 %3484
      %v3487 = vunpack.c.l.b16 %v3013
      %v3488 = vpack.c.b16 %v3487, %v3487
      %v3490 = vshrl.u32 %v3453, 16
      %v3492 = vshll.u32 %v3453, 16
      %v3494 = vrot.slane %v3492, 1
      %v3495 = vor.u32 %v3490, %v3494
      %v3497 = vshll.u32 %v3488, 16
      %v3499 = vrot.slane %v3497, 1
      %v3500 = vsel %vm1304, %v3495, %v3499
      %3501 = vrot.lane.b32.xlu0 %v3168, 32
      %v3502 = vpop.permute.xlu0 %3501
      %3503 = vrot.lane.b32.xlu0 %v3180, 32
      %v3504 = vpop.permute.xlu0 %3503
      %3505 = vrot.lane.b32.xlu0 %v3192, 32
      %v3506 = vpop.permute.xlu0 %3505
      %3507 = vrot.lane.b32.xlu0 %v3204, 32
      %v3508 = vpop.permute.xlu0 %3507
      %3509 = vrot.lane.b32.xlu0 %v3216, 32
      %v3510 = vpop.permute.xlu0 %3509
      %3511 = vrot.lane.b32.xlu0 %v3228, 32
      %v3512 = vpop.permute.xlu0 %3511
      %3513 = vrot.lane.b32.xlu0 %v3240, 32
      %v3514 = vpop.permute.xlu0 %3513
      %3515 = vrot.lane.b32.xlu0 %v3252, 32
      %v3516 = vpop.permute.xlu0 %3515
      %3517 = vrot.lane.b32.xlu0 %v3264, 32
      %v3518 = vpop.permute.xlu0 %3517
      %3519 = vrot.lane.b32.xlu0 %v3276, 32
      %v3520 = vpop.permute.xlu0 %3519
      %3521 = vrot.lane.b32.xlu0 %v3288, 32
      %v3522 = vpop.permute.xlu0 %3521
      %3523 = vrot.lane.b32.xlu0 %v3300, 32
      %v3524 = vpop.permute.xlu0 %3523
      %3525 = vrot.lane.b32.xlu0 %v3312, 32
      %v3526 = vpop.permute.xlu0 %3525
      %3527 = vrot.lane.b32.xlu0 %v3324, 32
      %v3528 = vpop.permute.xlu0 %3527
      %3529 = vrot.lane.b32.xlu0 %v3336, 32
      %v3530 = vpop.permute.xlu0 %3529
      %3531 = vrot.lane.b32.xlu0 %v3500, 32
      %v3532 = vpop.permute.xlu0 %3531
      %v3533 = vrot.slane %v3453, 1
      %v3534 = vrot.slane %v3488, 1
      %v3535 = vsel %vm1529, %v3533, %v3534
      %3536 = vrot.lane.b32.xlu0 %v3374, 40
      %v3537 = vpop.permute.xlu0 %3536
      %3538 = vrot.lane.b32.xlu0 %v3377, 40
      %v3539 = vpop.permute.xlu0 %3538
      %3540 = vrot.lane.b32.xlu0 %v3380, 40
      %v3541 = vpop.permute.xlu0 %3540
      %3542 = vrot.lane.b32.xlu0 %v3383, 40
      %v3543 = vpop.permute.xlu0 %3542
      %3544 = vrot.lane.b32.xlu0 %v3386, 40
      %v3545 = vpop.permute.xlu0 %3544
      %3546 = vrot.lane.b32.xlu0 %v3389, 40
      %v3547 = vpop.permute.xlu0 %3546
      %3548 = vrot.lane.b32.xlu0 %v3392, 40
      %v3549 = vpop.permute.xlu0 %3548
      %3550 = vrot.lane.b32.xlu0 %v3395, 40
      %v3551 = vpop.permute.xlu0 %3550
      %3552 = vrot.lane.b32.xlu0 %v3398, 40
      %v3553 = vpop.permute.xlu0 %3552
      %3554 = vrot.lane.b32.xlu0 %v3401, 40
      %v3555 = vpop.permute.xlu0 %3554
      %3556 = vrot.lane.b32.xlu0 %v3404, 40
      %v3557 = vpop.permute.xlu0 %3556
      %3558 = vrot.lane.b32.xlu0 %v3407, 40
      %v3559 = vpop.permute.xlu0 %3558
      %3560 = vrot.lane.b32.xlu0 %v3410, 40
      %v3561 = vpop.permute.xlu0 %3560
      %3562 = vrot.lane.b32.xlu0 %v3413, 40
      %v3563 = vpop.permute.xlu0 %3562
      %3564 = vrot.lane.b32.xlu0 %v3416, 40
      %v3565 = vpop.permute.xlu0 %3564
      %3566 = vrot.lane.b32.xlu0 %v3535, 40
      %v3567 = vpop.permute.xlu0 %3566
      %v3570 = vunpack.c.l.b16 %v3014
      %v3571 = vunpack.c.l.b16 %v3015
      %v3572 = vpack.c.b16 %v3571, %v3570
      %3573 = vrot.lane.b32.xlu0 %v3083, 48
      %v3574 = vpop.permute.xlu0 %3573
      %3575 = vrot.lane.b32.xlu0 %v3084, 48
      %v3576 = vpop.permute.xlu0 %3575
      %3577 = vrot.lane.b32.xlu0 %v3085, 48
      %v3578 = vpop.permute.xlu0 %3577
      %3579 = vrot.lane.b32.xlu0 %v3086, 48
      %v3580 = vpop.permute.xlu0 %3579
      %3581 = vrot.lane.b32.xlu0 %v3087, 48
      %v3582 = vpop.permute.xlu0 %3581
      %3583 = vrot.lane.b32.xlu0 %v3088, 48
      %v3584 = vpop.permute.xlu0 %3583
      %3585 = vrot.lane.b32.xlu0 %v3089, 48
      %v3586 = vpop.permute.xlu0 %3585
      %3587 = vrot.lane.b32.xlu0 %v3090, 48
      %v3588 = vpop.permute.xlu0 %3587
      %3589 = vrot.lane.b32.xlu0 %v3091, 48
      %v3590 = vpop.permute.xlu0 %3589
      %3591 = vrot.lane.b32.xlu0 %v3092, 48
      %v3592 = vpop.permute.xlu0 %3591
      %3593 = vrot.lane.b32.xlu0 %v3093, 48
      %v3594 = vpop.permute.xlu0 %3593
      %3595 = vrot.lane.b32.xlu0 %v3094, 48
      %v3596 = vpop.permute.xlu0 %3595
      %3597 = vrot.lane.b32.xlu0 %v3095, 48
      %v3598 = vpop.permute.xlu0 %3597
      %3599 = vrot.lane.b32.xlu0 %v3096, 48
      %v3600 = vpop.permute.xlu0 %3599
      %3601 = vrot.lane.b32.xlu0 %v3453, 48
      %v3602 = vpop.permute.xlu0 %3601
      %3603 = vrot.lane.b32.xlu0 %v3572, 48
      %v3604 = vpop.permute.xlu0 %3603
      %v3606 = vunpack.c.l.b16 %v3016
      %v3607 = vpack.c.b16 %v3606, %v3606
      %v3609 = vshrl.u32 %v3572, 16
      %v3611 = vshll.u32 %v3572, 16
      %v3613 = vrot.slane %v3611, 1
      %v3614 = vor.u32 %v3609, %v3613
      %v3616 = vshll.u32 %v3607, 16
      %v3618 = vrot.slane %v3616, 1
      %v3619 = vsel %vm1304, %v3614, %v3618
      %3620 = vrot.lane.b32.xlu0 %v3180, 56
      %v3621 = vpop.permute.xlu0 %3620
      %3622 = vrot.lane.b32.xlu0 %v3192, 56
      %v3623 = vpop.permute.xlu0 %3622
      %3624 = vrot.lane.b32.xlu0 %v3204, 56
      %v3625 = vpop.permute.xlu0 %3624
      %3626 = vrot.lane.b32.xlu0 %v3216, 56
      %v3627 = vpop.permute.xlu0 %3626
      %3628 = vrot.lane.b32.xlu0 %v3228, 56
      %v3629 = vpop.permute.xlu0 %3628
      %3630 = vrot.lane.b32.xlu0 %v3240, 56
      %v3631 = vpop.permute.xlu0 %3630
      %3632 = vrot.lane.b32.xlu0 %v3252, 56
      %v3633 = vpop.permute.xlu0 %3632
      %3634 = vrot.lane.b32.xlu0 %v3264, 56
      %v3635 = vpop.permute.xlu0 %3634
      %3636 = vrot.lane.b32.xlu0 %v3276, 56
      %v3637 = vpop.permute.xlu0 %3636
      %3638 = vrot.lane.b32.xlu0 %v3288, 56
      %v3639 = vpop.permute.xlu0 %3638
      %3640 = vrot.lane.b32.xlu0 %v3300, 56
      %v3641 = vpop.permute.xlu0 %3640
      %3642 = vrot.lane.b32.xlu0 %v3312, 56
      %v3643 = vpop.permute.xlu0 %3642
      %3644 = vrot.lane.b32.xlu0 %v3324, 56
      %v3645 = vpop.permute.xlu0 %3644
      %3646 = vrot.lane.b32.xlu0 %v3336, 56
      %v3647 = vpop.permute.xlu0 %3646
      %3648 = vrot.lane.b32.xlu0 %v3500, 56
      %v3649 = vpop.permute.xlu0 %3648
      %3650 = vrot.lane.b32.xlu0 %v3619, 56
      %v3651 = vpop.permute.xlu0 %3650
      %v3652 = vrot.slane %v3572, 1
      %v3653 = vrot.slane %v3607, 1
      %v3654 = vsel %vm1529, %v3652, %v3653
      %3655 = vrot.lane.b32.xlu0 %v3377, 64
      %v3656 = vpop.permute.xlu0 %3655
      %3657 = vrot.lane.b32.xlu0 %v3380, 64
      %v3658 = vpop.permute.xlu0 %3657
      %3659 = vrot.lane.b32.xlu0 %v3383, 64
      %v3660 = vpop.permute.xlu0 %3659
      %3661 = vrot.lane.b32.xlu0 %v3386, 64
      %v3662 = vpop.permute.xlu0 %3661
      %3663 = vrot.lane.b32.xlu0 %v3389, 64
      %v3664 = vpop.permute.xlu0 %3663
      %3665 = vrot.lane.b32.xlu0 %v3392, 64
      %v3666 = vpop.permute.xlu0 %3665
      %3667 = vrot.lane.b32.xlu0 %v3395, 64
      %v3668 = vpop.permute.xlu0 %3667
      %3669 = vrot.lane.b32.xlu0 %v3398, 64
      %v3670 = vpop.permute.xlu0 %3669
      %3671 = vrot.lane.b32.xlu0 %v3401, 64
      %v3672 = vpop.permute.xlu0 %3671
      %3673 = vrot.lane.b32.xlu0 %v3404, 64
      %v3674 = vpop.permute.xlu0 %3673
      %3675 = vrot.lane.b32.xlu0 %v3407, 64
      %v3676 = vpop.permute.xlu0 %3675
      %3677 = vrot.lane.b32.xlu0 %v3410, 64
      %v3678 = vpop.permute.xlu0 %3677
      %3679 = vrot.lane.b32.xlu0 %v3413, 64
      %v3680 = vpop.permute.xlu0 %3679
      %3681 = vrot.lane.b32.xlu0 %v3416, 64
      %v3682 = vpop.permute.xlu0 %3681
      %3683 = vrot.lane.b32.xlu0 %v3535, 64
      %v3684 = vpop.permute.xlu0 %3683
      %3685 = vrot.lane.b32.xlu0 %v3654, 64
      %v3686 = vpop.permute.xlu0 %3685
      %v3688 = vsel %vm1848, %v3081, %v3338
      %v3690 = vsel %vm1848, %v3082, %v3340
      %v3692 = vsel %vm1848, %v3083, %v3342
      %v3694 = vsel %vm1848, %v3084, %v3344
      %v3696 = vsel %vm1848, %v3085, %v3346
      %v3698 = vsel %vm1848, %v3086, %v3348
      %v3700 = vsel %vm1848, %v3087, %v3350
      %v3702 = vsel %vm1848, %v3088, %v3352
      %v3704 = vsel %vm1848, %v3089, %v3354
      %v3706 = vsel %vm1848, %v3090, %v3356
      %v3708 = vsel %vm1848, %v3091, %v3358
      %v3710 = vsel %vm1848, %v3092, %v3360
      %v3712 = vsel %vm1848, %v3093, %v3362
      %v3714 = vsel %vm1848, %v3094, %v3364
      %v3716 = vsel %vm1848, %v3095, %v3366
      %v3718 = vsel %vm1848, %v3096, %v3368
      %v3720 = vsel %vm1881, %v3688, %v3418
      %v3722 = vsel %vm1881, %v3690, %v3420
      %v3724 = vsel %vm1881, %v3692, %v3422
      %v3726 = vsel %vm1881, %v3694, %v3424
      %v3728 = vsel %vm1881, %v3696, %v3426
      %v3730 = vsel %vm1881, %v3698, %v3428
      %v3732 = vsel %vm1881, %v3700, %v3430
      %v3734 = vsel %vm1881, %v3702, %v3432
      %v3736 = vsel %vm1881, %v3704, %v3434
      %v3738 = vsel %vm1881, %v3706, %v3436
      %v3740 = vsel %vm1881, %v3708, %v3438
      %v3742 = vsel %vm1881, %v3710, %v3440
      %v3744 = vsel %vm1881, %v3712, %v3442
      %v3746 = vsel %vm1881, %v3714, %v3444
      %v3748 = vsel %vm1881, %v3716, %v3446
      %v3750 = vsel %vm1881, %v3718, %v3448
      %v3752 = vsel %vm1914, %v3720, %v3455
      %v3754 = vsel %vm1914, %v3722, %v3457
      %v3756 = vsel %vm1914, %v3724, %v3459
      %v3758 = vsel %vm1914, %v3726, %v3461
      %v3760 = vsel %vm1914, %v3728, %v3463
      %v3762 = vsel %vm1914, %v3730, %v3465
      %v3764 = vsel %vm1914, %v3732, %v3467
      %v3766 = vsel %vm1914, %v3734, %v3469
      %v3768 = vsel %vm1914, %v3736, %v3471
      %v3770 = vsel %vm1914, %v3738, %v3473
      %v3772 = vsel %vm1914, %v3740, %v3475
      %v3774 = vsel %vm1914, %v3742, %v3477
      %v3776 = vsel %vm1914, %v3744, %v3479
      %v3778 = vsel %vm1914, %v3746, %v3481
      %v3780 = vsel %vm1914, %v3748, %v3483
      %v3782 = vsel %vm1914, %v3750, %v3485
      %v3784 = vsel %vm1947, %v3752, %v3502
      %v3786 = vsel %vm1947, %v3754, %v3504
      %v3788 = vsel %vm1947, %v3756, %v3506
      %v3790 = vsel %vm1947, %v3758, %v3508
      %v3792 = vsel %vm1947, %v3760, %v3510
      %v3794 = vsel %vm1947, %v3762, %v3512
      %v3796 = vsel %vm1947, %v3764, %v3514
      %v3798 = vsel %vm1947, %v3766, %v3516
      %v3800 = vsel %vm1947, %v3768, %v3518
      %v3802 = vsel %vm1947, %v3770, %v3520
      %v3804 = vsel %vm1947, %v3772, %v3522
      %v3806 = vsel %vm1947, %v3774, %v3524
      %v3808 = vsel %vm1947, %v3776, %v3526
      %v3810 = vsel %vm1947, %v3778, %v3528
      %v3812 = vsel %vm1947, %v3780, %v3530
      %v3814 = vsel %vm1947, %v3782, %v3532
      %v3816 = vsel %vm1980, %v3784, %v3537
      %v3818 = vsel %vm1980, %v3786, %v3539
      %v3820 = vsel %vm1980, %v3788, %v3541
      %v3822 = vsel %vm1980, %v3790, %v3543
      %v3824 = vsel %vm1980, %v3792, %v3545
      %v3826 = vsel %vm1980, %v3794, %v3547
      %v3828 = vsel %vm1980, %v3796, %v3549
      %v3830 = vsel %vm1980, %v3798, %v3551
      %v3832 = vsel %vm1980, %v3800, %v3553
      %v3834 = vsel %vm1980, %v3802, %v3555
      %v3836 = vsel %vm1980, %v3804, %v3557
      %v3838 = vsel %vm1980, %v3806, %v3559
      %v3840 = vsel %vm1980, %v3808, %v3561
      %v3842 = vsel %vm1980, %v3810, %v3563
      %v3844 = vsel %vm1980, %v3812, %v3565
      %v3846 = vsel %vm1980, %v3814, %v3567
      %v3848 = vsel %vm2013, %v3816, %v3574
      %v3850 = vsel %vm2013, %v3818, %v3576
      %v3852 = vsel %vm2013, %v3820, %v3578
      %v3854 = vsel %vm2013, %v3822, %v3580
      %v3856 = vsel %vm2013, %v3824, %v3582
      %v3858 = vsel %vm2013, %v3826, %v3584
      %v3860 = vsel %vm2013, %v3828, %v3586
      %v3862 = vsel %vm2013, %v3830, %v3588
      %v3864 = vsel %vm2013, %v3832, %v3590
      %v3866 = vsel %vm2013, %v3834, %v3592
      %v3868 = vsel %vm2013, %v3836, %v3594
      %v3870 = vsel %vm2013, %v3838, %v3596
      %v3872 = vsel %vm2013, %v3840, %v3598
      %v3874 = vsel %vm2013, %v3842, %v3600
      %v3876 = vsel %vm2013, %v3844, %v3602
      %v3878 = vsel %vm2013, %v3846, %v3604
      %v3880 = vsel %vm2046, %v3848, %v3621
      %v3882 = vsel %vm2046, %v3850, %v3623
      %v3884 = vsel %vm2046, %v3852, %v3625
      %v3886 = vsel %vm2046, %v3854, %v3627
      %v3888 = vsel %vm2046, %v3856, %v3629
      %v3890 = vsel %vm2046, %v3858, %v3631
      %v3892 = vsel %vm2046, %v3860, %v3633
      %v3894 = vsel %vm2046, %v3862, %v3635
      %v3896 = vsel %vm2046, %v3864, %v3637
      %v3898 = vsel %vm2046, %v3866, %v3639
      %v3900 = vsel %vm2046, %v3868, %v3641
      %v3902 = vsel %vm2046, %v3870, %v3643
      %v3904 = vsel %vm2046, %v3872, %v3645
      %v3906 = vsel %vm2046, %v3874, %v3647
      %v3908 = vsel %vm2046, %v3876, %v3649
      %v3910 = vsel %vm2046, %v3878, %v3651
      %v3912 = vsel %vm2079, %v3880, %v3656
      %v3914 = vsel %vm2079, %v3882, %v3658
      %v3916 = vsel %vm2079, %v3884, %v3660
      %v3918 = vsel %vm2079, %v3886, %v3662
      %v3920 = vsel %vm2079, %v3888, %v3664
      %v3922 = vsel %vm2079, %v3890, %v3666
      %v3924 = vsel %vm2079, %v3892, %v3668
      %v3926 = vsel %vm2079, %v3894, %v3670
      %v3928 = vsel %vm2079, %v3896, %v3672
      %v3930 = vsel %vm2079, %v3898, %v3674
      %v3932 = vsel %vm2079, %v3900, %v3676
      %v3934 = vsel %vm2079, %v3902, %v3678
      %v3936 = vsel %vm2079, %v3904, %v3680
      %v3938 = vsel %vm2079, %v3906, %v3682
      %v3940 = vsel %vm2079, %v3908, %v3684
      %v3942 = vsel %vm2079, %v3910, %v3686
      %v3943 = vld [vmem:[%s3] sm:$0xf]
      %v3944 = vld [vmem:[%s3 + $0x4] sm:$0xf]
      %v3945 = vld [vmem:[%s3 + $0x8] sm:$0xf]
      %v3946 = vld [vmem:[%s3 + $0xc] sm:$0xf]
      %v3947 = vld [vmem:[%s3 + $0x10] sm:$0xf]
      %v3948 = vld [vmem:[%s3 + $0x14] sm:$0xf]
      %v3949 = vld [vmem:[%s3 + $0x18] sm:$0xf]
      %v3950 = vld [vmem:[%s3 + $0x1c] sm:$0xf]
      %v3951 = vld [vmem:[%s3 + $0x20] sm:$0xf]
      %v3961 = vunpack.c.l.b16 %v3943
      %v3962 = vunpack.c.l.b16 %v3944
      %v3963 = vunpack.c.l.b16 %v3945
      %v3964 = vunpack.c.l.b16 %v3946
      %v3965 = vunpack.c.l.b16 %v3947
      %v3966 = vunpack.c.l.b16 %v3948
      %v3967 = vunpack.c.l.b16 %v3949
      %v3968 = vunpack.c.l.b16 %v3950
      %v3969 = vunpack.c.l.b16 %v3951
      %v3970 = vpack.c.b16 %v3962, %v3961
      %v3971 = vpack.c.b16 %v3964, %v3963
      %v3972 = vpack.c.b16 %v3966, %v3965
      %v3973 = vpack.c.b16 %v3968, %v3967
      %v3974 = vpack.c.b16 %v3969, %v3969
      %v3979 = vsel %vm2148, %v3912, 0
      %v3981 = vsel %vm2148, %v3914, 0
      %v3983 = vsel %vm2148, %v3916, 0
      %v3985 = vsel %vm2148, %v3918, 0
      %v3987 = vsel %vm2148, %v3920, 0
      %v3989 = vsel %vm2148, %v3922, 0
      %v3991 = vsel %vm2148, %v3924, 0
      %v3993 = vsel %vm2148, %v3926, 0
      %v3995 = vsel %vm2148, %v3928, 0
      %v3997 = vsel %vm2148, %v3930, 0
      %v3999 = vsel %vm2148, %v3932, 0
      %v4001 = vsel %vm2148, %v3934, 0
      %v4003 = vsel %vm2148, %v3936, 0
      %v4005 = vsel %vm2148, %v3938, 0
      %v4007 = vsel %vm2148, %v3940, 0
      %v4009 = vsel %vm2148, %v3942, 0
      %v4012 = vsel %vm2181, %v3974, 0
      %4014 = vmatpush.bf16.msra.mxu0 0
      %4015 = vmatpush.bf16.msra.mxu0 0
      %4016 = vmatpush.bf16.msra.mxu0 0
      %4017 = vmatpush.bf16.msra.mxu0 %v4012
      %4018 = vmatpush.bf16.msra.mxu0 %v3973
      %4019 = vmatpush.bf16.msra.mxu0 %v3972
      %4020 = vmatpush.bf16.msra.mxu0 %v3971
      %4021 = vmatpush.bf16.msra.mxu0 %v3970
      %4022 = vmatmul.bf16.gmra.mxu0 %v3979
      %v4023 = vpop.f32.mrf.mxu0
      %v4024 = vadd.f32 0.0, %v4023
      %v4025 = vpop.f32.mrf.mxu0
      %v4026 = vadd.f32 0.0, %v4025
      %4027 = vmatmul.bf16.gmra.mxu0 %v3981
      %v4028 = vpop.f32.mrf.mxu0
      %v4029 = vadd.f32 0.0, %v4028
      %v4030 = vpop.f32.mrf.mxu0
      %v4031 = vadd.f32 0.0, %v4030
      %4032 = vmatmul.bf16.gmra.mxu0 %v3983
      %v4033 = vpop.f32.mrf.mxu0
      %v4034 = vadd.f32 0.0, %v4033
      %v4035 = vpop.f32.mrf.mxu0
      %v4036 = vadd.f32 0.0, %v4035
      %4037 = vmatmul.bf16.gmra.mxu0 %v3985
      %v4038 = vpop.f32.mrf.mxu0
      %v4039 = vadd.f32 0.0, %v4038
      %v4040 = vpop.f32.mrf.mxu0
      %v4041 = vadd.f32 0.0, %v4040
      %4042 = vmatmul.bf16.gmra.mxu0 %v3987
      %v4043 = vpop.f32.mrf.mxu0
      %v4044 = vadd.f32 0.0, %v4043
      %v4045 = vpop.f32.mrf.mxu0
      %v4046 = vadd.f32 0.0, %v4045
      %4047 = vmatmul.bf16.gmra.mxu0 %v3989
      %v4048 = vpop.f32.mrf.mxu0
      %v4049 = vadd.f32 0.0, %v4048
      %v4050 = vpop.f32.mrf.mxu0
      %v4051 = vadd.f32 0.0, %v4050
      %4052 = vmatmul.bf16.gmra.mxu0 %v3991
      %v4053 = vpop.f32.mrf.mxu0
      %v4054 = vadd.f32 0.0, %v4053
      %v4055 = vpop.f32.mrf.mxu0
      %v4056 = vadd.f32 0.0, %v4055
      %4057 = vmatmul.bf16.gmra.mxu0 %v3993
      %v4058 = vpop.f32.mrf.mxu0
      %v4059 = vadd.f32 0.0, %v4058
      %v4060 = vpop.f32.mrf.mxu0
      %v4061 = vadd.f32 0.0, %v4060
      %4062 = vmatmul.bf16.gmra.mxu0 %v3995
      %v4063 = vpop.f32.mrf.mxu0
      %v4064 = vadd.f32 0.0, %v4063
      %v4065 = vpop.f32.mrf.mxu0
      %v4066 = vadd.f32 0.0, %v4065
      %4067 = vmatmul.bf16.gmra.mxu0 %v3997
      %v4068 = vpop.f32.mrf.mxu0
      %v4069 = vadd.f32 0.0, %v4068
      %v4070 = vpop.f32.mrf.mxu0
      %v4071 = vadd.f32 0.0, %v4070
      %4072 = vmatmul.bf16.gmra.mxu0 %v3999
      %v4073 = vpop.f32.mrf.mxu0
      %v4074 = vadd.f32 0.0, %v4073
      %v4075 = vpop.f32.mrf.mxu0
      %v4076 = vadd.f32 0.0, %v4075
      %4077 = vmatmul.bf16.gmra.mxu0 %v4001
      %v4078 = vpop.f32.mrf.mxu0
      %v4079 = vadd.f32 0.0, %v4078
      %v4080 = vpop.f32.mrf.mxu0
      %v4081 = vadd.f32 0.0, %v4080
      %4082 = vmatmul.bf16.gmra.mxu0 %v4003
      %v4083 = vpop.f32.mrf.mxu0
      %v4084 = vadd.f32 0.0, %v4083
      %v4085 = vpop.f32.mrf.mxu0
      %v4086 = vadd.f32 0.0, %v4085
      %4087 = vmatmul.bf16.gmra.mxu0 %v4005
      %v4088 = vpop.f32.mrf.mxu0
      %v4089 = vadd.f32 0.0, %v4088
      %v4090 = vpop.f32.mrf.mxu0
      %v4091 = vadd.f32 0.0, %v4090
      %4092 = vmatmul.bf16.gmra.mxu0 %v4007
      %v4093 = vpop.f32.mrf.mxu0
      %v4094 = vadd.f32 0.0, %v4093
      %v4095 = vpop.f32.mrf.mxu0
      %v4096 = vadd.f32 0.0, %v4095
      %4097 = vmatmul.bf16.gmra.mxu0 %v4009
      %v4098 = vpop.f32.mrf.mxu0
      %v4099 = vadd.f32 0.0, %v4098
      %v4100 = vpop.f32.mrf.mxu0
      %v4101 = vadd.f32 0.0, %v4100
      %4102 = vdwg.mxu0
      %v4103 = vld [vmem:[%s6] sm:$0x1]
      %v4105 = vperm.slane %v4103, 0
      %v4107 = vmul.f32 %v4024, %v4105
      %v4108 = vmul.f32 %v4026, %v4105
      %v4109 = vmul.f32 %v4029, %v4105
      %v4110 = vmul.f32 %v4031, %v4105
      %v4111 = vmul.f32 %v4034, %v4105
      %v4112 = vmul.f32 %v4036, %v4105
      %v4113 = vmul.f32 %v4039, %v4105
      %v4114 = vmul.f32 %v4041, %v4105
      %v4115 = vmul.f32 %v4044, %v4105
      %v4116 = vmul.f32 %v4046, %v4105
      %v4117 = vmul.f32 %v4049, %v4105
      %v4118 = vmul.f32 %v4051, %v4105
      %v4119 = vmul.f32 %v4054, %v4105
      %v4120 = vmul.f32 %v4056, %v4105
      %v4121 = vmul.f32 %v4059, %v4105
      %v4122 = vmul.f32 %v4061, %v4105
      %v4123 = vmul.f32 %v4064, %v4105
      %v4124 = vmul.f32 %v4066, %v4105
      %v4125 = vmul.f32 %v4069, %v4105
      %v4126 = vmul.f32 %v4071, %v4105
      %v4127 = vmul.f32 %v4074, %v4105
      %v4128 = vmul.f32 %v4076, %v4105
      %v4129 = vmul.f32 %v4079, %v4105
      %v4130 = vmul.f32 %v4081, %v4105
      %v4131 = vmul.f32 %v4084, %v4105
      %v4132 = vmul.f32 %v4086, %v4105
      %v4133 = vmul.f32 %v4089, %v4105
      %v4134 = vmul.f32 %v4091, %v4105
      %v4135 = vmul.f32 %v4094, %v4105
      %v4136 = vmul.f32 %v4096, %v4105
      %v4137 = vmul.f32 %v4099, %v4105
      %v4138 = vmul.f32 %v4101, %v4105
      %v4139 = vld [vmem:[%s7] sm:$0x1]
      %v4141 = vperm.slane %v4139, 0
      %v4143 = vadd.f32 %v4107, %v4141
      %v4144 = vadd.f32 %v4108, %v4141
      %v4145 = vadd.f32 %v4109, %v4141
      %v4146 = vadd.f32 %v4110, %v4141
      %v4147 = vadd.f32 %v4111, %v4141
      %v4148 = vadd.f32 %v4112, %v4141
      %v4149 = vadd.f32 %v4113, %v4141
      %v4150 = vadd.f32 %v4114, %v4141
      %v4151 = vadd.f32 %v4115, %v4141
      %v4152 = vadd.f32 %v4116, %v4141
      %v4153 = vadd.f32 %v4117, %v4141
      %v4154 = vadd.f32 %v4118, %v4141
      %v4155 = vadd.f32 %v4119, %v4141
      %v4156 = vadd.f32 %v4120, %v4141
      %v4157 = vadd.f32 %v4121, %v4141
      %v4158 = vadd.f32 %v4122, %v4141
      %v4159 = vadd.f32 %v4123, %v4141
      %v4160 = vadd.f32 %v4124, %v4141
      %v4161 = vadd.f32 %v4125, %v4141
      %v4162 = vadd.f32 %v4126, %v4141
      %v4163 = vadd.f32 %v4127, %v4141
      %v4164 = vadd.f32 %v4128, %v4141
      %v4165 = vadd.f32 %v4129, %v4141
      %v4166 = vadd.f32 %v4130, %v4141
      %v4167 = vadd.f32 %v4131, %v4141
      %v4168 = vadd.f32 %v4132, %v4141
      %v4169 = vadd.f32 %v4133, %v4141
      %v4170 = vadd.f32 %v4134, %v4141
      %v4171 = vadd.f32 %v4135, %v4141
      %v4172 = vadd.f32 %v4136, %v4141
      %v4173 = vadd.f32 %v4137, %v4141
      %v4174 = vadd.f32 %v4138, %v4141
      %v4175 = vmax.f32 %v4143, 0.0
      %v4176 = vmax.f32 %v4144, 0.0
      %v4177 = vmax.f32 %v4145, 0.0
      %v4178 = vmax.f32 %v4146, 0.0
      %v4179 = vmax.f32 %v4147, 0.0
      %v4180 = vmax.f32 %v4148, 0.0
      %v4181 = vmax.f32 %v4149, 0.0
      %v4182 = vmax.f32 %v4150, 0.0
      %v4183 = vmax.f32 %v4151, 0.0
      %v4184 = vmax.f32 %v4152, 0.0
      %v4185 = vmax.f32 %v4153, 0.0
      %v4186 = vmax.f32 %v4154, 0.0
      %v4187 = vmax.f32 %v4155, 0.0
      %v4188 = vmax.f32 %v4156, 0.0
      %v4189 = vmax.f32 %v4157, 0.0
      %v4190 = vmax.f32 %v4158, 0.0
      %v4191 = vmax.f32 %v4159, 0.0
      %v4192 = vmax.f32 %v4160, 0.0
      %v4193 = vmax.f32 %v4161, 0.0
      %v4194 = vmax.f32 %v4162, 0.0
      %v4195 = vmax.f32 %v4163, 0.0
      %v4196 = vmax.f32 %v4164, 0.0
      %v4197 = vmax.f32 %v4165, 0.0
      %v4198 = vmax.f32 %v4166, 0.0
      %v4199 = vmax.f32 %v4167, 0.0
      %v4200 = vmax.f32 %v4168, 0.0
      %v4201 = vmax.f32 %v4169, 0.0
      %v4202 = vmax.f32 %v4170, 0.0
      %v4203 = vmax.f32 %v4171, 0.0
      %v4204 = vmax.f32 %v4172, 0.0
      %v4205 = vmax.f32 %v4173, 0.0
      %v4206 = vmax.f32 %v4174, 0.0
      %v4207 = vpack.c.bf16 %v4175, %v4175
      %v4208 = vpack.c.bf16 %v4176, %v4176
      %v4209 = vpack.c.bf16 %v4177, %v4177
      %v4210 = vpack.c.bf16 %v4178, %v4178
      %v4211 = vpack.c.bf16 %v4179, %v4179
      %v4212 = vpack.c.bf16 %v4180, %v4180
      %v4213 = vpack.c.bf16 %v4181, %v4181
      %v4214 = vpack.c.bf16 %v4182, %v4182
      %v4215 = vpack.c.bf16 %v4183, %v4183
      %v4216 = vpack.c.bf16 %v4184, %v4184
      %v4217 = vpack.c.bf16 %v4185, %v4185
      %v4218 = vpack.c.bf16 %v4186, %v4186
      %v4219 = vpack.c.bf16 %v4187, %v4187
      %v4220 = vpack.c.bf16 %v4188, %v4188
      %v4221 = vpack.c.bf16 %v4189, %v4189
      %v4222 = vpack.c.bf16 %v4190, %v4190
      %v4223 = vpack.c.bf16 %v4191, %v4191
      %v4224 = vpack.c.bf16 %v4192, %v4192
      %v4225 = vpack.c.bf16 %v4193, %v4193
      %v4226 = vpack.c.bf16 %v4194, %v4194
      %v4227 = vpack.c.bf16 %v4195, %v4195
      %v4228 = vpack.c.bf16 %v4196, %v4196
      %v4229 = vpack.c.bf16 %v4197, %v4197
      %v4230 = vpack.c.bf16 %v4198, %v4198
      %v4231 = vpack.c.bf16 %v4199, %v4199
      %v4232 = vpack.c.bf16 %v4200, %v4200
      %v4233 = vpack.c.bf16 %v4201, %v4201
      %v4234 = vpack.c.bf16 %v4202, %v4202
      %v4235 = vpack.c.bf16 %v4203, %v4203
      %v4236 = vpack.c.bf16 %v4204, %v4204
      %v4237 = vpack.c.bf16 %v4205, %v4205
      %v4238 = vpack.c.bf16 %v4206, %v4206
      %4239 = vst [vmem:[%s325] sm:$0xf] %v4207
      %4240 = vst [vmem:[%s325 + $0x4] sm:$0xf] %v4208
      %4241 = vst [vmem:[%s325 + $0x8] sm:$0xf] %v4209
      %4242 = vst [vmem:[%s325 + $0xc] sm:$0xf] %v4210
      %4243 = vst [vmem:[%s325 + $0x10] sm:$0xf] %v4211
      %4244 = vst [vmem:[%s325 + $0x14] sm:$0xf] %v4212
      %4245 = vst [vmem:[%s325 + $0x18] sm:$0xf] %v4213
      %4246 = vst [vmem:[%s325 + $0x1c] sm:$0xf] %v4214
      %4247 = vst [vmem:[%s325 + $0x20] sm:$0xf] %v4215
      %4248 = vst [vmem:[%s325 + $0x24] sm:$0xf] %v4216
      %4249 = vst [vmem:[%s325 + $0x28] sm:$0xf] %v4217
      %4250 = vst [vmem:[%s325 + $0x2c] sm:$0xf] %v4218
      %4251 = vst [vmem:[%s325 + $0x30] sm:$0xf] %v4219
      %4252 = vst [vmem:[%s325 + $0x34] sm:$0xf] %v4220
      %4253 = vst [vmem:[%s325 + $0x38] sm:$0xf] %v4221
      %4254 = vst [vmem:[%s325 + $0x3c] sm:$0xf] %v4222
      %4255 = vst [vmem:[%s325 + $0x40] sm:$0xf] %v4223
      %4256 = vst [vmem:[%s325 + $0x44] sm:$0xf] %v4224
      %4257 = vst [vmem:[%s325 + $0x48] sm:$0xf] %v4225
      %4258 = vst [vmem:[%s325 + $0x4c] sm:$0xf] %v4226
      %4259 = vst [vmem:[%s325 + $0x50] sm:$0xf] %v4227
      %4260 = vst [vmem:[%s325 + $0x54] sm:$0xf] %v4228
      %4261 = vst [vmem:[%s325 + $0x58] sm:$0xf] %v4229
      %4262 = vst [vmem:[%s325 + $0x5c] sm:$0xf] %v4230
      %4263 = vst [vmem:[%s325 + $0x60] sm:$0xf] %v4231
      %4264 = vst [vmem:[%s325 + $0x64] sm:$0xf] %v4232
      %4265 = vst [vmem:[%s325 + $0x68] sm:$0xf] %v4233
      %4266 = vst [vmem:[%s325 + $0x6c] sm:$0xf] %v4234
      %4267 = vst [vmem:[%s325 + $0x70] sm:$0xf] %v4235
      %4268 = vst [vmem:[%s325 + $0x74] sm:$0xf] %v4236
      %4269 = vst [vmem:[%s325 + $0x78] sm:$0xf] %v4237
      %4270 = vst [vmem:[%s325 + $0x7c] sm:$0xf] %v4238
      %p4271 = scmp.lt.s32.totalorder %s19, 1
      %s4272 = scalar_select %p4271, %s19, 1
      %s4273 = smul.addr %s4272, 32
      %s4274 = smul.addr %s4273, 4
      %s4275 = scalar_lea.vmem %s8, %s4274
      // Predicated region
      $region53: #{up_forward.1} parent=51 // pred_check
        %p4276 = pneg %p215
      $region54: #{up_forward.1} parent=51 // pred_check_branch
        %4278 = sbr.rel (%p4276) target = $region56
      $region55: #{up_forward.1} parent=51 // pred_region
        _
      $region56: #{up_forward.1} parent=51 // pred_fallthru
        _
    $region52: #{up_forward.1} parent=5 // pred_fallthru
      _
    %p4279 = scmp.le.s32.totalorder 2, %s14
    // Predicated region
    $region57: #{up_forward.1} parent=5 // pred_check
      %p4280 = pneg %p4279
    $region58: #{up_forward.1} parent=5 // pred_check_branch
      %4282 = sbr.rel (%p4280) target = $region60
    $region59: #{up_forward.1} parent=5 // pred_region
      %s4283 = ssub.s32 %s14, 2
      // Predicated region
      $region61: #{up_forward.1} parent=59 // pred_check
        %p4284 = pneg %p221
      $region62: #{up_forward.1} parent=59 // pred_check_branch
        %4286 = sbr.rel (%p4284) target = $region64
      $region63: #{up_forward.1} parent=59 // pred_region
        %p4287 = scmp.lt.s32.totalorder %s20, 1
        %s4288 = scalar_select %p4287, %s20, 1
        %s4289 = smul.addr %s4288, 32
        %s4290 = smul.addr %s4289, 4
        %s4291 = scalar_lea.vmem %s8, %s4290
      $region64: #{up_forward.1} parent=59 // pred_fallthru
        _
    $region60: #{up_forward.1} parent=5 // pred_fallthru
      _
  $region6: #{up_forward.1} parent=0 // loop_footer
    %s18 = sadd.s32 1, %s14
  $region7: #{up_forward.1} parent=0 // loop_footer_branch
    %13 = sbr.rel target = $region3
  $region8: #{up_forward.1} parent=0 // loop_exit
    _

</llo_original>
